<compile_context>
chip_gen: v6e
topology: v6e:2x2x1
jax: 0.10.0
libtpu: 0.0.40
codegen_flags: <defaults>
</compile_context>

<pallas_src>
import math
import functools

import jax
import jax.numpy as jnp
from jax.experimental import pallas as pl
from jax.experimental.pallas import tpu as pltpu


# --------------------------------------------------------------------------
# Pallas kernels
# --------------------------------------------------------------------------

def _matmul_bias_kernel(x_ref, w_ref, b_ref, o_ref):
    # bf16 operands on the MXU, f32 accumulation.
    x = x_ref[...].astype(jnp.bfloat16)
    y = jnp.dot(x, w_ref[...], preferred_element_type=jnp.float32)
    o_ref[...] = (y + b_ref[...]).astype(o_ref.dtype)


def linear_pallas(x, w_bf16, b):
    """x: (M, K) f32, w: (K, N) bf16, b: (N,) f32 -> (M, N) f32.

    Single-block kernel: at these sizes (<= ~1.2 MiB per operand) the whole
    matmul fits in VMEM, so no M-tiling and no wrapper-side padding pass.
    """
    M, K = x.shape
    N = w_bf16.shape[1]
    return pl.pallas_call(
        _matmul_bias_kernel,
        out_shape=jax.ShapeDtypeStruct((M, N), jnp.float32),
        grid=(1,),
        in_specs=[
            pl.BlockSpec((M, K), lambda i: (0, 0)),
            pl.BlockSpec((K, N), lambda i: (0, 0)),
            pl.BlockSpec((1, N), lambda i: (0, 0)),
        ],
        out_specs=pl.BlockSpec((M, N), lambda i: (0, 0)),
    )(x, w_bf16, b.reshape(1, N))


def _layernorm(x, gamma, beta, eps=1e-5):
    mu = jnp.mean(x, axis=-1, keepdims=True)
    var = jnp.mean(jnp.square(x - mu), axis=-1, keepdims=True)
    return (x - mu) * jax.lax.rsqrt(var + eps) * gamma + beta


def _encoder_stack_kernel(tok_ref, embw_ref, embb_ref, pe_ref, *refs,
                          num_heads, num_layers):
    """Fused per-batch-element kernel:
        per-patch embedding -> +PE -> Nx encoder layers -> fc -> view -> outLay
    """
    o_ref = refs[-1]
    wrefs = refs[:-1]
    PER_LAYER = 12

    # --- create_embeddings: one Linear per token, fused (VPU mul + reduce) ---
    x_tok = tok_ref[0].astype(jnp.float32)                       # (L, P)
    emb = jnp.sum(x_tok[:, :, None] * embw_ref[...].astype(jnp.float32),
                  axis=1)                                        # (L, D)
    x = emb + embb_ref[...] + pe_ref[...]                        # + positional enc.

    D = x.shape[-1]
    Dh = D // num_heads
    scale = 1.0 / math.sqrt(Dh)

    for i in range(num_layers):                                  # static unroll
        (wqkv, bqkv, wo, bo, g1, be1,
         w1, b1, w2, b2, g2, be2) = wrefs[i * PER_LAYER:(i + 1) * PER_LAYER]

        # fused QKV projection: one (L,D) @ (D,3D) matmul
        xb = x.astype(jnp.bfloat16)
        qkv = jnp.dot(xb, wqkv[...], preferred_element_type=jnp.float32) + bqkv[...]
        q, k, v = qkv[:, :D], qkv[:, D:2 * D], qkv[:, 2 * D:]

        # combine_heads + W_o folded: accumulate ctx_h @ W_o[h*Dh:(h+1)*Dh, :]
        wo_full = wo[...]                                        # (D, D) bf16
        attn = jnp.zeros_like(x)
        for h in range(num_heads):                               # static unroll
            sl = slice(h * Dh, (h + 1) * Dh)
            qh, kh, vh = q[:, sl], k[:, sl], v[:, sl]
            s = jnp.dot(qh, kh.T, preferred_element_type=jnp.float32) * scale
            s = s - jnp.max(s, axis=-1, keepdims=True)
            p = jnp.exp(s)
            p = p / jnp.sum(p, axis=-1, keepdims=True)
            ctx = jnp.dot(p.astype(jnp.bfloat16), vh.astype(jnp.bfloat16),
                          preferred_element_type=jnp.float32)    # (L, Dh)
            attn = attn + jnp.dot(ctx.astype(jnp.bfloat16), wo_full[sl, :],
                                  preferred_element_type=jnp.float32)
        attn = attn + bo[...]

        h1 = _layernorm(x + attn, g1[...], be1[...])             # dropout = identity
        h1b = h1.astype(jnp.bfloat16)
        ff = jnp.dot(h1b, w1[...], preferred_element_type=jnp.float32) + b1[...]
        ff = jnp.maximum(ff, 0.0)
        ff = jnp.dot(ff.astype(jnp.bfloat16), w2[...],
                     preferred_element_type=jnp.float32) + b2[...]
        x = _layernorm(h1 + ff, g2[...], be2[...])

    # --- classification head fused as epilogue --------------------------------
    # fc: (L, D) -> (L, 2); view(B, -1) + outputLayer(L*2 -> 2) is expressed as
    # an element-remapped (L, 2, 2) weight so no in-kernel reshape is needed.
    fc_w, fc_b, out_w_r, out_b = wrefs[num_layers * PER_LAYER:]
    logits = jnp.dot(x, fc_w[...], preferred_element_type=jnp.float32) + fc_b[...]
    t = jnp.sum(logits[:, :, None] * out_w_r[...], axis=0)       # (2, 2)
    y = jnp.sum(t, axis=0, keepdims=True) + out_b[...]           # (1, 2)
    o_ref[...] = y.reshape(1, 1, 2).astype(o_ref.dtype)


def encoder_stack_pallas(tokens, params, *, num_heads):
    """tokens: (B, L, P) -> (B, 2).  One pallas_call, grid over the batch."""
    B, L, P = tokens.shape
    c = params['cnn']
    D = c['emb_w'].shape[-1]
    bf = lambda a: a.astype(jnp.bfloat16)

    args = [tokens, bf(c['emb_w']), c['emb_b'], params['pe'][:L, :]]
    in_specs = [
        pl.BlockSpec((1, L, P), lambda b: (b, 0, 0)),
        pl.BlockSpec((L, P, D), lambda b: (0, 0, 0)),
        pl.BlockSpec((L, D), lambda b: (0, 0)),
        pl.BlockSpec((L, D), lambda b: (0, 0)),
    ]

    def add(arr):
        args.append(arr)
        nd = arr.ndim
        in_specs.append(pl.BlockSpec(arr.shape, lambda b, nd=nd: (0,) * nd))

    for lp in params['layers']:
        wqkv = jnp.concatenate([lp['wq'], lp['wk'], lp['wv']], axis=1)   # (D, 3D)
        bqkv = jnp.concatenate([lp['bq'], lp['bk'], lp['bv']])           # (3D,)
        add(bf(wqkv)); add(bqkv.reshape(1, 3 * D))
        add(bf(lp['wo'])); add(lp['bo'].reshape(1, D))
        add(lp['g1'].reshape(1, D)); add(lp['be1'].reshape(1, D))
        add(bf(lp['w1'])); add(lp['b1'].reshape(1, -1))
        add(bf(lp['w2'])); add(lp['b2'].reshape(1, D))
        add(lp['g2'].reshape(1, D)); add(lp['be2'].reshape(1, D))

    # head weights; out_w (L*2, 2) -> (L, 2, 2) so flat[2*l + c] maps to [l, c]
    add(params['fc_w']); add(params['fc_b'].reshape(1, 2))
    add(params['out_w'].reshape(L, 2, 2)); add(params['out_b'].reshape(1, 2))

    out = pl.pallas_call(
        functools.partial(_encoder_stack_kernel,
                          num_heads=num_heads,
                          num_layers=len(params['layers'])),
        out_shape=jax.ShapeDtypeStruct((B, 1, 2), jnp.float32),
        grid=(B,),
        in_specs=in_specs,
        out_specs=pl.BlockSpec((1, 1, 2), lambda b: (b, 0, 0)),
        compiler_params=pltpu.CompilerParams(dimension_semantics=("parallel",)),
    )(*args)
    return out.reshape(B, 2)


# --------------------------------------------------------------------------
# Conv stem: im2col (XLA) + Pallas matmul; BN folded into conv2 in the wrapper
# --------------------------------------------------------------------------

def conv2d_pallas(x_nhwc, w_hwio_bf16, b, stride, pad):
    B, H, W, Cin = x_nhwc.shape
    KH, KW, _, Cout = w_hwio_bf16.shape
    xp = jnp.pad(x_nhwc, ((0, 0), (pad, pad), (pad, pad), (0, 0)))
    Hp, Wp = H + 2 * pad, W + 2 * pad
    OH = (Hp - KH) // stride + 1
    OW = (Wp - KW) // stride + 1
    cols = [xp[:, i:i + stride * OH:stride, j:j + stride * OW:stride, :]
            for i in range(KH) for j in range(KW)]
    cols = jnp.concatenate(cols, axis=-1)                        # (B, OH, OW, KH*KW*Cin)
    out = linear_pallas(cols.reshape(B * OH * OW, KH * KW * Cin),
                        w_hwio_bf16.reshape(KH * KW * Cin, Cout), b)
    return out.reshape(B, OH, OW, Cout)


def positional_encoding(maxL, D):
    pos = jnp.arange(maxL, dtype=jnp.float32)[:, None]
    i = jnp.arange(0, D, 2, dtype=jnp.float32)[None, :]
    angle = pos / jnp.power(10000.0, i / D)
    pe = jnp.zeros((maxL, D), dtype=jnp.float32)
    pe = pe.at[:, 0::2].set(jnp.sin(angle))
    pe = pe.at[:, 1::2].set(jnp.cos(angle))
    return pe


# --------------------------------------------------------------------------
# Full forward pass
# --------------------------------------------------------------------------

def transformer_forward(params, source_nchw, *, num_heads):
    x = jnp.transpose(source_nchw, (0, 2, 3, 1))                 # NCHW -> NHWC
    c = params['cnn']
    bf = lambda a: a.astype(jnp.bfloat16)

    # eval-mode BatchNorm2d folded into cnn2's weights/bias (one fewer kernel)
    scale = c['bn_g'] * jax.lax.rsqrt(c['bn_v'] + 1e-5)
    shift = c['bn_b'] - c['bn_m'] * scale
    w2f = c['w2'] * scale                                        # scale out-channels
    b2f = c['b2'] * scale + shift

    x = conv2d_pallas(x, bf(c['w1']), c['b1'], stride=2, pad=2)  # cnn1
    x = conv2d_pallas(x, bf(w2f), b2f, stride=2, pad=2)          # cnn2 (+BN folded)
    x = conv2d_pallas(x, bf(c['w3']), c['b3'], stride=2, pad=2)  # cnn3
    x = conv2d_pallas(x, bf(c['w4']), c['b4'], stride=2, pad=0)  # cnn4
    # x is (B, OH, OW, C) == torch's cnn4.permute(0, 2, 3, 1)
    B, OH, OW, C = x.shape
    tokens = x.reshape(B, OH * OW, C)

    # embedding + PE + Nx encoder layers + fc + view + outputLayer: one kernel
    return encoder_stack_pallas(tokens, params, num_heads=num_heads)


# --------------------------------------------------------------------------
# Deterministic parameter init
# --------------------------------------------------------------------------

def init_params(key, *, D, H, Nx, Dff, maxL, L, patch_dim):
    ks = iter(jax.random.split(key, 128))

    def nrm(shape, s=0.05):
        return jax.random.normal(next(ks), shape, jnp.float32) * s

    cnn = dict(
        w1=nrm((5, 7, 3, 32)), b1=nrm((32,)),
        w2=nrm((5, 7, 32, 64)), b2=nrm((64,)),
        bn_g=1.0 + nrm((64,)), bn_b=nrm((64,)),
        bn_m=nrm((64,)), bn_v=1.0 + jnp.abs(nrm((64,))),
        w3=nrm((3, 3, 64, 32)), b3=nrm((32,)),
        w4=nrm((3, 3, 32, 16)), b4=nrm((16,)),
        emb_w=nrm((L, patch_dim, D)), emb_b=nrm((L, D)),
    )
    layers = []
    for _ in range(Nx):
        layers.append(dict(
            wq=nrm((D, D)), bq=nrm((D,)),
            wk=nrm((D, D)), bk=nrm((D,)),
            wv=nrm((D, D)), bv=nrm((D,)),
            wo=nrm((D, D)), bo=nrm((D,)),
            g1=jnp.ones((D,), jnp.float32), be1=jnp.zeros((D,), jnp.float32),
            w1=nrm((D, Dff)), b1=nrm((Dff,)),
            w2=nrm((Dff, D)), b2=nrm((D,)),
            g2=jnp.ones((D,), jnp.float32), be2=jnp.zeros((D,), jnp.float32),
        ))
    return dict(
        cnn=cnn,
        pe=positional_encoding(maxL, D),
        layers=layers,
        fc_w=nrm((D, 2)), fc_b=nrm((2,)),
        out_w=nrm((L * 2, 2)), out_b=nrm((2,)),
    )


def _conv_out(n, k, s, p):
    return (n + 2 * p - k) // s + 1


if __name__ == "__main__":
    # Small, self-consistent shapes
    D, H, Nx, D_ff, maxL, dropout = 32, 4, 2, 64, 16, 0.1
    B, Cin, IH, IW = 2, 3, 48, 48

    # Derive the CNN output geometry (matches the conv stack above)
    h = _conv_out(IH, 5, 2, 2); w = _conv_out(IW, 7, 2, 2)
    h = _conv_out(h, 5, 2, 2);  w = _conv_out(w, 7, 2, 2)
    h = _conv_out(h, 3, 2, 2);  w = _conv_out(w, 3, 2, 2)
    h = _conv_out(h, 3, 2, 0);  w = _conv_out(w, 3, 2, 0)
    L, patch_dim = h * w, 16
    assert L <= maxL and D % H == 0

    key = jax.random.PRNGKey(0)
    kp, kx = jax.random.split(key)
    params = init_params(kp, D=D, H=H, Nx=Nx, Dff=D_ff, maxL=maxL,
                         L=L, patch_dim=patch_dim)
    x = jax.random.normal(kx, (B, Cin, IH, IW), jnp.float32)

    fwd = jax.jit(functools.partial(transformer_forward, num_heads=H))
    y = fwd(params, x)
    jax.block_until_ready(y)
    assert y.shape == (B, 2) and jnp.all(jnp.isfinite(y))
    print("KERNEL_OK")
</pallas_src>

<mosaic_0001>
module attributes {stable_mosaic.version = 11 : i64} {
  func.func @_matmul_bias_kernel(%arg0: i32, %arg1: memref<1104x105xf32, #tpu.memory_space<vmem>>, %arg2: memref<105x32xbf16, #tpu.memory_space<vmem>>, %arg3: memref<1x32xf32, #tpu.memory_space<vmem>>, %arg4: memref<1104x32xf32, #tpu.memory_space<vmem>>) attributes {dimension_semantics = [#tpu.dimension_semantics<arbitrary>], iteration_bounds = array<i64: 1>, scalar_prefetch = 0 : i64, scratch_operands = 0 : i64, tpu.core_type = #tpu.core_type<tc>, window_params = [{pipeline_mode = #tpu.pipeline_mode<synchronous>, transform_indices = @transform_0, window_bounds = array<i64: 1104, 105>}, {pipeline_mode = #tpu.pipeline_mode<synchronous>, transform_indices = @transform_1, window_bounds = array<i64: 105, 32>}, {pipeline_mode = #tpu.pipeline_mode<synchronous>, transform_indices = @transform_2, window_bounds = array<i64: 1, 32>}, {pipeline_mode = #tpu.pipeline_mode<synchronous>, transform_indices = @transform_3, window_bounds = array<i64: 1104, 32>}]} {
    %c0 = arith.constant 0 : index
    %c0_0 = arith.constant 0 : index
    %0 = vector.load %arg1[%c0, %c0_0] : memref<1104x105xf32, #tpu.memory_space<vmem>>, vector<1104x105xf32>
    %1 = arith.truncf %0 : vector<1104x105xf32> to vector<1104x105xbf16>
    %c0_1 = arith.constant 0 : index
    %c0_2 = arith.constant 0 : index
    %2 = vector.load %arg2[%c0_1, %c0_2] : memref<105x32xbf16, #tpu.memory_space<vmem>>, vector<105x32xbf16>
    %cst = arith.constant dense<0.000000e+00> : vector<1104x32xf32>
    %3 = tpu.matmul %1, %2, %cst {dimension_numbers = #tpu.dot_dimension_numbers<[1], [0], [0], [1], [0, 0, 1, 1], [], []>} : vector<1104x105xbf16>, vector<105x32xbf16>, vector<1104x32xf32> -> vector<1104x32xf32>
    %c0_3 = arith.constant 0 : index
    %c0_4 = arith.constant 0 : index
    %4 = vector.load %arg3[%c0_3, %c0_4] : memref<1x32xf32, #tpu.memory_space<vmem>>, vector<1x32xf32>
    %5 = vector.broadcast %4 : vector<1x32xf32> to vector<1104x32xf32>
    %6 = arith.addf %3, %5 : vector<1104x32xf32>
    %c0_5 = arith.constant 0 : index
    %c0_6 = arith.constant 0 : index
    %7 = vector.load %arg4[%c0_5, %c0_6] : memref<1104x32xf32, #tpu.memory_space<vmem>>, vector<1104x32xf32>
    tpu.vector_store %arg4[%c0_5, %c0_6], %6 {strides = array<i32>} : memref<1104x32xf32, #tpu.memory_space<vmem>>, vector<1104x32xf32>,
    return
  }
  func.func @transform_0(%arg0: i32) -> (i32, i32) {
    %c0_i32 = arith.constant 0 : i32
    %c0_i32_0 = arith.constant 0 : i32
    %c0_i32_1 = arith.constant 0 : i32
    return %c0_i32, %c0_i32_0 : i32, i32
  }
  func.func @transform_1(%arg0: i32) -> (i32, i32) {
    %c0_i32 = arith.constant 0 : i32
    %c0_i32_0 = arith.constant 0 : i32
    %c0_i32_1 = arith.constant 0 : i32
    return %c0_i32, %c0_i32_0 : i32, i32
  }
  func.func @transform_2(%arg0: i32) -> (i32, i32) {
    %c0_i32 = arith.constant 0 : i32
    %c0_i32_0 = arith.constant 0 : i32
    %c0_i32_1 = arith.constant 0 : i32
    return %c0_i32, %c0_i32_0 : i32, i32
  }
  func.func @transform_3(%arg0: i32) -> (i32, i32) {
    %c0_i32 = arith.constant 0 : i32
    %c0_i32_0 = arith.constant 0 : i32
    %c0_i32_1 = arith.constant 0 : i32
    return %c0_i32, %c0_i32_0 : i32, i32
  }
}

module attributes {stable_mosaic.version = 11 : i64} {
  func.func @_matmul_bias_kernel(%arg0: i32, %arg1: memref<264x1120xf32, #tpu.memory_space<vmem>>, %arg2: memref<1120x64xbf16, #tpu.memory_space<vmem>>, %arg3: memref<1x64xf32, #tpu.memory_space<vmem>>, %arg4: memref<264x64xf32, #tpu.memory_space<vmem>>) attributes {dimension_semantics = [#tpu.dimension_semantics<arbitrary>], iteration_bounds = array<i64: 1>, scalar_prefetch = 0 : i64, scratch_operands = 0 : i64, tpu.core_type = #tpu.core_type<tc>, window_params = [{pipeline_mode = #tpu.pipeline_mode<synchronous>, transform_indices = @transform_0, window_bounds = array<i64: 264, 1120>}, {pipeline_mode = #tpu.pipeline_mode<synchronous>, transform_indices = @transform_1, window_bounds = array<i64: 1120, 64>}, {pipeline_mode = #tpu.pipeline_mode<synchronous>, transform_indices = @transform_2, window_bounds = array<i64: 1, 64>}, {pipeline_mode = #tpu.pipeline_mode<synchronous>, transform_indices = @transform_3, window_bounds = array<i64: 264, 64>}]} {
    %c0 = arith.constant 0 : index
    %c0_0 = arith.constant 0 : index
    %0 = vector.load %arg1[%c0, %c0_0] : memref<264x1120xf32, #tpu.memory_space<vmem>>, vector<264x1120xf32>
    %1 = arith.truncf %0 : vector<264x1120xf32> to vector<264x1120xbf16>
    %c0_1 = arith.constant 0 : index
    %c0_2 = arith.constant 0 : index
    %2 = vector.load %arg2[%c0_1, %c0_2] : memref<1120x64xbf16, #tpu.memory_space<vmem>>, vector<1120x64xbf16>
    %cst = arith.constant dense<0.000000e+00> : vector<264x64xf32>
    %3 = tpu.matmul %1, %2, %cst {dimension_numbers = #tpu.dot_dimension_numbers<[1], [0], [0], [1], [0, 0, 1, 1], [], []>} : vector<264x1120xbf16>, vector<1120x64xbf16>, vector<264x64xf32> -> vector<264x64xf32>
    %c0_3 = arith.constant 0 : index
    %c0_4 = arith.constant 0 : index
    %4 = vector.load %arg3[%c0_3, %c0_4] : memref<1x64xf32, #tpu.memory_space<vmem>>, vector<1x64xf32>
    %5 = vector.broadcast %4 : vector<1x64xf32> to vector<264x64xf32>
    %6 = arith.addf %3, %5 : vector<264x64xf32>
    %c0_5 = arith.constant 0 : index
    %c0_6 = arith.constant 0 : index
    %7 = vector.load %arg4[%c0_5, %c0_6] : memref<264x64xf32, #tpu.memory_space<vmem>>, vector<264x64xf32>
    tpu.vector_store %arg4[%c0_5, %c0_6], %6 {strides = array<i32>} : memref<264x64xf32, #tpu.memory_space<vmem>>, vector<264x64xf32>,
    return
  }
  func.func @transform_0(%arg0: i32) -> (i32, i32) {
    %c0_i32 = arith.constant 0 : i32
    %c0_i32_0 = arith.constant 0 : i32
    %c0_i32_1 = arith.constant 0 : i32
    return %c0_i32, %c0_i32_0 : i32, i32
  }
  func.func @transform_1(%arg0: i32) -> (i32, i32) {
    %c0_i32 = arith.constant 0 : i32
    %c0_i32_0 = arith.constant 0 : i32
    %c0_i32_1 = arith.constant 0 : i32
    return %c0_i32, %c0_i32_0 : i32, i32
  }
  func.func @transform_2(%arg0: i32) -> (i32, i32) {
    %c0_i32 = arith.constant 0 : i32
    %c0_i32_0 = arith.constant 0 : i32
    %c0_i32_1 = arith.constant 0 : i32
    return %c0_i32, %c0_i32_0 : i32, i32
  }
  func.func @transform_3(%arg0: i32) -> (i32, i32) {
    %c0_i32 = arith.constant 0 : i32
    %c0_i32_0 = arith.constant 0 : i32
    %c0_i32_1 = arith.constant 0 : i32
    return %c0_i32, %c0_i32_0 : i32, i32
  }
}

module attributes {stable_mosaic.version = 11 : i64} {
  func.func @_matmul_bias_kernel(%arg0: i32, %arg1: memref<98x576xf32, #tpu.memory_space<vmem>>, %arg2: memref<576x32xbf16, #tpu.memory_space<vmem>>, %arg3: memref<1x32xf32, #tpu.memory_space<vmem>>, %arg4: memref<98x32xf32, #tpu.memory_space<vmem>>) attributes {dimension_semantics = [#tpu.dimension_semantics<arbitrary>], iteration_bounds = array<i64: 1>, scalar_prefetch = 0 : i64, scratch_operands = 0 : i64, tpu.core_type = #tpu.core_type<tc>, window_params = [{pipeline_mode = #tpu.pipeline_mode<synchronous>, transform_indices = @transform_0, window_bounds = array<i64: 98, 576>}, {pipeline_mode = #tpu.pipeline_mode<synchronous>, transform_indices = @transform_1, window_bounds = array<i64: 576, 32>}, {pipeline_mode = #tpu.pipeline_mode<synchronous>, transform_indices = @transform_2, window_bounds = array<i64: 1, 32>}, {pipeline_mode = #tpu.pipeline_mode<synchronous>, transform_indices = @transform_3, window_bounds = array<i64: 98, 32>}]} {
    %c0 = arith.constant 0 : index
    %c0_0 = arith.constant 0 : index
    %0 = vector.load %arg1[%c0, %c0_0] : memref<98x576xf32, #tpu.memory_space<vmem>>, vector<98x576xf32>
    %1 = arith.truncf %0 : vector<98x576xf32> to vector<98x576xbf16>
    %c0_1 = arith.constant 0 : index
    %c0_2 = arith.constant 0 : index
    %2 = vector.load %arg2[%c0_1, %c0_2] : memref<576x32xbf16, #tpu.memory_space<vmem>>, vector<576x32xbf16>
    %cst = arith.constant dense<0.000000e+00> : vector<98x32xf32>
    %3 = tpu.matmul %1, %2, %cst {dimension_numbers = #tpu.dot_dimension_numbers<[1], [0], [0], [1], [0, 0, 1, 1], [], []>} : vector<98x576xbf16>, vector<576x32xbf16>, vector<98x32xf32> -> vector<98x32xf32>
    %c0_3 = arith.constant 0 : index
    %c0_4 = arith.constant 0 : index
    %4 = vector.load %arg3[%c0_3, %c0_4] : memref<1x32xf32, #tpu.memory_space<vmem>>, vector<1x32xf32>
    %5 = vector.broadcast %4 : vector<1x32xf32> to vector<98x32xf32>
    %6 = arith.addf %3, %5 : vector<98x32xf32>
    %c0_5 = arith.constant 0 : index
    %c0_6 = arith.constant 0 : index
    %7 = vector.load %arg4[%c0_5, %c0_6] : memref<98x32xf32, #tpu.memory_space<vmem>>, vector<98x32xf32>
    tpu.vector_store %arg4[%c0_5, %c0_6], %6 {strides = array<i32>} : memref<98x32xf32, #tpu.memory_space<vmem>>, vector<98x32xf32>,
    return
  }
  func.func @transform_0(%arg0: i32) -> (i32, i32) {
    %c0_i32 = arith.constant 0 : i32
    %c0_i32_0 = arith.constant 0 : i32
    %c0_i32_1 = arith.constant 0 : i32
    return %c0_i32, %c0_i32_0 : i32, i32
  }
  func.func @transform_1(%arg0: i32) -> (i32, i32) {
    %c0_i32 = arith.constant 0 : i32
    %c0_i32_0 = arith.constant 0 : i32
    %c0_i32_1 = arith.constant 0 : i32
    return %c0_i32, %c0_i32_0 : i32, i32
  }
  func.func @transform_2(%arg0: i32) -> (i32, i32) {
    %c0_i32 = arith.constant 0 : i32
    %c0_i32_0 = arith.constant 0 : i32
    %c0_i32_1 = arith.constant 0 : i32
    return %c0_i32, %c0_i32_0 : i32, i32
  }
  func.func @transform_3(%arg0: i32) -> (i32, i32) {
    %c0_i32 = arith.constant 0 : i32
    %c0_i32_0 = arith.constant 0 : i32
    %c0_i32_1 = arith.constant 0 : i32
    return %c0_i32, %c0_i32_0 : i32, i32
  }
}

module attributes {stable_mosaic.version = 11 : i64} {
  func.func @_matmul_bias_kernel(%arg0: i32, %arg1: memref<18x288xf32, #tpu.memory_space<vmem>>, %arg2: memref<288x16xbf16, #tpu.memory_space<vmem>>, %arg3: memref<1x16xf32, #tpu.memory_space<vmem>>, %arg4: memref<18x16xf32, #tpu.memory_space<vmem>>) attributes {dimension_semantics = [#tpu.dimension_semantics<arbitrary>], iteration_bounds = array<i64: 1>, scalar_prefetch = 0 : i64, scratch_operands = 0 : i64, tpu.core_type = #tpu.core_type<tc>, window_params = [{pipeline_mode = #tpu.pipeline_mode<synchronous>, transform_indices = @transform_0, window_bounds = array<i64: 18, 288>}, {pipeline_mode = #tpu.pipeline_mode<synchronous>, transform_indices = @transform_1, window_bounds = array<i64: 288, 16>}, {pipeline_mode = #tpu.pipeline_mode<synchronous>, transform_indices = @transform_2, window_bounds = array<i64: 1, 16>}, {pipeline_mode = #tpu.pipeline_mode<synchronous>, transform_indices = @transform_3, window_bounds = array<i64: 18, 16>}]} {
    %c0 = arith.constant 0 : index
    %c0_0 = arith.constant 0 : index
    %0 = vector.load %arg1[%c0, %c0_0] : memref<18x288xf32, #tpu.memory_space<vmem>>, vector<18x288xf32>
    %1 = arith.truncf %0 : vector<18x288xf32> to vector<18x288xbf16>
    %c0_1 = arith.constant 0 : index
    %c0_2 = arith.constant 0 : index
    %2 = vector.load %arg2[%c0_1, %c0_2] : memref<288x16xbf16, #tpu.memory_space<vmem>>, vector<288x16xbf16>
    %cst = arith.constant dense<0.000000e+00> : vector<18x16xf32>
    %3 = tpu.matmul %1, %2, %cst {dimension_numbers = #tpu.dot_dimension_numbers<[1], [0], [0], [1], [0, 0, 1, 1], [], []>} : vector<18x288xbf16>, vector<288x16xbf16>, vector<18x16xf32> -> vector<18x16xf32>
    %c0_3 = arith.constant 0 : index
    %c0_4 = arith.constant 0 : index
    %4 = vector.load %arg3[%c0_3, %c0_4] : memref<1x16xf32, #tpu.memory_space<vmem>>, vector<1x16xf32>
    %5 = vector.broadcast %4 : vector<1x16xf32> to vector<18x16xf32>
    %6 = arith.addf %3, %5 : vector<18x16xf32>
    %c0_5 = arith.constant 0 : index
    %c0_6 = arith.constant 0 : index
    %7 = vector.load %arg4[%c0_5, %c0_6] : memref<18x16xf32, #tpu.memory_space<vmem>>, vector<18x16xf32>
    tpu.vector_store %arg4[%c0_5, %c0_6], %6 {strides = array<i32>} : memref<18x16xf32, #tpu.memory_space<vmem>>, vector<18x16xf32>,
    return
  }
  func.func @transform_0(%arg0: i32) -> (i32, i32) {
    %c0_i32 = arith.constant 0 : i32
    %c0_i32_0 = arith.constant 0 : i32
    %c0_i32_1 = arith.constant 0 : i32
    return %c0_i32, %c0_i32_0 : i32, i32
  }
  func.func @transform_1(%arg0: i32) -> (i32, i32) {
    %c0_i32 = arith.constant 0 : i32
    %c0_i32_0 = arith.constant 0 : i32
    %c0_i32_1 = arith.constant 0 : i32
    return %c0_i32, %c0_i32_0 : i32, i32
  }
  func.func @transform_2(%arg0: i32) -> (i32, i32) {
    %c0_i32 = arith.constant 0 : i32
    %c0_i32_0 = arith.constant 0 : i32
    %c0_i32_1 = arith.constant 0 : i32
    return %c0_i32, %c0_i32_0 : i32, i32
  }
  func.func @transform_3(%arg0: i32) -> (i32, i32) {
    %c0_i32 = arith.constant 0 : i32
    %c0_i32_0 = arith.constant 0 : i32
    %c0_i32_1 = arith.constant 0 : i32
    return %c0_i32, %c0_i32_0 : i32, i32
  }
}

module attributes {stable_mosaic.version = 11 : i64} {
  func.func @_encoder_stack_kernel(%arg0: i32, %arg1: memref<1x9x16xf32, #tpu.memory_space<vmem>>, %arg2: memref<9x16x32xbf16, #tpu.memory_space<vmem>>, %arg3: memref<9x32xf32, #tpu.memory_space<vmem>>, %arg4: memref<9x32xf32, #tpu.memory_space<vmem>>, %arg5: memref<32x96xbf16, #tpu.memory_space<vmem>>, %arg6: memref<1x96xf32, #tpu.memory_space<vmem>>, %arg7: memref<32x32xbf16, #tpu.memory_space<vmem>>, %arg8: memref<1x32xf32, #tpu.memory_space<vmem>>, %arg9: memref<1x32xf32, #tpu.memory_space<vmem>>, %arg10: memref<1x32xf32, #tpu.memory_space<vmem>>, %arg11: memref<32x64xbf16, #tpu.memory_space<vmem>>, %arg12: memref<1x64xf32, #tpu.memory_space<vmem>>, %arg13: memref<64x32xbf16, #tpu.memory_space<vmem>>, %arg14: memref<1x32xf32, #tpu.memory_space<vmem>>, %arg15: memref<1x32xf32, #tpu.memory_space<vmem>>, %arg16: memref<1x32xf32, #tpu.memory_space<vmem>>, %arg17: memref<32x96xbf16, #tpu.memory_space<vmem>>, %arg18: memref<1x96xf32, #tpu.memory_space<vmem>>, %arg19: memref<32x32xbf16, #tpu.memory_space<vmem>>, %arg20: memref<1x32xf32, #tpu.memory_space<vmem>>, %arg21: memref<1x32xf32, #tpu.memory_space<vmem>>, %arg22: memref<1x32xf32, #tpu.memory_space<vmem>>, %arg23: memref<32x64xbf16, #tpu.memory_space<vmem>>, %arg24: memref<1x64xf32, #tpu.memory_space<vmem>>, %arg25: memref<64x32xbf16, #tpu.memory_space<vmem>>, %arg26: memref<1x32xf32, #tpu.memory_space<vmem>>, %arg27: memref<1x32xf32, #tpu.memory_space<vmem>>, %arg28: memref<1x32xf32, #tpu.memory_space<vmem>>, %arg29: memref<32x2xf32, #tpu.memory_space<vmem>>, %arg30: memref<1x2xf32, #tpu.memory_space<vmem>>, %arg31: memref<9x2x2xf32, #tpu.memory_space<vmem>>, %arg32: memref<1x2xf32, #tpu.memory_space<vmem>>, %arg33: memref<1x1x2xf32, #tpu.memory_space<vmem>>) attributes {dimension_semantics = [#tpu.dimension_semantics<parallel>], iteration_bounds = array<i64: 2>, scalar_prefetch = 0 : i64, scratch_operands = 0 : i64, tpu.core_type = #tpu.core_type<tc>, window_params = [{transform_indices = @transform_0, window_bounds = array<i64: 1, 9, 16>}, {pipeline_mode = #tpu.pipeline_mode<synchronous>, transform_indices = @transform_1, window_bounds = array<i64: 9, 16, 32>}, {pipeline_mode = #tpu.pipeline_mode<synchronous>, transform_indices = @transform_2, window_bounds = array<i64: 9, 32>}, {pipeline_mode = #tpu.pipeline_mode<synchronous>, transform_indices = @transform_3, window_bounds = array<i64: 9, 32>}, {pipeline_mode = #tpu.pipeline_mode<synchronous>, transform_indices = @transform_4, window_bounds = array<i64: 32, 96>}, {pipeline_mode = #tpu.pipeline_mode<synchronous>, transform_indices = @transform_5, window_bounds = array<i64: 1, 96>}, {pipeline_mode = #tpu.pipeline_mode<synchronous>, transform_indices = @transform_6, window_bounds = array<i64: 32, 32>}, {pipeline_mode = #tpu.pipeline_mode<synchronous>, transform_indices = @transform_7, window_bounds = array<i64: 1, 32>}, {pipeline_mode = #tpu.pipeline_mode<synchronous>, transform_indices = @transform_8, window_bounds = array<i64: 1, 32>}, {pipeline_mode = #tpu.pipeline_mode<synchronous>, transform_indices = @transform_9, window_bounds = array<i64: 1, 32>}, {pipeline_mode = #tpu.pipeline_mode<synchronous>, transform_indices = @transform_10, window_bounds = array<i64: 32, 64>}, {pipeline_mode = #tpu.pipeline_mode<synchronous>, transform_indices = @transform_11, window_bounds = array<i64: 1, 64>}, {pipeline_mode = #tpu.pipeline_mode<synchronous>, transform_indices = @transform_12, window_bounds = array<i64: 64, 32>}, {pipeline_mode = #tpu.pipeline_mode<synchronous>, transform_indices = @transform_13, window_bounds = array<i64: 1, 32>}, {pipeline_mode = #tpu.pipeline_mode<synchronous>, transform_indices = @transform_14, window_bounds = array<i64: 1, 32>}, {pipeline_mode = #tpu.pipeline_mode<synchronous>, transform_indices = @transform_15, window_bounds = array<i64: 1, 32>}, {pipeline_mode = #tpu.pipeline_mode<synchronous>, transform_indices = @transform_16, window_bounds = array<i64: 32, 96>}, {pipeline_mode = #tpu.pipeline_mode<synchronous>, transform_indices = @transform_17, window_bounds = array<i64: 1, 96>}, {pipeline_mode = #tpu.pipeline_mode<synchronous>, transform_indices = @transform_18, window_bounds = array<i64: 32, 32>}, {pipeline_mode = #tpu.pipeline_mode<synchronous>, transform_indices = @transform_19, window_bounds = array<i64: 1, 32>}, {pipeline_mode = #tpu.pipeline_mode<synchronous>, transform_indices = @transform_20, window_bounds = array<i64: 1, 32>}, {pipeline_mode = #tpu.pipeline_mode<synchronous>, transform_indices = @transform_21, window_bounds = array<i64: 1, 32>}, {pipeline_mode = #tpu.pipeline_mode<synchronous>, transform_indices = @transform_22, window_bounds = array<i64: 32, 64>}, {pipeline_mode = #tpu.pipeline_mode<synchronous>, transform_indices = @transform_23, window_bounds = array<i64: 1, 64>}, {pipeline_mode = #tpu.pipeline_mode<synchronous>, transform_indices = @transform_24, window_bounds = array<i64: 64, 32>}, {pipeline_mode = #tpu.pipeline_mode<synchronous>, transform_indices = @transform_25, window_bounds = array<i64: 1, 32>}, {pipeline_mode = #tpu.pipeline_mode<synchronous>, transform_indices = @transform_26, window_bounds = array<i64: 1, 32>}, {pipeline_mode = #tpu.pipeline_mode<synchronous>, transform_indices = @transform_27, window_bounds = array<i64: 1, 32>}, {pipeline_mode = #tpu.pipeline_mode<synchronous>, transform_indices = @transform_28, window_bounds = array<i64: 32, 2>}, {pipeline_mode = #tpu.pipeline_mode<synchronous>, transform_indices = @transform_29, window_bounds = array<i64: 1, 2>}, {pipeline_mode = #tpu.pipeline_mode<synchronous>, transform_indices = @transform_30, window_bounds = array<i64: 9, 2, 2>}, {pipeline_mode = #tpu.pipeline_mode<synchronous>, transform_indices = @transform_31, window_bounds = array<i64: 1, 2>}, {transform_indices = @transform_32, window_bounds = array<i64: 1, 1, 2>}]} {
    %c0 = arith.constant 0 : index
    %c0_0 = arith.constant 0 : index
    %c0_1 = arith.constant 0 : index
    %0 = vector.load %arg1[%c0, %c0_0, %c0_1] : memref<1x9x16xf32, #tpu.memory_space<vmem>>, vector<1x9x16xf32>
    %1 = vector.shape_cast %0 : vector<1x9x16xf32> to vector<9x16xf32>
    %2 = vector.shape_cast %1 : vector<9x16xf32> to vector<9x16x1xf32>
    %c0_2 = arith.constant 0 : index
    %c0_3 = arith.constant 0 : index
    %c0_4 = arith.constant 0 : index
    %3 = vector.load %arg2[%c0_2, %c0_3, %c0_4] : memref<9x16x32xbf16, #tpu.memory_space<vmem>>, vector<9x16x32xbf16>
    %4 = arith.extf %3 : vector<9x16x32xbf16> to vector<9x16x32xf32>
    %5 = vector.broadcast %2 : vector<9x16x1xf32> to vector<9x16x32xf32>
    %6 = arith.mulf %5, %4 : vector<9x16x32xf32>
    %cst = arith.constant dense<0.000000e+00> : vector<9x32xf32>
    %7 = vector.multi_reduction <add>, %6, %cst [1] : vector<9x16x32xf32> to vector<9x32xf32>
    %c0_5 = arith.constant 0 : index
    %c0_6 = arith.constant 0 : index
    %8 = vector.load %arg3[%c0_5, %c0_6] : memref<9x32xf32, #tpu.memory_space<vmem>>, vector<9x32xf32>
    %9 = arith.addf %7, %8 : vector<9x32xf32>
    %c0_7 = arith.constant 0 : index
    %c0_8 = arith.constant 0 : index
    %10 = vector.load %arg4[%c0_7, %c0_8] : memref<9x32xf32, #tpu.memory_space<vmem>>, vector<9x32xf32>
    %11 = arith.addf %9, %10 : vector<9x32xf32>
    %12 = arith.truncf %11 : vector<9x32xf32> to vector<9x32xbf16>
    %c0_9 = arith.constant 0 : index
    %c0_10 = arith.constant 0 : index
    %13 = vector.load %arg5[%c0_9, %c0_10] : memref<32x96xbf16, #tpu.memory_space<vmem>>, vector<32x96xbf16>
    %cst_11 = arith.constant dense<0.000000e+00> : vector<9x96xf32>
    %14 = tpu.matmul %12, %13, %cst_11 {dimension_numbers = #tpu.dot_dimension_numbers<[1], [0], [0], [1], [0, 0, 1, 1], [], []>} : vector<9x32xbf16>, vector<32x96xbf16>, vector<9x96xf32> -> vector<9x96xf32>
    %c0_12 = arith.constant 0 : index
    %c0_13 = arith.constant 0 : index
    %15 = vector.load %arg6[%c0_12, %c0_13] : memref<1x96xf32, #tpu.memory_space<vmem>>, vector<1x96xf32>
    %16 = vector.broadcast %15 : vector<1x96xf32> to vector<9x96xf32>
    %17 = arith.addf %14, %16 : vector<9x96xf32>
    %18 = vector.extract_strided_slice %17 {offsets = [0, 0], sizes = [9, 32], strides = [1, 1]} : vector<9x96xf32> to vector<9x32xf32>
    %19 = vector.extract_strided_slice %17 {offsets = [0, 32], sizes = [9, 32], strides = [1, 1]} : vector<9x96xf32> to vector<9x32xf32>
    %20 = vector.extract_strided_slice %17 {offsets = [0, 64], sizes = [9, 32], strides = [1, 1]} : vector<9x96xf32> to vector<9x32xf32>
    %c0_14 = arith.constant 0 : index
    %c0_15 = arith.constant 0 : index
    %21 = vector.load %arg7[%c0_14, %c0_15] : memref<32x32xbf16, #tpu.memory_space<vmem>>, vector<32x32xbf16>
    %cst_16 = arith.constant 0.000000e+00 : f32
    %22 = vector.broadcast %cst_16 : f32 to vector<9x32xf32>
    %23 = vector.extract_strided_slice %18 {offsets = [0, 0], sizes = [9, 8], strides = [1, 1]} : vector<9x32xf32> to vector<9x8xf32>
    %24 = vector.extract_strided_slice %19 {offsets = [0, 0], sizes = [9, 8], strides = [1, 1]} : vector<9x32xf32> to vector<9x8xf32>
    %25 = vector.extract_strided_slice %20 {offsets = [0, 0], sizes = [9, 8], strides = [1, 1]} : vector<9x32xf32> to vector<9x8xf32>
    %26 = tpu.transpose %24, [1, 0] : vector<9x8xf32> -> vector<8x9xf32>
    %cst_17 = arith.constant dense<0.000000e+00> : vector<9x9xf32>
    %27 = tpu.matmul %23, %26, %cst_17 {dimension_numbers = #tpu.dot_dimension_numbers<[1], [0], [0], [1], [0, 0, 1, 1], [], []>} : vector<9x8xf32>, vector<8x9xf32>, vector<9x9xf32> -> vector<9x9xf32>
    %cst_18 = arith.constant 0.353553385 : f32
    %28 = vector.broadcast %cst_18 : f32 to vector<9x9xf32>
    %29 = arith.mulf %27, %28 : vector<9x9xf32>
    %cst_19 = arith.constant dense<0xFF800000> : vector<9xf32>
    %30 = vector.multi_reduction <maximumf>, %29, %cst_19 [1] : vector<9x9xf32> to vector<9xf32>
    %31 = vector.shape_cast %30 : vector<9xf32> to vector<9x1xf32>
    %32 = vector.broadcast %31 : vector<9x1xf32> to vector<9x9xf32>
    %33 = arith.subf %29, %32 : vector<9x9xf32>
    %34 = math.exp %33 : vector<9x9xf32>
    %cst_20 = arith.constant dense<0.000000e+00> : vector<9xf32>
    %35 = vector.multi_reduction <add>, %34, %cst_20 [1] : vector<9x9xf32> to vector<9xf32>
    %36 = vector.shape_cast %35 : vector<9xf32> to vector<9x1xf32>
    %37 = vector.broadcast %36 : vector<9x1xf32> to vector<9x9xf32>
    %38 = arith.divf %34, %37 : vector<9x9xf32>
    %39 = arith.truncf %38 : vector<9x9xf32> to vector<9x9xbf16>
    %40 = arith.truncf %25 : vector<9x8xf32> to vector<9x8xbf16>
    %cst_21 = arith.constant dense<0.000000e+00> : vector<9x8xf32>
    %41 = tpu.matmul %39, %40, %cst_21 {dimension_numbers = #tpu.dot_dimension_numbers<[1], [0], [0], [1], [0, 0, 1, 1], [], []>} : vector<9x9xbf16>, vector<9x8xbf16>, vector<9x8xf32> -> vector<9x8xf32>
    %42 = arith.truncf %41 : vector<9x8xf32> to vector<9x8xbf16>
    %43 = vector.extract_strided_slice %21 {offsets = [0, 0], sizes = [8, 32], strides = [1, 1]} : vector<32x32xbf16> to vector<8x32xbf16>
    %cst_22 = arith.constant dense<0.000000e+00> : vector<9x32xf32>
    %44 = tpu.matmul %42, %43, %cst_22 {dimension_numbers = #tpu.dot_dimension_numbers<[1], [0], [0], [1], [0, 0, 1, 1], [], []>} : vector<9x8xbf16>, vector<8x32xbf16>, vector<9x32xf32> -> vector<9x32xf32>
    %45 = arith.addf %22, %44 : vector<9x32xf32>
    %46 = vector.extract_strided_slice %18 {offsets = [0, 8], sizes = [9, 8], strides = [1, 1]} : vector<9x32xf32> to vector<9x8xf32>
    %47 = vector.extract_strided_slice %19 {offsets = [0, 8], sizes = [9, 8], strides = [1, 1]} : vector<9x32xf32> to vector<9x8xf32>
    %48 = vector.extract_strided_slice %20 {offsets = [0, 8], sizes = [9, 8], strides = [1, 1]} : vector<9x32xf32> to vector<9x8xf32>
    %49 = tpu.transpose %47, [1, 0] : vector<9x8xf32> -> vector<8x9xf32>
    %cst_23 = arith.constant dense<0.000000e+00> : vector<9x9xf32>
    %50 = tpu.matmul %46, %49, %cst_23 {dimension_numbers = #tpu.dot_dimension_numbers<[1], [0], [0], [1], [0, 0, 1, 1], [], []>} : vector<9x8xf32>, vector<8x9xf32>, vector<9x9xf32> -> vector<9x9xf32>
    %cst_24 = arith.constant 0.353553385 : f32
    %51 = vector.broadcast %cst_24 : f32 to vector<9x9xf32>
    %52 = arith.mulf %50, %51 : vector<9x9xf32>
    %cst_25 = arith.constant dense<0xFF800000> : vector<9xf32>
    %53 = vector.multi_reduction <maximumf>, %52, %cst_25 [1] : vector<9x9xf32> to vector<9xf32>
    %54 = vector.shape_cast %53 : vector<9xf32> to vector<9x1xf32>
    %55 = vector.broadcast %54 : vector<9x1xf32> to vector<9x9xf32>
    %56 = arith.subf %52, %55 : vector<9x9xf32>
    %57 = math.exp %56 : vector<9x9xf32>
    %cst_26 = arith.constant dense<0.000000e+00> : vector<9xf32>
    %58 = vector.multi_reduction <add>, %57, %cst_26 [1] : vector<9x9xf32> to vector<9xf32>
    %59 = vector.shape_cast %58 : vector<9xf32> to vector<9x1xf32>
    %60 = vector.broadcast %59 : vector<9x1xf32> to vector<9x9xf32>
    %61 = arith.divf %57, %60 : vector<9x9xf32>
    %62 = arith.truncf %61 : vector<9x9xf32> to vector<9x9xbf16>
    %63 = arith.truncf %48 : vector<9x8xf32> to vector<9x8xbf16>
    %cst_27 = arith.constant dense<0.000000e+00> : vector<9x8xf32>
    %64 = tpu.matmul %62, %63, %cst_27 {dimension_numbers = #tpu.dot_dimension_numbers<[1], [0], [0], [1], [0, 0, 1, 1], [], []>} : vector<9x9xbf16>, vector<9x8xbf16>, vector<9x8xf32> -> vector<9x8xf32>
    %65 = arith.truncf %64 : vector<9x8xf32> to vector<9x8xbf16>
    %66 = vector.extract_strided_slice %21 {offsets = [8, 0], sizes = [8, 32], strides = [1, 1]} : vector<32x32xbf16> to vector<8x32xbf16>
    %cst_28 = arith.constant dense<0.000000e+00> : vector<9x32xf32>
    %67 = tpu.matmul %65, %66, %cst_28 {dimension_numbers = #tpu.dot_dimension_numbers<[1], [0], [0], [1], [0, 0, 1, 1], [], []>} : vector<9x8xbf16>, vector<8x32xbf16>, vector<9x32xf32> -> vector<9x32xf32>
    %68 = arith.addf %45, %67 : vector<9x32xf32>
    %69 = vector.extract_strided_slice %18 {offsets = [0, 16], sizes = [9, 8], strides = [1, 1]} : vector<9x32xf32> to vector<9x8xf32>
    %70 = vector.extract_strided_slice %19 {offsets = [0, 16], sizes = [9, 8], strides = [1, 1]} : vector<9x32xf32> to vector<9x8xf32>
    %71 = vector.extract_strided_slice %20 {offsets = [0, 16], sizes = [9, 8], strides = [1, 1]} : vector<9x32xf32> to vector<9x8xf32>
    %72 = tpu.transpose %70, [1, 0] : vector<9x8xf32> -> vector<8x9xf32>
    %cst_29 = arith.constant dense<0.000000e+00> : vector<9x9xf32>
    %73 = tpu.matmul %69, %72, %cst_29 {dimension_numbers = #tpu.dot_dimension_numbers<[1], [0], [0], [1], [0, 0, 1, 1], [], []>} : vector<9x8xf32>, vector<8x9xf32>, vector<9x9xf32> -> vector<9x9xf32>
    %cst_30 = arith.constant 0.353553385 : f32
    %74 = vector.broadcast %cst_30 : f32 to vector<9x9xf32>
    %75 = arith.mulf %73, %74 : vector<9x9xf32>
    %cst_31 = arith.constant dense<0xFF800000> : vector<9xf32>
    %76 = vector.multi_reduction <maximumf>, %75, %cst_31 [1] : vector<9x9xf32> to vector<9xf32>
    %77 = vector.shape_cast %76 : vector<9xf32> to vector<9x1xf32>
    %78 = vector.broadcast %77 : vector<9x1xf32> to vector<9x9xf32>
    %79 = arith.subf %75, %78 : vector<9x9xf32>
    %80 = math.exp %79 : vector<9x9xf32>
    %cst_32 = arith.constant dense<0.000000e+00> : vector<9xf32>
    %81 = vector.multi_reduction <add>, %80, %cst_32 [1] : vector<9x9xf32> to vector<9xf32>
    %82 = vector.shape_cast %81 : vector<9xf32> to vector<9x1xf32>
    %83 = vector.broadcast %82 : vector<9x1xf32> to vector<9x9xf32>
    %84 = arith.divf %80, %83 : vector<9x9xf32>
    %85 = arith.truncf %84 : vector<9x9xf32> to vector<9x9xbf16>
    %86 = arith.truncf %71 : vector<9x8xf32> to vector<9x8xbf16>
    %cst_33 = arith.constant dense<0.000000e+00> : vector<9x8xf32>
    %87 = tpu.matmul %85, %86, %cst_33 {dimension_numbers = #tpu.dot_dimension_numbers<[1], [0], [0], [1], [0, 0, 1, 1], [], []>} : vector<9x9xbf16>, vector<9x8xbf16>, vector<9x8xf32> -> vector<9x8xf32>
    %88 = arith.truncf %87 : vector<9x8xf32> to vector<9x8xbf16>
    %89 = vector.extract_strided_slice %21 {offsets = [16, 0], sizes = [8, 32], strides = [1, 1]} : vector<32x32xbf16> to vector<8x32xbf16>
    %cst_34 = arith.constant dense<0.000000e+00> : vector<9x32xf32>
    %90 = tpu.matmul %88, %89, %cst_34 {dimension_numbers = #tpu.dot_dimension_numbers<[1], [0], [0], [1], [0, 0, 1, 1], [], []>} : vector<9x8xbf16>, vector<8x32xbf16>, vector<9x32xf32> -> vector<9x32xf32>
    %91 = arith.addf %68, %90 : vector<9x32xf32>
    %92 = vector.extract_strided_slice %18 {offsets = [0, 24], sizes = [9, 8], strides = [1, 1]} : vector<9x32xf32> to vector<9x8xf32>
    %93 = vector.extract_strided_slice %19 {offsets = [0, 24], sizes = [9, 8], strides = [1, 1]} : vector<9x32xf32> to vector<9x8xf32>
    %94 = vector.extract_strided_slice %20 {offsets = [0, 24], sizes = [9, 8], strides = [1, 1]} : vector<9x32xf32> to vector<9x8xf32>
    %95 = tpu.transpose %93, [1, 0] : vector<9x8xf32> -> vector<8x9xf32>
    %cst_35 = arith.constant dense<0.000000e+00> : vector<9x9xf32>
    %96 = tpu.matmul %92, %95, %cst_35 {dimension_numbers = #tpu.dot_dimension_numbers<[1], [0], [0], [1], [0, 0, 1, 1], [], []>} : vector<9x8xf32>, vector<8x9xf32>, vector<9x9xf32> -> vector<9x9xf32>
    %cst_36 = arith.constant 0.353553385 : f32
    %97 = vector.broadcast %cst_36 : f32 to vector<9x9xf32>
    %98 = arith.mulf %96, %97 : vector<9x9xf32>
    %cst_37 = arith.constant dense<0xFF800000> : vector<9xf32>
    %99 = vector.multi_reduction <maximumf>, %98, %cst_37 [1] : vector<9x9xf32> to vector<9xf32>
    %100 = vector.shape_cast %99 : vector<9xf32> to vector<9x1xf32>
    %101 = vector.broadcast %100 : vector<9x1xf32> to vector<9x9xf32>
    %102 = arith.subf %98, %101 : vector<9x9xf32>
    %103 = math.exp %102 : vector<9x9xf32>
    %cst_38 = arith.constant dense<0.000000e+00> : vector<9xf32>
    %104 = vector.multi_reduction <add>, %103, %cst_38 [1] : vector<9x9xf32> to vector<9xf32>
    %105 = vector.shape_cast %104 : vector<9xf32> to vector<9x1xf32>
    %106 = vector.broadcast %105 : vector<9x1xf32> to vector<9x9xf32>
    %107 = arith.divf %103, %106 : vector<9x9xf32>
    %108 = arith.truncf %107 : vector<9x9xf32> to vector<9x9xbf16>
    %109 = arith.truncf %94 : vector<9x8xf32> to vector<9x8xbf16>
    %cst_39 = arith.constant dense<0.000000e+00> : vector<9x8xf32>
    %110 = tpu.matmul %108, %109, %cst_39 {dimension_numbers = #tpu.dot_dimension_numbers<[1], [0], [0], [1], [0, 0, 1, 1], [], []>} : vector<9x9xbf16>, vector<9x8xbf16>, vector<9x8xf32> -> vector<9x8xf32>
    %111 = arith.truncf %110 : vector<9x8xf32> to vector<9x8xbf16>
    %112 = vector.extract_strided_slice %21 {offsets = [24, 0], sizes = [8, 32], strides = [1, 1]} : vector<32x32xbf16> to vector<8x32xbf16>
    %cst_40 = arith.constant dense<0.000000e+00> : vector<9x32xf32>
    %113 = tpu.matmul %111, %112, %cst_40 {dimension_numbers = #tpu.dot_dimension_numbers<[1], [0], [0], [1], [0, 0, 1, 1], [], []>} : vector<9x8xbf16>, vector<8x32xbf16>, vector<9x32xf32> -> vector<9x32xf32>
    %114 = arith.addf %91, %113 : vector<9x32xf32>
    %c0_41 = arith.constant 0 : index
    %c0_42 = arith.constant 0 : index
    %115 = vector.load %arg8[%c0_41, %c0_42] : memref<1x32xf32, #tpu.memory_space<vmem>>, vector<1x32xf32>
    %116 = vector.broadcast %115 : vector<1x32xf32> to vector<9x32xf32>
    %117 = arith.addf %114, %116 : vector<9x32xf32>
    %118 = arith.addf %11, %117 : vector<9x32xf32>
    %c0_43 = arith.constant 0 : index
    %c0_44 = arith.constant 0 : index
    %119 = vector.load %arg9[%c0_43, %c0_44] : memref<1x32xf32, #tpu.memory_space<vmem>>, vector<1x32xf32>
    %c0_45 = arith.constant 0 : index
    %c0_46 = arith.constant 0 : index
    %120 = vector.load %arg10[%c0_45, %c0_46] : memref<1x32xf32, #tpu.memory_space<vmem>>, vector<1x32xf32>
    %cst_47 = arith.constant dense<0.000000e+00> : vector<9xf32>
    %121 = vector.multi_reduction <add>, %118, %cst_47 [1] : vector<9x32xf32> to vector<9xf32>
    %122 = vector.shape_cast %121 : vector<9xf32> to vector<9x1xf32>
    %cst_48 = arith.constant 3.200000e+01 : f32
    %123 = vector.broadcast %cst_48 : f32 to vector<9x1xf32>
    %124 = arith.divf %122, %123 : vector<9x1xf32>
    %125 = vector.broadcast %124 : vector<9x1xf32> to vector<9x32xf32>
    %126 = arith.subf %118, %125 : vector<9x32xf32>
    %127 = arith.mulf %126, %126 : vector<9x32xf32>
    %cst_49 = arith.constant dense<0.000000e+00> : vector<9xf32>
    %128 = vector.multi_reduction <add>, %127, %cst_49 [1] : vector<9x32xf32> to vector<9xf32>
    %129 = vector.shape_cast %128 : vector<9xf32> to vector<9x1xf32>
    %cst_50 = arith.constant 3.200000e+01 : f32
    %130 = vector.broadcast %cst_50 : f32 to vector<9x1xf32>
    %131 = arith.divf %129, %130 : vector<9x1xf32>
    %132 = vector.broadcast %124 : vector<9x1xf32> to vector<9x32xf32>
    %133 = arith.subf %118, %132 : vector<9x32xf32>
    %cst_51 = arith.constant 9.99999974E-6 : f32
    %134 = vector.broadcast %cst_51 : f32 to vector<9x1xf32>
    %135 = arith.addf %131, %134 : vector<9x1xf32>
    %136 = math.rsqrt %135 : vector<9x1xf32>
    %137 = vector.broadcast %136 : vector<9x1xf32> to vector<9x32xf32>
    %138 = arith.mulf %133, %137 : vector<9x32xf32>
    %139 = vector.broadcast %119 : vector<1x32xf32> to vector<9x32xf32>
    %140 = arith.mulf %138, %139 : vector<9x32xf32>
    %141 = vector.broadcast %120 : vector<1x32xf32> to vector<9x32xf32>
    %142 = arith.addf %140, %141 : vector<9x32xf32>
    %143 = arith.truncf %142 : vector<9x32xf32> to vector<9x32xbf16>
    %c0_52 = arith.constant 0 : index
    %c0_53 = arith.constant 0 : index
    %144 = vector.load %arg11[%c0_52, %c0_53] : memref<32x64xbf16, #tpu.memory_space<vmem>>, vector<32x64xbf16>
    %cst_54 = arith.constant dense<0.000000e+00> : vector<9x64xf32>
    %145 = tpu.matmul %143, %144, %cst_54 {dimension_numbers = #tpu.dot_dimension_numbers<[1], [0], [0], [1], [0, 0, 1, 1], [], []>} : vector<9x32xbf16>, vector<32x64xbf16>, vector<9x64xf32> -> vector<9x64xf32>
    %c0_55 = arith.constant 0 : index
    %c0_56 = arith.constant 0 : index
    %146 = vector.load %arg12[%c0_55, %c0_56] : memref<1x64xf32, #tpu.memory_space<vmem>>, vector<1x64xf32>
    %147 = vector.broadcast %146 : vector<1x64xf32> to vector<9x64xf32>
    %148 = arith.addf %145, %147 : vector<9x64xf32>
    %cst_57 = arith.constant 0.000000e+00 : f32
    %149 = vector.broadcast %cst_57 : f32 to vector<9x64xf32>
    %150 = arith.maximumf %148, %149 : vector<9x64xf32>
    %151 = arith.truncf %150 : vector<9x64xf32> to vector<9x64xbf16>
    %c0_58 = arith.constant 0 : index
    %c0_59 = arith.constant 0 : index
    %152 = vector.load %arg13[%c0_58, %c0_59] : memref<64x32xbf16, #tpu.memory_space<vmem>>, vector<64x32xbf16>
    %cst_60 = arith.constant dense<0.000000e+00> : vector<9x32xf32>
    %153 = tpu.matmul %151, %152, %cst_60 {dimension_numbers = #tpu.dot_dimension_numbers<[1], [0], [0], [1], [0, 0, 1, 1], [], []>} : vector<9x64xbf16>, vector<64x32xbf16>, vector<9x32xf32> -> vector<9x32xf32>
    %c0_61 = arith.constant 0 : index
    %c0_62 = arith.constant 0 : index
    %154 = vector.load %arg14[%c0_61, %c0_62] : memref<1x32xf32, #tpu.memory_space<vmem>>, vector<1x32xf32>
    %155 = vector.broadcast %154 : vector<1x32xf32> to vector<9x32xf32>
    %156 = arith.addf %153, %155 : vector<9x32xf32>
    %157 = arith.addf %142, %156 : vector<9x32xf32>
    %c0_63 = arith.constant 0 : index
    %c0_64 = arith.constant 0 : index
    %158 = vector.load %arg15[%c0_63, %c0_64] : memref<1x32xf32, #tpu.memory_space<vmem>>, vector<1x32xf32>
    %c0_65 = arith.constant 0 : index
    %c0_66 = arith.constant 0 : index
    %159 = vector.load %arg16[%c0_65, %c0_66] : memref<1x32xf32, #tpu.memory_space<vmem>>, vector<1x32xf32>
    %cst_67 = arith.constant dense<0.000000e+00> : vector<9xf32>
    %160 = vector.multi_reduction <add>, %157, %cst_67 [1] : vector<9x32xf32> to vector<9xf32>
    %161 = vector.shape_cast %160 : vector<9xf32> to vector<9x1xf32>
    %cst_68 = arith.constant 3.200000e+01 : f32
    %162 = vector.broadcast %cst_68 : f32 to vector<9x1xf32>
    %163 = arith.divf %161, %162 : vector<9x1xf32>
    %164 = vector.broadcast %163 : vector<9x1xf32> to vector<9x32xf32>
    %165 = arith.subf %157, %164 : vector<9x32xf32>
    %166 = arith.mulf %165, %165 : vector<9x32xf32>
    %cst_69 = arith.constant dense<0.000000e+00> : vector<9xf32>
    %167 = vector.multi_reduction <add>, %166, %cst_69 [1] : vector<9x32xf32> to vector<9xf32>
    %168 = vector.shape_cast %167 : vector<9xf32> to vector<9x1xf32>
    %cst_70 = arith.constant 3.200000e+01 : f32
    %169 = vector.broadcast %cst_70 : f32 to vector<9x1xf32>
    %170 = arith.divf %168, %169 : vector<9x1xf32>
    %171 = vector.broadcast %163 : vector<9x1xf32> to vector<9x32xf32>
    %172 = arith.subf %157, %171 : vector<9x32xf32>
    %cst_71 = arith.constant 9.99999974E-6 : f32
    %173 = vector.broadcast %cst_71 : f32 to vector<9x1xf32>
    %174 = arith.addf %170, %173 : vector<9x1xf32>
    %175 = math.rsqrt %174 : vector<9x1xf32>
    %176 = vector.broadcast %175 : vector<9x1xf32> to vector<9x32xf32>
    %177 = arith.mulf %172, %176 : vector<9x32xf32>
    %178 = vector.broadcast %158 : vector<1x32xf32> to vector<9x32xf32>
    %179 = arith.mulf %177, %178 : vector<9x32xf32>
    %180 = vector.broadcast %159 : vector<1x32xf32> to vector<9x32xf32>
    %181 = arith.addf %179, %180 : vector<9x32xf32>
    %182 = arith.truncf %181 : vector<9x32xf32> to vector<9x32xbf16>
    %c0_72 = arith.constant 0 : index
    %c0_73 = arith.constant 0 : index
    %183 = vector.load %arg17[%c0_72, %c0_73] : memref<32x96xbf16, #tpu.memory_space<vmem>>, vector<32x96xbf16>
    %cst_74 = arith.constant dense<0.000000e+00> : vector<9x96xf32>
    %184 = tpu.matmul %182, %183, %cst_74 {dimension_numbers = #tpu.dot_dimension_numbers<[1], [0], [0], [1], [0, 0, 1, 1], [], []>} : vector<9x32xbf16>, vector<32x96xbf16>, vector<9x96xf32> -> vector<9x96xf32>
    %c0_75 = arith.constant 0 : index
    %c0_76 = arith.constant 0 : index
    %185 = vector.load %arg18[%c0_75, %c0_76] : memref<1x96xf32, #tpu.memory_space<vmem>>, vector<1x96xf32>
    %186 = vector.broadcast %185 : vector<1x96xf32> to vector<9x96xf32>
    %187 = arith.addf %184, %186 : vector<9x96xf32>
    %188 = vector.extract_strided_slice %187 {offsets = [0, 0], sizes = [9, 32], strides = [1, 1]} : vector<9x96xf32> to vector<9x32xf32>
    %189 = vector.extract_strided_slice %187 {offsets = [0, 32], sizes = [9, 32], strides = [1, 1]} : vector<9x96xf32> to vector<9x32xf32>
    %190 = vector.extract_strided_slice %187 {offsets = [0, 64], sizes = [9, 32], strides = [1, 1]} : vector<9x96xf32> to vector<9x32xf32>
    %c0_77 = arith.constant 0 : index
    %c0_78 = arith.constant 0 : index
    %191 = vector.load %arg19[%c0_77, %c0_78] : memref<32x32xbf16, #tpu.memory_space<vmem>>, vector<32x32xbf16>
    %cst_79 = arith.constant 0.000000e+00 : f32
    %192 = vector.broadcast %cst_79 : f32 to vector<9x32xf32>
    %193 = vector.extract_strided_slice %188 {offsets = [0, 0], sizes = [9, 8], strides = [1, 1]} : vector<9x32xf32> to vector<9x8xf32>
    %194 = vector.extract_strided_slice %189 {offsets = [0, 0], sizes = [9, 8], strides = [1, 1]} : vector<9x32xf32> to vector<9x8xf32>
    %195 = vector.extract_strided_slice %190 {offsets = [0, 0], sizes = [9, 8], strides = [1, 1]} : vector<9x32xf32> to vector<9x8xf32>
    %196 = tpu.transpose %194, [1, 0] : vector<9x8xf32> -> vector<8x9xf32>
    %cst_80 = arith.constant dense<0.000000e+00> : vector<9x9xf32>
    %197 = tpu.matmul %193, %196, %cst_80 {dimension_numbers = #tpu.dot_dimension_numbers<[1], [0], [0], [1], [0, 0, 1, 1], [], []>} : vector<9x8xf32>, vector<8x9xf32>, vector<9x9xf32> -> vector<9x9xf32>
    %cst_81 = arith.constant 0.353553385 : f32
    %198 = vector.broadcast %cst_81 : f32 to vector<9x9xf32>
    %199 = arith.mulf %197, %198 : vector<9x9xf32>
    %cst_82 = arith.constant dense<0xFF800000> : vector<9xf32>
    %200 = vector.multi_reduction <maximumf>, %199, %cst_82 [1] : vector<9x9xf32> to vector<9xf32>
    %201 = vector.shape_cast %200 : vector<9xf32> to vector<9x1xf32>
    %202 = vector.broadcast %201 : vector<9x1xf32> to vector<9x9xf32>
    %203 = arith.subf %199, %202 : vector<9x9xf32>
    %204 = math.exp %203 : vector<9x9xf32>
    %cst_83 = arith.constant dense<0.000000e+00> : vector<9xf32>
    %205 = vector.multi_reduction <add>, %204, %cst_83 [1] : vector<9x9xf32> to vector<9xf32>
    %206 = vector.shape_cast %205 : vector<9xf32> to vector<9x1xf32>
    %207 = vector.broadcast %206 : vector<9x1xf32> to vector<9x9xf32>
    %208 = arith.divf %204, %207 : vector<9x9xf32>
    %209 = arith.truncf %208 : vector<9x9xf32> to vector<9x9xbf16>
    %210 = arith.truncf %195 : vector<9x8xf32> to vector<9x8xbf16>
    %cst_84 = arith.constant dense<0.000000e+00> : vector<9x8xf32>
    %211 = tpu.matmul %209, %210, %cst_84 {dimension_numbers = #tpu.dot_dimension_numbers<[1], [0], [0], [1], [0, 0, 1, 1], [], []>} : vector<9x9xbf16>, vector<9x8xbf16>, vector<9x8xf32> -> vector<9x8xf32>
    %212 = arith.truncf %211 : vector<9x8xf32> to vector<9x8xbf16>
    %213 = vector.extract_strided_slice %191 {offsets = [0, 0], sizes = [8, 32], strides = [1, 1]} : vector<32x32xbf16> to vector<8x32xbf16>
    %cst_85 = arith.constant dense<0.000000e+00> : vector<9x32xf32>
    %214 = tpu.matmul %212, %213, %cst_85 {dimension_numbers = #tpu.dot_dimension_numbers<[1], [0], [0], [1], [0, 0, 1, 1], [], []>} : vector<9x8xbf16>, vector<8x32xbf16>, vector<9x32xf32> -> vector<9x32xf32>
    %215 = arith.addf %192, %214 : vector<9x32xf32>
    %216 = vector.extract_strided_slice %188 {offsets = [0, 8], sizes = [9, 8], strides = [1, 1]} : vector<9x32xf32> to vector<9x8xf32>
    %217 = vector.extract_strided_slice %189 {offsets = [0, 8], sizes = [9, 8], strides = [1, 1]} : vector<9x32xf32> to vector<9x8xf32>
    %218 = vector.extract_strided_slice %190 {offsets = [0, 8], sizes = [9, 8], strides = [1, 1]} : vector<9x32xf32> to vector<9x8xf32>
    %219 = tpu.transpose %217, [1, 0] : vector<9x8xf32> -> vector<8x9xf32>
    %cst_86 = arith.constant dense<0.000000e+00> : vector<9x9xf32>
    %220 = tpu.matmul %216, %219, %cst_86 {dimension_numbers = #tpu.dot_dimension_numbers<[1], [0], [0], [1], [0, 0, 1, 1], [], []>} : vector<9x8xf32>, vector<8x9xf32>, vector<9x9xf32> -> vector<9x9xf32>
    %cst_87 = arith.constant 0.353553385 : f32
    %221 = vector.broadcast %cst_87 : f32 to vector<9x9xf32>
    %222 = arith.mulf %220, %221 : vector<9x9xf32>
    %cst_88 = arith.constant dense<0xFF800000> : vector<9xf32>
    %223 = vector.multi_reduction <maximumf>, %222, %cst_88 [1] : vector<9x9xf32> to vector<9xf32>
    %224 = vector.shape_cast %223 : vector<9xf32> to vector<9x1xf32>
    %225 = vector.broadcast %224 : vector<9x1xf32> to vector<9x9xf32>
    %226 = arith.subf %222, %225 : vector<9x9xf32>
    %227 = math.exp %226 : vector<9x9xf32>
    %cst_89 = arith.constant dense<0.000000e+00> : vector<9xf32>
    %228 = vector.multi_reduction <add>, %227, %cst_89 [1] : vector<9x9xf32> to vector<9xf32>
    %229 = vector.shape_cast %228 : vector<9xf32> to vector<9x1xf32>
    %230 = vector.broadcast %229 : vector<9x1xf32> to vector<9x9xf32>
    %231 = arith.divf %227, %230 : vector<9x9xf32>
    %232 = arith.truncf %231 : vector<9x9xf32> to vector<9x9xbf16>
    %233 = arith.truncf %218 : vector<9x8xf32> to vector<9x8xbf16>
    %cst_90 = arith.constant dense<0.000000e+00> : vector<9x8xf32>
    %234 = tpu.matmul %232, %233, %cst_90 {dimension_numbers = #tpu.dot_dimension_numbers<[1], [0], [0], [1], [0, 0, 1, 1], [], []>} : vector<9x9xbf16>, vector<9x8xbf16>, vector<9x8xf32> -> vector<9x8xf32>
    %235 = arith.truncf %234 : vector<9x8xf32> to vector<9x8xbf16>
    %236 = vector.extract_strided_slice %191 {offsets = [8, 0], sizes = [8, 32], strides = [1, 1]} : vector<32x32xbf16> to vector<8x32xbf16>
    %cst_91 = arith.constant dense<0.000000e+00> : vector<9x32xf32>
    %237 = tpu.matmul %235, %236, %cst_91 {dimension_numbers = #tpu.dot_dimension_numbers<[1], [0], [0], [1], [0, 0, 1, 1], [], []>} : vector<9x8xbf16>, vector<8x32xbf16>, vector<9x32xf32> -> vector<9x32xf32>
    %238 = arith.addf %215, %237 : vector<9x32xf32>
    %239 = vector.extract_strided_slice %188 {offsets = [0, 16], sizes = [9, 8], strides = [1, 1]} : vector<9x32xf32> to vector<9x8xf32>
    %240 = vector.extract_strided_slice %189 {offsets = [0, 16], sizes = [9, 8], strides = [1, 1]} : vector<9x32xf32> to vector<9x8xf32>
    %241 = vector.extract_strided_slice %190 {offsets = [0, 16], sizes = [9, 8], strides = [1, 1]} : vector<9x32xf32> to vector<9x8xf32>
    %242 = tpu.transpose %240, [1, 0] : vector<9x8xf32> -> vector<8x9xf32>
    %cst_92 = arith.constant dense<0.000000e+00> : vector<9x9xf32>
    %243 = tpu.matmul %239, %242, %cst_92 {dimension_numbers = #tpu.dot_dimension_numbers<[1], [0], [0], [1], [0, 0, 1, 1], [], []>} : vector<9x8xf32>, vector<8x9xf32>, vector<9x9xf32> -> vector<9x9xf32>
    %cst_93 = arith.constant 0.353553385 : f32
    %244 = vector.broadcast %cst_93 : f32 to vector<9x9xf32>
    %245 = arith.mulf %243, %244 : vector<9x9xf32>
    %cst_94 = arith.constant dense<0xFF800000> : vector<9xf32>
    %246 = vector.multi_reduction <maximumf>, %245, %cst_94 [1] : vector<9x9xf32> to vector<9xf32>
    %247 = vector.shape_cast %246 : vector<9xf32> to vector<9x1xf32>
    %248 = vector.broadcast %247 : vector<9x1xf32> to vector<9x9xf32>
    %249 = arith.subf %245, %248 : vector<9x9xf32>
    %250 = math.exp %249 : vector<9x9xf32>
    %cst_95 = arith.constant dense<0.000000e+00> : vector<9xf32>
    %251 = vector.multi_reduction <add>, %250, %cst_95 [1] : vector<9x9xf32> to vector<9xf32>
    %252 = vector.shape_cast %251 : vector<9xf32> to vector<9x1xf32>
    %253 = vector.broadcast %252 : vector<9x1xf32> to vector<9x9xf32>
    %254 = arith.divf %250, %253 : vector<9x9xf32>
    %255 = arith.truncf %254 : vector<9x9xf32> to vector<9x9xbf16>
    %256 = arith.truncf %241 : vector<9x8xf32> to vector<9x8xbf16>
    %cst_96 = arith.constant dense<0.000000e+00> : vector<9x8xf32>
    %257 = tpu.matmul %255, %256, %cst_96 {dimension_numbers = #tpu.dot_dimension_numbers<[1], [0], [0], [1], [0, 0, 1, 1], [], []>} : vector<9x9xbf16>, vector<9x8xbf16>, vector<9x8xf32> -> vector<9x8xf32>
    %258 = arith.truncf %257 : vector<9x8xf32> to vector<9x8xbf16>
    %259 = vector.extract_strided_slice %191 {offsets = [16, 0], sizes = [8, 32], strides = [1, 1]} : vector<32x32xbf16> to vector<8x32xbf16>
    %cst_97 = arith.constant dense<0.000000e+00> : vector<9x32xf32>
    %260 = tpu.matmul %258, %259, %cst_97 {dimension_numbers = #tpu.dot_dimension_numbers<[1], [0], [0], [1], [0, 0, 1, 1], [], []>} : vector<9x8xbf16>, vector<8x32xbf16>, vector<9x32xf32> -> vector<9x32xf32>
    %261 = arith.addf %238, %260 : vector<9x32xf32>
    %262 = vector.extract_strided_slice %188 {offsets = [0, 24], sizes = [9, 8], strides = [1, 1]} : vector<9x32xf32> to vector<9x8xf32>
    %263 = vector.extract_strided_slice %189 {offsets = [0, 24], sizes = [9, 8], strides = [1, 1]} : vector<9x32xf32> to vector<9x8xf32>
    %264 = vector.extract_strided_slice %190 {offsets = [0, 24], sizes = [9, 8], strides = [1, 1]} : vector<9x32xf32> to vector<9x8xf32>
    %265 = tpu.transpose %263, [1, 0] : vector<9x8xf32> -> vector<8x9xf32>
    %cst_98 = arith.constant dense<0.000000e+00> : vector<9x9xf32>
    %266 = tpu.matmul %262, %265, %cst_98 {dimension_numbers = #tpu.dot_dimension_numbers<[1], [0], [0], [1], [0, 0, 1, 1], [], []>} : vector<9x8xf32>, vector<8x9xf32>, vector<9x9xf32> -> vector<9x9xf32>
    %cst_99 = arith.constant 0.353553385 : f32
    %267 = vector.broadcast %cst_99 : f32 to vector<9x9xf32>
    %268 = arith.mulf %266, %267 : vector<9x9xf32>
    %cst_100 = arith.constant dense<0xFF800000> : vector<9xf32>
    %269 = vector.multi_reduction <maximumf>, %268, %cst_100 [1] : vector<9x9xf32> to vector<9xf32>
    %270 = vector.shape_cast %269 : vector<9xf32> to vector<9x1xf32>
    %271 = vector.broadcast %270 : vector<9x1xf32> to vector<9x9xf32>
    %272 = arith.subf %268, %271 : vector<9x9xf32>
    %273 = math.exp %272 : vector<9x9xf32>
    %cst_101 = arith.constant dense<0.000000e+00> : vector<9xf32>
    %274 = vector.multi_reduction <add>, %273, %cst_101 [1] : vector<9x9xf32> to vector<9xf32>
    %275 = vector.shape_cast %274 : vector<9xf32> to vector<9x1xf32>
    %276 = vector.broadcast %275 : vector<9x1xf32> to vector<9x9xf32>
    %277 = arith.divf %273, %276 : vector<9x9xf32>
    %278 = arith.truncf %277 : vector<9x9xf32> to vector<9x9xbf16>
    %279 = arith.truncf %264 : vector<9x8xf32> to vector<9x8xbf16>
    %cst_102 = arith.constant dense<0.000000e+00> : vector<9x8xf32>
    %280 = tpu.matmul %278, %279, %cst_102 {dimension_numbers = #tpu.dot_dimension_numbers<[1], [0], [0], [1], [0, 0, 1, 1], [], []>} : vector<9x9xbf16>, vector<9x8xbf16>, vector<9x8xf32> -> vector<9x8xf32>
    %281 = arith.truncf %280 : vector<9x8xf32> to vector<9x8xbf16>
    %282 = vector.extract_strided_slice %191 {offsets = [24, 0], sizes = [8, 32], strides = [1, 1]} : vector<32x32xbf16> to vector<8x32xbf16>
    %cst_103 = arith.constant dense<0.000000e+00> : vector<9x32xf32>
    %283 = tpu.matmul %281, %282, %cst_103 {dimension_numbers = #tpu.dot_dimension_numbers<[1], [0], [0], [1], [0, 0, 1, 1], [], []>} : vector<9x8xbf16>, vector<8x32xbf16>, vector<9x32xf32> -> vector<9x32xf32>
    %284 = arith.addf %261, %283 : vector<9x32xf32>
    %c0_104 = arith.constant 0 : index
    %c0_105 = arith.constant 0 : index
    %285 = vector.load %arg20[%c0_104, %c0_105] : memref<1x32xf32, #tpu.memory_space<vmem>>, vector<1x32xf32>
    %286 = vector.broadcast %285 : vector<1x32xf32> to vector<9x32xf32>
    %287 = arith.addf %284, %286 : vector<9x32xf32>
    %288 = arith.addf %181, %287 : vector<9x32xf32>
    %c0_106 = arith.constant 0 : index
    %c0_107 = arith.constant 0 : index
    %289 = vector.load %arg21[%c0_106, %c0_107] : memref<1x32xf32, #tpu.memory_space<vmem>>, vector<1x32xf32>
    %c0_108 = arith.constant 0 : index
    %c0_109 = arith.constant 0 : index
    %290 = vector.load %arg22[%c0_108, %c0_109] : memref<1x32xf32, #tpu.memory_space<vmem>>, vector<1x32xf32>
    %cst_110 = arith.constant dense<0.000000e+00> : vector<9xf32>
    %291 = vector.multi_reduction <add>, %288, %cst_110 [1] : vector<9x32xf32> to vector<9xf32>
    %292 = vector.shape_cast %291 : vector<9xf32> to vector<9x1xf32>
    %cst_111 = arith.constant 3.200000e+01 : f32
    %293 = vector.broadcast %cst_111 : f32 to vector<9x1xf32>
    %294 = arith.divf %292, %293 : vector<9x1xf32>
    %295 = vector.broadcast %294 : vector<9x1xf32> to vector<9x32xf32>
    %296 = arith.subf %288, %295 : vector<9x32xf32>
    %297 = arith.mulf %296, %296 : vector<9x32xf32>
    %cst_112 = arith.constant dense<0.000000e+00> : vector<9xf32>
    %298 = vector.multi_reduction <add>, %297, %cst_112 [1] : vector<9x32xf32> to vector<9xf32>
    %299 = vector.shape_cast %298 : vector<9xf32> to vector<9x1xf32>
    %cst_113 = arith.constant 3.200000e+01 : f32
    %300 = vector.broadcast %cst_113 : f32 to vector<9x1xf32>
    %301 = arith.divf %299, %300 : vector<9x1xf32>
    %302 = vector.broadcast %294 : vector<9x1xf32> to vector<9x32xf32>
    %303 = arith.subf %288, %302 : vector<9x32xf32>
    %cst_114 = arith.constant 9.99999974E-6 : f32
    %304 = vector.broadcast %cst_114 : f32 to vector<9x1xf32>
    %305 = arith.addf %301, %304 : vector<9x1xf32>
    %306 = math.rsqrt %305 : vector<9x1xf32>
    %307 = vector.broadcast %306 : vector<9x1xf32> to vector<9x32xf32>
    %308 = arith.mulf %303, %307 : vector<9x32xf32>
    %309 = vector.broadcast %289 : vector<1x32xf32> to vector<9x32xf32>
    %310 = arith.mulf %308, %309 : vector<9x32xf32>
    %311 = vector.broadcast %290 : vector<1x32xf32> to vector<9x32xf32>
    %312 = arith.addf %310, %311 : vector<9x32xf32>
    %313 = arith.truncf %312 : vector<9x32xf32> to vector<9x32xbf16>
    %c0_115 = arith.constant 0 : index
    %c0_116 = arith.constant 0 : index
    %314 = vector.load %arg23[%c0_115, %c0_116] : memref<32x64xbf16, #tpu.memory_space<vmem>>, vector<32x64xbf16>
    %cst_117 = arith.constant dense<0.000000e+00> : vector<9x64xf32>
    %315 = tpu.matmul %313, %314, %cst_117 {dimension_numbers = #tpu.dot_dimension_numbers<[1], [0], [0], [1], [0, 0, 1, 1], [], []>} : vector<9x32xbf16>, vector<32x64xbf16>, vector<9x64xf32> -> vector<9x64xf32>
    %c0_118 = arith.constant 0 : index
    %c0_119 = arith.constant 0 : index
    %316 = vector.load %arg24[%c0_118, %c0_119] : memref<1x64xf32, #tpu.memory_space<vmem>>, vector<1x64xf32>
    %317 = vector.broadcast %316 : vector<1x64xf32> to vector<9x64xf32>
    %318 = arith.addf %315, %317 : vector<9x64xf32>
    %cst_120 = arith.constant 0.000000e+00 : f32
    %319 = vector.broadcast %cst_120 : f32 to vector<9x64xf32>
    %320 = arith.maximumf %318, %319 : vector<9x64xf32>
    %321 = arith.truncf %320 : vector<9x64xf32> to vector<9x64xbf16>
    %c0_121 = arith.constant 0 : index
    %c0_122 = arith.constant 0 : index
    %322 = vector.load %arg25[%c0_121, %c0_122] : memref<64x32xbf16, #tpu.memory_space<vmem>>, vector<64x32xbf16>
    %cst_123 = arith.constant dense<0.000000e+00> : vector<9x32xf32>
    %323 = tpu.matmul %321, %322, %cst_123 {dimension_numbers = #tpu.dot_dimension_numbers<[1], [0], [0], [1], [0, 0, 1, 1], [], []>} : vector<9x64xbf16>, vector<64x32xbf16>, vector<9x32xf32> -> vector<9x32xf32>
    %c0_124 = arith.constant 0 : index
    %c0_125 = arith.constant 0 : index
    %324 = vector.load %arg26[%c0_124, %c0_125] : memref<1x32xf32, #tpu.memory_space<vmem>>, vector<1x32xf32>
    %325 = vector.broadcast %324 : vector<1x32xf32> to vector<9x32xf32>
    %326 = arith.addf %323, %325 : vector<9x32xf32>
    %327 = arith.addf %312, %326 : vector<9x32xf32>
    %c0_126 = arith.constant 0 : index
    %c0_127 = arith.constant 0 : index
    %328 = vector.load %arg27[%c0_126, %c0_127] : memref<1x32xf32, #tpu.memory_space<vmem>>, vector<1x32xf32>
    %c0_128 = arith.constant 0 : index
    %c0_129 = arith.constant 0 : index
    %329 = vector.load %arg28[%c0_128, %c0_129] : memref<1x32xf32, #tpu.memory_space<vmem>>, vector<1x32xf32>
    %cst_130 = arith.constant dense<0.000000e+00> : vector<9xf32>
    %330 = vector.multi_reduction <add>, %327, %cst_130 [1] : vector<9x32xf32> to vector<9xf32>
    %331 = vector.shape_cast %330 : vector<9xf32> to vector<9x1xf32>
    %cst_131 = arith.constant 3.200000e+01 : f32
    %332 = vector.broadcast %cst_131 : f32 to vector<9x1xf32>
    %333 = arith.divf %331, %332 : vector<9x1xf32>
    %334 = vector.broadcast %333 : vector<9x1xf32> to vector<9x32xf32>
    %335 = arith.subf %327, %334 : vector<9x32xf32>
    %336 = arith.mulf %335, %335 : vector<9x32xf32>
    %cst_132 = arith.constant dense<0.000000e+00> : vector<9xf32>
    %337 = vector.multi_reduction <add>, %336, %cst_132 [1] : vector<9x32xf32> to vector<9xf32>
    %338 = vector.shape_cast %337 : vector<9xf32> to vector<9x1xf32>
    %cst_133 = arith.constant 3.200000e+01 : f32
    %339 = vector.broadcast %cst_133 : f32 to vector<9x1xf32>
    %340 = arith.divf %338, %339 : vector<9x1xf32>
    %341 = vector.broadcast %333 : vector<9x1xf32> to vector<9x32xf32>
    %342 = arith.subf %327, %341 : vector<9x32xf32>
    %cst_134 = arith.constant 9.99999974E-6 : f32
    %343 = vector.broadcast %cst_134 : f32 to vector<9x1xf32>
    %344 = arith.addf %340, %343 : vector<9x1xf32>
    %345 = math.rsqrt %344 : vector<9x1xf32>
    %346 = vector.broadcast %345 : vector<9x1xf32> to vector<9x32xf32>
    %347 = arith.mulf %342, %346 : vector<9x32xf32>
    %348 = vector.broadcast %328 : vector<1x32xf32> to vector<9x32xf32>
    %349 = arith.mulf %347, %348 : vector<9x32xf32>
    %350 = vector.broadcast %329 : vector<1x32xf32> to vector<9x32xf32>
    %351 = arith.addf %349, %350 : vector<9x32xf32>
    %c0_135 = arith.constant 0 : index
    %c0_136 = arith.constant 0 : index
    %352 = vector.load %arg29[%c0_135, %c0_136] : memref<32x2xf32, #tpu.memory_space<vmem>>, vector<32x2xf32>
    %cst_137 = arith.constant dense<0.000000e+00> : vector<9x2xf32>
    %353 = tpu.matmul %351, %352, %cst_137 {dimension_numbers = #tpu.dot_dimension_numbers<[1], [0], [0], [1], [0, 0, 1, 1], [], []>} : vector<9x32xf32>, vector<32x2xf32>, vector<9x2xf32> -> vector<9x2xf32>
    %c0_138 = arith.constant 0 : index
    %c0_139 = arith.constant 0 : index
    %354 = vector.load %arg30[%c0_138, %c0_139] : memref<1x2xf32, #tpu.memory_space<vmem>>, vector<1x2xf32>
    %355 = vector.broadcast %354 : vector<1x2xf32> to vector<9x2xf32>
    %356 = arith.addf %353, %355 : vector<9x2xf32>
    %357 = vector.shape_cast %356 : vector<9x2xf32> to vector<9x2x1xf32>
    %c0_140 = arith.constant 0 : index
    %c0_141 = arith.constant 0 : index
    %c0_142 = arith.constant 0 : index
    %358 = vector.load %arg31[%c0_140, %c0_141, %c0_142] : memref<9x2x2xf32, #tpu.memory_space<vmem>>, vector<9x2x2xf32>
    %359 = vector.broadcast %357 : vector<9x2x1xf32> to vector<9x2x2xf32>
    %360 = arith.mulf %359, %358 : vector<9x2x2xf32>
    %cst_143 = arith.constant dense<0.000000e+00> : vector<2x2xf32>
    %361 = vector.multi_reduction <add>, %360, %cst_143 [0] : vector<9x2x2xf32> to vector<2x2xf32>
    %cst_144 = arith.constant dense<0.000000e+00> : vector<2xf32>
    %362 = vector.multi_reduction <add>, %361, %cst_144 [0] : vector<2x2xf32> to vector<2xf32>
    %363 = vector.shape_cast %362 : vector<2xf32> to vector<1x2xf32>
    %c0_145 = arith.constant 0 : index
    %c0_146 = arith.constant 0 : index
    %364 = vector.load %arg32[%c0_145, %c0_146] : memref<1x2xf32, #tpu.memory_space<vmem>>, vector<1x2xf32>
    %365 = arith.addf %363, %364 : vector<1x2xf32>
    %366 = vector.shape_cast %365 : vector<1x2xf32> to vector<1x1x2xf32>
    %c0_147 = arith.constant 0 : index
    %c0_148 = arith.constant 0 : index
    %c0_149 = arith.constant 0 : index
    %367 = vector.load %arg33[%c0_147, %c0_148, %c0_149] : memref<1x1x2xf32, #tpu.memory_space<vmem>>, vector<1x1x2xf32>
    tpu.vector_store %arg33[%c0_147, %c0_148, %c0_149], %366 {strides = array<i32>} : memref<1x1x2xf32, #tpu.memory_space<vmem>>, vector<1x1x2xf32>,
    return
  }
  func.func @transform_0(%arg0: i32) -> (i32, i32, i32) {
    %c0_i32 = arith.constant 0 : i32
    %c0_i32_0 = arith.constant 0 : i32
    %c0_i32_1 = arith.constant 0 : i32
    return %arg0, %c0_i32, %c0_i32_0 : i32, i32, i32
  }
  func.func @transform_1(%arg0: i32) -> (i32, i32, i32) {
    %c0_i32 = arith.constant 0 : i32
    %c0_i32_0 = arith.constant 0 : i32
    %c0_i32_1 = arith.constant 0 : i32
    %c0_i32_2 = arith.constant 0 : i32
    return %c0_i32, %c0_i32_0, %c0_i32_1 : i32, i32, i32
  }
  func.func @transform_2(%arg0: i32) -> (i32, i32) {
    %c0_i32 = arith.constant 0 : i32
    %c0_i32_0 = arith.constant 0 : i32
    %c0_i32_1 = arith.constant 0 : i32
    return %c0_i32, %c0_i32_0 : i32, i32
  }
  func.func @transform_3(%arg0: i32) -> (i32, i32) {
    %c0_i32 = arith.constant 0 : i32
    %c0_i32_0 = arith.constant 0 : i32
    %c0_i32_1 = arith.constant 0 : i32
    return %c0_i32, %c0_i32_0 : i32, i32
  }
  func.func @transform_4(%arg0: i32) -> (i32, i32) {
    %c0_i32 = arith.constant 0 : i32
    %c0_i32_0 = arith.constant 0 : i32
    %c0_i32_1 = arith.constant 0 : i32
    return %c0_i32, %c0_i32_0 : i32, i32
  }
  func.func @transform_5(%arg0: i32) -> (i32, i32) {
    %c0_i32 = arith.constant 0 : i32
    %c0_i32_0 = arith.constant 0 : i32
    %c0_i32_1 = arith.constant 0 : i32
    return %c0_i32, %c0_i32_0 : i32, i32
  }
  func.func @transform_6(%arg0: i32) -> (i32, i32) {
    %c0_i32 = arith.constant 0 : i32
    %c0_i32_0 = arith.constant 0 : i32
    %c0_i32_1 = arith.constant 0 : i32
    return %c0_i32, %c0_i32_0 : i32, i32
  }
  func.func @transform_7(%arg0: i32) -> (i32, i32) {
    %c0_i32 = arith.constant 0 : i32
    %c0_i32_0 = arith.constant 0 : i32
    %c0_i32_1 = arith.constant 0 : i32
    return %c0_i32, %c0_i32_0 : i32, i32
  }
  func.func @transform_8(%arg0: i32) -> (i32, i32) {
    %c0_i32 = arith.constant 0 : i32
    %c0_i32_0 = arith.constant 0 : i32
    %c0_i32_1 = arith.constant 0 : i32
    return %c0_i32, %c0_i32_0 : i32, i32
  }
  func.func @transform_9(%arg0: i32) -> (i32, i32) {
    %c0_i32 = arith.constant 0 : i32
    %c0_i32_0 = arith.constant 0 : i32
    %c0_i32_1 = arith.constant 0 : i32
    return %c0_i32, %c0_i32_0 : i32, i32
  }
  func.func @transform_10(%arg0: i32) -> (i32, i32) {
    %c0_i32 = arith.constant 0 : i32
    %c0_i32_0 = arith.constant 0 : i32
    %c0_i32_1 = arith.constant 0 : i32
    return %c0_i32, %c0_i32_0 : i32, i32
  }
  func.func @transform_11(%arg0: i32) -> (i32, i32) {
    %c0_i32 = arith.constant 0 : i32
    %c0_i32_0 = arith.constant 0 : i32
    %c0_i32_1 = arith.constant 0 : i32
    return %c0_i32, %c0_i32_0 : i32, i32
  }
  func.func @transform_12(%arg0: i32) -> (i32, i32) {
    %c0_i32 = arith.constant 0 : i32
    %c0_i32_0 = arith.constant 0 : i32
    %c0_i32_1 = arith.constant 0 : i32
    return %c0_i32, %c0_i32_0 : i32, i32
  }
  func.func @transform_13(%arg0: i32) -> (i32, i32) {
    %c0_i32 = arith.constant 0 : i32
    %c0_i32_0 = arith.constant 0 : i32
    %c0_i32_1 = arith.constant 0 : i32
    return %c0_i32, %c0_i32_0 : i32, i32
  }
  func.func @transform_14(%arg0: i32) -> (i32, i32) {
    %c0_i32 = arith.constant 0 : i32
    %c0_i32_0 = arith.constant 0 : i32
    %c0_i32_1 = arith.constant 0 : i32
    return %c0_i32, %c0_i32_0 : i32, i32
  }
  func.func @transform_15(%arg0: i32) -> (i32, i32) {
    %c0_i32 = arith.constant 0 : i32
    %c0_i32_0 = arith.constant 0 : i32
    %c0_i32_1 = arith.constant 0 : i32
    return %c0_i32, %c0_i32_0 : i32, i32
  }
  func.func @transform_16(%arg0: i32) -> (i32, i32) {
    %c0_i32 = arith.constant 0 : i32
    %c0_i32_0 = arith.constant 0 : i32
    %c0_i32_1 = arith.constant 0 : i32
    return %c0_i32, %c0_i32_0 : i32, i32
  }
  func.func @transform_17(%arg0: i32) -> (i32, i32) {
    %c0_i32 = arith.constant 0 : i32
    %c0_i32_0 = arith.constant 0 : i32
    %c0_i32_1 = arith.constant 0 : i32
    return %c0_i32, %c0_i32_0 : i32, i32
  }
  func.func @transform_18(%arg0: i32) -> (i32, i32) {
    %c0_i32 = arith.constant 0 : i32
    %c0_i32_0 = arith.constant 0 : i32
    %c0_i32_1 = arith.constant 0 : i32
    return %c0_i32, %c0_i32_0 : i32, i32
  }
  func.func @transform_19(%arg0: i32) -> (i32, i32) {
    %c0_i32 = arith.constant 0 : i32
    %c0_i32_0 = arith.constant 0 : i32
    %c0_i32_1 = arith.constant 0 : i32
    return %c0_i32, %c0_i32_0 : i32, i32
  }
  func.func @transform_20(%arg0: i32) -> (i32, i32) {
    %c0_i32 = arith.constant 0 : i32
    %c0_i32_0 = arith.constant 0 : i32
    %c0_i32_1 = arith.constant 0 : i32
    return %c0_i32, %c0_i32_0 : i32, i32
  }
  func.func @transform_21(%arg0: i32) -> (i32, i32) {
    %c0_i32 = arith.constant 0 : i32
    %c0_i32_0 = arith.constant 0 : i32
    %c0_i32_1 = arith.constant 0 : i32
    return %c0_i32, %c0_i32_0 : i32, i32
  }
  func.func @transform_22(%arg0: i32) -> (i32, i32) {
    %c0_i32 = arith.constant 0 : i32
    %c0_i32_0 = arith.constant 0 : i32
    %c0_i32_1 = arith.constant 0 : i32
    return %c0_i32, %c0_i32_0 : i32, i32
  }
  func.func @transform_23(%arg0: i32) -> (i32, i32) {
    %c0_i32 = arith.constant 0 : i32
    %c0_i32_0 = arith.constant 0 : i32
    %c0_i32_1 = arith.constant 0 : i32
    return %c0_i32, %c0_i32_0 : i32, i32
  }
  func.func @transform_24(%arg0: i32) -> (i32, i32) {
    %c0_i32 = arith.constant 0 : i32
    %c0_i32_0 = arith.constant 0 : i32
    %c0_i32_1 = arith.constant 0 : i32
    return %c0_i32, %c0_i32_0 : i32, i32
  }
  func.func @transform_25(%arg0: i32) -> (i32, i32) {
    %c0_i32 = arith.constant 0 : i32
    %c0_i32_0 = arith.constant 0 : i32
    %c0_i32_1 = arith.constant 0 : i32
    return %c0_i32, %c0_i32_0 : i32, i32
  }
  func.func @transform_26(%arg0: i32) -> (i32, i32) {
    %c0_i32 = arith.constant 0 : i32
    %c0_i32_0 = arith.constant 0 : i32
    %c0_i32_1 = arith.constant 0 : i32
    return %c0_i32, %c0_i32_0 : i32, i32
  }
  func.func @transform_27(%arg0: i32) -> (i32, i32) {
    %c0_i32 = arith.constant 0 : i32
    %c0_i32_0 = arith.constant 0 : i32
    %c0_i32_1 = arith.constant 0 : i32
    return %c0_i32, %c0_i32_0 : i32, i32
  }
  func.func @transform_28(%arg0: i32) -> (i32, i32) {
    %c0_i32 = arith.constant 0 : i32
    %c0_i32_0 = arith.constant 0 : i32
    %c0_i32_1 = arith.constant 0 : i32
    return %c0_i32, %c0_i32_0 : i32, i32
  }
  func.func @transform_29(%arg0: i32) -> (i32, i32) {
    %c0_i32 = arith.constant 0 : i32
    %c0_i32_0 = arith.constant 0 : i32
    %c0_i32_1 = arith.constant 0 : i32
    return %c0_i32, %c0_i32_0 : i32, i32
  }
  func.func @transform_30(%arg0: i32) -> (i32, i32, i32) {
    %c0_i32 = arith.constant 0 : i32
    %c0_i32_0 = arith.constant 0 : i32
    %c0_i32_1 = arith.constant 0 : i32
    %c0_i32_2 = arith.constant 0 : i32
    return %c0_i32, %c0_i32_0, %c0_i32_1 : i32, i32, i32
  }
  func.func @transform_31(%arg0: i32) -> (i32, i32) {
    %c0_i32 = arith.constant 0 : i32
    %c0_i32_0 = arith.constant 0 : i32
    %c0_i32_1 = arith.constant 0 : i32
    return %c0_i32, %c0_i32_0 : i32, i32
  }
  func.func @transform_32(%arg0: i32) -> (i32, i32, i32) {
    %c0_i32 = arith.constant 0 : i32
    %c0_i32_0 = arith.constant 0 : i32
    %c0_i32_1 = arith.constant 0 : i32
    return %arg0, %c0_i32, %c0_i32_0 : i32, i32, i32
  }
}

</mosaic_0001>

<llo_original>
// kernel: transformer_forward.5
$region0: #{transformer_forward.5}
  #allocation0 [shape = 'u32[]', space=smem, size = 0x4, offset = 0x4, fixed_abs, tag = 'smem constant byte address 0x4 - core index']
  #allocation1 [shape = 'u32[144,128]{1,0:T(1,128)}', space=vmem, size = 0x12000, scoped, tag = 'internal scratch']
  %s0 = inlined_call_operand.vmem [shape: f32[1104,105], index: 0, kind: input, shape index: {}]
  %s1 = inlined_call_operand.vmem [shape: bf16[105,32], index: 1, kind: input, shape index: {}]
  %s2 = inlined_call_operand.vmem [shape: f32[1,32], index: 2, kind: input, shape index: {}]
  %s3 = inlined_call_operand.vmem [shape: f32[1104,32], index: 3, kind: output, shape index: {}]
  %s4 = sld [smem:[#allocation0]]
  $region22: #{transformer_forward.5} parent=0
    _
  %s6 = ssub.s32 1, %s4
  %s7 = scalar_select 0, %s6, %s4
  // Predicated region
  $region2: #{transformer_forward.5} parent=0 // pred_check
    _
  $region3: #{transformer_forward.5} parent=0 // pred_check_branch
    %9 = sbr.rel (0) target = $region5
  $region4: #{transformer_forward.5} parent=0 // pred_region
    _
  $region5: #{transformer_forward.5} parent=0 // pred_fallthru
    _
  // Predicated region
  $region6: #{transformer_forward.5} parent=0 // pred_check
    _
  $region7: #{transformer_forward.5} parent=0 // pred_check_branch
    %11 = sbr.rel (0) target = $region9
  $region8: #{transformer_forward.5} parent=0 // pred_region
    _
  $region9: #{transformer_forward.5} parent=0 // pred_fallthru
    _
  // Predicated region
  $region10: #{transformer_forward.5} parent=0 // pred_check
    _
  $region11: #{transformer_forward.5} parent=0 // pred_check_branch
    %13 = sbr.rel (0) target = $region13
  $region12: #{transformer_forward.5} parent=0 // pred_region
    _
  $region13: #{transformer_forward.5} parent=0 // pred_fallthru
    _
  %v15 = vld [vmem:[%s0] sm:$0xff]
  %v16 = vld [vmem:[%s0 + $0x8] sm:$0xff]
  %v17 = vld [vmem:[%s0 + $0x10] sm:$0xff]
  %v18 = vld [vmem:[%s0 + $0x18] sm:$0xff]
  %v19 = vld [vmem:[%s0 + $0x20] sm:$0xff]
  %v20 = vld [vmem:[%s0 + $0x28] sm:$0xff]
  %v21 = vld [vmem:[%s0 + $0x30] sm:$0xff]
  %v22 = vld [vmem:[%s0 + $0x38] sm:$0xff]
  %v23 = vld [vmem:[%s0 + $0x40] sm:$0xff]
  %v24 = vld [vmem:[%s0 + $0x48] sm:$0xff]
  %v25 = vld [vmem:[%s0 + $0x50] sm:$0xff]
  %v26 = vld [vmem:[%s0 + $0x58] sm:$0xff]
  %v27 = vld [vmem:[%s0 + $0x60] sm:$0xff]
  %v28 = vld [vmem:[%s0 + $0x68] sm:$0xff]
  %v29 = vld [vmem:[%s0 + $0x70] sm:$0xff]
  %v30 = vld [vmem:[%s0 + $0x78] sm:$0xff]
  %v31 = vld [vmem:[%s0 + $0x80] sm:$0xff]
  %v32 = vld [vmem:[%s0 + $0x88] sm:$0xff]
  %v33 = vld [vmem:[%s0 + $0x90] sm:$0xff]
  %v34 = vld [vmem:[%s0 + $0x98] sm:$0xff]
  %v35 = vld [vmem:[%s0 + $0xa0] sm:$0xff]
  %v36 = vld [vmem:[%s0 + $0xa8] sm:$0xff]
  %v37 = vld [vmem:[%s0 + $0xb0] sm:$0xff]
  %v38 = vld [vmem:[%s0 + $0xb8] sm:$0xff]
  %v39 = vld [vmem:[%s0 + $0xc0] sm:$0xff]
  %v40 = vld [vmem:[%s0 + $0xc8] sm:$0xff]
  %v41 = vld [vmem:[%s0 + $0xd0] sm:$0xff]
  %v42 = vld [vmem:[%s0 + $0xd8] sm:$0xff]
  %v43 = vld [vmem:[%s0 + $0xe0] sm:$0xff]
  %v44 = vld [vmem:[%s0 + $0xe8] sm:$0xff]
  %v45 = vld [vmem:[%s0 + $0xf0] sm:$0xff]
  %v46 = vld [vmem:[%s0 + $0xf8] sm:$0xff]
  %v47 = vld [vmem:[%s0 + $0x100] sm:$0xff]
  %v48 = vld [vmem:[%s0 + $0x108] sm:$0xff]
  %v49 = vld [vmem:[%s0 + $0x110] sm:$0xff]
  %v50 = vld [vmem:[%s0 + $0x118] sm:$0xff]
  %v51 = vld [vmem:[%s0 + $0x120] sm:$0xff]
  %v52 = vld [vmem:[%s0 + $0x128] sm:$0xff]
  %v53 = vld [vmem:[%s0 + $0x130] sm:$0xff]
  %v54 = vld [vmem:[%s0 + $0x138] sm:$0xff]
  %v55 = vld [vmem:[%s0 + $0x140] sm:$0xff]
  %v56 = vld [vmem:[%s0 + $0x148] sm:$0xff]
  %v57 = vld [vmem:[%s0 + $0x150] sm:$0xff]
  %v58 = vld [vmem:[%s0 + $0x158] sm:$0xff]
  %v59 = vld [vmem:[%s0 + $0x160] sm:$0xff]
  %v60 = vld [vmem:[%s0 + $0x168] sm:$0xff]
  %v61 = vld [vmem:[%s0 + $0x170] sm:$0xff]
  %v62 = vld [vmem:[%s0 + $0x178] sm:$0xff]
  %v63 = vld [vmem:[%s0 + $0x180] sm:$0xff]
  %v64 = vld [vmem:[%s0 + $0x188] sm:$0xff]
  %v65 = vld [vmem:[%s0 + $0x190] sm:$0xff]
  %v66 = vld [vmem:[%s0 + $0x198] sm:$0xff]
  %v67 = vld [vmem:[%s0 + $0x1a0] sm:$0xff]
  %v68 = vld [vmem:[%s0 + $0x1a8] sm:$0xff]
  %v69 = vld [vmem:[%s0 + $0x1b0] sm:$0xff]
  %v70 = vld [vmem:[%s0 + $0x1b8] sm:$0xff]
  %v71 = vld [vmem:[%s0 + $0x1c0] sm:$0xff]
  %v72 = vld [vmem:[%s0 + $0x1c8] sm:$0xff]
  %v73 = vld [vmem:[%s0 + $0x1d0] sm:$0xff]
  %v74 = vld [vmem:[%s0 + $0x1d8] sm:$0xff]
  %v75 = vld [vmem:[%s0 + $0x1e0] sm:$0xff]
  %v76 = vld [vmem:[%s0 + $0x1e8] sm:$0xff]
  %v77 = vld [vmem:[%s0 + $0x1f0] sm:$0xff]
  %v78 = vld [vmem:[%s0 + $0x1f8] sm:$0xff]
  %v79 = vld [vmem:[%s0 + $0x200] sm:$0xff]
  %v80 = vld [vmem:[%s0 + $0x208] sm:$0xff]
  %v81 = vld [vmem:[%s0 + $0x210] sm:$0xff]
  %v82 = vld [vmem:[%s0 + $0x218] sm:$0xff]
  %v83 = vld [vmem:[%s0 + $0x220] sm:$0xff]
  %v84 = vld [vmem:[%s0 + $0x228] sm:$0xff]
  %v85 = vld [vmem:[%s0 + $0x230] sm:$0xff]
  %v86 = vld [vmem:[%s0 + $0x238] sm:$0xff]
  %v87 = vld [vmem:[%s0 + $0x240] sm:$0xff]
  %v88 = vld [vmem:[%s0 + $0x248] sm:$0xff]
  %v89 = vld [vmem:[%s0 + $0x250] sm:$0xff]
  %v90 = vld [vmem:[%s0 + $0x258] sm:$0xff]
  %v91 = vld [vmem:[%s0 + $0x260] sm:$0xff]
  %v92 = vld [vmem:[%s0 + $0x268] sm:$0xff]
  %v93 = vld [vmem:[%s0 + $0x270] sm:$0xff]
  %v94 = vld [vmem:[%s0 + $0x278] sm:$0xff]
  %v95 = vld [vmem:[%s0 + $0x280] sm:$0xff]
  %v96 = vld [vmem:[%s0 + $0x288] sm:$0xff]
  %v97 = vld [vmem:[%s0 + $0x290] sm:$0xff]
  %v98 = vld [vmem:[%s0 + $0x298] sm:$0xff]
  %v99 = vld [vmem:[%s0 + $0x2a0] sm:$0xff]
  %v100 = vld [vmem:[%s0 + $0x2a8] sm:$0xff]
  %v101 = vld [vmem:[%s0 + $0x2b0] sm:$0xff]
  %v102 = vld [vmem:[%s0 + $0x2b8] sm:$0xff]
  %v103 = vld [vmem:[%s0 + $0x2c0] sm:$0xff]
  %v104 = vld [vmem:[%s0 + $0x2c8] sm:$0xff]
  %v105 = vld [vmem:[%s0 + $0x2d0] sm:$0xff]
  %v106 = vld [vmem:[%s0 + $0x2d8] sm:$0xff]
  %v107 = vld [vmem:[%s0 + $0x2e0] sm:$0xff]
  %v108 = vld [vmem:[%s0 + $0x2e8] sm:$0xff]
  %v109 = vld [vmem:[%s0 + $0x2f0] sm:$0xff]
  %v110 = vld [vmem:[%s0 + $0x2f8] sm:$0xff]
  %v111 = vld [vmem:[%s0 + $0x300] sm:$0xff]
  %v112 = vld [vmem:[%s0 + $0x308] sm:$0xff]
  %v113 = vld [vmem:[%s0 + $0x310] sm:$0xff]
  %v114 = vld [vmem:[%s0 + $0x318] sm:$0xff]
  %v115 = vld [vmem:[%s0 + $0x320] sm:$0xff]
  %v116 = vld [vmem:[%s0 + $0x328] sm:$0xff]
  %v117 = vld [vmem:[%s0 + $0x330] sm:$0xff]
  %v118 = vld [vmem:[%s0 + $0x338] sm:$0xff]
  %v119 = vld [vmem:[%s0 + $0x340] sm:$0xff]
  %v120 = vld [vmem:[%s0 + $0x348] sm:$0xff]
  %v121 = vld [vmem:[%s0 + $0x350] sm:$0xff]
  %v122 = vld [vmem:[%s0 + $0x358] sm:$0xff]
  %v123 = vld [vmem:[%s0 + $0x360] sm:$0xff]
  %v124 = vld [vmem:[%s0 + $0x368] sm:$0xff]
  %v125 = vld [vmem:[%s0 + $0x370] sm:$0xff]
  %v126 = vld [vmem:[%s0 + $0x378] sm:$0xff]
  %v127 = vld [vmem:[%s0 + $0x380] sm:$0xff]
  %v128 = vld [vmem:[%s0 + $0x388] sm:$0xff]
  %v129 = vld [vmem:[%s0 + $0x390] sm:$0xff]
  %v130 = vld [vmem:[%s0 + $0x398] sm:$0xff]
  %v131 = vld [vmem:[%s0 + $0x3a0] sm:$0xff]
  %v132 = vld [vmem:[%s0 + $0x3a8] sm:$0xff]
  %v133 = vld [vmem:[%s0 + $0x3b0] sm:$0xff]
  %v134 = vld [vmem:[%s0 + $0x3b8] sm:$0xff]
  %v135 = vld [vmem:[%s0 + $0x3c0] sm:$0xff]
  %v136 = vld [vmem:[%s0 + $0x3c8] sm:$0xff]
  %v137 = vld [vmem:[%s0 + $0x3d0] sm:$0xff]
  %v138 = vld [vmem:[%s0 + $0x3d8] sm:$0xff]
  %v139 = vld [vmem:[%s0 + $0x3e0] sm:$0xff]
  %v140 = vld [vmem:[%s0 + $0x3e8] sm:$0xff]
  %v141 = vld [vmem:[%s0 + $0x3f0] sm:$0xff]
  %v142 = vld [vmem:[%s0 + $0x3f8] sm:$0xff]
  %v143 = vld [vmem:[%s0 + $0x400] sm:$0xff]
  %v144 = vld [vmem:[%s0 + $0x408] sm:$0xff]
  %v145 = vld [vmem:[%s0 + $0x410] sm:$0xff]
  %v146 = vld [vmem:[%s0 + $0x418] sm:$0xff]
  %v147 = vld [vmem:[%s0 + $0x420] sm:$0xff]
  %v148 = vld [vmem:[%s0 + $0x428] sm:$0xff]
  %v149 = vld [vmem:[%s0 + $0x430] sm:$0xff]
  %v150 = vld [vmem:[%s0 + $0x438] sm:$0xff]
  %v151 = vld [vmem:[%s0 + $0x440] sm:$0xff]
  %v152 = vld [vmem:[%s0 + $0x448] sm:$0xff]
  %v153 = vpack.c.bf16 %v16, %v15
  %v154 = vpack.c.bf16 %v18, %v17
  %v155 = vpack.c.bf16 %v20, %v19
  %v156 = vpack.c.bf16 %v22, %v21
  %v157 = vpack.c.bf16 %v24, %v23
  %v158 = vpack.c.bf16 %v26, %v25
  %v159 = vpack.c.bf16 %v28, %v27
  %v160 = vpack.c.bf16 %v30, %v29
  %v161 = vpack.c.bf16 %v32, %v31
  %v162 = vpack.c.bf16 %v34, %v33
  %v163 = vpack.c.bf16 %v36, %v35
  %v164 = vpack.c.bf16 %v38, %v37
  %v165 = vpack.c.bf16 %v40, %v39
  %v166 = vpack.c.bf16 %v42, %v41
  %v167 = vpack.c.bf16 %v44, %v43
  %v168 = vpack.c.bf16 %v46, %v45
  %v169 = vpack.c.bf16 %v48, %v47
  %v170 = vpack.c.bf16 %v50, %v49
  %v171 = vpack.c.bf16 %v52, %v51
  %v172 = vpack.c.bf16 %v54, %v53
  %v173 = vpack.c.bf16 %v56, %v55
  %v174 = vpack.c.bf16 %v58, %v57
  %v175 = vpack.c.bf16 %v60, %v59
  %v176 = vpack.c.bf16 %v62, %v61
  %v177 = vpack.c.bf16 %v64, %v63
  %v178 = vpack.c.bf16 %v66, %v65
  %v179 = vpack.c.bf16 %v68, %v67
  %v180 = vpack.c.bf16 %v70, %v69
  %v181 = vpack.c.bf16 %v72, %v71
  %v182 = vpack.c.bf16 %v74, %v73
  %v183 = vpack.c.bf16 %v76, %v75
  %v184 = vpack.c.bf16 %v78, %v77
  %v185 = vpack.c.bf16 %v80, %v79
  %v186 = vpack.c.bf16 %v82, %v81
  %v187 = vpack.c.bf16 %v84, %v83
  %v188 = vpack.c.bf16 %v86, %v85
  %v189 = vpack.c.bf16 %v88, %v87
  %v190 = vpack.c.bf16 %v90, %v89
  %v191 = vpack.c.bf16 %v92, %v91
  %v192 = vpack.c.bf16 %v94, %v93
  %v193 = vpack.c.bf16 %v96, %v95
  %v194 = vpack.c.bf16 %v98, %v97
  %v195 = vpack.c.bf16 %v100, %v99
  %v196 = vpack.c.bf16 %v102, %v101
  %v197 = vpack.c.bf16 %v104, %v103
  %v198 = vpack.c.bf16 %v106, %v105
  %v199 = vpack.c.bf16 %v108, %v107
  %v200 = vpack.c.bf16 %v110, %v109
  %v201 = vpack.c.bf16 %v112, %v111
  %v202 = vpack.c.bf16 %v114, %v113
  %v203 = vpack.c.bf16 %v116, %v115
  %v204 = vpack.c.bf16 %v118, %v117
  %v205 = vpack.c.bf16 %v120, %v119
  %v206 = vpack.c.bf16 %v122, %v121
  %v207 = vpack.c.bf16 %v124, %v123
  %v208 = vpack.c.bf16 %v126, %v125
  %v209 = vpack.c.bf16 %v128, %v127
  %v210 = vpack.c.bf16 %v130, %v129
  %v211 = vpack.c.bf16 %v132, %v131
  %v212 = vpack.c.bf16 %v134, %v133
  %v213 = vpack.c.bf16 %v136, %v135
  %v214 = vpack.c.bf16 %v138, %v137
  %v215 = vpack.c.bf16 %v140, %v139
  %v216 = vpack.c.bf16 %v142, %v141
  %v217 = vpack.c.bf16 %v144, %v143
  %v218 = vpack.c.bf16 %v146, %v145
  %v219 = vpack.c.bf16 %v148, %v147
  %v220 = vpack.c.bf16 %v150, %v149
  %v221 = vpack.c.bf16 %v152, %v151
  %v222 = vld [vmem:[%s1] sm:$0xf]
  %v223 = vld [vmem:[%s1 + $0x4] sm:$0xf]
  %v224 = vld [vmem:[%s1 + $0x8] sm:$0xf]
  %v225 = vld [vmem:[%s1 + $0xc] sm:$0xf]
  %v226 = vld [vmem:[%s1 + $0x10] sm:$0xf]
  %v227 = vld [vmem:[%s1 + $0x14] sm:$0xf]
  %v228 = vld [vmem:[%s1 + $0x18] sm:$0xf]
  %v229 = vld [vmem:[%s1 + $0x1c] sm:$0xf]
  %v230 = vld [vmem:[%s1 + $0x20] sm:$0xf]
  %v231 = vld [vmem:[%s1 + $0x24] sm:$0xf]
  %v232 = vld [vmem:[%s1 + $0x28] sm:$0xf]
  %v233 = vld [vmem:[%s1 + $0x2c] sm:$0xf]
  %v234 = vld [vmem:[%s1 + $0x30] sm:$0xf]
  %v235 = vld [vmem:[%s1 + $0x34] sm:$0x1]
  %v236 = vld [vmem:[%s2] sm:$0x1]
  %v238 = vlaneseq
  %v239 = vshrl.u32 %v238, 7
  %v240 = vsub.s32 0, %v239
  %v241 = vrot.slane %v236, %v240
  %v257 = vunpack.c.l.b16 %v222
  %v258 = vunpack.c.l.b16 %v223
  %v259 = vunpack.c.l.b16 %v224
  %v260 = vunpack.c.l.b16 %v225
  %v261 = vunpack.c.l.b16 %v226
  %v262 = vunpack.c.l.b16 %v227
  %v263 = vunpack.c.l.b16 %v228
  %v264 = vunpack.c.l.b16 %v229
  %v265 = vunpack.c.l.b16 %v230
  %v266 = vunpack.c.l.b16 %v231
  %v267 = vunpack.c.l.b16 %v232
  %v268 = vunpack.c.l.b16 %v233
  %v269 = vunpack.c.l.b16 %v234
  %v270 = vunpack.c.l.b16 %v235
  %v271 = vpack.c.b16 %v258, %v257
  %v272 = vpack.c.b16 %v260, %v259
  %v273 = vpack.c.b16 %v262, %v261
  %v274 = vpack.c.b16 %v264, %v263
  %v275 = vpack.c.b16 %v266, %v265
  %v276 = vpack.c.b16 %v268, %v267
  %v277 = vpack.c.b16 %v270, %v269
  %vm284 = vcmask 859136
  %v286 = vsel %vm284, %v153, 0
  %v289 = vsel %vm284, %v154, 0
  %v292 = vsel %vm284, %v155, 0
  %v295 = vsel %vm284, %v156, 0
  %v298 = vsel %vm284, %v157, 0
  %v301 = vsel %vm284, %v158, 0
  %v304 = vsel %vm284, %v159, 0
  %v307 = vsel %vm284, %v160, 0
  %v310 = vsel %vm284, %v161, 0
  %v313 = vsel %vm284, %v162, 0
  %v316 = vsel %vm284, %v163, 0
  %v319 = vsel %vm284, %v164, 0
  %v322 = vsel %vm284, %v165, 0
  %v325 = vsel %vm284, %v166, 0
  %v328 = vsel %vm284, %v167, 0
  %v331 = vsel %vm284, %v168, 0
  %v334 = vsel %vm284, %v169, 0
  %v337 = vsel %vm284, %v170, 0
  %v340 = vsel %vm284, %v171, 0
  %v343 = vsel %vm284, %v172, 0
  %v346 = vsel %vm284, %v173, 0
  %v349 = vsel %vm284, %v174, 0
  %v352 = vsel %vm284, %v175, 0
  %v355 = vsel %vm284, %v176, 0
  %v358 = vsel %vm284, %v177, 0
  %v361 = vsel %vm284, %v178, 0
  %v364 = vsel %vm284, %v179, 0
  %v367 = vsel %vm284, %v180, 0
  %v370 = vsel %vm284, %v181, 0
  %v373 = vsel %vm284, %v182, 0
  %v376 = vsel %vm284, %v183, 0
  %v379 = vsel %vm284, %v184, 0
  %v382 = vsel %vm284, %v185, 0
  %v385 = vsel %vm284, %v186, 0
  %v388 = vsel %vm284, %v187, 0
  %v391 = vsel %vm284, %v188, 0
  %v394 = vsel %vm284, %v189, 0
  %v397 = vsel %vm284, %v190, 0
  %v400 = vsel %vm284, %v191, 0
  %v403 = vsel %vm284, %v192, 0
  %v406 = vsel %vm284, %v193, 0
  %v409 = vsel %vm284, %v194, 0
  %v412 = vsel %vm284, %v195, 0
  %v415 = vsel %vm284, %v196, 0
  %v418 = vsel %vm284, %v197, 0
  %v421 = vsel %vm284, %v198, 0
  %v424 = vsel %vm284, %v199, 0
  %v427 = vsel %vm284, %v200, 0
  %v430 = vsel %vm284, %v201, 0
  %v433 = vsel %vm284, %v202, 0
  %v436 = vsel %vm284, %v203, 0
  %v439 = vsel %vm284, %v204, 0
  %v442 = vsel %vm284, %v205, 0
  %v445 = vsel %vm284, %v206, 0
  %v448 = vsel %vm284, %v207, 0
  %v451 = vsel %vm284, %v208, 0
  %v454 = vsel %vm284, %v209, 0
  %v457 = vsel %vm284, %v210, 0
  %v460 = vsel %vm284, %v211, 0
  %v463 = vsel %vm284, %v212, 0
  %v466 = vsel %vm284, %v213, 0
  %v469 = vsel %vm284, %v214, 0
  %v472 = vsel %vm284, %v215, 0
  %v475 = vsel %vm284, %v216, 0
  %v478 = vsel %vm284, %v217, 0
  %v481 = vsel %vm284, %v218, 0
  %v484 = vsel %vm284, %v219, 0
  %v487 = vsel %vm284, %v220, 0
  %v490 = vsel %vm284, %v221, 0
  %vm492 = vcmask 1043456
  %vm493 = vcmask 1044480
  %v494 = vsel %vm492, 4294967295, 65535
  %v495 = vsel %vm493, %v494, 0
  %v497 = vand.u32 %v277, %v495
  %499 = vmatprep.subr.bf16.mxu0 0
  %500 = vmatpush1.bf16.msra.mxu0 0
  %501 = vmatprep.subr.bf16.mxu0 0
  %502 = vmatpush1.bf16.msra.mxu0 %v497
  %503 = vmatprep.subr.bf16.mxu0 0
  %504 = vmatpush1.bf16.msra.mxu0 %v276
  %505 = vmatprep.subr.bf16.mxu0 0
  %506 = vmatpush1.bf16.msra.mxu0 %v275
  %507 = vmatprep.subr.bf16.mxu0 0
  %508 = vmatpush1.bf16.msra.mxu0 %v274
  %509 = vmatprep.subr.bf16.mxu0 0
  %510 = vmatpush1.bf16.msra.mxu0 %v273
  %511 = vmatprep.subr.bf16.mxu0 0
  %512 = vmatpush1.bf16.msra.mxu0 %v272
  %513 = vmatprep.subr.bf16.mxu0 0
  %514 = vmatpush1.bf16.msra.mxu0 %v271
  %515 = vmatprep.subr.bf16.mxu0 0
  %516 = vmatpush2.bf16.msra.mxu0 0
  %517 = vmatprep.subr.bf16.mxu0 0
  %518 = vmatpush2.bf16.msra.mxu0 0
  %519 = vmatprep.subr.bf16.mxu0 0
  %520 = vmatpush2.bf16.msra.mxu0 0
  %521 = vmatprep.subr.bf16.mxu0 0
  %522 = vmatpush2.bf16.msra.mxu0 0
  %523 = vmatprep.subr.bf16.mxu0 0
  %524 = vmatpush2.bf16.msra.mxu0 0
  %525 = vmatprep.subr.bf16.mxu0 0
  %526 = vmatpush2.bf16.msra.mxu0 0
  %527 = vmatprep.subr.bf16.mxu0 0
  %528 = vmatpush2.bf16.msra.mxu0 0
  %529 = vmatprep.subr.bf16.mxu0 0
  %530 = vmatpush2.bf16.msra.mxu0 0
  %531 = vmatprep.mubr.bf16.mxu0 0
  %532 = vmatmul.mubr.bf16.gmra.mxu0 %v286
  %v533 = vpop.f32.mrf.mxu0
  %v534 = vadd.f32 %v241, %v533
  %v535 = vpop.f32.mrf.mxu0
  %v536 = vpop.f32.mrf.mxu0
  %v537 = vadd.f32 %v241, %v536
  %v538 = vpop.f32.mrf.mxu0
  %539 = vmatprep.mubr.bf16.mxu0 0
  %540 = vmatmul.mubr.bf16.gmra.mxu0 %v289
  %v541 = vpop.f32.mrf.mxu0
  %v542 = vadd.f32 %v241, %v541
  %v543 = vpop.f32.mrf.mxu0
  %v544 = vpop.f32.mrf.mxu0
  %v545 = vadd.f32 %v241, %v544
  %v546 = vpop.f32.mrf.mxu0
  %547 = vmatprep.mubr.bf16.mxu0 0
  %548 = vmatmul.mubr.bf16.gmra.mxu0 %v292
  %v549 = vpop.f32.mrf.mxu0
  %v550 = vadd.f32 %v241, %v549
  %v551 = vpop.f32.mrf.mxu0
  %v552 = vpop.f32.mrf.mxu0
  %v553 = vadd.f32 %v241, %v552
  %v554 = vpop.f32.mrf.mxu0
  %555 = vmatprep.mubr.bf16.mxu0 0
  %556 = vmatmul.mubr.bf16.gmra.mxu0 %v295
  %v557 = vpop.f32.mrf.mxu0
  %v558 = vadd.f32 %v241, %v557
  %v559 = vpop.f32.mrf.mxu0
  %v560 = vpop.f32.mrf.mxu0
  %v561 = vadd.f32 %v241, %v560
  %v562 = vpop.f32.mrf.mxu0
  %563 = vmatprep.mubr.bf16.mxu0 0
  %564 = vmatmul.mubr.bf16.gmra.mxu0 %v298
  %v565 = vpop.f32.mrf.mxu0
  %v566 = vadd.f32 %v241, %v565
  %v567 = vpop.f32.mrf.mxu0
  %v568 = vpop.f32.mrf.mxu0
  %v569 = vadd.f32 %v241, %v568
  %v570 = vpop.f32.mrf.mxu0
  %571 = vmatprep.mubr.bf16.mxu0 0
  %572 = vmatmul.mubr.bf16.gmra.mxu0 %v301
  %v573 = vpop.f32.mrf.mxu0
  %v574 = vadd.f32 %v241, %v573
  %v575 = vpop.f32.mrf.mxu0
  %v576 = vpop.f32.mrf.mxu0
  %v577 = vadd.f32 %v241, %v576
  %v578 = vpop.f32.mrf.mxu0
  %579 = vmatprep.mubr.bf16.mxu0 0
  %580 = vmatmul.mubr.bf16.gmra.mxu0 %v304
  %v581 = vpop.f32.mrf.mxu0
  %v582 = vadd.f32 %v241, %v581
  %v583 = vpop.f32.mrf.mxu0
  %v584 = vpop.f32.mrf.mxu0
  %v585 = vadd.f32 %v241, %v584
  %v586 = vpop.f32.mrf.mxu0
  %587 = vmatprep.mubr.bf16.mxu0 0
  %588 = vmatmul.mubr.bf16.gmra.mxu0 %v307
  %v589 = vpop.f32.mrf.mxu0
  %v590 = vadd.f32 %v241, %v589
  %v591 = vpop.f32.mrf.mxu0
  %v592 = vpop.f32.mrf.mxu0
  %v593 = vadd.f32 %v241, %v592
  %v594 = vpop.f32.mrf.mxu0
  %595 = vmatprep.mubr.bf16.mxu0 0
  %596 = vmatmul.mubr.bf16.gmra.mxu0 %v310
  %v597 = vpop.f32.mrf.mxu0
  %v598 = vadd.f32 %v241, %v597
  %v599 = vpop.f32.mrf.mxu0
  %v600 = vpop.f32.mrf.mxu0
  %v601 = vadd.f32 %v241, %v600
  %v602 = vpop.f32.mrf.mxu0
  %603 = vmatprep.mubr.bf16.mxu0 0
  %604 = vmatmul.mubr.bf16.gmra.mxu0 %v313
  %v605 = vpop.f32.mrf.mxu0
  %v606 = vadd.f32 %v241, %v605
  %v607 = vpop.f32.mrf.mxu0
  %v608 = vpop.f32.mrf.mxu0
  %v609 = vadd.f32 %v241, %v608
  %v610 = vpop.f32.mrf.mxu0
  %611 = vmatprep.mubr.bf16.mxu0 0
  %612 = vmatmul.mubr.bf16.gmra.mxu0 %v316
  %v613 = vpop.f32.mrf.mxu0
  %v614 = vadd.f32 %v241, %v613
  %v615 = vpop.f32.mrf.mxu0
  %v616 = vpop.f32.mrf.mxu0
  %v617 = vadd.f32 %v241, %v616
  %v618 = vpop.f32.mrf.mxu0
  %619 = vmatprep.mubr.bf16.mxu0 0
  %620 = vmatmul.mubr.bf16.gmra.mxu0 %v319
  %v621 = vpop.f32.mrf.mxu0
  %v622 = vadd.f32 %v241, %v621
  %v623 = vpop.f32.mrf.mxu0
  %v624 = vpop.f32.mrf.mxu0
  %v625 = vadd.f32 %v241, %v624
  %v626 = vpop.f32.mrf.mxu0
  %627 = vmatprep.mubr.bf16.mxu0 0
  %628 = vmatmul.mubr.bf16.gmra.mxu0 %v322
  %v629 = vpop.f32.mrf.mxu0
  %v630 = vadd.f32 %v241, %v629
  %v631 = vpop.f32.mrf.mxu0
  %v632 = vpop.f32.mrf.mxu0
  %v633 = vadd.f32 %v241, %v632
  %v634 = vpop.f32.mrf.mxu0
  %635 = vmatprep.mubr.bf16.mxu0 0
  %636 = vmatmul.mubr.bf16.gmra.mxu0 %v325
  %v637 = vpop.f32.mrf.mxu0
  %v638 = vadd.f32 %v241, %v637
  %v639 = vpop.f32.mrf.mxu0
  %v640 = vpop.f32.mrf.mxu0
  %v641 = vadd.f32 %v241, %v640
  %v642 = vpop.f32.mrf.mxu0
  %643 = vmatprep.mubr.bf16.mxu0 0
  %644 = vmatmul.mubr.bf16.gmra.mxu0 %v328
  %v645 = vpop.f32.mrf.mxu0
  %v646 = vadd.f32 %v241, %v645
  %v647 = vpop.f32.mrf.mxu0
  %v648 = vpop.f32.mrf.mxu0
  %v649 = vadd.f32 %v241, %v648
  %v650 = vpop.f32.mrf.mxu0
  %651 = vmatprep.mubr.bf16.mxu0 0
  %652 = vmatmul.mubr.bf16.gmra.mxu0 %v331
  %v653 = vpop.f32.mrf.mxu0
  %v654 = vadd.f32 %v241, %v653
  %v655 = vpop.f32.mrf.mxu0
  %v656 = vpop.f32.mrf.mxu0
  %v657 = vadd.f32 %v241, %v656
  %v658 = vpop.f32.mrf.mxu0
  %659 = vmatprep.mubr.bf16.mxu0 0
  %660 = vmatmul.mubr.bf16.gmra.mxu0 %v334
  %v661 = vpop.f32.mrf.mxu0
  %v662 = vadd.f32 %v241, %v661
  %v663 = vpop.f32.mrf.mxu0
  %v664 = vpop.f32.mrf.mxu0
  %v665 = vadd.f32 %v241, %v664
  %v666 = vpop.f32.mrf.mxu0
  %667 = vmatprep.mubr.bf16.mxu0 0
  %668 = vmatmul.mubr.bf16.gmra.mxu0 %v337
  %v669 = vpop.f32.mrf.mxu0
  %v670 = vadd.f32 %v241, %v669
  %v671 = vpop.f32.mrf.mxu0
  %v672 = vpop.f32.mrf.mxu0
  %v673 = vadd.f32 %v241, %v672
  %v674 = vpop.f32.mrf.mxu0
  %675 = vmatprep.mubr.bf16.mxu0 0
  %676 = vmatmul.mubr.bf16.gmra.mxu0 %v340
  %v677 = vpop.f32.mrf.mxu0
  %v678 = vadd.f32 %v241, %v677
  %v679 = vpop.f32.mrf.mxu0
  %v680 = vpop.f32.mrf.mxu0
  %v681 = vadd.f32 %v241, %v680
  %v682 = vpop.f32.mrf.mxu0
  %683 = vmatprep.mubr.bf16.mxu0 0
  %684 = vmatmul.mubr.bf16.gmra.mxu0 %v343
  %v685 = vpop.f32.mrf.mxu0
  %v686 = vadd.f32 %v241, %v685
  %v687 = vpop.f32.mrf.mxu0
  %v688 = vpop.f32.mrf.mxu0
  %v689 = vadd.f32 %v241, %v688
  %v690 = vpop.f32.mrf.mxu0
  %691 = vmatprep.mubr.bf16.mxu0 0
  %692 = vmatmul.mubr.bf16.gmra.mxu0 %v346
  %v693 = vpop.f32.mrf.mxu0
  %v694 = vadd.f32 %v241, %v693
  %v695 = vpop.f32.mrf.mxu0
  %v696 = vpop.f32.mrf.mxu0
  %v697 = vadd.f32 %v241, %v696
  %v698 = vpop.f32.mrf.mxu0
  %699 = vmatprep.mubr.bf16.mxu0 0
  %700 = vmatmul.mubr.bf16.gmra.mxu0 %v349
  %v701 = vpop.f32.mrf.mxu0
  %v702 = vadd.f32 %v241, %v701
  %v703 = vpop.f32.mrf.mxu0
  %v704 = vpop.f32.mrf.mxu0
  %v705 = vadd.f32 %v241, %v704
  %v706 = vpop.f32.mrf.mxu0
  %707 = vmatprep.mubr.bf16.mxu0 0
  %708 = vmatmul.mubr.bf16.gmra.mxu0 %v352
  %v709 = vpop.f32.mrf.mxu0
  %v710 = vadd.f32 %v241, %v709
  %v711 = vpop.f32.mrf.mxu0
  %v712 = vpop.f32.mrf.mxu0
  %v713 = vadd.f32 %v241, %v712
  %v714 = vpop.f32.mrf.mxu0
  %715 = vmatprep.mubr.bf16.mxu0 0
  %716 = vmatmul.mubr.bf16.gmra.mxu0 %v355
  %v717 = vpop.f32.mrf.mxu0
  %v718 = vadd.f32 %v241, %v717
  %v719 = vpop.f32.mrf.mxu0
  %v720 = vpop.f32.mrf.mxu0
  %v721 = vadd.f32 %v241, %v720
  %v722 = vpop.f32.mrf.mxu0
  %723 = vmatprep.mubr.bf16.mxu0 0
  %724 = vmatmul.mubr.bf16.gmra.mxu0 %v358
  %v725 = vpop.f32.mrf.mxu0
  %v726 = vadd.f32 %v241, %v725
  %v727 = vpop.f32.mrf.mxu0
  %v728 = vpop.f32.mrf.mxu0
  %v729 = vadd.f32 %v241, %v728
  %v730 = vpop.f32.mrf.mxu0
  %731 = vmatprep.mubr.bf16.mxu0 0
  %732 = vmatmul.mubr.bf16.gmra.mxu0 %v361
  %v733 = vpop.f32.mrf.mxu0
  %v734 = vadd.f32 %v241, %v733
  %v735 = vpop.f32.mrf.mxu0
  %v736 = vpop.f32.mrf.mxu0
  %v737 = vadd.f32 %v241, %v736
  %v738 = vpop.f32.mrf.mxu0
  %739 = vmatprep.mubr.bf16.mxu0 0
  %740 = vmatmul.mubr.bf16.gmra.mxu0 %v364
  %v741 = vpop.f32.mrf.mxu0
  %v742 = vadd.f32 %v241, %v741
  %v743 = vpop.f32.mrf.mxu0
  %v744 = vpop.f32.mrf.mxu0
  %v745 = vadd.f32 %v241, %v744
  %v746 = vpop.f32.mrf.mxu0
  %747 = vmatprep.mubr.bf16.mxu0 0
  %748 = vmatmul.mubr.bf16.gmra.mxu0 %v367
  %v749 = vpop.f32.mrf.mxu0
  %v750 = vadd.f32 %v241, %v749
  %v751 = vpop.f32.mrf.mxu0
  %v752 = vpop.f32.mrf.mxu0
  %v753 = vadd.f32 %v241, %v752
  %v754 = vpop.f32.mrf.mxu0
  %755 = vmatprep.mubr.bf16.mxu0 0
  %756 = vmatmul.mubr.bf16.gmra.mxu0 %v370
  %v757 = vpop.f32.mrf.mxu0
  %v758 = vadd.f32 %v241, %v757
  %v759 = vpop.f32.mrf.mxu0
  %v760 = vpop.f32.mrf.mxu0
  %v761 = vadd.f32 %v241, %v760
  %v762 = vpop.f32.mrf.mxu0
  %763 = vmatprep.mubr.bf16.mxu0 0
  %764 = vmatmul.mubr.bf16.gmra.mxu0 %v373
  %v765 = vpop.f32.mrf.mxu0
  %v766 = vadd.f32 %v241, %v765
  %v767 = vpop.f32.mrf.mxu0
  %v768 = vpop.f32.mrf.mxu0
  %v769 = vadd.f32 %v241, %v768
  %v770 = vpop.f32.mrf.mxu0
  %771 = vmatprep.mubr.bf16.mxu0 0
  %772 = vmatmul.mubr.bf16.gmra.mxu0 %v376
  %v773 = vpop.f32.mrf.mxu0
  %v774 = vadd.f32 %v241, %v773
  %v775 = vpop.f32.mrf.mxu0
  %v776 = vpop.f32.mrf.mxu0
  %v777 = vadd.f32 %v241, %v776
  %v778 = vpop.f32.mrf.mxu0
  %779 = vmatprep.mubr.bf16.mxu0 0
  %780 = vmatmul.mubr.bf16.gmra.mxu0 %v379
  %v781 = vpop.f32.mrf.mxu0
  %v782 = vadd.f32 %v241, %v781
  %v783 = vpop.f32.mrf.mxu0
  %v784 = vpop.f32.mrf.mxu0
  %v785 = vadd.f32 %v241, %v784
  %v786 = vpop.f32.mrf.mxu0
  %787 = vmatprep.mubr.bf16.mxu0 0
  %788 = vmatmul.mubr.bf16.gmra.mxu0 %v382
  %v789 = vpop.f32.mrf.mxu0
  %v790 = vadd.f32 %v241, %v789
  %v791 = vpop.f32.mrf.mxu0
  %v792 = vpop.f32.mrf.mxu0
  %v793 = vadd.f32 %v241, %v792
  %v794 = vpop.f32.mrf.mxu0
  %795 = vmatprep.mubr.bf16.mxu0 0
  %796 = vmatmul.mubr.bf16.gmra.mxu0 %v385
  %v797 = vpop.f32.mrf.mxu0
  %v798 = vadd.f32 %v241, %v797
  %v799 = vpop.f32.mrf.mxu0
  %v800 = vpop.f32.mrf.mxu0
  %v801 = vadd.f32 %v241, %v800
  %v802 = vpop.f32.mrf.mxu0
  %803 = vmatprep.mubr.bf16.mxu0 0
  %804 = vmatmul.mubr.bf16.gmra.mxu0 %v388
  %v805 = vpop.f32.mrf.mxu0
  %v806 = vadd.f32 %v241, %v805
  %v807 = vpop.f32.mrf.mxu0
  %v808 = vpop.f32.mrf.mxu0
  %v809 = vadd.f32 %v241, %v808
  %v810 = vpop.f32.mrf.mxu0
  %811 = vmatprep.mubr.bf16.mxu0 0
  %812 = vmatmul.mubr.bf16.gmra.mxu0 %v391
  %v813 = vpop.f32.mrf.mxu0
  %v814 = vadd.f32 %v241, %v813
  %v815 = vpop.f32.mrf.mxu0
  %v816 = vpop.f32.mrf.mxu0
  %v817 = vadd.f32 %v241, %v816
  %v818 = vpop.f32.mrf.mxu0
  %819 = vmatprep.mubr.bf16.mxu0 0
  %820 = vmatmul.mubr.bf16.gmra.mxu0 %v394
  %v821 = vpop.f32.mrf.mxu0
  %v822 = vadd.f32 %v241, %v821
  %v823 = vpop.f32.mrf.mxu0
  %v824 = vpop.f32.mrf.mxu0
  %v825 = vadd.f32 %v241, %v824
  %v826 = vpop.f32.mrf.mxu0
  %827 = vmatprep.mubr.bf16.mxu0 0
  %828 = vmatmul.mubr.bf16.gmra.mxu0 %v397
  %v829 = vpop.f32.mrf.mxu0
  %v830 = vadd.f32 %v241, %v829
  %v831 = vpop.f32.mrf.mxu0
  %v832 = vpop.f32.mrf.mxu0
  %v833 = vadd.f32 %v241, %v832
  %v834 = vpop.f32.mrf.mxu0
  %835 = vmatprep.mubr.bf16.mxu0 0
  %836 = vmatmul.mubr.bf16.gmra.mxu0 %v400
  %v837 = vpop.f32.mrf.mxu0
  %v838 = vadd.f32 %v241, %v837
  %v839 = vpop.f32.mrf.mxu0
  %v840 = vpop.f32.mrf.mxu0
  %v841 = vadd.f32 %v241, %v840
  %v842 = vpop.f32.mrf.mxu0
  %843 = vmatprep.mubr.bf16.mxu0 0
  %844 = vmatmul.mubr.bf16.gmra.mxu0 %v403
  %v845 = vpop.f32.mrf.mxu0
  %v846 = vadd.f32 %v241, %v845
  %v847 = vpop.f32.mrf.mxu0
  %v848 = vpop.f32.mrf.mxu0
  %v849 = vadd.f32 %v241, %v848
  %v850 = vpop.f32.mrf.mxu0
  %851 = vmatprep.mubr.bf16.mxu0 0
  %852 = vmatmul.mubr.bf16.gmra.mxu0 %v406
  %v853 = vpop.f32.mrf.mxu0
  %v854 = vadd.f32 %v241, %v853
  %v855 = vpop.f32.mrf.mxu0
  %v856 = vpop.f32.mrf.mxu0
  %v857 = vadd.f32 %v241, %v856
  %v858 = vpop.f32.mrf.mxu0
  %859 = vmatprep.mubr.bf16.mxu0 0
  %860 = vmatmul.mubr.bf16.gmra.mxu0 %v409
  %v861 = vpop.f32.mrf.mxu0
  %v862 = vadd.f32 %v241, %v861
  %v863 = vpop.f32.mrf.mxu0
  %v864 = vpop.f32.mrf.mxu0
  %v865 = vadd.f32 %v241, %v864
  %v866 = vpop.f32.mrf.mxu0
  %867 = vmatprep.mubr.bf16.mxu0 0
  %868 = vmatmul.mubr.bf16.gmra.mxu0 %v412
  %v869 = vpop.f32.mrf.mxu0
  %v870 = vadd.f32 %v241, %v869
  %v871 = vpop.f32.mrf.mxu0
  %v872 = vpop.f32.mrf.mxu0
  %v873 = vadd.f32 %v241, %v872
  %v874 = vpop.f32.mrf.mxu0
  %875 = vmatprep.mubr.bf16.mxu0 0
  %876 = vmatmul.mubr.bf16.gmra.mxu0 %v415
  %v877 = vpop.f32.mrf.mxu0
  %v878 = vadd.f32 %v241, %v877
  %v879 = vpop.f32.mrf.mxu0
  %v880 = vpop.f32.mrf.mxu0
  %v881 = vadd.f32 %v241, %v880
  %v882 = vpop.f32.mrf.mxu0
  %883 = vmatprep.mubr.bf16.mxu0 0
  %884 = vmatmul.mubr.bf16.gmra.mxu0 %v418
  %v885 = vpop.f32.mrf.mxu0
  %v886 = vadd.f32 %v241, %v885
  %v887 = vpop.f32.mrf.mxu0
  %v888 = vpop.f32.mrf.mxu0
  %v889 = vadd.f32 %v241, %v888
  %v890 = vpop.f32.mrf.mxu0
  %891 = vmatprep.mubr.bf16.mxu0 0
  %892 = vmatmul.mubr.bf16.gmra.mxu0 %v421
  %v893 = vpop.f32.mrf.mxu0
  %v894 = vadd.f32 %v241, %v893
  %v895 = vpop.f32.mrf.mxu0
  %v896 = vpop.f32.mrf.mxu0
  %v897 = vadd.f32 %v241, %v896
  %v898 = vpop.f32.mrf.mxu0
  %899 = vmatprep.mubr.bf16.mxu0 0
  %900 = vmatmul.mubr.bf16.gmra.mxu0 %v424
  %v901 = vpop.f32.mrf.mxu0
  %v902 = vadd.f32 %v241, %v901
  %v903 = vpop.f32.mrf.mxu0
  %v904 = vpop.f32.mrf.mxu0
  %v905 = vadd.f32 %v241, %v904
  %v906 = vpop.f32.mrf.mxu0
  %907 = vmatprep.mubr.bf16.mxu0 0
  %908 = vmatmul.mubr.bf16.gmra.mxu0 %v427
  %v909 = vpop.f32.mrf.mxu0
  %v910 = vadd.f32 %v241, %v909
  %v911 = vpop.f32.mrf.mxu0
  %v912 = vpop.f32.mrf.mxu0
  %v913 = vadd.f32 %v241, %v912
  %v914 = vpop.f32.mrf.mxu0
  %915 = vmatprep.mubr.bf16.mxu0 0
  %916 = vmatmul.mubr.bf16.gmra.mxu0 %v430
  %v917 = vpop.f32.mrf.mxu0
  %v918 = vadd.f32 %v241, %v917
  %v919 = vpop.f32.mrf.mxu0
  %v920 = vpop.f32.mrf.mxu0
  %v921 = vadd.f32 %v241, %v920
  %v922 = vpop.f32.mrf.mxu0
  %923 = vmatprep.mubr.bf16.mxu0 0
  %924 = vmatmul.mubr.bf16.gmra.mxu0 %v433
  %v925 = vpop.f32.mrf.mxu0
  %v926 = vadd.f32 %v241, %v925
  %v927 = vpop.f32.mrf.mxu0
  %v928 = vpop.f32.mrf.mxu0
  %v929 = vadd.f32 %v241, %v928
  %v930 = vpop.f32.mrf.mxu0
  %931 = vmatprep.mubr.bf16.mxu0 0
  %932 = vmatmul.mubr.bf16.gmra.mxu0 %v436
  %v933 = vpop.f32.mrf.mxu0
  %v934 = vadd.f32 %v241, %v933
  %v935 = vpop.f32.mrf.mxu0
  %v936 = vpop.f32.mrf.mxu0
  %v937 = vadd.f32 %v241, %v936
  %v938 = vpop.f32.mrf.mxu0
  %939 = vmatprep.mubr.bf16.mxu0 0
  %940 = vmatmul.mubr.bf16.gmra.mxu0 %v439
  %v941 = vpop.f32.mrf.mxu0
  %v942 = vadd.f32 %v241, %v941
  %v943 = vpop.f32.mrf.mxu0
  %v944 = vpop.f32.mrf.mxu0
  %v945 = vadd.f32 %v241, %v944
  %v946 = vpop.f32.mrf.mxu0
  %947 = vmatprep.mubr.bf16.mxu0 0
  %948 = vmatmul.mubr.bf16.gmra.mxu0 %v442
  %v949 = vpop.f32.mrf.mxu0
  %v950 = vadd.f32 %v241, %v949
  %v951 = vpop.f32.mrf.mxu0
  %v952 = vpop.f32.mrf.mxu0
  %v953 = vadd.f32 %v241, %v952
  %v954 = vpop.f32.mrf.mxu0
  %955 = vmatprep.mubr.bf16.mxu0 0
  %956 = vmatmul.mubr.bf16.gmra.mxu0 %v445
  %v957 = vpop.f32.mrf.mxu0
  %v958 = vadd.f32 %v241, %v957
  %v959 = vpop.f32.mrf.mxu0
  %v960 = vpop.f32.mrf.mxu0
  %v961 = vadd.f32 %v241, %v960
  %v962 = vpop.f32.mrf.mxu0
  %963 = vmatprep.mubr.bf16.mxu0 0
  %964 = vmatmul.mubr.bf16.gmra.mxu0 %v448
  %v965 = vpop.f32.mrf.mxu0
  %v966 = vadd.f32 %v241, %v965
  %v967 = vpop.f32.mrf.mxu0
  %v968 = vpop.f32.mrf.mxu0
  %v969 = vadd.f32 %v241, %v968
  %v970 = vpop.f32.mrf.mxu0
  %971 = vmatprep.mubr.bf16.mxu0 0
  %972 = vmatmul.mubr.bf16.gmra.mxu0 %v451
  %v973 = vpop.f32.mrf.mxu0
  %v974 = vadd.f32 %v241, %v973
  %v975 = vpop.f32.mrf.mxu0
  %v976 = vpop.f32.mrf.mxu0
  %v977 = vadd.f32 %v241, %v976
  %v978 = vpop.f32.mrf.mxu0
  %979 = vmatprep.mubr.bf16.mxu0 0
  %980 = vmatmul.mubr.bf16.gmra.mxu0 %v454
  %v981 = vpop.f32.mrf.mxu0
  %v982 = vadd.f32 %v241, %v981
  %v983 = vpop.f32.mrf.mxu0
  %v984 = vpop.f32.mrf.mxu0
  %v985 = vadd.f32 %v241, %v984
  %v986 = vpop.f32.mrf.mxu0
  %987 = vmatprep.mubr.bf16.mxu0 0
  %988 = vmatmul.mubr.bf16.gmra.mxu0 %v457
  %v989 = vpop.f32.mrf.mxu0
  %v990 = vadd.f32 %v241, %v989
  %v991 = vpop.f32.mrf.mxu0
  %v992 = vpop.f32.mrf.mxu0
  %v993 = vadd.f32 %v241, %v992
  %v994 = vpop.f32.mrf.mxu0
  %995 = vmatprep.mubr.bf16.mxu0 0
  %996 = vmatmul.mubr.bf16.gmra.mxu0 %v460
  %v997 = vpop.f32.mrf.mxu0
  %v998 = vadd.f32 %v241, %v997
  %v999 = vpop.f32.mrf.mxu0
  %v1000 = vpop.f32.mrf.mxu0
  %v1001 = vadd.f32 %v241, %v1000
  %v1002 = vpop.f32.mrf.mxu0
  %1003 = vmatprep.mubr.bf16.mxu0 0
  %1004 = vmatmul.mubr.bf16.gmra.mxu0 %v463
  %v1005 = vpop.f32.mrf.mxu0
  %v1006 = vadd.f32 %v241, %v1005
  %v1007 = vpop.f32.mrf.mxu0
  %v1008 = vpop.f32.mrf.mxu0
  %v1009 = vadd.f32 %v241, %v1008
  %v1010 = vpop.f32.mrf.mxu0
  %1011 = vmatprep.mubr.bf16.mxu0 0
  %1012 = vmatmul.mubr.bf16.gmra.mxu0 %v466
  %v1013 = vpop.f32.mrf.mxu0
  %v1014 = vadd.f32 %v241, %v1013
  %v1015 = vpop.f32.mrf.mxu0
  %v1016 = vpop.f32.mrf.mxu0
  %v1017 = vadd.f32 %v241, %v1016
  %v1018 = vpop.f32.mrf.mxu0
  %1019 = vmatprep.mubr.bf16.mxu0 0
  %1020 = vmatmul.mubr.bf16.gmra.mxu0 %v469
  %v1021 = vpop.f32.mrf.mxu0
  %v1022 = vadd.f32 %v241, %v1021
  %v1023 = vpop.f32.mrf.mxu0
  %v1024 = vpop.f32.mrf.mxu0
  %v1025 = vadd.f32 %v241, %v1024
  %v1026 = vpop.f32.mrf.mxu0
  %1027 = vmatprep.mubr.bf16.mxu0 0
  %1028 = vmatmul.mubr.bf16.gmra.mxu0 %v472
  %v1029 = vpop.f32.mrf.mxu0
  %v1030 = vadd.f32 %v241, %v1029
  %v1031 = vpop.f32.mrf.mxu0
  %v1032 = vpop.f32.mrf.mxu0
  %v1033 = vadd.f32 %v241, %v1032
  %v1034 = vpop.f32.mrf.mxu0
  %1035 = vmatprep.mubr.bf16.mxu0 0
  %1036 = vmatmul.mubr.bf16.gmra.mxu0 %v475
  %v1037 = vpop.f32.mrf.mxu0
  %v1038 = vadd.f32 %v241, %v1037
  %v1039 = vpop.f32.mrf.mxu0
  %v1040 = vpop.f32.mrf.mxu0
  %v1041 = vadd.f32 %v241, %v1040
  %v1042 = vpop.f32.mrf.mxu0
  %1043 = vmatprep.mubr.bf16.mxu0 0
  %1044 = vmatmul.mubr.bf16.gmra.mxu0 %v478
  %v1045 = vpop.f32.mrf.mxu0
  %v1046 = vadd.f32 %v241, %v1045
  %v1047 = vpop.f32.mrf.mxu0
  %v1048 = vpop.f32.mrf.mxu0
  %v1049 = vadd.f32 %v241, %v1048
  %v1050 = vpop.f32.mrf.mxu0
  %1051 = vmatprep.mubr.bf16.mxu0 0
  %1052 = vmatmul.mubr.bf16.gmra.mxu0 %v481
  %v1053 = vpop.f32.mrf.mxu0
  %v1054 = vadd.f32 %v241, %v1053
  %v1055 = vpop.f32.mrf.mxu0
  %v1056 = vpop.f32.mrf.mxu0
  %v1057 = vadd.f32 %v241, %v1056
  %v1058 = vpop.f32.mrf.mxu0
  %1059 = vmatprep.mubr.bf16.mxu0 0
  %1060 = vmatmul.mubr.bf16.gmra.mxu0 %v484
  %v1061 = vpop.f32.mrf.mxu0
  %v1062 = vadd.f32 %v241, %v1061
  %v1063 = vpop.f32.mrf.mxu0
  %v1064 = vpop.f32.mrf.mxu0
  %v1065 = vadd.f32 %v241, %v1064
  %v1066 = vpop.f32.mrf.mxu0
  %1067 = vmatprep.mubr.bf16.mxu0 0
  %1068 = vmatmul.mubr.bf16.gmra.mxu0 %v487
  %v1069 = vpop.f32.mrf.mxu0
  %v1070 = vadd.f32 %v241, %v1069
  %v1071 = vpop.f32.mrf.mxu0
  %v1072 = vpop.f32.mrf.mxu0
  %v1073 = vadd.f32 %v241, %v1072
  %v1074 = vpop.f32.mrf.mxu0
  %1075 = vmatprep.mubr.bf16.mxu0 0
  %1076 = vmatmul.mubr.bf16.gmra.mxu0 %v490
  %v1077 = vpop.f32.mrf.mxu0
  %v1078 = vadd.f32 %v241, %v1077
  %v1079 = vpop.f32.mrf.mxu0
  %v1080 = vpop.f32.mrf.mxu0
  %v1081 = vadd.f32 %v241, %v1080
  %v1082 = vpop.f32.mrf.mxu0
  %1083 = vdwg.mxu0
  %vm1084 = vcmask 261120
  %1085 = vst.msk [vmem:[%s3] sm:$0xff] %vm1084, %v534
  %1086 = vst.msk [vmem:[%s3 + $0x8] sm:$0xff] %vm1084, %v537
  %1087 = vst.msk [vmem:[%s3 + $0x10] sm:$0xff] %vm1084, %v542
  %1088 = vst.msk [vmem:[%s3 + $0x18] sm:$0xff] %vm1084, %v545
  %1089 = vst.msk [vmem:[%s3 + $0x20] sm:$0xff] %vm1084, %v550
  %1090 = vst.msk [vmem:[%s3 + $0x28] sm:$0xff] %vm1084, %v553
  %1091 = vst.msk [vmem:[%s3 + $0x30] sm:$0xff] %vm1084, %v558
  %1092 = vst.msk [vmem:[%s3 + $0x38] sm:$0xff] %vm1084, %v561
  %1093 = vst.msk [vmem:[%s3 + $0x40] sm:$0xff] %vm1084, %v566
  %1094 = vst.msk [vmem:[%s3 + $0x48] sm:$0xff] %vm1084, %v569
  %1095 = vst.msk [vmem:[%s3 + $0x50] sm:$0xff] %vm1084, %v574
  %1096 = vst.msk [vmem:[%s3 + $0x58] sm:$0xff] %vm1084, %v577
  %1097 = vst.msk [vmem:[%s3 + $0x60] sm:$0xff] %vm1084, %v582
  %1098 = vst.msk [vmem:[%s3 + $0x68] sm:$0xff] %vm1084, %v585
  %1099 = vst.msk [vmem:[%s3 + $0x70] sm:$0xff] %vm1084, %v590
  %1100 = vst.msk [vmem:[%s3 + $0x78] sm:$0xff] %vm1084, %v593
  %1101 = vst.msk [vmem:[%s3 + $0x80] sm:$0xff] %vm1084, %v598
  %1102 = vst.msk [vmem:[%s3 + $0x88] sm:$0xff] %vm1084, %v601
  %1103 = vst.msk [vmem:[%s3 + $0x90] sm:$0xff] %vm1084, %v606
  %1104 = vst.msk [vmem:[%s3 + $0x98] sm:$0xff] %vm1084, %v609
  %1105 = vst.msk [vmem:[%s3 + $0xa0] sm:$0xff] %vm1084, %v614
  %1106 = vst.msk [vmem:[%s3 + $0xa8] sm:$0xff] %vm1084, %v617
  %1107 = vst.msk [vmem:[%s3 + $0xb0] sm:$0xff] %vm1084, %v622
  %1108 = vst.msk [vmem:[%s3 + $0xb8] sm:$0xff] %vm1084, %v625
  %1109 = vst.msk [vmem:[%s3 + $0xc0] sm:$0xff] %vm1084, %v630
  %1110 = vst.msk [vmem:[%s3 + $0xc8] sm:$0xff] %vm1084, %v633
  %1111 = vst.msk [vmem:[%s3 + $0xd0] sm:$0xff] %vm1084, %v638
  %1112 = vst.msk [vmem:[%s3 + $0xd8] sm:$0xff] %vm1084, %v641
  %1113 = vst.msk [vmem:[%s3 + $0xe0] sm:$0xff] %vm1084, %v646
  %1114 = vst.msk [vmem:[%s3 + $0xe8] sm:$0xff] %vm1084, %v649
  %1115 = vst.msk [vmem:[%s3 + $0xf0] sm:$0xff] %vm1084, %v654
  %1116 = vst.msk [vmem:[%s3 + $0xf8] sm:$0xff] %vm1084, %v657
  %1117 = vst.msk [vmem:[%s3 + $0x100] sm:$0xff] %vm1084, %v662
  %1118 = vst.msk [vmem:[%s3 + $0x108] sm:$0xff] %vm1084, %v665
  %1119 = vst.msk [vmem:[%s3 + $0x110] sm:$0xff] %vm1084, %v670
  %1120 = vst.msk [vmem:[%s3 + $0x118] sm:$0xff] %vm1084, %v673
  %1121 = vst.msk [vmem:[%s3 + $0x120] sm:$0xff] %vm1084, %v678
  %1122 = vst.msk [vmem:[%s3 + $0x128] sm:$0xff] %vm1084, %v681
  %1123 = vst.msk [vmem:[%s3 + $0x130] sm:$0xff] %vm1084, %v686
  %1124 = vst.msk [vmem:[%s3 + $0x138] sm:$0xff] %vm1084, %v689
  %1125 = vst.msk [vmem:[%s3 + $0x140] sm:$0xff] %vm1084, %v694
  %1126 = vst.msk [vmem:[%s3 + $0x148] sm:$0xff] %vm1084, %v697
  %1127 = vst.msk [vmem:[%s3 + $0x150] sm:$0xff] %vm1084, %v702
  %1128 = vst.msk [vmem:[%s3 + $0x158] sm:$0xff] %vm1084, %v705
  %1129 = vst.msk [vmem:[%s3 + $0x160] sm:$0xff] %vm1084, %v710
  %1130 = vst.msk [vmem:[%s3 + $0x168] sm:$0xff] %vm1084, %v713
  %1131 = vst.msk [vmem:[%s3 + $0x170] sm:$0xff] %vm1084, %v718
  %1132 = vst.msk [vmem:[%s3 + $0x178] sm:$0xff] %vm1084, %v721
  %1133 = vst.msk [vmem:[%s3 + $0x180] sm:$0xff] %vm1084, %v726
  %1134 = vst.msk [vmem:[%s3 + $0x188] sm:$0xff] %vm1084, %v729
  %1135 = vst.msk [vmem:[%s3 + $0x190] sm:$0xff] %vm1084, %v734
  %1136 = vst.msk [vmem:[%s3 + $0x198] sm:$0xff] %vm1084, %v737
  %1137 = vst.msk [vmem:[%s3 + $0x1a0] sm:$0xff] %vm1084, %v742
  %1138 = vst.msk [vmem:[%s3 + $0x1a8] sm:$0xff] %vm1084, %v745
  %1139 = vst.msk [vmem:[%s3 + $0x1b0] sm:$0xff] %vm1084, %v750
  %1140 = vst.msk [vmem:[%s3 + $0x1b8] sm:$0xff] %vm1084, %v753
  %1141 = vst.msk [vmem:[%s3 + $0x1c0] sm:$0xff] %vm1084, %v758
  %1142 = vst.msk [vmem:[%s3 + $0x1c8] sm:$0xff] %vm1084, %v761
  %1143 = vst.msk [vmem:[%s3 + $0x1d0] sm:$0xff] %vm1084, %v766
  %1144 = vst.msk [vmem:[%s3 + $0x1d8] sm:$0xff] %vm1084, %v769
  %1145 = vst.msk [vmem:[%s3 + $0x1e0] sm:$0xff] %vm1084, %v774
  %1146 = vst.msk [vmem:[%s3 + $0x1e8] sm:$0xff] %vm1084, %v777
  %1147 = vst.msk [vmem:[%s3 + $0x1f0] sm:$0xff] %vm1084, %v782
  %1148 = vst.msk [vmem:[%s3 + $0x1f8] sm:$0xff] %vm1084, %v785
  %1149 = vst.msk [vmem:[%s3 + $0x200] sm:$0xff] %vm1084, %v790
  %1150 = vst.msk [vmem:[%s3 + $0x208] sm:$0xff] %vm1084, %v793
  %1151 = vst.msk [vmem:[%s3 + $0x210] sm:$0xff] %vm1084, %v798
  %1152 = vst.msk [vmem:[%s3 + $0x218] sm:$0xff] %vm1084, %v801
  %1153 = vst.msk [vmem:[%s3 + $0x220] sm:$0xff] %vm1084, %v806
  %1154 = vst.msk [vmem:[%s3 + $0x228] sm:$0xff] %vm1084, %v809
  %1155 = vst.msk [vmem:[%s3 + $0x230] sm:$0xff] %vm1084, %v814
  %1156 = vst.msk [vmem:[%s3 + $0x238] sm:$0xff] %vm1084, %v817
  %1157 = vst.msk [vmem:[%s3 + $0x240] sm:$0xff] %vm1084, %v822
  %1158 = vst.msk [vmem:[%s3 + $0x248] sm:$0xff] %vm1084, %v825
  %1159 = vst.msk [vmem:[%s3 + $0x250] sm:$0xff] %vm1084, %v830
  %1160 = vst.msk [vmem:[%s3 + $0x258] sm:$0xff] %vm1084, %v833
  %1161 = vst.msk [vmem:[%s3 + $0x260] sm:$0xff] %vm1084, %v838
  %1162 = vst.msk [vmem:[%s3 + $0x268] sm:$0xff] %vm1084, %v841
  %1163 = vst.msk [vmem:[%s3 + $0x270] sm:$0xff] %vm1084, %v846
  %1164 = vst.msk [vmem:[%s3 + $0x278] sm:$0xff] %vm1084, %v849
  %1165 = vst.msk [vmem:[%s3 + $0x280] sm:$0xff] %vm1084, %v854
  %1166 = vst.msk [vmem:[%s3 + $0x288] sm:$0xff] %vm1084, %v857
  %1167 = vst.msk [vmem:[%s3 + $0x290] sm:$0xff] %vm1084, %v862
  %1168 = vst.msk [vmem:[%s3 + $0x298] sm:$0xff] %vm1084, %v865
  %1169 = vst.msk [vmem:[%s3 + $0x2a0] sm:$0xff] %vm1084, %v870
  %1170 = vst.msk [vmem:[%s3 + $0x2a8] sm:$0xff] %vm1084, %v873
  %1171 = vst.msk [vmem:[%s3 + $0x2b0] sm:$0xff] %vm1084, %v878
  %1172 = vst.msk [vmem:[%s3 + $0x2b8] sm:$0xff] %vm1084, %v881
  %1173 = vst.msk [vmem:[%s3 + $0x2c0] sm:$0xff] %vm1084, %v886
  %1174 = vst.msk [vmem:[%s3 + $0x2c8] sm:$0xff] %vm1084, %v889
  %1175 = vst.msk [vmem:[%s3 + $0x2d0] sm:$0xff] %vm1084, %v894
  %1176 = vst.msk [vmem:[%s3 + $0x2d8] sm:$0xff] %vm1084, %v897
  %1177 = vst.msk [vmem:[%s3 + $0x2e0] sm:$0xff] %vm1084, %v902
  %1178 = vst.msk [vmem:[%s3 + $0x2e8] sm:$0xff] %vm1084, %v905
  %1179 = vst.msk [vmem:[%s3 + $0x2f0] sm:$0xff] %vm1084, %v910
  %1180 = vst.msk [vmem:[%s3 + $0x2f8] sm:$0xff] %vm1084, %v913
  %1181 = vst.msk [vmem:[%s3 + $0x300] sm:$0xff] %vm1084, %v918
  %1182 = vst.msk [vmem:[%s3 + $0x308] sm:$0xff] %vm1084, %v921
  %1183 = vst.msk [vmem:[%s3 + $0x310] sm:$0xff] %vm1084, %v926
  %1184 = vst.msk [vmem:[%s3 + $0x318] sm:$0xff] %vm1084, %v929
  %1185 = vst.msk [vmem:[%s3 + $0x320] sm:$0xff] %vm1084, %v934
  %1186 = vst.msk [vmem:[%s3 + $0x328] sm:$0xff] %vm1084, %v937
  %1187 = vst.msk [vmem:[%s3 + $0x330] sm:$0xff] %vm1084, %v942
  %1188 = vst.msk [vmem:[%s3 + $0x338] sm:$0xff] %vm1084, %v945
  %1189 = vst.msk [vmem:[%s3 + $0x340] sm:$0xff] %vm1084, %v950
  %1190 = vst.msk [vmem:[%s3 + $0x348] sm:$0xff] %vm1084, %v953
  %1191 = vst.msk [vmem:[%s3 + $0x350] sm:$0xff] %vm1084, %v958
  %1192 = vst.msk [vmem:[%s3 + $0x358] sm:$0xff] %vm1084, %v961
  %1193 = vst.msk [vmem:[%s3 + $0x360] sm:$0xff] %vm1084, %v966
  %1194 = vst.msk [vmem:[%s3 + $0x368] sm:$0xff] %vm1084, %v969
  %1195 = vst.msk [vmem:[%s3 + $0x370] sm:$0xff] %vm1084, %v974
  %1196 = vst.msk [vmem:[%s3 + $0x378] sm:$0xff] %vm1084, %v977
  %1197 = vst.msk [vmem:[%s3 + $0x380] sm:$0xff] %vm1084, %v982
  %1198 = vst.msk [vmem:[%s3 + $0x388] sm:$0xff] %vm1084, %v985
  %1199 = vst.msk [vmem:[%s3 + $0x390] sm:$0xff] %vm1084, %v990
  %1200 = vst.msk [vmem:[%s3 + $0x398] sm:$0xff] %vm1084, %v993
  %1201 = vst.msk [vmem:[%s3 + $0x3a0] sm:$0xff] %vm1084, %v998
  %1202 = vst.msk [vmem:[%s3 + $0x3a8] sm:$0xff] %vm1084, %v1001
  %1203 = vst.msk [vmem:[%s3 + $0x3b0] sm:$0xff] %vm1084, %v1006
  %1204 = vst.msk [vmem:[%s3 + $0x3b8] sm:$0xff] %vm1084, %v1009
  %1205 = vst.msk [vmem:[%s3 + $0x3c0] sm:$0xff] %vm1084, %v1014
  %1206 = vst.msk [vmem:[%s3 + $0x3c8] sm:$0xff] %vm1084, %v1017
  %1207 = vst.msk [vmem:[%s3 + $0x3d0] sm:$0xff] %vm1084, %v1022
  %1208 = vst.msk [vmem:[%s3 + $0x3d8] sm:$0xff] %vm1084, %v1025
  %1209 = vst.msk [vmem:[%s3 + $0x3e0] sm:$0xff] %vm1084, %v1030
  %1210 = vst.msk [vmem:[%s3 + $0x3e8] sm:$0xff] %vm1084, %v1033
  %1211 = vst.msk [vmem:[%s3 + $0x3f0] sm:$0xff] %vm1084, %v1038
  %1212 = vst.msk [vmem:[%s3 + $0x3f8] sm:$0xff] %vm1084, %v1041
  %1213 = vst.msk [vmem:[%s3 + $0x400] sm:$0xff] %vm1084, %v1046
  %1214 = vst.msk [vmem:[%s3 + $0x408] sm:$0xff] %vm1084, %v1049
  %1215 = vst.msk [vmem:[%s3 + $0x410] sm:$0xff] %vm1084, %v1054
  %1216 = vst.msk [vmem:[%s3 + $0x418] sm:$0xff] %vm1084, %v1057
  %1217 = vst.msk [vmem:[%s3 + $0x420] sm:$0xff] %vm1084, %v1062
  %1218 = vst.msk [vmem:[%s3 + $0x428] sm:$0xff] %vm1084, %v1065
  %1219 = vst.msk [vmem:[%s3 + $0x430] sm:$0xff] %vm1084, %v1070
  %1220 = vst.msk [vmem:[%s3 + $0x438] sm:$0xff] %vm1084, %v1073
  %1221 = vst.msk [vmem:[%s3 + $0x440] sm:$0xff] %vm1084, %v1078
  %1222 = vst.msk [vmem:[%s3 + $0x448] sm:$0xff] %vm1084, %v1081
  // Predicated region
  $region14: #{transformer_forward.5} parent=0 // pred_check
    _
  $region15: #{transformer_forward.5} parent=0 // pred_check_branch
    %1224 = sbr.rel (0) target = $region17
  $region16: #{transformer_forward.5} parent=0 // pred_region
    _
  $region17: #{transformer_forward.5} parent=0 // pred_fallthru
    _
  // Predicated region
  $region18: #{transformer_forward.5} parent=0 // pred_check
    _
  $region19: #{transformer_forward.5} parent=0 // pred_check_branch
    %1226 = sbr.rel (0) target = $region21
  $region20: #{transformer_forward.5} parent=0 // pred_region
    _
  $region21: #{transformer_forward.5} parent=0 // pred_fallthru
    _

// kernel: transformer_forward.6
$region0: #{transformer_forward.6}
  #allocation0 [shape = 'u32[]', space=smem, size = 0x4, offset = 0x4, fixed_abs, tag = 'smem constant byte address 0x4 - core index']
  #allocation1 [shape = 'u32[144,128]{1,0:T(1,128)}', space=vmem, size = 0x12000, scoped, tag = 'internal scratch']
  %s0 = inlined_call_operand.vmem [shape: f32[264,1120], index: 0, kind: input, shape index: {}]
  %s1 = inlined_call_operand.vmem [shape: bf16[1120,64], index: 1, kind: input, shape index: {}]
  %s2 = inlined_call_operand.vmem [shape: f32[1,64], index: 2, kind: input, shape index: {}]
  %s3 = inlined_call_operand.vmem [shape: f32[264,64], index: 3, kind: output, shape index: {}]
  %s4 = sld [smem:[#allocation0]]
  $region22: #{transformer_forward.6} parent=0
    _
  %s6 = ssub.s32 1, %s4
  %s7 = scalar_select 0, %s6, %s4
  // Predicated region
  $region2: #{transformer_forward.6} parent=0 // pred_check
    _
  $region3: #{transformer_forward.6} parent=0 // pred_check_branch
    %9 = sbr.rel (0) target = $region5
  $region4: #{transformer_forward.6} parent=0 // pred_region
    _
  $region5: #{transformer_forward.6} parent=0 // pred_fallthru
    _
  // Predicated region
  $region6: #{transformer_forward.6} parent=0 // pred_check
    _
  $region7: #{transformer_forward.6} parent=0 // pred_check_branch
    %11 = sbr.rel (0) target = $region9
  $region8: #{transformer_forward.6} parent=0 // pred_region
    _
  $region9: #{transformer_forward.6} parent=0 // pred_fallthru
    _
  // Predicated region
  $region10: #{transformer_forward.6} parent=0 // pred_check
    _
  $region11: #{transformer_forward.6} parent=0 // pred_check_branch
    %13 = sbr.rel (0) target = $region13
  $region12: #{transformer_forward.6} parent=0 // pred_region
    _
  $region13: #{transformer_forward.6} parent=0 // pred_fallthru
    _
  %v15 = vld [vmem:[%s0] sm:$0xff]
  %v16 = vld [vmem:[%s0 + $0x8] sm:$0xff]
  %v17 = vld [vmem:[%s0 + $0x10] sm:$0xff]
  %v18 = vld [vmem:[%s0 + $0x18] sm:$0xff]
  %v19 = vld [vmem:[%s0 + $0x20] sm:$0xff]
  %v20 = vld [vmem:[%s0 + $0x28] sm:$0xff]
  %v21 = vld [vmem:[%s0 + $0x30] sm:$0xff]
  %v22 = vld [vmem:[%s0 + $0x38] sm:$0xff]
  %v23 = vld [vmem:[%s0 + $0x40] sm:$0xff]
  %v24 = vld [vmem:[%s0 + $0x48] sm:$0xff]
  %v25 = vld [vmem:[%s0 + $0x50] sm:$0xff]
  %v26 = vld [vmem:[%s0 + $0x58] sm:$0xff]
  %v27 = vld [vmem:[%s0 + $0x60] sm:$0xff]
  %v28 = vld [vmem:[%s0 + $0x68] sm:$0xff]
  %v29 = vld [vmem:[%s0 + $0x70] sm:$0xff]
  %v30 = vld [vmem:[%s0 + $0x78] sm:$0xff]
  %v31 = vld [vmem:[%s0 + $0x80] sm:$0xff]
  %v32 = vld [vmem:[%s0 + $0x88] sm:$0xff]
  %v33 = vld [vmem:[%s0 + $0x90] sm:$0xff]
  %v34 = vld [vmem:[%s0 + $0x98] sm:$0xff]
  %v35 = vld [vmem:[%s0 + $0xa0] sm:$0xff]
  %v36 = vld [vmem:[%s0 + $0xa8] sm:$0xff]
  %v37 = vld [vmem:[%s0 + $0xb0] sm:$0xff]
  %v38 = vld [vmem:[%s0 + $0xb8] sm:$0xff]
  %v39 = vld [vmem:[%s0 + $0xc0] sm:$0xff]
  %v40 = vld [vmem:[%s0 + $0xc8] sm:$0xff]
  %v41 = vld [vmem:[%s0 + $0xd0] sm:$0xff]
  %v42 = vld [vmem:[%s0 + $0xd8] sm:$0xff]
  %v43 = vld [vmem:[%s0 + $0xe0] sm:$0xff]
  %v44 = vld [vmem:[%s0 + $0xe8] sm:$0xff]
  %v45 = vld [vmem:[%s0 + $0xf0] sm:$0xff]
  %v46 = vld [vmem:[%s0 + $0xf8] sm:$0xff]
  %v47 = vld [vmem:[%s0 + $0x100] sm:$0xff]
  %v48 = vld [vmem:[%s0 + $0x108] sm:$0xff]
  %v49 = vld [vmem:[%s0 + $0x110] sm:$0xff]
  %v50 = vld [vmem:[%s0 + $0x118] sm:$0xff]
  %v51 = vld [vmem:[%s0 + $0x120] sm:$0xff]
  %v52 = vld [vmem:[%s0 + $0x128] sm:$0xff]
  %v53 = vld [vmem:[%s0 + $0x130] sm:$0xff]
  %v54 = vld [vmem:[%s0 + $0x138] sm:$0xff]
  %v55 = vld [vmem:[%s0 + $0x140] sm:$0xff]
  %v56 = vld [vmem:[%s0 + $0x148] sm:$0xff]
  %v57 = vld [vmem:[%s0 + $0x150] sm:$0xff]
  %v58 = vld [vmem:[%s0 + $0x158] sm:$0xff]
  %v59 = vld [vmem:[%s0 + $0x160] sm:$0xff]
  %v60 = vld [vmem:[%s0 + $0x168] sm:$0xff]
  %v61 = vld [vmem:[%s0 + $0x170] sm:$0xff]
  %v62 = vld [vmem:[%s0 + $0x178] sm:$0xff]
  %v63 = vld [vmem:[%s0 + $0x180] sm:$0xff]
  %v64 = vld [vmem:[%s0 + $0x188] sm:$0xff]
  %v65 = vld [vmem:[%s0 + $0x190] sm:$0xff]
  %v66 = vld [vmem:[%s0 + $0x198] sm:$0xff]
  %v67 = vld [vmem:[%s0 + $0x1a0] sm:$0xff]
  %v68 = vld [vmem:[%s0 + $0x1a8] sm:$0xff]
  %v69 = vld [vmem:[%s0 + $0x1b0] sm:$0xff]
  %v70 = vld [vmem:[%s0 + $0x1b8] sm:$0xff]
  %v71 = vld [vmem:[%s0 + $0x1c0] sm:$0xff]
  %v72 = vld [vmem:[%s0 + $0x1c8] sm:$0xff]
  %v73 = vld [vmem:[%s0 + $0x1d0] sm:$0xff]
  %v74 = vld [vmem:[%s0 + $0x1d8] sm:$0xff]
  %v75 = vld [vmem:[%s0 + $0x1e0] sm:$0xff]
  %v76 = vld [vmem:[%s0 + $0x1e8] sm:$0xff]
  %v77 = vld [vmem:[%s0 + $0x1f0] sm:$0xff]
  %v78 = vld [vmem:[%s0 + $0x1f8] sm:$0xff]
  %v79 = vld [vmem:[%s0 + $0x200] sm:$0xff]
  %v80 = vld [vmem:[%s0 + $0x208] sm:$0xff]
  %v81 = vld [vmem:[%s0 + $0x210] sm:$0xff]
  %v82 = vld [vmem:[%s0 + $0x218] sm:$0xff]
  %v83 = vld [vmem:[%s0 + $0x220] sm:$0xff]
  %v84 = vld [vmem:[%s0 + $0x228] sm:$0xff]
  %v85 = vld [vmem:[%s0 + $0x230] sm:$0xff]
  %v86 = vld [vmem:[%s0 + $0x238] sm:$0xff]
  %v87 = vld [vmem:[%s0 + $0x240] sm:$0xff]
  %v88 = vld [vmem:[%s0 + $0x248] sm:$0xff]
  %v89 = vld [vmem:[%s0 + $0x250] sm:$0xff]
  %v90 = vld [vmem:[%s0 + $0x258] sm:$0xff]
  %v91 = vld [vmem:[%s0 + $0x260] sm:$0xff]
  %v92 = vld [vmem:[%s0 + $0x268] sm:$0xff]
  %v93 = vld [vmem:[%s0 + $0x270] sm:$0xff]
  %v94 = vld [vmem:[%s0 + $0x278] sm:$0xff]
  %v95 = vld [vmem:[%s0 + $0x280] sm:$0xff]
  %v96 = vld [vmem:[%s0 + $0x288] sm:$0xff]
  %v97 = vld [vmem:[%s0 + $0x290] sm:$0xff]
  %v98 = vld [vmem:[%s0 + $0x298] sm:$0xff]
  %v99 = vld [vmem:[%s0 + $0x2a0] sm:$0xff]
  %v100 = vld [vmem:[%s0 + $0x2a8] sm:$0xff]
  %v101 = vld [vmem:[%s0 + $0x2b0] sm:$0xff]
  %v102 = vld [vmem:[%s0 + $0x2b8] sm:$0xff]
  %v103 = vld [vmem:[%s0 + $0x2c0] sm:$0xff]
  %v104 = vld [vmem:[%s0 + $0x2c8] sm:$0xff]
  %v105 = vld [vmem:[%s0 + $0x2d0] sm:$0xff]
  %v106 = vld [vmem:[%s0 + $0x2d8] sm:$0xff]
  %v107 = vld [vmem:[%s0 + $0x2e0] sm:$0xff]
  %v108 = vld [vmem:[%s0 + $0x2e8] sm:$0xff]
  %v109 = vld [vmem:[%s0 + $0x2f0] sm:$0xff]
  %v110 = vld [vmem:[%s0 + $0x2f8] sm:$0xff]
  %v111 = vld [vmem:[%s0 + $0x300] sm:$0xff]
  %v112 = vld [vmem:[%s0 + $0x308] sm:$0xff]
  %v113 = vld [vmem:[%s0 + $0x310] sm:$0xff]
  %v114 = vld [vmem:[%s0 + $0x318] sm:$0xff]
  %v115 = vld [vmem:[%s0 + $0x320] sm:$0xff]
  %v116 = vld [vmem:[%s0 + $0x328] sm:$0xff]
  %v117 = vld [vmem:[%s0 + $0x330] sm:$0xff]
  %v118 = vld [vmem:[%s0 + $0x338] sm:$0xff]
  %v119 = vld [vmem:[%s0 + $0x340] sm:$0xff]
  %v120 = vld [vmem:[%s0 + $0x348] sm:$0xff]
  %v121 = vld [vmem:[%s0 + $0x350] sm:$0xff]
  %v122 = vld [vmem:[%s0 + $0x358] sm:$0xff]
  %v123 = vld [vmem:[%s0 + $0x360] sm:$0xff]
  %v124 = vld [vmem:[%s0 + $0x368] sm:$0xff]
  %v125 = vld [vmem:[%s0 + $0x370] sm:$0xff]
  %v126 = vld [vmem:[%s0 + $0x378] sm:$0xff]
  %v127 = vld [vmem:[%s0 + $0x380] sm:$0xff]
  %v128 = vld [vmem:[%s0 + $0x388] sm:$0xff]
  %v129 = vld [vmem:[%s0 + $0x390] sm:$0xff]
  %v130 = vld [vmem:[%s0 + $0x398] sm:$0xff]
  %v131 = vld [vmem:[%s0 + $0x3a0] sm:$0xff]
  %v132 = vld [vmem:[%s0 + $0x3a8] sm:$0xff]
  %v133 = vld [vmem:[%s0 + $0x3b0] sm:$0xff]
  %v134 = vld [vmem:[%s0 + $0x3b8] sm:$0xff]
  %v135 = vld [vmem:[%s0 + $0x3c0] sm:$0xff]
  %v136 = vld [vmem:[%s0 + $0x3c8] sm:$0xff]
  %v137 = vld [vmem:[%s0 + $0x3d0] sm:$0xff]
  %v138 = vld [vmem:[%s0 + $0x3d8] sm:$0xff]
  %v139 = vld [vmem:[%s0 + $0x3e0] sm:$0xff]
  %v140 = vld [vmem:[%s0 + $0x3e8] sm:$0xff]
  %v141 = vld [vmem:[%s0 + $0x3f0] sm:$0xff]
  %v142 = vld [vmem:[%s0 + $0x3f8] sm:$0xff]
  %v143 = vld [vmem:[%s0 + $0x400] sm:$0xff]
  %v144 = vld [vmem:[%s0 + $0x408] sm:$0xff]
  %v145 = vld [vmem:[%s0 + $0x410] sm:$0xff]
  %v146 = vld [vmem:[%s0 + $0x418] sm:$0xff]
  %v147 = vld [vmem:[%s0 + $0x420] sm:$0xff]
  %v148 = vld [vmem:[%s0 + $0x428] sm:$0xff]
  %v149 = vld [vmem:[%s0 + $0x430] sm:$0xff]
  %v150 = vld [vmem:[%s0 + $0x438] sm:$0xff]
  %v151 = vld [vmem:[%s0 + $0x440] sm:$0xff]
  %v152 = vld [vmem:[%s0 + $0x448] sm:$0xff]
  %v153 = vld [vmem:[%s0 + $0x450] sm:$0xff]
  %v154 = vld [vmem:[%s0 + $0x458] sm:$0xff]
  %v155 = vld [vmem:[%s0 + $0x460] sm:$0xff]
  %v156 = vld [vmem:[%s0 + $0x468] sm:$0xff]
  %v157 = vld [vmem:[%s0 + $0x470] sm:$0xff]
  %v158 = vld [vmem:[%s0 + $0x478] sm:$0xff]
  %v159 = vld [vmem:[%s0 + $0x480] sm:$0xff]
  %v160 = vld [vmem:[%s0 + $0x488] sm:$0xff]
  %v161 = vld [vmem:[%s0 + $0x490] sm:$0xff]
  %v162 = vld [vmem:[%s0 + $0x498] sm:$0xff]
  %v163 = vld [vmem:[%s0 + $0x4a0] sm:$0xff]
  %v164 = vld [vmem:[%s0 + $0x4a8] sm:$0xff]
  %v165 = vld [vmem:[%s0 + $0x4b0] sm:$0xff]
  %v166 = vld [vmem:[%s0 + $0x4b8] sm:$0xff]
  %v167 = vld [vmem:[%s0 + $0x4c0] sm:$0xff]
  %v168 = vld [vmem:[%s0 + $0x4c8] sm:$0xff]
  %v169 = vld [vmem:[%s0 + $0x4d0] sm:$0xff]
  %v170 = vld [vmem:[%s0 + $0x4d8] sm:$0xff]
  %v171 = vld [vmem:[%s0 + $0x4e0] sm:$0xff]
  %v172 = vld [vmem:[%s0 + $0x4e8] sm:$0xff]
  %v173 = vld [vmem:[%s0 + $0x4f0] sm:$0xff]
  %v174 = vld [vmem:[%s0 + $0x4f8] sm:$0xff]
  %v175 = vld [vmem:[%s0 + $0x500] sm:$0xff]
  %v176 = vld [vmem:[%s0 + $0x508] sm:$0xff]
  %v177 = vld [vmem:[%s0 + $0x510] sm:$0xff]
  %v178 = vld [vmem:[%s0 + $0x518] sm:$0xff]
  %v179 = vld [vmem:[%s0 + $0x520] sm:$0xff]
  %v180 = vld [vmem:[%s0 + $0x528] sm:$0xff]
  %v181 = vld [vmem:[%s0 + $0x530] sm:$0xff]
  %v182 = vld [vmem:[%s0 + $0x538] sm:$0xff]
  %v183 = vld [vmem:[%s0 + $0x540] sm:$0xff]
  %v184 = vld [vmem:[%s0 + $0x548] sm:$0xff]
  %v185 = vld [vmem:[%s0 + $0x550] sm:$0xff]
  %v186 = vld [vmem:[%s0 + $0x558] sm:$0xff]
  %v187 = vld [vmem:[%s0 + $0x560] sm:$0xff]
  %v188 = vld [vmem:[%s0 + $0x568] sm:$0xff]
  %v189 = vld [vmem:[%s0 + $0x570] sm:$0xff]
  %v190 = vld [vmem:[%s0 + $0x578] sm:$0xff]
  %v191 = vld [vmem:[%s0 + $0x580] sm:$0xff]
  %v192 = vld [vmem:[%s0 + $0x588] sm:$0xff]
  %v193 = vld [vmem:[%s0 + $0x590] sm:$0xff]
  %v194 = vld [vmem:[%s0 + $0x598] sm:$0xff]
  %v195 = vld [vmem:[%s0 + $0x5a0] sm:$0xff]
  %v196 = vld [vmem:[%s0 + $0x5a8] sm:$0xff]
  %v197 = vld [vmem:[%s0 + $0x5b0] sm:$0xff]
  %v198 = vld [vmem:[%s0 + $0x5b8] sm:$0xff]
  %v199 = vld [vmem:[%s0 + $0x5c0] sm:$0xff]
  %v200 = vld [vmem:[%s0 + $0x5c8] sm:$0xff]
  %v201 = vld [vmem:[%s0 + $0x5d0] sm:$0xff]
  %v202 = vld [vmem:[%s0 + $0x5d8] sm:$0xff]
  %v203 = vld [vmem:[%s0 + $0x5e0] sm:$0xff]
  %v204 = vld [vmem:[%s0 + $0x5e8] sm:$0xff]
  %v205 = vld [vmem:[%s0 + $0x5f0] sm:$0xff]
  %v206 = vld [vmem:[%s0 + $0x5f8] sm:$0xff]
  %v207 = vld [vmem:[%s0 + $0x600] sm:$0xff]
  %v208 = vld [vmem:[%s0 + $0x608] sm:$0xff]
  %v209 = vld [vmem:[%s0 + $0x610] sm:$0xff]
  %v210 = vld [vmem:[%s0 + $0x618] sm:$0xff]
  %v211 = vld [vmem:[%s0 + $0x620] sm:$0xff]
  %v212 = vld [vmem:[%s0 + $0x628] sm:$0xff]
  %v213 = vld [vmem:[%s0 + $0x630] sm:$0xff]
  %v214 = vld [vmem:[%s0 + $0x638] sm:$0xff]
  %v215 = vld [vmem:[%s0 + $0x640] sm:$0xff]
  %v216 = vld [vmem:[%s0 + $0x648] sm:$0xff]
  %v217 = vld [vmem:[%s0 + $0x650] sm:$0xff]
  %v218 = vld [vmem:[%s0 + $0x658] sm:$0xff]
  %v219 = vld [vmem:[%s0 + $0x660] sm:$0xff]
  %v220 = vld [vmem:[%s0 + $0x668] sm:$0xff]
  %v221 = vld [vmem:[%s0 + $0x670] sm:$0xff]
  %v222 = vld [vmem:[%s0 + $0x678] sm:$0xff]
  %v223 = vld [vmem:[%s0 + $0x680] sm:$0xff]
  %v224 = vld [vmem:[%s0 + $0x688] sm:$0xff]
  %v225 = vld [vmem:[%s0 + $0x690] sm:$0xff]
  %v226 = vld [vmem:[%s0 + $0x698] sm:$0xff]
  %v227 = vld [vmem:[%s0 + $0x6a0] sm:$0xff]
  %v228 = vld [vmem:[%s0 + $0x6a8] sm:$0xff]
  %v229 = vld [vmem:[%s0 + $0x6b0] sm:$0xff]
  %v230 = vld [vmem:[%s0 + $0x6b8] sm:$0xff]
  %v231 = vld [vmem:[%s0 + $0x6c0] sm:$0xff]
  %v232 = vld [vmem:[%s0 + $0x6c8] sm:$0xff]
  %v233 = vld [vmem:[%s0 + $0x6d0] sm:$0xff]
  %v234 = vld [vmem:[%s0 + $0x6d8] sm:$0xff]
  %v235 = vld [vmem:[%s0 + $0x6e0] sm:$0xff]
  %v236 = vld [vmem:[%s0 + $0x6e8] sm:$0xff]
  %v237 = vld [vmem:[%s0 + $0x6f0] sm:$0xff]
  %v238 = vld [vmem:[%s0 + $0x6f8] sm:$0xff]
  %v239 = vld [vmem:[%s0 + $0x700] sm:$0xff]
  %v240 = vld [vmem:[%s0 + $0x708] sm:$0xff]
  %v241 = vld [vmem:[%s0 + $0x710] sm:$0xff]
  %v242 = vld [vmem:[%s0 + $0x718] sm:$0xff]
  %v243 = vld [vmem:[%s0 + $0x720] sm:$0xff]
  %v244 = vld [vmem:[%s0 + $0x728] sm:$0xff]
  %v245 = vld [vmem:[%s0 + $0x730] sm:$0xff]
  %v246 = vld [vmem:[%s0 + $0x738] sm:$0xff]
  %v247 = vld [vmem:[%s0 + $0x740] sm:$0xff]
  %v248 = vld [vmem:[%s0 + $0x748] sm:$0xff]
  %v249 = vld [vmem:[%s0 + $0x750] sm:$0xff]
  %v250 = vld [vmem:[%s0 + $0x758] sm:$0xff]
  %v251 = vld [vmem:[%s0 + $0x760] sm:$0xff]
  %v252 = vld [vmem:[%s0 + $0x768] sm:$0xff]
  %v253 = vld [vmem:[%s0 + $0x770] sm:$0xff]
  %v254 = vld [vmem:[%s0 + $0x778] sm:$0xff]
  %v255 = vld [vmem:[%s0 + $0x780] sm:$0xff]
  %v256 = vld [vmem:[%s0 + $0x788] sm:$0xff]
  %v257 = vld [vmem:[%s0 + $0x790] sm:$0xff]
  %v258 = vld [vmem:[%s0 + $0x798] sm:$0xff]
  %v259 = vld [vmem:[%s0 + $0x7a0] sm:$0xff]
  %v260 = vld [vmem:[%s0 + $0x7a8] sm:$0xff]
  %v261 = vld [vmem:[%s0 + $0x7b0] sm:$0xff]
  %v262 = vld [vmem:[%s0 + $0x7b8] sm:$0xff]
  %v263 = vld [vmem:[%s0 + $0x7c0] sm:$0xff]
  %v264 = vld [vmem:[%s0 + $0x7c8] sm:$0xff]
  %v265 = vld [vmem:[%s0 + $0x7d0] sm:$0xff]
  %v266 = vld [vmem:[%s0 + $0x7d8] sm:$0xff]
  %v267 = vld [vmem:[%s0 + $0x7e0] sm:$0xff]
  %v268 = vld [vmem:[%s0 + $0x7e8] sm:$0xff]
  %v269 = vld [vmem:[%s0 + $0x7f0] sm:$0xff]
  %v270 = vld [vmem:[%s0 + $0x7f8] sm:$0xff]
  %v271 = vld [vmem:[%s0 + $0x800] sm:$0xff]
  %v272 = vld [vmem:[%s0 + $0x808] sm:$0xff]
  %v273 = vld [vmem:[%s0 + $0x810] sm:$0xff]
  %v274 = vld [vmem:[%s0 + $0x818] sm:$0xff]
  %v275 = vld [vmem:[%s0 + $0x820] sm:$0xff]
  %v276 = vld [vmem:[%s0 + $0x828] sm:$0xff]
  %v277 = vld [vmem:[%s0 + $0x830] sm:$0xff]
  %v278 = vld [vmem:[%s0 + $0x838] sm:$0xff]
  %v279 = vld [vmem:[%s0 + $0x840] sm:$0xff]
  %v280 = vld [vmem:[%s0 + $0x848] sm:$0xff]
  %v281 = vld [vmem:[%s0 + $0x850] sm:$0xff]
  %v282 = vld [vmem:[%s0 + $0x858] sm:$0xff]
  %v283 = vld [vmem:[%s0 + $0x860] sm:$0xff]
  %v284 = vld [vmem:[%s0 + $0x868] sm:$0xff]
  %v285 = vld [vmem:[%s0 + $0x870] sm:$0xff]
  %v286 = vld [vmem:[%s0 + $0x878] sm:$0xff]
  %v287 = vld [vmem:[%s0 + $0x880] sm:$0xff]
  %v288 = vld [vmem:[%s0 + $0x888] sm:$0xff]
  %v289 = vld [vmem:[%s0 + $0x890] sm:$0xff]
  %v290 = vld [vmem:[%s0 + $0x898] sm:$0xff]
  %v291 = vld [vmem:[%s0 + $0x8a0] sm:$0xff]
  %v292 = vld [vmem:[%s0 + $0x8a8] sm:$0xff]
  %v293 = vld [vmem:[%s0 + $0x8b0] sm:$0xff]
  %v294 = vld [vmem:[%s0 + $0x8b8] sm:$0xff]
  %v295 = vld [vmem:[%s0 + $0x8c0] sm:$0xff]
  %v296 = vld [vmem:[%s0 + $0x8c8] sm:$0xff]
  %v297 = vld [vmem:[%s0 + $0x8d0] sm:$0xff]
  %v298 = vld [vmem:[%s0 + $0x8d8] sm:$0xff]
  %v299 = vld [vmem:[%s0 + $0x8e0] sm:$0xff]
  %v300 = vld [vmem:[%s0 + $0x8e8] sm:$0xff]
  %v301 = vld [vmem:[%s0 + $0x8f0] sm:$0xff]
  %v302 = vld [vmem:[%s0 + $0x8f8] sm:$0xff]
  %v303 = vld [vmem:[%s0 + $0x900] sm:$0xff]
  %v304 = vld [vmem:[%s0 + $0x908] sm:$0xff]
  %v305 = vld [vmem:[%s0 + $0x910] sm:$0xff]
  %v306 = vld [vmem:[%s0 + $0x918] sm:$0xff]
  %v307 = vld [vmem:[%s0 + $0x920] sm:$0xff]
  %v308 = vld [vmem:[%s0 + $0x928] sm:$0xff]
  %v309 = vld [vmem:[%s0 + $0x930] sm:$0xff]
  %v310 = vld [vmem:[%s0 + $0x938] sm:$0xff]
  %v311 = vld [vmem:[%s0 + $0x940] sm:$0xff]
  %v312 = vpack.c.bf16 %v24, %v15
  %v313 = vpack.c.bf16 %v25, %v16
  %v314 = vpack.c.bf16 %v26, %v17
  %v315 = vpack.c.bf16 %v27, %v18
  %v316 = vpack.c.bf16 %v28, %v19
  %v317 = vpack.c.bf16 %v29, %v20
  %v318 = vpack.c.bf16 %v30, %v21
  %v319 = vpack.c.bf16 %v31, %v22
  %v320 = vpack.c.bf16 %v32, %v23
  %v321 = vpack.c.bf16 %v42, %v33
  %v322 = vpack.c.bf16 %v43, %v34
  %v323 = vpack.c.bf16 %v44, %v35
  %v324 = vpack.c.bf16 %v45, %v36
  %v325 = vpack.c.bf16 %v46, %v37
  %v326 = vpack.c.bf16 %v47, %v38
  %v327 = vpack.c.bf16 %v48, %v39
  %v328 = vpack.c.bf16 %v49, %v40
  %v329 = vpack.c.bf16 %v50, %v41
  %v330 = vpack.c.bf16 %v60, %v51
  %v331 = vpack.c.bf16 %v61, %v52
  %v332 = vpack.c.bf16 %v62, %v53
  %v333 = vpack.c.bf16 %v63, %v54
  %v334 = vpack.c.bf16 %v64, %v55
  %v335 = vpack.c.bf16 %v65, %v56
  %v336 = vpack.c.bf16 %v66, %v57
  %v337 = vpack.c.bf16 %v67, %v58
  %v338 = vpack.c.bf16 %v68, %v59
  %v339 = vpack.c.bf16 %v78, %v69
  %v340 = vpack.c.bf16 %v79, %v70
  %v341 = vpack.c.bf16 %v80, %v71
  %v342 = vpack.c.bf16 %v81, %v72
  %v343 = vpack.c.bf16 %v82, %v73
  %v344 = vpack.c.bf16 %v83, %v74
  %v345 = vpack.c.bf16 %v84, %v75
  %v346 = vpack.c.bf16 %v85, %v76
  %v347 = vpack.c.bf16 %v86, %v77
  %v348 = vpack.c.bf16 %v96, %v87
  %v349 = vpack.c.bf16 %v97, %v88
  %v350 = vpack.c.bf16 %v98, %v89
  %v351 = vpack.c.bf16 %v99, %v90
  %v352 = vpack.c.bf16 %v100, %v91
  %v353 = vpack.c.bf16 %v101, %v92
  %v354 = vpack.c.bf16 %v102, %v93
  %v355 = vpack.c.bf16 %v103, %v94
  %v356 = vpack.c.bf16 %v104, %v95
  %v357 = vpack.c.bf16 %v114, %v105
  %v358 = vpack.c.bf16 %v115, %v106
  %v359 = vpack.c.bf16 %v116, %v107
  %v360 = vpack.c.bf16 %v117, %v108
  %v361 = vpack.c.bf16 %v118, %v109
  %v362 = vpack.c.bf16 %v119, %v110
  %v363 = vpack.c.bf16 %v120, %v111
  %v364 = vpack.c.bf16 %v121, %v112
  %v365 = vpack.c.bf16 %v122, %v113
  %v366 = vpack.c.bf16 %v132, %v123
  %v367 = vpack.c.bf16 %v133, %v124
  %v368 = vpack.c.bf16 %v134, %v125
  %v369 = vpack.c.bf16 %v135, %v126
  %v370 = vpack.c.bf16 %v136, %v127
  %v371 = vpack.c.bf16 %v137, %v128
  %v372 = vpack.c.bf16 %v138, %v129
  %v373 = vpack.c.bf16 %v139, %v130
  %v374 = vpack.c.bf16 %v140, %v131
  %v375 = vpack.c.bf16 %v150, %v141
  %v376 = vpack.c.bf16 %v151, %v142
  %v377 = vpack.c.bf16 %v152, %v143
  %v378 = vpack.c.bf16 %v153, %v144
  %v379 = vpack.c.bf16 %v154, %v145
  %v380 = vpack.c.bf16 %v155, %v146
  %v381 = vpack.c.bf16 %v156, %v147
  %v382 = vpack.c.bf16 %v157, %v148
  %v383 = vpack.c.bf16 %v158, %v149
  %v384 = vpack.c.bf16 %v168, %v159
  %v385 = vpack.c.bf16 %v169, %v160
  %v386 = vpack.c.bf16 %v170, %v161
  %v387 = vpack.c.bf16 %v171, %v162
  %v388 = vpack.c.bf16 %v172, %v163
  %v389 = vpack.c.bf16 %v173, %v164
  %v390 = vpack.c.bf16 %v174, %v165
  %v391 = vpack.c.bf16 %v175, %v166
  %v392 = vpack.c.bf16 %v176, %v167
  %v393 = vpack.c.bf16 %v186, %v177
  %v394 = vpack.c.bf16 %v187, %v178
  %v395 = vpack.c.bf16 %v188, %v179
  %v396 = vpack.c.bf16 %v189, %v180
  %v397 = vpack.c.bf16 %v190, %v181
  %v398 = vpack.c.bf16 %v191, %v182
  %v399 = vpack.c.bf16 %v192, %v183
  %v400 = vpack.c.bf16 %v193, %v184
  %v401 = vpack.c.bf16 %v194, %v185
  %v402 = vpack.c.bf16 %v204, %v195
  %v403 = vpack.c.bf16 %v205, %v196
  %v404 = vpack.c.bf16 %v206, %v197
  %v405 = vpack.c.bf16 %v207, %v198
  %v406 = vpack.c.bf16 %v208, %v199
  %v407 = vpack.c.bf16 %v209, %v200
  %v408 = vpack.c.bf16 %v210, %v201
  %v409 = vpack.c.bf16 %v211, %v202
  %v410 = vpack.c.bf16 %v212, %v203
  %v411 = vpack.c.bf16 %v222, %v213
  %v412 = vpack.c.bf16 %v223, %v214
  %v413 = vpack.c.bf16 %v224, %v215
  %v414 = vpack.c.bf16 %v225, %v216
  %v415 = vpack.c.bf16 %v226, %v217
  %v416 = vpack.c.bf16 %v227, %v218
  %v417 = vpack.c.bf16 %v228, %v219
  %v418 = vpack.c.bf16 %v229, %v220
  %v419 = vpack.c.bf16 %v230, %v221
  %v420 = vpack.c.bf16 %v240, %v231
  %v421 = vpack.c.bf16 %v241, %v232
  %v422 = vpack.c.bf16 %v242, %v233
  %v423 = vpack.c.bf16 %v243, %v234
  %v424 = vpack.c.bf16 %v244, %v235
  %v425 = vpack.c.bf16 %v245, %v236
  %v426 = vpack.c.bf16 %v246, %v237
  %v427 = vpack.c.bf16 %v247, %v238
  %v428 = vpack.c.bf16 %v248, %v239
  %v429 = vpack.c.bf16 %v258, %v249
  %v430 = vpack.c.bf16 %v259, %v250
  %v431 = vpack.c.bf16 %v260, %v251
  %v432 = vpack.c.bf16 %v261, %v252
  %v433 = vpack.c.bf16 %v262, %v253
  %v434 = vpack.c.bf16 %v263, %v254
  %v435 = vpack.c.bf16 %v264, %v255
  %v436 = vpack.c.bf16 %v265, %v256
  %v437 = vpack.c.bf16 %v266, %v257
  %v438 = vpack.c.bf16 %v276, %v267
  %v439 = vpack.c.bf16 %v277, %v268
  %v440 = vpack.c.bf16 %v278, %v269
  %v441 = vpack.c.bf16 %v279, %v270
  %v442 = vpack.c.bf16 %v280, %v271
  %v443 = vpack.c.bf16 %v281, %v272
  %v444 = vpack.c.bf16 %v282, %v273
  %v445 = vpack.c.bf16 %v283, %v274
  %v446 = vpack.c.bf16 %v284, %v275
  %v447 = vpack.c.bf16 %v294, %v285
  %v448 = vpack.c.bf16 %v295, %v286
  %v449 = vpack.c.bf16 %v296, %v287
  %v450 = vpack.c.bf16 %v297, %v288
  %v451 = vpack.c.bf16 %v298, %v289
  %v452 = vpack.c.bf16 %v299, %v290
  %v453 = vpack.c.bf16 %v300, %v291
  %v454 = vpack.c.bf16 %v301, %v292
  %v455 = vpack.c.bf16 %v302, %v293
  %v456 = vpack.c.bf16 %v303, %v303
  %v457 = vpack.c.bf16 %v304, %v304
  %v458 = vpack.c.bf16 %v305, %v305
  %v459 = vpack.c.bf16 %v306, %v306
  %v460 = vpack.c.bf16 %v307, %v307
  %v461 = vpack.c.bf16 %v308, %v308
  %v462 = vpack.c.bf16 %v309, %v309
  %v463 = vpack.c.bf16 %v310, %v310
  %v464 = vpack.c.bf16 %v311, %v311
  %v465 = vld [vmem:[%s1] sm:$0xf]
  %v466 = vld [vmem:[%s1 + $0x4] sm:$0xf]
  %v467 = vld [vmem:[%s1 + $0x8] sm:$0xf]
  %v468 = vld [vmem:[%s1 + $0xc] sm:$0xf]
  %v469 = vld [vmem:[%s1 + $0x10] sm:$0xf]
  %v470 = vld [vmem:[%s1 + $0x14] sm:$0xf]
  %v471 = vld [vmem:[%s1 + $0x18] sm:$0xf]
  %v472 = vld [vmem:[%s1 + $0x1c] sm:$0xf]
  %v473 = vld [vmem:[%s1 + $0x20] sm:$0xf]
  %v474 = vld [vmem:[%s1 + $0x24] sm:$0xf]
  %v475 = vld [vmem:[%s1 + $0x28] sm:$0xf]
  %v476 = vld [vmem:[%s1 + $0x2c] sm:$0xf]
  %v477 = vld [vmem:[%s1 + $0x30] sm:$0xf]
  %v478 = vld [vmem:[%s1 + $0x34] sm:$0xf]
  %v479 = vld [vmem:[%s1 + $0x38] sm:$0xf]
  %v480 = vld [vmem:[%s1 + $0x3c] sm:$0xf]
  %v481 = vld [vmem:[%s1 + $0x40] sm:$0xf]
  %v482 = vld [vmem:[%s1 + $0x44] sm:$0xf]
  %v483 = vld [vmem:[%s1 + $0x48] sm:$0xf]
  %v484 = vld [vmem:[%s1 + $0x4c] sm:$0xf]
  %v485 = vld [vmem:[%s1 + $0x50] sm:$0xf]
  %v486 = vld [vmem:[%s1 + $0x54] sm:$0xf]
  %v487 = vld [vmem:[%s1 + $0x58] sm:$0xf]
  %v488 = vld [vmem:[%s1 + $0x5c] sm:$0xf]
  %v489 = vld [vmem:[%s1 + $0x60] sm:$0xf]
  %v490 = vld [vmem:[%s1 + $0x64] sm:$0xf]
  %v491 = vld [vmem:[%s1 + $0x68] sm:$0xf]
  %v492 = vld [vmem:[%s1 + $0x6c] sm:$0xf]
  %v493 = vld [vmem:[%s1 + $0x70] sm:$0xf]
  %v494 = vld [vmem:[%s1 + $0x74] sm:$0xf]
  %v495 = vld [vmem:[%s1 + $0x78] sm:$0xf]
  %v496 = vld [vmem:[%s1 + $0x7c] sm:$0xf]
  %v497 = vld [vmem:[%s1 + $0x80] sm:$0xf]
  %v498 = vld [vmem:[%s1 + $0x84] sm:$0xf]
  %v499 = vld [vmem:[%s1 + $0x88] sm:$0xf]
  %v500 = vld [vmem:[%s1 + $0x8c] sm:$0xf]
  %v501 = vld [vmem:[%s1 + $0x90] sm:$0xf]
  %v502 = vld [vmem:[%s1 + $0x94] sm:$0xf]
  %v503 = vld [vmem:[%s1 + $0x98] sm:$0xf]
  %v504 = vld [vmem:[%s1 + $0x9c] sm:$0xf]
  %v505 = vld [vmem:[%s1 + $0xa0] sm:$0xf]
  %v506 = vld [vmem:[%s1 + $0xa4] sm:$0xf]
  %v507 = vld [vmem:[%s1 + $0xa8] sm:$0xf]
  %v508 = vld [vmem:[%s1 + $0xac] sm:$0xf]
  %v509 = vld [vmem:[%s1 + $0xb0] sm:$0xf]
  %v510 = vld [vmem:[%s1 + $0xb4] sm:$0xf]
  %v511 = vld [vmem:[%s1 + $0xb8] sm:$0xf]
  %v512 = vld [vmem:[%s1 + $0xbc] sm:$0xf]
  %v513 = vld [vmem:[%s1 + $0xc0] sm:$0xf]
  %v514 = vld [vmem:[%s1 + $0xc4] sm:$0xf]
  %v515 = vld [vmem:[%s1 + $0xc8] sm:$0xf]
  %v516 = vld [vmem:[%s1 + $0xcc] sm:$0xf]
  %v517 = vld [vmem:[%s1 + $0xd0] sm:$0xf]
  %v518 = vld [vmem:[%s1 + $0xd4] sm:$0xf]
  %v519 = vld [vmem:[%s1 + $0xd8] sm:$0xf]
  %v520 = vld [vmem:[%s1 + $0xdc] sm:$0xf]
  %v521 = vld [vmem:[%s1 + $0xe0] sm:$0xf]
  %v522 = vld [vmem:[%s1 + $0xe4] sm:$0xf]
  %v523 = vld [vmem:[%s1 + $0xe8] sm:$0xf]
  %v524 = vld [vmem:[%s1 + $0xec] sm:$0xf]
  %v525 = vld [vmem:[%s1 + $0xf0] sm:$0xf]
  %v526 = vld [vmem:[%s1 + $0xf4] sm:$0xf]
  %v527 = vld [vmem:[%s1 + $0xf8] sm:$0xf]
  %v528 = vld [vmem:[%s1 + $0xfc] sm:$0xf]
  %v529 = vld [vmem:[%s1 + $0x100] sm:$0xf]
  %v530 = vld [vmem:[%s1 + $0x104] sm:$0xf]
  %v531 = vld [vmem:[%s1 + $0x108] sm:$0xf]
  %v532 = vld [vmem:[%s1 + $0x10c] sm:$0xf]
  %v533 = vld [vmem:[%s1 + $0x110] sm:$0xf]
  %v534 = vld [vmem:[%s1 + $0x114] sm:$0xf]
  %v535 = vld [vmem:[%s1 + $0x118] sm:$0xf]
  %v536 = vld [vmem:[%s1 + $0x11c] sm:$0xf]
  %v537 = vld [vmem:[%s1 + $0x120] sm:$0xf]
  %v538 = vld [vmem:[%s1 + $0x124] sm:$0xf]
  %v539 = vld [vmem:[%s1 + $0x128] sm:$0xf]
  %v540 = vld [vmem:[%s1 + $0x12c] sm:$0xf]
  %v541 = vld [vmem:[%s1 + $0x130] sm:$0xf]
  %v542 = vld [vmem:[%s1 + $0x134] sm:$0xf]
  %v543 = vld [vmem:[%s1 + $0x138] sm:$0xf]
  %v544 = vld [vmem:[%s1 + $0x13c] sm:$0xf]
  %v545 = vld [vmem:[%s1 + $0x140] sm:$0xf]
  %v546 = vld [vmem:[%s1 + $0x144] sm:$0xf]
  %v547 = vld [vmem:[%s1 + $0x148] sm:$0xf]
  %v548 = vld [vmem:[%s1 + $0x14c] sm:$0xf]
  %v549 = vld [vmem:[%s1 + $0x150] sm:$0xf]
  %v550 = vld [vmem:[%s1 + $0x154] sm:$0xf]
  %v551 = vld [vmem:[%s1 + $0x158] sm:$0xf]
  %v552 = vld [vmem:[%s1 + $0x15c] sm:$0xf]
  %v553 = vld [vmem:[%s1 + $0x160] sm:$0xf]
  %v554 = vld [vmem:[%s1 + $0x164] sm:$0xf]
  %v555 = vld [vmem:[%s1 + $0x168] sm:$0xf]
  %v556 = vld [vmem:[%s1 + $0x16c] sm:$0xf]
  %v557 = vld [vmem:[%s1 + $0x170] sm:$0xf]
  %v558 = vld [vmem:[%s1 + $0x174] sm:$0xf]
  %v559 = vld [vmem:[%s1 + $0x178] sm:$0xf]
  %v560 = vld [vmem:[%s1 + $0x17c] sm:$0xf]
  %v561 = vld [vmem:[%s1 + $0x180] sm:$0xf]
  %v562 = vld [vmem:[%s1 + $0x184] sm:$0xf]
  %v563 = vld [vmem:[%s1 + $0x188] sm:$0xf]
  %v564 = vld [vmem:[%s1 + $0x18c] sm:$0xf]
  %v565 = vld [vmem:[%s1 + $0x190] sm:$0xf]
  %v566 = vld [vmem:[%s1 + $0x194] sm:$0xf]
  %v567 = vld [vmem:[%s1 + $0x198] sm:$0xf]
  %v568 = vld [vmem:[%s1 + $0x19c] sm:$0xf]
  %v569 = vld [vmem:[%s1 + $0x1a0] sm:$0xf]
  %v570 = vld [vmem:[%s1 + $0x1a4] sm:$0xf]
  %v571 = vld [vmem:[%s1 + $0x1a8] sm:$0xf]
  %v572 = vld [vmem:[%s1 + $0x1ac] sm:$0xf]
  %v573 = vld [vmem:[%s1 + $0x1b0] sm:$0xf]
  %v574 = vld [vmem:[%s1 + $0x1b4] sm:$0xf]
  %v575 = vld [vmem:[%s1 + $0x1b8] sm:$0xf]
  %v576 = vld [vmem:[%s1 + $0x1bc] sm:$0xf]
  %v577 = vld [vmem:[%s1 + $0x1c0] sm:$0xf]
  %v578 = vld [vmem:[%s1 + $0x1c4] sm:$0xf]
  %v579 = vld [vmem:[%s1 + $0x1c8] sm:$0xf]
  %v580 = vld [vmem:[%s1 + $0x1cc] sm:$0xf]
  %v581 = vld [vmem:[%s1 + $0x1d0] sm:$0xf]
  %v582 = vld [vmem:[%s1 + $0x1d4] sm:$0xf]
  %v583 = vld [vmem:[%s1 + $0x1d8] sm:$0xf]
  %v584 = vld [vmem:[%s1 + $0x1dc] sm:$0xf]
  %v585 = vld [vmem:[%s1 + $0x1e0] sm:$0xf]
  %v586 = vld [vmem:[%s1 + $0x1e4] sm:$0xf]
  %v587 = vld [vmem:[%s1 + $0x1e8] sm:$0xf]
  %v588 = vld [vmem:[%s1 + $0x1ec] sm:$0xf]
  %v589 = vld [vmem:[%s1 + $0x1f0] sm:$0xf]
  %v590 = vld [vmem:[%s1 + $0x1f4] sm:$0xf]
  %v591 = vld [vmem:[%s1 + $0x1f8] sm:$0xf]
  %v592 = vld [vmem:[%s1 + $0x1fc] sm:$0xf]
  %v593 = vld [vmem:[%s1 + $0x200] sm:$0xf]
  %v594 = vld [vmem:[%s1 + $0x204] sm:$0xf]
  %v595 = vld [vmem:[%s1 + $0x208] sm:$0xf]
  %v596 = vld [vmem:[%s1 + $0x20c] sm:$0xf]
  %v597 = vld [vmem:[%s1 + $0x210] sm:$0xf]
  %v598 = vld [vmem:[%s1 + $0x214] sm:$0xf]
  %v599 = vld [vmem:[%s1 + $0x218] sm:$0xf]
  %v600 = vld [vmem:[%s1 + $0x21c] sm:$0xf]
  %v601 = vld [vmem:[%s1 + $0x220] sm:$0xf]
  %v602 = vld [vmem:[%s1 + $0x224] sm:$0xf]
  %v603 = vld [vmem:[%s1 + $0x228] sm:$0xf]
  %v604 = vld [vmem:[%s1 + $0x22c] sm:$0xf]
  %v605 = vld [vmem:[%s2] sm:$0x1]
  %v607 = vlaneseq
  %v608 = vshrl.u32 %v607, 7
  %v609 = vsub.s32 0, %v608
  %v610 = vrot.slane %v605, %v609
  %v752 = vunpack.c.l.b16 %v465
  %v753 = vunpack.c.l.b16 %v466
  %v754 = vunpack.c.l.b16 %v467
  %v755 = vunpack.c.l.b16 %v468
  %v756 = vunpack.c.l.b16 %v469
  %v757 = vunpack.c.l.b16 %v470
  %v758 = vunpack.c.l.b16 %v471
  %v759 = vunpack.c.l.b16 %v472
  %v760 = vunpack.c.l.b16 %v473
  %v761 = vunpack.c.l.b16 %v474
  %v762 = vunpack.c.l.b16 %v475
  %v763 = vunpack.c.l.b16 %v476
  %v764 = vunpack.c.l.b16 %v477
  %v765 = vunpack.c.l.b16 %v478
  %v766 = vunpack.c.l.b16 %v479
  %v767 = vunpack.c.l.b16 %v480
  %v768 = vunpack.c.l.b16 %v481
  %v769 = vunpack.c.l.b16 %v482
  %v770 = vunpack.c.l.b16 %v483
  %v771 = vunpack.c.l.b16 %v484
  %v772 = vunpack.c.l.b16 %v485
  %v773 = vunpack.c.l.b16 %v486
  %v774 = vunpack.c.l.b16 %v487
  %v775 = vunpack.c.l.b16 %v488
  %v776 = vunpack.c.l.b16 %v489
  %v777 = vunpack.c.l.b16 %v490
  %v778 = vunpack.c.l.b16 %v491
  %v779 = vunpack.c.l.b16 %v492
  %v780 = vunpack.c.l.b16 %v493
  %v781 = vunpack.c.l.b16 %v494
  %v782 = vunpack.c.l.b16 %v495
  %v783 = vunpack.c.l.b16 %v496
  %v784 = vunpack.c.l.b16 %v497
  %v785 = vunpack.c.l.b16 %v498
  %v786 = vunpack.c.l.b16 %v499
  %v787 = vunpack.c.l.b16 %v500
  %v788 = vunpack.c.l.b16 %v501
  %v789 = vunpack.c.l.b16 %v502
  %v790 = vunpack.c.l.b16 %v503
  %v791 = vunpack.c.l.b16 %v504
  %v792 = vunpack.c.l.b16 %v505
  %v793 = vunpack.c.l.b16 %v506
  %v794 = vunpack.c.l.b16 %v507
  %v795 = vunpack.c.l.b16 %v508
  %v796 = vunpack.c.l.b16 %v509
  %v797 = vunpack.c.l.b16 %v510
  %v798 = vunpack.c.l.b16 %v511
  %v799 = vunpack.c.l.b16 %v512
  %v800 = vunpack.c.l.b16 %v513
  %v801 = vunpack.c.l.b16 %v514
  %v802 = vunpack.c.l.b16 %v515
  %v803 = vunpack.c.l.b16 %v516
  %v804 = vunpack.c.l.b16 %v517
  %v805 = vunpack.c.l.b16 %v518
  %v806 = vunpack.c.l.b16 %v519
  %v807 = vunpack.c.l.b16 %v520
  %v808 = vunpack.c.l.b16 %v521
  %v809 = vunpack.c.l.b16 %v522
  %v810 = vunpack.c.l.b16 %v523
  %v811 = vunpack.c.l.b16 %v524
  %v812 = vunpack.c.l.b16 %v525
  %v813 = vunpack.c.l.b16 %v526
  %v814 = vunpack.c.l.b16 %v527
  %v815 = vunpack.c.l.b16 %v528
  %v816 = vunpack.c.l.b16 %v529
  %v817 = vunpack.c.l.b16 %v530
  %v818 = vunpack.c.l.b16 %v531
  %v819 = vunpack.c.l.b16 %v532
  %v820 = vunpack.c.l.b16 %v533
  %v821 = vunpack.c.l.b16 %v534
  %v822 = vunpack.c.l.b16 %v535
  %v823 = vunpack.c.l.b16 %v536
  %v824 = vunpack.c.l.b16 %v537
  %v825 = vunpack.c.l.b16 %v538
  %v826 = vunpack.c.l.b16 %v539
  %v827 = vunpack.c.l.b16 %v540
  %v828 = vunpack.c.l.b16 %v541
  %v829 = vunpack.c.l.b16 %v542
  %v830 = vunpack.c.l.b16 %v543
  %v831 = vunpack.c.l.b16 %v544
  %v832 = vunpack.c.l.b16 %v545
  %v833 = vunpack.c.l.b16 %v546
  %v834 = vunpack.c.l.b16 %v547
  %v835 = vunpack.c.l.b16 %v548
  %v836 = vunpack.c.l.b16 %v549
  %v837 = vunpack.c.l.b16 %v550
  %v838 = vunpack.c.l.b16 %v551
  %v839 = vunpack.c.l.b16 %v552
  %v840 = vunpack.c.l.b16 %v553
  %v841 = vunpack.c.l.b16 %v554
  %v842 = vunpack.c.l.b16 %v555
  %v843 = vunpack.c.l.b16 %v556
  %v844 = vunpack.c.l.b16 %v557
  %v845 = vunpack.c.l.b16 %v558
  %v846 = vunpack.c.l.b16 %v559
  %v847 = vunpack.c.l.b16 %v560
  %v848 = vunpack.c.l.b16 %v561
  %v849 = vunpack.c.l.b16 %v562
  %v850 = vunpack.c.l.b16 %v563
  %v851 = vunpack.c.l.b16 %v564
  %v852 = vunpack.c.l.b16 %v565
  %v853 = vunpack.c.l.b16 %v566
  %v854 = vunpack.c.l.b16 %v567
  %v855 = vunpack.c.l.b16 %v568
  %v856 = vunpack.c.l.b16 %v569
  %v857 = vunpack.c.l.b16 %v570
  %v858 = vunpack.c.l.b16 %v571
  %v859 = vunpack.c.l.b16 %v572
  %v860 = vunpack.c.l.b16 %v573
  %v861 = vunpack.c.l.b16 %v574
  %v862 = vunpack.c.l.b16 %v575
  %v863 = vunpack.c.l.b16 %v576
  %v864 = vunpack.c.l.b16 %v577
  %v865 = vunpack.c.l.b16 %v578
  %v866 = vunpack.c.l.b16 %v579
  %v867 = vunpack.c.l.b16 %v580
  %v868 = vunpack.c.l.b16 %v581
  %v869 = vunpack.c.l.b16 %v582
  %v870 = vunpack.c.l.b16 %v583
  %v871 = vunpack.c.l.b16 %v584
  %v872 = vunpack.c.l.b16 %v585
  %v873 = vunpack.c.l.b16 %v586
  %v874 = vunpack.c.l.b16 %v587
  %v875 = vunpack.c.l.b16 %v588
  %v876 = vunpack.c.l.b16 %v589
  %v877 = vunpack.c.l.b16 %v590
  %v878 = vunpack.c.l.b16 %v591
  %v879 = vunpack.c.l.b16 %v592
  %v880 = vunpack.c.l.b16 %v593
  %v881 = vunpack.c.l.b16 %v594
  %v882 = vunpack.c.l.b16 %v595
  %v883 = vunpack.c.l.b16 %v596
  %v884 = vunpack.c.l.b16 %v597
  %v885 = vunpack.c.l.b16 %v598
  %v886 = vunpack.c.l.b16 %v599
  %v887 = vunpack.c.l.b16 %v600
  %v888 = vunpack.c.l.b16 %v601
  %v889 = vunpack.c.l.b16 %v602
  %v890 = vunpack.c.l.b16 %v603
  %v891 = vunpack.c.l.b16 %v604
  %v892 = vpack.c.b16 %v753, %v752
  %v893 = vpack.c.b16 %v755, %v754
  %v894 = vpack.c.b16 %v757, %v756
  %v895 = vpack.c.b16 %v759, %v758
  %v896 = vpack.c.b16 %v761, %v760
  %v897 = vpack.c.b16 %v763, %v762
  %v898 = vpack.c.b16 %v765, %v764
  %v899 = vpack.c.b16 %v767, %v766
  %v900 = vpack.c.b16 %v769, %v768
  %v901 = vpack.c.b16 %v771, %v770
  %v902 = vpack.c.b16 %v773, %v772
  %v903 = vpack.c.b16 %v775, %v774
  %v904 = vpack.c.b16 %v777, %v776
  %v905 = vpack.c.b16 %v779, %v778
  %v906 = vpack.c.b16 %v781, %v780
  %v907 = vpack.c.b16 %v783, %v782
  %v908 = vpack.c.b16 %v785, %v784
  %v909 = vpack.c.b16 %v787, %v786
  %v910 = vpack.c.b16 %v789, %v788
  %v911 = vpack.c.b16 %v791, %v790
  %v912 = vpack.c.b16 %v793, %v792
  %v913 = vpack.c.b16 %v795, %v794
  %v914 = vpack.c.b16 %v797, %v796
  %v915 = vpack.c.b16 %v799, %v798
  %v916 = vpack.c.b16 %v801, %v800
  %v917 = vpack.c.b16 %v803, %v802
  %v918 = vpack.c.b16 %v805, %v804
  %v919 = vpack.c.b16 %v807, %v806
  %v920 = vpack.c.b16 %v809, %v808
  %v921 = vpack.c.b16 %v811, %v810
  %v922 = vpack.c.b16 %v813, %v812
  %v923 = vpack.c.b16 %v815, %v814
  %v924 = vpack.c.b16 %v817, %v816
  %v925 = vpack.c.b16 %v819, %v818
  %v926 = vpack.c.b16 %v821, %v820
  %v927 = vpack.c.b16 %v823, %v822
  %v928 = vpack.c.b16 %v825, %v824
  %v929 = vpack.c.b16 %v827, %v826
  %v930 = vpack.c.b16 %v829, %v828
  %v931 = vpack.c.b16 %v831, %v830
  %v932 = vpack.c.b16 %v833, %v832
  %v933 = vpack.c.b16 %v835, %v834
  %v934 = vpack.c.b16 %v837, %v836
  %v935 = vpack.c.b16 %v839, %v838
  %v936 = vpack.c.b16 %v841, %v840
  %v937 = vpack.c.b16 %v843, %v842
  %v938 = vpack.c.b16 %v845, %v844
  %v939 = vpack.c.b16 %v847, %v846
  %v940 = vpack.c.b16 %v849, %v848
  %v941 = vpack.c.b16 %v851, %v850
  %v942 = vpack.c.b16 %v853, %v852
  %v943 = vpack.c.b16 %v855, %v854
  %v944 = vpack.c.b16 %v857, %v856
  %v945 = vpack.c.b16 %v859, %v858
  %v946 = vpack.c.b16 %v861, %v860
  %v947 = vpack.c.b16 %v863, %v862
  %v948 = vpack.c.b16 %v865, %v864
  %v949 = vpack.c.b16 %v867, %v866
  %v950 = vpack.c.b16 %v869, %v868
  %v951 = vpack.c.b16 %v871, %v870
  %v952 = vpack.c.b16 %v873, %v872
  %v953 = vpack.c.b16 %v875, %v874
  %v954 = vpack.c.b16 %v877, %v876
  %v955 = vpack.c.b16 %v879, %v878
  %v956 = vpack.c.b16 %v881, %v880
  %v957 = vpack.c.b16 %v883, %v882
  %v958 = vpack.c.b16 %v885, %v884
  %v959 = vpack.c.b16 %v887, %v886
  %v960 = vpack.c.b16 %v889, %v888
  %v961 = vpack.c.b16 %v891, %v890
  %vm1032 = vcmask 785408
  %v1034 = vsel %vm1032, %v320, 0
  %v1037 = vsel %vm1032, %v329, 0
  %v1040 = vsel %vm1032, %v338, 0
  %v1043 = vsel %vm1032, %v347, 0
  %v1046 = vsel %vm1032, %v356, 0
  %v1049 = vsel %vm1032, %v365, 0
  %v1052 = vsel %vm1032, %v374, 0
  %v1055 = vsel %vm1032, %v383, 0
  %v1058 = vsel %vm1032, %v392, 0
  %v1061 = vsel %vm1032, %v401, 0
  %v1064 = vsel %vm1032, %v410, 0
  %v1067 = vsel %vm1032, %v419, 0
  %v1070 = vsel %vm1032, %v428, 0
  %v1073 = vsel %vm1032, %v437, 0
  %v1076 = vsel %vm1032, %v446, 0
  %v1079 = vsel %vm1032, %v455, 0
  %v1082 = vsel %vm1032, %v464, 0
  %1084 = vmatprep.subr.bf16.mxu0 0
  %1085 = vmatpush1.bf16.msra.mxu0 %v899
  %1086 = vmatprep.subr.bf16.mxu0 0
  %1087 = vmatpush1.bf16.msra.mxu0 %v898
  %1088 = vmatprep.subr.bf16.mxu0 0
  %1089 = vmatpush1.bf16.msra.mxu0 %v897
  %1090 = vmatprep.subr.bf16.mxu0 0
  %1091 = vmatpush1.bf16.msra.mxu0 %v896
  %1092 = vmatprep.subr.bf16.mxu0 0
  %1093 = vmatpush1.bf16.msra.mxu0 %v895
  %1094 = vmatprep.subr.bf16.mxu0 0
  %1095 = vmatpush1.bf16.msra.mxu0 %v894
  %1096 = vmatprep.subr.bf16.mxu0 0
  %1097 = vmatpush1.bf16.msra.mxu0 %v893
  %1098 = vmatprep.subr.bf16.mxu0 0
  %1099 = vmatpush1.bf16.msra.mxu0 %v892
  %1100 = vmatprep.subr.bf16.mxu0 0
  %1101 = vmatpush2.bf16.msra.mxu0 %v907
  %1102 = vmatprep.subr.bf16.mxu0 0
  %1103 = vmatpush2.bf16.msra.mxu0 %v906
  %1104 = vmatprep.subr.bf16.mxu0 0
  %1105 = vmatpush2.bf16.msra.mxu0 %v905
  %1106 = vmatprep.subr.bf16.mxu0 0
  %1107 = vmatpush2.bf16.msra.mxu0 %v904
  %1108 = vmatprep.subr.bf16.mxu0 0
  %1109 = vmatpush2.bf16.msra.mxu0 %v903
  %1110 = vmatprep.subr.bf16.mxu0 0
  %1111 = vmatpush2.bf16.msra.mxu0 %v902
  %1112 = vmatprep.subr.bf16.mxu0 0
  %1113 = vmatpush2.bf16.msra.mxu0 %v901
  %1114 = vmatprep.subr.bf16.mxu0 0
  %1115 = vmatpush2.bf16.msra.mxu0 %v900
  %1116 = vmatprep.mubr.bf16.mxu0 %v313
  %1117 = vmatmul.mubr.bf16.gmra.mxu0 %v312
  %v1118 = vpop.f32.mrf.mxu0
  %v1119 = vadd.f32 %v610, %v1118
  %v1120 = vpop.f32.mrf.mxu0
  %v1121 = vpop.f32.mrf.mxu0
  %v1122 = vadd.f32 %v610, %v1121
  %v1123 = vpop.f32.mrf.mxu0
  %1124 = vmatprep.mubr.bf16.mxu0 %v322
  %1125 = vmatmul.mubr.bf16.gmra.mxu0 %v321
  %v1126 = vpop.f32.mrf.mxu0
  %v1127 = vadd.f32 %v610, %v1126
  %v1128 = vpop.f32.mrf.mxu0
  %v1129 = vpop.f32.mrf.mxu0
  %v1130 = vadd.f32 %v610, %v1129
  %v1131 = vpop.f32.mrf.mxu0
  %1132 = vmatprep.mubr.bf16.mxu0 %v331
  %1133 = vmatmul.mubr.bf16.gmra.mxu0 %v330
  %v1134 = vpop.f32.mrf.mxu0
  %v1135 = vadd.f32 %v610, %v1134
  %v1136 = vpop.f32.mrf.mxu0
  %v1137 = vpop.f32.mrf.mxu0
  %v1138 = vadd.f32 %v610, %v1137
  %v1139 = vpop.f32.mrf.mxu0
  %1140 = vmatprep.mubr.bf16.mxu0 %v340
  %1141 = vmatmul.mubr.bf16.gmra.mxu0 %v339
  %v1142 = vpop.f32.mrf.mxu0
  %v1143 = vadd.f32 %v610, %v1142
  %v1144 = vpop.f32.mrf.mxu0
  %v1145 = vpop.f32.mrf.mxu0
  %v1146 = vadd.f32 %v610, %v1145
  %v1147 = vpop.f32.mrf.mxu0
  %1148 = vmatprep.mubr.bf16.mxu0 %v349
  %1149 = vmatmul.mubr.bf16.gmra.mxu0 %v348
  %v1150 = vpop.f32.mrf.mxu0
  %v1151 = vadd.f32 %v610, %v1150
  %v1152 = vpop.f32.mrf.mxu0
  %v1153 = vpop.f32.mrf.mxu0
  %v1154 = vadd.f32 %v610, %v1153
  %v1155 = vpop.f32.mrf.mxu0
  %1156 = vmatprep.mubr.bf16.mxu0 %v358
  %1157 = vmatmul.mubr.bf16.gmra.mxu0 %v357
  %v1158 = vpop.f32.mrf.mxu0
  %v1159 = vadd.f32 %v610, %v1158
  %v1160 = vpop.f32.mrf.mxu0
  %v1161 = vpop.f32.mrf.mxu0
  %v1162 = vadd.f32 %v610, %v1161
  %v1163 = vpop.f32.mrf.mxu0
  %1164 = vmatprep.mubr.bf16.mxu0 %v367
  %1165 = vmatmul.mubr.bf16.gmra.mxu0 %v366
  %v1166 = vpop.f32.mrf.mxu0
  %v1167 = vadd.f32 %v610, %v1166
  %v1168 = vpop.f32.mrf.mxu0
  %v1169 = vpop.f32.mrf.mxu0
  %v1170 = vadd.f32 %v610, %v1169
  %v1171 = vpop.f32.mrf.mxu0
  %1172 = vmatprep.mubr.bf16.mxu0 %v376
  %1173 = vmatmul.mubr.bf16.gmra.mxu0 %v375
  %v1174 = vpop.f32.mrf.mxu0
  %v1175 = vadd.f32 %v610, %v1174
  %v1176 = vpop.f32.mrf.mxu0
  %v1177 = vpop.f32.mrf.mxu0
  %v1178 = vadd.f32 %v610, %v1177
  %v1179 = vpop.f32.mrf.mxu0
  %1180 = vmatprep.mubr.bf16.mxu0 %v385
  %1181 = vmatmul.mubr.bf16.gmra.mxu0 %v384
  %v1182 = vpop.f32.mrf.mxu0
  %v1183 = vadd.f32 %v610, %v1182
  %v1184 = vpop.f32.mrf.mxu0
  %v1185 = vpop.f32.mrf.mxu0
  %v1186 = vadd.f32 %v610, %v1185
  %v1187 = vpop.f32.mrf.mxu0
  %1188 = vmatprep.mubr.bf16.mxu0 %v394
  %1189 = vmatmul.mubr.bf16.gmra.mxu0 %v393
  %v1190 = vpop.f32.mrf.mxu0
  %v1191 = vadd.f32 %v610, %v1190
  %v1192 = vpop.f32.mrf.mxu0
  %v1193 = vpop.f32.mrf.mxu0
  %v1194 = vadd.f32 %v610, %v1193
  %v1195 = vpop.f32.mrf.mxu0
  %1196 = vmatprep.mubr.bf16.mxu0 %v403
  %1197 = vmatmul.mubr.bf16.gmra.mxu0 %v402
  %v1198 = vpop.f32.mrf.mxu0
  %v1199 = vadd.f32 %v610, %v1198
  %v1200 = vpop.f32.mrf.mxu0
  %v1201 = vpop.f32.mrf.mxu0
  %v1202 = vadd.f32 %v610, %v1201
  %v1203 = vpop.f32.mrf.mxu0
  %1204 = vmatprep.mubr.bf16.mxu0 %v412
  %1205 = vmatmul.mubr.bf16.gmra.mxu0 %v411
  %v1206 = vpop.f32.mrf.mxu0
  %v1207 = vadd.f32 %v610, %v1206
  %v1208 = vpop.f32.mrf.mxu0
  %v1209 = vpop.f32.mrf.mxu0
  %v1210 = vadd.f32 %v610, %v1209
  %v1211 = vpop.f32.mrf.mxu0
  %1212 = vmatprep.mubr.bf16.mxu0 %v421
  %1213 = vmatmul.mubr.bf16.gmra.mxu0 %v420
  %v1214 = vpop.f32.mrf.mxu0
  %v1215 = vadd.f32 %v610, %v1214
  %v1216 = vpop.f32.mrf.mxu0
  %v1217 = vpop.f32.mrf.mxu0
  %v1218 = vadd.f32 %v610, %v1217
  %v1219 = vpop.f32.mrf.mxu0
  %1220 = vmatprep.mubr.bf16.mxu0 %v430
  %1221 = vmatmul.mubr.bf16.gmra.mxu0 %v429
  %v1222 = vpop.f32.mrf.mxu0
  %v1223 = vadd.f32 %v610, %v1222
  %v1224 = vpop.f32.mrf.mxu0
  %v1225 = vpop.f32.mrf.mxu0
  %v1226 = vadd.f32 %v610, %v1225
  %v1227 = vpop.f32.mrf.mxu0
  %1228 = vmatprep.mubr.bf16.mxu0 %v439
  %1229 = vmatmul.mubr.bf16.gmra.mxu0 %v438
  %v1230 = vpop.f32.mrf.mxu0
  %v1231 = vadd.f32 %v610, %v1230
  %v1232 = vpop.f32.mrf.mxu0
  %v1233 = vpop.f32.mrf.mxu0
  %v1234 = vadd.f32 %v610, %v1233
  %v1235 = vpop.f32.mrf.mxu0
  %1236 = vmatprep.mubr.bf16.mxu0 %v448
  %1237 = vmatmul.mubr.bf16.gmra.mxu0 %v447
  %v1238 = vpop.f32.mrf.mxu0
  %v1239 = vadd.f32 %v610, %v1238
  %v1240 = vpop.f32.mrf.mxu0
  %v1241 = vpop.f32.mrf.mxu0
  %v1242 = vadd.f32 %v610, %v1241
  %v1243 = vpop.f32.mrf.mxu0
  %1244 = vmatprep.mubr.bf16.mxu0 %v457
  %1245 = vmatmul.mubr.bf16.gmra.mxu0 %v456
  %v1246 = vpop.f32.mrf.mxu0
  %v1247 = vadd.f32 %v610, %v1246
  %v1248 = vpop.f32.mrf.mxu0
  %v1249 = vpop.f32.mrf.mxu0
  %v1250 = vpop.f32.mrf.mxu0
  %1251 = vdwg.mxu0
  %1252 = vmatprep.subr.bf16.mxu0 0
  %1253 = vmatpush1.bf16.msra.mxu0 %v915
  %1254 = vmatprep.subr.bf16.mxu0 0
  %1255 = vmatpush1.bf16.msra.mxu0 %v914
  %1256 = vmatprep.subr.bf16.mxu0 0
  %1257 = vmatpush1.bf16.msra.mxu0 %v913
  %1258 = vmatprep.subr.bf16.mxu0 0
  %1259 = vmatpush1.bf16.msra.mxu0 %v912
  %1260 = vmatprep.subr.bf16.mxu0 0
  %1261 = vmatpush1.bf16.msra.mxu0 %v911
  %1262 = vmatprep.subr.bf16.mxu0 0
  %1263 = vmatpush1.bf16.msra.mxu0 %v910
  %1264 = vmatprep.subr.bf16.mxu0 0
  %1265 = vmatpush1.bf16.msra.mxu0 %v909
  %1266 = vmatprep.subr.bf16.mxu0 0
  %1267 = vmatpush1.bf16.msra.mxu0 %v908
  %1268 = vmatprep.subr.bf16.mxu0 0
  %1269 = vmatpush2.bf16.msra.mxu0 %v923
  %1270 = vmatprep.subr.bf16.mxu0 0
  %1271 = vmatpush2.bf16.msra.mxu0 %v922
  %1272 = vmatprep.subr.bf16.mxu0 0
  %1273 = vmatpush2.bf16.msra.mxu0 %v921
  %1274 = vmatprep.subr.bf16.mxu0 0
  %1275 = vmatpush2.bf16.msra.mxu0 %v920
  %1276 = vmatprep.subr.bf16.mxu0 0
  %1277 = vmatpush2.bf16.msra.mxu0 %v919
  %1278 = vmatprep.subr.bf16.mxu0 0
  %1279 = vmatpush2.bf16.msra.mxu0 %v918
  %1280 = vmatprep.subr.bf16.mxu0 0
  %1281 = vmatpush2.bf16.msra.mxu0 %v917
  %1282 = vmatprep.subr.bf16.mxu0 0
  %1283 = vmatpush2.bf16.msra.mxu0 %v916
  %1284 = vmatprep.mubr.bf16.mxu0 %v315
  %1285 = vmatmul.mubr.bf16.gmra.mxu0 %v314
  %v1286 = vpop.f32.mrf.mxu0
  %v1287 = vadd.f32 %v1119, %v1286
  %v1288 = vpop.f32.mrf.mxu0
  %v1289 = vpop.f32.mrf.mxu0
  %v1290 = vadd.f32 %v1122, %v1289
  %v1291 = vpop.f32.mrf.mxu0
  %1292 = vmatprep.mubr.bf16.mxu0 %v324
  %1293 = vmatmul.mubr.bf16.gmra.mxu0 %v323
  %v1294 = vpop.f32.mrf.mxu0
  %v1295 = vadd.f32 %v1127, %v1294
  %v1296 = vpop.f32.mrf.mxu0
  %v1297 = vpop.f32.mrf.mxu0
  %v1298 = vadd.f32 %v1130, %v1297
  %v1299 = vpop.f32.mrf.mxu0
  %1300 = vmatprep.mubr.bf16.mxu0 %v333
  %1301 = vmatmul.mubr.bf16.gmra.mxu0 %v332
  %v1302 = vpop.f32.mrf.mxu0
  %v1303 = vadd.f32 %v1135, %v1302
  %v1304 = vpop.f32.mrf.mxu0
  %v1305 = vpop.f32.mrf.mxu0
  %v1306 = vadd.f32 %v1138, %v1305
  %v1307 = vpop.f32.mrf.mxu0
  %1308 = vmatprep.mubr.bf16.mxu0 %v342
  %1309 = vmatmul.mubr.bf16.gmra.mxu0 %v341
  %v1310 = vpop.f32.mrf.mxu0
  %v1311 = vadd.f32 %v1143, %v1310
  %v1312 = vpop.f32.mrf.mxu0
  %v1313 = vpop.f32.mrf.mxu0
  %v1314 = vadd.f32 %v1146, %v1313
  %v1315 = vpop.f32.mrf.mxu0
  %1316 = vmatprep.mubr.bf16.mxu0 %v351
  %1317 = vmatmul.mubr.bf16.gmra.mxu0 %v350
  %v1318 = vpop.f32.mrf.mxu0
  %v1319 = vadd.f32 %v1151, %v1318
  %v1320 = vpop.f32.mrf.mxu0
  %v1321 = vpop.f32.mrf.mxu0
  %v1322 = vadd.f32 %v1154, %v1321
  %v1323 = vpop.f32.mrf.mxu0
  %1324 = vmatprep.mubr.bf16.mxu0 %v360
  %1325 = vmatmul.mubr.bf16.gmra.mxu0 %v359
  %v1326 = vpop.f32.mrf.mxu0
  %v1327 = vadd.f32 %v1159, %v1326
  %v1328 = vpop.f32.mrf.mxu0
  %v1329 = vpop.f32.mrf.mxu0
  %v1330 = vadd.f32 %v1162, %v1329
  %v1331 = vpop.f32.mrf.mxu0
  %1332 = vmatprep.mubr.bf16.mxu0 %v369
  %1333 = vmatmul.mubr.bf16.gmra.mxu0 %v368
  %v1334 = vpop.f32.mrf.mxu0
  %v1335 = vadd.f32 %v1167, %v1334
  %v1336 = vpop.f32.mrf.mxu0
  %v1337 = vpop.f32.mrf.mxu0
  %v1338 = vadd.f32 %v1170, %v1337
  %v1339 = vpop.f32.mrf.mxu0
  %1340 = vmatprep.mubr.bf16.mxu0 %v378
  %1341 = vmatmul.mubr.bf16.gmra.mxu0 %v377
  %v1342 = vpop.f32.mrf.mxu0
  %v1343 = vadd.f32 %v1175, %v1342
  %v1344 = vpop.f32.mrf.mxu0
  %v1345 = vpop.f32.mrf.mxu0
  %v1346 = vadd.f32 %v1178, %v1345
  %v1347 = vpop.f32.mrf.mxu0
  %1348 = vmatprep.mubr.bf16.mxu0 %v387
  %1349 = vmatmul.mubr.bf16.gmra.mxu0 %v386
  %v1350 = vpop.f32.mrf.mxu0
  %v1351 = vadd.f32 %v1183, %v1350
  %v1352 = vpop.f32.mrf.mxu0
  %v1353 = vpop.f32.mrf.mxu0
  %v1354 = vadd.f32 %v1186, %v1353
  %v1355 = vpop.f32.mrf.mxu0
  %1356 = vmatprep.mubr.bf16.mxu0 %v396
  %1357 = vmatmul.mubr.bf16.gmra.mxu0 %v395
  %v1358 = vpop.f32.mrf.mxu0
  %v1359 = vadd.f32 %v1191, %v1358
  %v1360 = vpop.f32.mrf.mxu0
  %v1361 = vpop.f32.mrf.mxu0
  %v1362 = vadd.f32 %v1194, %v1361
  %v1363 = vpop.f32.mrf.mxu0
  %1364 = vmatprep.mubr.bf16.mxu0 %v405
  %1365 = vmatmul.mubr.bf16.gmra.mxu0 %v404
  %v1366 = vpop.f32.mrf.mxu0
  %v1367 = vadd.f32 %v1199, %v1366
  %v1368 = vpop.f32.mrf.mxu0
  %v1369 = vpop.f32.mrf.mxu0
  %v1370 = vadd.f32 %v1202, %v1369
  %v1371 = vpop.f32.mrf.mxu0
  %1372 = vmatprep.mubr.bf16.mxu0 %v414
  %1373 = vmatmul.mubr.bf16.gmra.mxu0 %v413
  %v1374 = vpop.f32.mrf.mxu0
  %v1375 = vadd.f32 %v1207, %v1374
  %v1376 = vpop.f32.mrf.mxu0
  %v1377 = vpop.f32.mrf.mxu0
  %v1378 = vadd.f32 %v1210, %v1377
  %v1379 = vpop.f32.mrf.mxu0
  %1380 = vmatprep.mubr.bf16.mxu0 %v423
  %1381 = vmatmul.mubr.bf16.gmra.mxu0 %v422
  %v1382 = vpop.f32.mrf.mxu0
  %v1383 = vadd.f32 %v1215, %v1382
  %v1384 = vpop.f32.mrf.mxu0
  %v1385 = vpop.f32.mrf.mxu0
  %v1386 = vadd.f32 %v1218, %v1385
  %v1387 = vpop.f32.mrf.mxu0
  %1388 = vmatprep.mubr.bf16.mxu0 %v432
  %1389 = vmatmul.mubr.bf16.gmra.mxu0 %v431
  %v1390 = vpop.f32.mrf.mxu0
  %v1391 = vadd.f32 %v1223, %v1390
  %v1392 = vpop.f32.mrf.mxu0
  %v1393 = vpop.f32.mrf.mxu0
  %v1394 = vadd.f32 %v1226, %v1393
  %v1395 = vpop.f32.mrf.mxu0
  %1396 = vmatprep.mubr.bf16.mxu0 %v441
  %1397 = vmatmul.mubr.bf16.gmra.mxu0 %v440
  %v1398 = vpop.f32.mrf.mxu0
  %v1399 = vadd.f32 %v1231, %v1398
  %v1400 = vpop.f32.mrf.mxu0
  %v1401 = vpop.f32.mrf.mxu0
  %v1402 = vadd.f32 %v1234, %v1401
  %v1403 = vpop.f32.mrf.mxu0
  %1404 = vmatprep.mubr.bf16.mxu0 %v450
  %1405 = vmatmul.mubr.bf16.gmra.mxu0 %v449
  %v1406 = vpop.f32.mrf.mxu0
  %v1407 = vadd.f32 %v1239, %v1406
  %v1408 = vpop.f32.mrf.mxu0
  %v1409 = vpop.f32.mrf.mxu0
  %v1410 = vadd.f32 %v1242, %v1409
  %v1411 = vpop.f32.mrf.mxu0
  %1412 = vmatprep.mubr.bf16.mxu0 %v459
  %1413 = vmatmul.mubr.bf16.gmra.mxu0 %v458
  %v1414 = vpop.f32.mrf.mxu0
  %v1415 = vadd.f32 %v1247, %v1414
  %v1416 = vpop.f32.mrf.mxu0
  %v1417 = vpop.f32.mrf.mxu0
  %v1418 = vpop.f32.mrf.mxu0
  %1419 = vdwg.mxu0
  %1420 = vmatprep.subr.bf16.mxu0 0
  %1421 = vmatpush1.bf16.msra.mxu0 %v931
  %1422 = vmatprep.subr.bf16.mxu0 0
  %1423 = vmatpush1.bf16.msra.mxu0 %v930
  %1424 = vmatprep.subr.bf16.mxu0 0
  %1425 = vmatpush1.bf16.msra.mxu0 %v929
  %1426 = vmatprep.subr.bf16.mxu0 0
  %1427 = vmatpush1.bf16.msra.mxu0 %v928
  %1428 = vmatprep.subr.bf16.mxu0 0
  %1429 = vmatpush1.bf16.msra.mxu0 %v927
  %1430 = vmatprep.subr.bf16.mxu0 0
  %1431 = vmatpush1.bf16.msra.mxu0 %v926
  %1432 = vmatprep.subr.bf16.mxu0 0
  %1433 = vmatpush1.bf16.msra.mxu0 %v925
  %1434 = vmatprep.subr.bf16.mxu0 0
  %1435 = vmatpush1.bf16.msra.mxu0 %v924
  %1436 = vmatprep.subr.bf16.mxu0 0
  %1437 = vmatpush2.bf16.msra.mxu0 %v939
  %1438 = vmatprep.subr.bf16.mxu0 0
  %1439 = vmatpush2.bf16.msra.mxu0 %v938
  %1440 = vmatprep.subr.bf16.mxu0 0
  %1441 = vmatpush2.bf16.msra.mxu0 %v937
  %1442 = vmatprep.subr.bf16.mxu0 0
  %1443 = vmatpush2.bf16.msra.mxu0 %v936
  %1444 = vmatprep.subr.bf16.mxu0 0
  %1445 = vmatpush2.bf16.msra.mxu0 %v935
  %1446 = vmatprep.subr.bf16.mxu0 0
  %1447 = vmatpush2.bf16.msra.mxu0 %v934
  %1448 = vmatprep.subr.bf16.mxu0 0
  %1449 = vmatpush2.bf16.msra.mxu0 %v933
  %1450 = vmatprep.subr.bf16.mxu0 0
  %1451 = vmatpush2.bf16.msra.mxu0 %v932
  %1452 = vmatprep.mubr.bf16.mxu0 %v317
  %1453 = vmatmul.mubr.bf16.gmra.mxu0 %v316
  %v1454 = vpop.f32.mrf.mxu0
  %v1455 = vadd.f32 %v1287, %v1454
  %v1456 = vpop.f32.mrf.mxu0
  %v1457 = vpop.f32.mrf.mxu0
  %v1458 = vadd.f32 %v1290, %v1457
  %v1459 = vpop.f32.mrf.mxu0
  %1460 = vmatprep.mubr.bf16.mxu0 %v326
  %1461 = vmatmul.mubr.bf16.gmra.mxu0 %v325
  %v1462 = vpop.f32.mrf.mxu0
  %v1463 = vadd.f32 %v1295, %v1462
  %v1464 = vpop.f32.mrf.mxu0
  %v1465 = vpop.f32.mrf.mxu0
  %v1466 = vadd.f32 %v1298, %v1465
  %v1467 = vpop.f32.mrf.mxu0
  %1468 = vmatprep.mubr.bf16.mxu0 %v335
  %1469 = vmatmul.mubr.bf16.gmra.mxu0 %v334
  %v1470 = vpop.f32.mrf.mxu0
  %v1471 = vadd.f32 %v1303, %v1470
  %v1472 = vpop.f32.mrf.mxu0
  %v1473 = vpop.f32.mrf.mxu0
  %v1474 = vadd.f32 %v1306, %v1473
  %v1475 = vpop.f32.mrf.mxu0
  %1476 = vmatprep.mubr.bf16.mxu0 %v344
  %1477 = vmatmul.mubr.bf16.gmra.mxu0 %v343
  %v1478 = vpop.f32.mrf.mxu0
  %v1479 = vadd.f32 %v1311, %v1478
  %v1480 = vpop.f32.mrf.mxu0
  %v1481 = vpop.f32.mrf.mxu0
  %v1482 = vadd.f32 %v1314, %v1481
  %v1483 = vpop.f32.mrf.mxu0
  %1484 = vmatprep.mubr.bf16.mxu0 %v353
  %1485 = vmatmul.mubr.bf16.gmra.mxu0 %v352
  %v1486 = vpop.f32.mrf.mxu0
  %v1487 = vadd.f32 %v1319, %v1486
  %v1488 = vpop.f32.mrf.mxu0
  %v1489 = vpop.f32.mrf.mxu0
  %v1490 = vadd.f32 %v1322, %v1489
  %v1491 = vpop.f32.mrf.mxu0
  %1492 = vmatprep.mubr.bf16.mxu0 %v362
  %1493 = vmatmul.mubr.bf16.gmra.mxu0 %v361
  %v1494 = vpop.f32.mrf.mxu0
  %v1495 = vadd.f32 %v1327, %v1494
  %v1496 = vpop.f32.mrf.mxu0
  %v1497 = vpop.f32.mrf.mxu0
  %v1498 = vadd.f32 %v1330, %v1497
  %v1499 = vpop.f32.mrf.mxu0
  %1500 = vmatprep.mubr.bf16.mxu0 %v371
  %1501 = vmatmul.mubr.bf16.gmra.mxu0 %v370
  %v1502 = vpop.f32.mrf.mxu0
  %v1503 = vadd.f32 %v1335, %v1502
  %v1504 = vpop.f32.mrf.mxu0
  %v1505 = vpop.f32.mrf.mxu0
  %v1506 = vadd.f32 %v1338, %v1505
  %v1507 = vpop.f32.mrf.mxu0
  %1508 = vmatprep.mubr.bf16.mxu0 %v380
  %1509 = vmatmul.mubr.bf16.gmra.mxu0 %v379
  %v1510 = vpop.f32.mrf.mxu0
  %v1511 = vadd.f32 %v1343, %v1510
  %v1512 = vpop.f32.mrf.mxu0
  %v1513 = vpop.f32.mrf.mxu0
  %v1514 = vadd.f32 %v1346, %v1513
  %v1515 = vpop.f32.mrf.mxu0
  %1516 = vmatprep.mubr.bf16.mxu0 %v389
  %1517 = vmatmul.mubr.bf16.gmra.mxu0 %v388
  %v1518 = vpop.f32.mrf.mxu0
  %v1519 = vadd.f32 %v1351, %v1518
  %v1520 = vpop.f32.mrf.mxu0
  %v1521 = vpop.f32.mrf.mxu0
  %v1522 = vadd.f32 %v1354, %v1521
  %v1523 = vpop.f32.mrf.mxu0
  %1524 = vmatprep.mubr.bf16.mxu0 %v398
  %1525 = vmatmul.mubr.bf16.gmra.mxu0 %v397
  %v1526 = vpop.f32.mrf.mxu0
  %v1527 = vadd.f32 %v1359, %v1526
  %v1528 = vpop.f32.mrf.mxu0
  %v1529 = vpop.f32.mrf.mxu0
  %v1530 = vadd.f32 %v1362, %v1529
  %v1531 = vpop.f32.mrf.mxu0
  %1532 = vmatprep.mubr.bf16.mxu0 %v407
  %1533 = vmatmul.mubr.bf16.gmra.mxu0 %v406
  %v1534 = vpop.f32.mrf.mxu0
  %v1535 = vadd.f32 %v1367, %v1534
  %v1536 = vpop.f32.mrf.mxu0
  %v1537 = vpop.f32.mrf.mxu0
  %v1538 = vadd.f32 %v1370, %v1537
  %v1539 = vpop.f32.mrf.mxu0
  %1540 = vmatprep.mubr.bf16.mxu0 %v416
  %1541 = vmatmul.mubr.bf16.gmra.mxu0 %v415
  %v1542 = vpop.f32.mrf.mxu0
  %v1543 = vadd.f32 %v1375, %v1542
  %v1544 = vpop.f32.mrf.mxu0
  %v1545 = vpop.f32.mrf.mxu0
  %v1546 = vadd.f32 %v1378, %v1545
  %v1547 = vpop.f32.mrf.mxu0
  %1548 = vmatprep.mubr.bf16.mxu0 %v425
  %1549 = vmatmul.mubr.bf16.gmra.mxu0 %v424
  %v1550 = vpop.f32.mrf.mxu0
  %v1551 = vadd.f32 %v1383, %v1550
  %v1552 = vpop.f32.mrf.mxu0
  %v1553 = vpop.f32.mrf.mxu0
  %v1554 = vadd.f32 %v1386, %v1553
  %v1555 = vpop.f32.mrf.mxu0
  %1556 = vmatprep.mubr.bf16.mxu0 %v434
  %1557 = vmatmul.mubr.bf16.gmra.mxu0 %v433
  %v1558 = vpop.f32.mrf.mxu0
  %v1559 = vadd.f32 %v1391, %v1558
  %v1560 = vpop.f32.mrf.mxu0
  %v1561 = vpop.f32.mrf.mxu0
  %v1562 = vadd.f32 %v1394, %v1561
  %v1563 = vpop.f32.mrf.mxu0
  %1564 = vmatprep.mubr.bf16.mxu0 %v443
  %1565 = vmatmul.mubr.bf16.gmra.mxu0 %v442
  %v1566 = vpop.f32.mrf.mxu0
  %v1567 = vadd.f32 %v1399, %v1566
  %v1568 = vpop.f32.mrf.mxu0
  %v1569 = vpop.f32.mrf.mxu0
  %v1570 = vadd.f32 %v1402, %v1569
  %v1571 = vpop.f32.mrf.mxu0
  %1572 = vmatprep.mubr.bf16.mxu0 %v452
  %1573 = vmatmul.mubr.bf16.gmra.mxu0 %v451
  %v1574 = vpop.f32.mrf.mxu0
  %v1575 = vadd.f32 %v1407, %v1574
  %v1576 = vpop.f32.mrf.mxu0
  %v1577 = vpop.f32.mrf.mxu0
  %v1578 = vadd.f32 %v1410, %v1577
  %v1579 = vpop.f32.mrf.mxu0
  %1580 = vmatprep.mubr.bf16.mxu0 %v461
  %1581 = vmatmul.mubr.bf16.gmra.mxu0 %v460
  %v1582 = vpop.f32.mrf.mxu0
  %v1583 = vadd.f32 %v1415, %v1582
  %v1584 = vpop.f32.mrf.mxu0
  %v1585 = vpop.f32.mrf.mxu0
  %v1586 = vpop.f32.mrf.mxu0
  %1587 = vdwg.mxu0
  %1588 = vmatprep.subr.bf16.mxu0 0
  %1589 = vmatpush1.bf16.msra.mxu0 %v947
  %1590 = vmatprep.subr.bf16.mxu0 0
  %1591 = vmatpush1.bf16.msra.mxu0 %v946
  %1592 = vmatprep.subr.bf16.mxu0 0
  %1593 = vmatpush1.bf16.msra.mxu0 %v945
  %1594 = vmatprep.subr.bf16.mxu0 0
  %1595 = vmatpush1.bf16.msra.mxu0 %v944
  %1596 = vmatprep.subr.bf16.mxu0 0
  %1597 = vmatpush1.bf16.msra.mxu0 %v943
  %1598 = vmatprep.subr.bf16.mxu0 0
  %1599 = vmatpush1.bf16.msra.mxu0 %v942
  %1600 = vmatprep.subr.bf16.mxu0 0
  %1601 = vmatpush1.bf16.msra.mxu0 %v941
  %1602 = vmatprep.subr.bf16.mxu0 0
  %1603 = vmatpush1.bf16.msra.mxu0 %v940
  %1604 = vmatprep.subr.bf16.mxu0 0
  %1605 = vmatpush2.bf16.msra.mxu0 %v955
  %1606 = vmatprep.subr.bf16.mxu0 0
  %1607 = vmatpush2.bf16.msra.mxu0 %v954
  %1608 = vmatprep.subr.bf16.mxu0 0
  %1609 = vmatpush2.bf16.msra.mxu0 %v953
  %1610 = vmatprep.subr.bf16.mxu0 0
  %1611 = vmatpush2.bf16.msra.mxu0 %v952
  %1612 = vmatprep.subr.bf16.mxu0 0
  %1613 = vmatpush2.bf16.msra.mxu0 %v951
  %1614 = vmatprep.subr.bf16.mxu0 0
  %1615 = vmatpush2.bf16.msra.mxu0 %v950
  %1616 = vmatprep.subr.bf16.mxu0 0
  %1617 = vmatpush2.bf16.msra.mxu0 %v949
  %1618 = vmatprep.subr.bf16.mxu0 0
  %1619 = vmatpush2.bf16.msra.mxu0 %v948
  %1620 = vmatprep.mubr.bf16.mxu0 %v319
  %1621 = vmatmul.mubr.bf16.gmra.mxu0 %v318
  %v1622 = vpop.f32.mrf.mxu0
  %v1623 = vadd.f32 %v1455, %v1622
  %v1624 = vpop.f32.mrf.mxu0
  %v1625 = vpop.f32.mrf.mxu0
  %v1626 = vadd.f32 %v1458, %v1625
  %v1627 = vpop.f32.mrf.mxu0
  %1628 = vmatprep.mubr.bf16.mxu0 %v328
  %1629 = vmatmul.mubr.bf16.gmra.mxu0 %v327
  %v1630 = vpop.f32.mrf.mxu0
  %v1631 = vadd.f32 %v1463, %v1630
  %v1632 = vpop.f32.mrf.mxu0
  %v1633 = vpop.f32.mrf.mxu0
  %v1634 = vadd.f32 %v1466, %v1633
  %v1635 = vpop.f32.mrf.mxu0
  %1636 = vmatprep.mubr.bf16.mxu0 %v337
  %1637 = vmatmul.mubr.bf16.gmra.mxu0 %v336
  %v1638 = vpop.f32.mrf.mxu0
  %v1639 = vadd.f32 %v1471, %v1638
  %v1640 = vpop.f32.mrf.mxu0
  %v1641 = vpop.f32.mrf.mxu0
  %v1642 = vadd.f32 %v1474, %v1641
  %v1643 = vpop.f32.mrf.mxu0
  %1644 = vmatprep.mubr.bf16.mxu0 %v346
  %1645 = vmatmul.mubr.bf16.gmra.mxu0 %v345
  %v1646 = vpop.f32.mrf.mxu0
  %v1647 = vadd.f32 %v1479, %v1646
  %v1648 = vpop.f32.mrf.mxu0
  %v1649 = vpop.f32.mrf.mxu0
  %v1650 = vadd.f32 %v1482, %v1649
  %v1651 = vpop.f32.mrf.mxu0
  %1652 = vmatprep.mubr.bf16.mxu0 %v355
  %1653 = vmatmul.mubr.bf16.gmra.mxu0 %v354
  %v1654 = vpop.f32.mrf.mxu0
  %v1655 = vadd.f32 %v1487, %v1654
  %v1656 = vpop.f32.mrf.mxu0
  %v1657 = vpop.f32.mrf.mxu0
  %v1658 = vadd.f32 %v1490, %v1657
  %v1659 = vpop.f32.mrf.mxu0
  %1660 = vmatprep.mubr.bf16.mxu0 %v364
  %1661 = vmatmul.mubr.bf16.gmra.mxu0 %v363
  %v1662 = vpop.f32.mrf.mxu0
  %v1663 = vadd.f32 %v1495, %v1662
  %v1664 = vpop.f32.mrf.mxu0
  %v1665 = vpop.f32.mrf.mxu0
  %v1666 = vadd.f32 %v1498, %v1665
  %v1667 = vpop.f32.mrf.mxu0
  %1668 = vmatprep.mubr.bf16.mxu0 %v373
  %1669 = vmatmul.mubr.bf16.gmra.mxu0 %v372
  %v1670 = vpop.f32.mrf.mxu0
  %v1671 = vadd.f32 %v1503, %v1670
  %v1672 = vpop.f32.mrf.mxu0
  %v1673 = vpop.f32.mrf.mxu0
  %v1674 = vadd.f32 %v1506, %v1673
  %v1675 = vpop.f32.mrf.mxu0
  %1676 = vmatprep.mubr.bf16.mxu0 %v382
  %1677 = vmatmul.mubr.bf16.gmra.mxu0 %v381
  %v1678 = vpop.f32.mrf.mxu0
  %v1679 = vadd.f32 %v1511, %v1678
  %v1680 = vpop.f32.mrf.mxu0
  %v1681 = vpop.f32.mrf.mxu0
  %v1682 = vadd.f32 %v1514, %v1681
  %v1683 = vpop.f32.mrf.mxu0
  %1684 = vmatprep.mubr.bf16.mxu0 %v391
  %1685 = vmatmul.mubr.bf16.gmra.mxu0 %v390
  %v1686 = vpop.f32.mrf.mxu0
  %v1687 = vadd.f32 %v1519, %v1686
  %v1688 = vpop.f32.mrf.mxu0
  %v1689 = vpop.f32.mrf.mxu0
  %v1690 = vadd.f32 %v1522, %v1689
  %v1691 = vpop.f32.mrf.mxu0
  %1692 = vmatprep.mubr.bf16.mxu0 %v400
  %1693 = vmatmul.mubr.bf16.gmra.mxu0 %v399
  %v1694 = vpop.f32.mrf.mxu0
  %v1695 = vadd.f32 %v1527, %v1694
  %v1696 = vpop.f32.mrf.mxu0
  %v1697 = vpop.f32.mrf.mxu0
  %v1698 = vadd.f32 %v1530, %v1697
  %v1699 = vpop.f32.mrf.mxu0
  %1700 = vmatprep.mubr.bf16.mxu0 %v409
  %1701 = vmatmul.mubr.bf16.gmra.mxu0 %v408
  %v1702 = vpop.f32.mrf.mxu0
  %v1703 = vadd.f32 %v1535, %v1702
  %v1704 = vpop.f32.mrf.mxu0
  %v1705 = vpop.f32.mrf.mxu0
  %v1706 = vadd.f32 %v1538, %v1705
  %v1707 = vpop.f32.mrf.mxu0
  %1708 = vmatprep.mubr.bf16.mxu0 %v418
  %1709 = vmatmul.mubr.bf16.gmra.mxu0 %v417
  %v1710 = vpop.f32.mrf.mxu0
  %v1711 = vadd.f32 %v1543, %v1710
  %v1712 = vpop.f32.mrf.mxu0
  %v1713 = vpop.f32.mrf.mxu0
  %v1714 = vadd.f32 %v1546, %v1713
  %v1715 = vpop.f32.mrf.mxu0
  %1716 = vmatprep.mubr.bf16.mxu0 %v427
  %1717 = vmatmul.mubr.bf16.gmra.mxu0 %v426
  %v1718 = vpop.f32.mrf.mxu0
  %v1719 = vadd.f32 %v1551, %v1718
  %v1720 = vpop.f32.mrf.mxu0
  %v1721 = vpop.f32.mrf.mxu0
  %v1722 = vadd.f32 %v1554, %v1721
  %v1723 = vpop.f32.mrf.mxu0
  %1724 = vmatprep.mubr.bf16.mxu0 %v436
  %1725 = vmatmul.mubr.bf16.gmra.mxu0 %v435
  %v1726 = vpop.f32.mrf.mxu0
  %v1727 = vadd.f32 %v1559, %v1726
  %v1728 = vpop.f32.mrf.mxu0
  %v1729 = vpop.f32.mrf.mxu0
  %v1730 = vadd.f32 %v1562, %v1729
  %v1731 = vpop.f32.mrf.mxu0
  %1732 = vmatprep.mubr.bf16.mxu0 %v445
  %1733 = vmatmul.mubr.bf16.gmra.mxu0 %v444
  %v1734 = vpop.f32.mrf.mxu0
  %v1735 = vadd.f32 %v1567, %v1734
  %v1736 = vpop.f32.mrf.mxu0
  %v1737 = vpop.f32.mrf.mxu0
  %v1738 = vadd.f32 %v1570, %v1737
  %v1739 = vpop.f32.mrf.mxu0
  %1740 = vmatprep.mubr.bf16.mxu0 %v454
  %1741 = vmatmul.mubr.bf16.gmra.mxu0 %v453
  %v1742 = vpop.f32.mrf.mxu0
  %v1743 = vadd.f32 %v1575, %v1742
  %v1744 = vpop.f32.mrf.mxu0
  %v1745 = vpop.f32.mrf.mxu0
  %v1746 = vadd.f32 %v1578, %v1745
  %v1747 = vpop.f32.mrf.mxu0
  %1748 = vmatprep.mubr.bf16.mxu0 %v463
  %1749 = vmatmul.mubr.bf16.gmra.mxu0 %v462
  %v1750 = vpop.f32.mrf.mxu0
  %v1751 = vadd.f32 %v1583, %v1750
  %v1752 = vpop.f32.mrf.mxu0
  %v1753 = vpop.f32.mrf.mxu0
  %v1754 = vpop.f32.mrf.mxu0
  %1755 = vdwg.mxu0
  %1756 = vmatprep.subr.bf16.mxu0 0
  %1757 = vmatpush1.bf16.msra.mxu0 0
  %1758 = vmatprep.subr.bf16.mxu0 0
  %1759 = vmatpush1.bf16.msra.mxu0 0
  %1760 = vmatprep.subr.bf16.mxu0 0
  %1761 = vmatpush1.bf16.msra.mxu0 %v961
  %1762 = vmatprep.subr.bf16.mxu0 0
  %1763 = vmatpush1.bf16.msra.mxu0 %v960
  %1764 = vmatprep.subr.bf16.mxu0 0
  %1765 = vmatpush1.bf16.msra.mxu0 %v959
  %1766 = vmatprep.subr.bf16.mxu0 0
  %1767 = vmatpush1.bf16.msra.mxu0 %v958
  %1768 = vmatprep.subr.bf16.mxu0 0
  %1769 = vmatpush1.bf16.msra.mxu0 %v957
  %1770 = vmatprep.subr.bf16.mxu0 0
  %1771 = vmatpush1.bf16.msra.mxu0 %v956
  %1772 = vmatprep.subr.bf16.mxu0 0
  %1773 = vmatpush2.bf16.msra.mxu0 0
  %1774 = vmatprep.subr.bf16.mxu0 0
  %1775 = vmatpush2.bf16.msra.mxu0 0
  %1776 = vmatprep.subr.bf16.mxu0 0
  %1777 = vmatpush2.bf16.msra.mxu0 0
  %1778 = vmatprep.subr.bf16.mxu0 0
  %1779 = vmatpush2.bf16.msra.mxu0 0
  %1780 = vmatprep.subr.bf16.mxu0 0
  %1781 = vmatpush2.bf16.msra.mxu0 0
  %1782 = vmatprep.subr.bf16.mxu0 0
  %1783 = vmatpush2.bf16.msra.mxu0 0
  %1784 = vmatprep.subr.bf16.mxu0 0
  %1785 = vmatpush2.bf16.msra.mxu0 0
  %1786 = vmatprep.subr.bf16.mxu0 0
  %1787 = vmatpush2.bf16.msra.mxu0 0
  %1788 = vmatprep.mubr.bf16.mxu0 0
  %1789 = vmatmul.mubr.bf16.gmra.mxu0 %v1034
  %v1790 = vpop.f32.mrf.mxu0
  %v1791 = vadd.f32 %v1623, %v1790
  %v1792 = vpop.f32.mrf.mxu0
  %v1793 = vpop.f32.mrf.mxu0
  %v1794 = vadd.f32 %v1626, %v1793
  %v1795 = vpop.f32.mrf.mxu0
  %1796 = vmatprep.mubr.bf16.mxu0 0
  %1797 = vmatmul.mubr.bf16.gmra.mxu0 %v1037
  %v1798 = vpop.f32.mrf.mxu0
  %v1799 = vadd.f32 %v1631, %v1798
  %v1800 = vpop.f32.mrf.mxu0
  %v1801 = vpop.f32.mrf.mxu0
  %v1802 = vadd.f32 %v1634, %v1801
  %v1803 = vpop.f32.mrf.mxu0
  %1804 = vmatprep.mubr.bf16.mxu0 0
  %1805 = vmatmul.mubr.bf16.gmra.mxu0 %v1040
  %v1806 = vpop.f32.mrf.mxu0
  %v1807 = vadd.f32 %v1639, %v1806
  %v1808 = vpop.f32.mrf.mxu0
  %v1809 = vpop.f32.mrf.mxu0
  %v1810 = vadd.f32 %v1642, %v1809
  %v1811 = vpop.f32.mrf.mxu0
  %1812 = vmatprep.mubr.bf16.mxu0 0
  %1813 = vmatmul.mubr.bf16.gmra.mxu0 %v1043
  %v1814 = vpop.f32.mrf.mxu0
  %v1815 = vadd.f32 %v1647, %v1814
  %v1816 = vpop.f32.mrf.mxu0
  %v1817 = vpop.f32.mrf.mxu0
  %v1818 = vadd.f32 %v1650, %v1817
  %v1819 = vpop.f32.mrf.mxu0
  %1820 = vmatprep.mubr.bf16.mxu0 0
  %1821 = vmatmul.mubr.bf16.gmra.mxu0 %v1046
  %v1822 = vpop.f32.mrf.mxu0
  %v1823 = vadd.f32 %v1655, %v1822
  %v1824 = vpop.f32.mrf.mxu0
  %v1825 = vpop.f32.mrf.mxu0
  %v1826 = vadd.f32 %v1658, %v1825
  %v1827 = vpop.f32.mrf.mxu0
  %1828 = vmatprep.mubr.bf16.mxu0 0
  %1829 = vmatmul.mubr.bf16.gmra.mxu0 %v1049
  %v1830 = vpop.f32.mrf.mxu0
  %v1831 = vadd.f32 %v1663, %v1830
  %v1832 = vpop.f32.mrf.mxu0
  %v1833 = vpop.f32.mrf.mxu0
  %v1834 = vadd.f32 %v1666, %v1833
  %v1835 = vpop.f32.mrf.mxu0
  %1836 = vmatprep.mubr.bf16.mxu0 0
  %1837 = vmatmul.mubr.bf16.gmra.mxu0 %v1052
  %v1838 = vpop.f32.mrf.mxu0
  %v1839 = vadd.f32 %v1671, %v1838
  %v1840 = vpop.f32.mrf.mxu0
  %v1841 = vpop.f32.mrf.mxu0
  %v1842 = vadd.f32 %v1674, %v1841
  %v1843 = vpop.f32.mrf.mxu0
  %1844 = vmatprep.mubr.bf16.mxu0 0
  %1845 = vmatmul.mubr.bf16.gmra.mxu0 %v1055
  %v1846 = vpop.f32.mrf.mxu0
  %v1847 = vadd.f32 %v1679, %v1846
  %v1848 = vpop.f32.mrf.mxu0
  %v1849 = vpop.f32.mrf.mxu0
  %v1850 = vadd.f32 %v1682, %v1849
  %v1851 = vpop.f32.mrf.mxu0
  %1852 = vmatprep.mubr.bf16.mxu0 0
  %1853 = vmatmul.mubr.bf16.gmra.mxu0 %v1058
  %v1854 = vpop.f32.mrf.mxu0
  %v1855 = vadd.f32 %v1687, %v1854
  %v1856 = vpop.f32.mrf.mxu0
  %v1857 = vpop.f32.mrf.mxu0
  %v1858 = vadd.f32 %v1690, %v1857
  %v1859 = vpop.f32.mrf.mxu0
  %1860 = vmatprep.mubr.bf16.mxu0 0
  %1861 = vmatmul.mubr.bf16.gmra.mxu0 %v1061
  %v1862 = vpop.f32.mrf.mxu0
  %v1863 = vadd.f32 %v1695, %v1862
  %v1864 = vpop.f32.mrf.mxu0
  %v1865 = vpop.f32.mrf.mxu0
  %v1866 = vadd.f32 %v1698, %v1865
  %v1867 = vpop.f32.mrf.mxu0
  %1868 = vmatprep.mubr.bf16.mxu0 0
  %1869 = vmatmul.mubr.bf16.gmra.mxu0 %v1064
  %v1870 = vpop.f32.mrf.mxu0
  %v1871 = vadd.f32 %v1703, %v1870
  %v1872 = vpop.f32.mrf.mxu0
  %v1873 = vpop.f32.mrf.mxu0
  %v1874 = vadd.f32 %v1706, %v1873
  %v1875 = vpop.f32.mrf.mxu0
  %1876 = vmatprep.mubr.bf16.mxu0 0
  %1877 = vmatmul.mubr.bf16.gmra.mxu0 %v1067
  %v1878 = vpop.f32.mrf.mxu0
  %v1879 = vadd.f32 %v1711, %v1878
  %v1880 = vpop.f32.mrf.mxu0
  %v1881 = vpop.f32.mrf.mxu0
  %v1882 = vadd.f32 %v1714, %v1881
  %v1883 = vpop.f32.mrf.mxu0
  %1884 = vmatprep.mubr.bf16.mxu0 0
  %1885 = vmatmul.mubr.bf16.gmra.mxu0 %v1070
  %v1886 = vpop.f32.mrf.mxu0
  %v1887 = vadd.f32 %v1719, %v1886
  %v1888 = vpop.f32.mrf.mxu0
  %v1889 = vpop.f32.mrf.mxu0
  %v1890 = vadd.f32 %v1722, %v1889
  %v1891 = vpop.f32.mrf.mxu0
  %1892 = vmatprep.mubr.bf16.mxu0 0
  %1893 = vmatmul.mubr.bf16.gmra.mxu0 %v1073
  %v1894 = vpop.f32.mrf.mxu0
  %v1895 = vadd.f32 %v1727, %v1894
  %v1896 = vpop.f32.mrf.mxu0
  %v1897 = vpop.f32.mrf.mxu0
  %v1898 = vadd.f32 %v1730, %v1897
  %v1899 = vpop.f32.mrf.mxu0
  %1900 = vmatprep.mubr.bf16.mxu0 0
  %1901 = vmatmul.mubr.bf16.gmra.mxu0 %v1076
  %v1902 = vpop.f32.mrf.mxu0
  %v1903 = vadd.f32 %v1735, %v1902
  %v1904 = vpop.f32.mrf.mxu0
  %v1905 = vpop.f32.mrf.mxu0
  %v1906 = vadd.f32 %v1738, %v1905
  %v1907 = vpop.f32.mrf.mxu0
  %1908 = vmatprep.mubr.bf16.mxu0 0
  %1909 = vmatmul.mubr.bf16.gmra.mxu0 %v1079
  %v1910 = vpop.f32.mrf.mxu0
  %v1911 = vadd.f32 %v1743, %v1910
  %v1912 = vpop.f32.mrf.mxu0
  %v1913 = vpop.f32.mrf.mxu0
  %v1914 = vadd.f32 %v1746, %v1913
  %v1915 = vpop.f32.mrf.mxu0
  %1916 = vmatprep.mubr.bf16.mxu0 0
  %1917 = vmatmul.mubr.bf16.gmra.mxu0 %v1082
  %v1918 = vpop.f32.mrf.mxu0
  %v1919 = vadd.f32 %v1751, %v1918
  %v1920 = vpop.f32.mrf.mxu0
  %v1921 = vpop.f32.mrf.mxu0
  %v1922 = vpop.f32.mrf.mxu0
  %1923 = vdwg.mxu0
  %vm1924 = vcmask 523264
  %1925 = vst.msk [vmem:[%s3] sm:$0xff] %vm1924, %v1791
  %1926 = vst.msk [vmem:[%s3 + $0x8] sm:$0xff] %vm1924, %v1794
  %1927 = vst.msk [vmem:[%s3 + $0x10] sm:$0xff] %vm1924, %v1799
  %1928 = vst.msk [vmem:[%s3 + $0x18] sm:$0xff] %vm1924, %v1802
  %1929 = vst.msk [vmem:[%s3 + $0x20] sm:$0xff] %vm1924, %v1807
  %1930 = vst.msk [vmem:[%s3 + $0x28] sm:$0xff] %vm1924, %v1810
  %1931 = vst.msk [vmem:[%s3 + $0x30] sm:$0xff] %vm1924, %v1815
  %1932 = vst.msk [vmem:[%s3 + $0x38] sm:$0xff] %vm1924, %v1818
  %1933 = vst.msk [vmem:[%s3 + $0x40] sm:$0xff] %vm1924, %v1823
  %1934 = vst.msk [vmem:[%s3 + $0x48] sm:$0xff] %vm1924, %v1826
  %1935 = vst.msk [vmem:[%s3 + $0x50] sm:$0xff] %vm1924, %v1831
  %1936 = vst.msk [vmem:[%s3 + $0x58] sm:$0xff] %vm1924, %v1834
  %1937 = vst.msk [vmem:[%s3 + $0x60] sm:$0xff] %vm1924, %v1839
  %1938 = vst.msk [vmem:[%s3 + $0x68] sm:$0xff] %vm1924, %v1842
  %1939 = vst.msk [vmem:[%s3 + $0x70] sm:$0xff] %vm1924, %v1847
  %1940 = vst.msk [vmem:[%s3 + $0x78] sm:$0xff] %vm1924, %v1850
  %1941 = vst.msk [vmem:[%s3 + $0x80] sm:$0xff] %vm1924, %v1855
  %1942 = vst.msk [vmem:[%s3 + $0x88] sm:$0xff] %vm1924, %v1858
  %1943 = vst.msk [vmem:[%s3 + $0x90] sm:$0xff] %vm1924, %v1863
  %1944 = vst.msk [vmem:[%s3 + $0x98] sm:$0xff] %vm1924, %v1866
  %1945 = vst.msk [vmem:[%s3 + $0xa0] sm:$0xff] %vm1924, %v1871
  %1946 = vst.msk [vmem:[%s3 + $0xa8] sm:$0xff] %vm1924, %v1874
  %1947 = vst.msk [vmem:[%s3 + $0xb0] sm:$0xff] %vm1924, %v1879
  %1948 = vst.msk [vmem:[%s3 + $0xb8] sm:$0xff] %vm1924, %v1882
  %1949 = vst.msk [vmem:[%s3 + $0xc0] sm:$0xff] %vm1924, %v1887
  %1950 = vst.msk [vmem:[%s3 + $0xc8] sm:$0xff] %vm1924, %v1890
  %1951 = vst.msk [vmem:[%s3 + $0xd0] sm:$0xff] %vm1924, %v1895
  %1952 = vst.msk [vmem:[%s3 + $0xd8] sm:$0xff] %vm1924, %v1898
  %1953 = vst.msk [vmem:[%s3 + $0xe0] sm:$0xff] %vm1924, %v1903
  %1954 = vst.msk [vmem:[%s3 + $0xe8] sm:$0xff] %vm1924, %v1906
  %1955 = vst.msk [vmem:[%s3 + $0xf0] sm:$0xff] %vm1924, %v1911
  %1956 = vst.msk [vmem:[%s3 + $0xf8] sm:$0xff] %vm1924, %v1914
  %1957 = vst.msk [vmem:[%s3 + $0x100] sm:$0xff] %vm1924, %v1919
  // Predicated region
  $region14: #{transformer_forward.6} parent=0 // pred_check
    _
  $region15: #{transformer_forward.6} parent=0 // pred_check_branch
    %1959 = sbr.rel (0) target = $region17
  $region16: #{transformer_forward.6} parent=0 // pred_region
    _
  $region17: #{transformer_forward.6} parent=0 // pred_fallthru
    _
  // Predicated region
  $region18: #{transformer_forward.6} parent=0 // pred_check
    _
  $region19: #{transformer_forward.6} parent=0 // pred_check_branch
    %1961 = sbr.rel (0) target = $region21
  $region20: #{transformer_forward.6} parent=0 // pred_region
    _
  $region21: #{transformer_forward.6} parent=0 // pred_fallthru
    _

// kernel: transformer_forward.7
$region0: #{transformer_forward.7}
  #allocation0 [shape = 'u32[]', space=smem, size = 0x4, offset = 0x4, fixed_abs, tag = 'smem constant byte address 0x4 - core index']
  #allocation1 [shape = 'u32[144,128]{1,0:T(1,128)}', space=vmem, size = 0x12000, scoped, tag = 'internal scratch']
  %s0 = inlined_call_operand.vmem [shape: f32[98,576], index: 0, kind: input, shape index: {}]
  %s1 = inlined_call_operand.vmem [shape: bf16[576,32], index: 1, kind: input, shape index: {}]
  %s2 = inlined_call_operand.vmem [shape: f32[1,32], index: 2, kind: input, shape index: {}]
  %s3 = inlined_call_operand.vmem [shape: f32[98,32], index: 3, kind: output, shape index: {}]
  %s4 = sld [smem:[#allocation0]]
  $region22: #{transformer_forward.7} parent=0
    _
  %s6 = ssub.s32 1, %s4
  %s7 = scalar_select 0, %s6, %s4
  // Predicated region
  $region2: #{transformer_forward.7} parent=0 // pred_check
    _
  $region3: #{transformer_forward.7} parent=0 // pred_check_branch
    %9 = sbr.rel (0) target = $region5
  $region4: #{transformer_forward.7} parent=0 // pred_region
    _
  $region5: #{transformer_forward.7} parent=0 // pred_fallthru
    _
  // Predicated region
  $region6: #{transformer_forward.7} parent=0 // pred_check
    _
  $region7: #{transformer_forward.7} parent=0 // pred_check_branch
    %11 = sbr.rel (0) target = $region9
  $region8: #{transformer_forward.7} parent=0 // pred_region
    _
  $region9: #{transformer_forward.7} parent=0 // pred_fallthru
    _
  // Predicated region
  $region10: #{transformer_forward.7} parent=0 // pred_check
    _
  $region11: #{transformer_forward.7} parent=0 // pred_check_branch
    %13 = sbr.rel (0) target = $region13
  $region12: #{transformer_forward.7} parent=0 // pred_region
    _
  $region13: #{transformer_forward.7} parent=0 // pred_fallthru
    _
  %v15 = vld [vmem:[%s0] sm:$0xff]
  %v16 = vld [vmem:[%s0 + $0x8] sm:$0xff]
  %v17 = vld [vmem:[%s0 + $0x10] sm:$0xff]
  %v18 = vld [vmem:[%s0 + $0x18] sm:$0xff]
  %v19 = vld [vmem:[%s0 + $0x20] sm:$0xff]
  %v20 = vld [vmem:[%s0 + $0x28] sm:$0xff]
  %v21 = vld [vmem:[%s0 + $0x30] sm:$0xff]
  %v22 = vld [vmem:[%s0 + $0x38] sm:$0xff]
  %v23 = vld [vmem:[%s0 + $0x40] sm:$0xff]
  %v24 = vld [vmem:[%s0 + $0x48] sm:$0xff]
  %v25 = vld [vmem:[%s0 + $0x50] sm:$0xff]
  %v26 = vld [vmem:[%s0 + $0x58] sm:$0xff]
  %v27 = vld [vmem:[%s0 + $0x60] sm:$0xff]
  %v28 = vld [vmem:[%s0 + $0x68] sm:$0xff]
  %v29 = vld [vmem:[%s0 + $0x70] sm:$0xff]
  %v30 = vld [vmem:[%s0 + $0x78] sm:$0xff]
  %v31 = vld [vmem:[%s0 + $0x80] sm:$0xff]
  %v32 = vld [vmem:[%s0 + $0x88] sm:$0xff]
  %v33 = vld [vmem:[%s0 + $0x90] sm:$0xff]
  %v34 = vld [vmem:[%s0 + $0x98] sm:$0xff]
  %v35 = vld [vmem:[%s0 + $0xa0] sm:$0xff]
  %v36 = vld [vmem:[%s0 + $0xa8] sm:$0xff]
  %v37 = vld [vmem:[%s0 + $0xb0] sm:$0xff]
  %v38 = vld [vmem:[%s0 + $0xb8] sm:$0xff]
  %v39 = vld [vmem:[%s0 + $0xc0] sm:$0xff]
  %v40 = vld [vmem:[%s0 + $0xc8] sm:$0xff]
  %v41 = vld [vmem:[%s0 + $0xd0] sm:$0xff]
  %v42 = vld [vmem:[%s0 + $0xd8] sm:$0xff]
  %v43 = vld [vmem:[%s0 + $0xe0] sm:$0xff]
  %v44 = vld [vmem:[%s0 + $0xe8] sm:$0xff]
  %v45 = vld [vmem:[%s0 + $0xf0] sm:$0xff]
  %v46 = vld [vmem:[%s0 + $0xf8] sm:$0xff]
  %v47 = vld [vmem:[%s0 + $0x100] sm:$0xff]
  %v48 = vld [vmem:[%s0 + $0x108] sm:$0xff]
  %v49 = vld [vmem:[%s0 + $0x110] sm:$0xff]
  %v50 = vld [vmem:[%s0 + $0x118] sm:$0xff]
  %v51 = vld [vmem:[%s0 + $0x120] sm:$0xff]
  %v52 = vld [vmem:[%s0 + $0x128] sm:$0xff]
  %v53 = vld [vmem:[%s0 + $0x130] sm:$0xff]
  %v54 = vld [vmem:[%s0 + $0x138] sm:$0xff]
  %v55 = vld [vmem:[%s0 + $0x140] sm:$0xff]
  %v56 = vld [vmem:[%s0 + $0x148] sm:$0xff]
  %v57 = vld [vmem:[%s0 + $0x150] sm:$0xff]
  %v58 = vld [vmem:[%s0 + $0x158] sm:$0xff]
  %v59 = vld [vmem:[%s0 + $0x160] sm:$0xff]
  %v60 = vld [vmem:[%s0 + $0x168] sm:$0xff]
  %v61 = vld [vmem:[%s0 + $0x170] sm:$0xff]
  %v62 = vld [vmem:[%s0 + $0x178] sm:$0xff]
  %v63 = vld [vmem:[%s0 + $0x180] sm:$0xff]
  %v64 = vld [vmem:[%s0 + $0x188] sm:$0xff]
  %v65 = vld [vmem:[%s0 + $0x190] sm:$0xff]
  %v66 = vld [vmem:[%s0 + $0x198] sm:$0xff]
  %v67 = vld [vmem:[%s0 + $0x1a0] sm:$0xff]
  %v68 = vld [vmem:[%s0 + $0x1a8] sm:$0xff]
  %v69 = vld [vmem:[%s0 + $0x1b0] sm:$0xff]
  %v70 = vld [vmem:[%s0 + $0x1b8] sm:$0xff]
  %v71 = vld [vmem:[%s0 + $0x1c0] sm:$0xff]
  %v72 = vld [vmem:[%s0 + $0x1c8] sm:$0xff]
  %v73 = vld [vmem:[%s0 + $0x1d0] sm:$0xff]
  %v74 = vld [vmem:[%s0 + $0x1d8] sm:$0xff]
  %v75 = vld [vmem:[%s0 + $0x1e0] sm:$0x3]
  %v76 = vld [vmem:[%s0 + $0x1e8] sm:$0x3]
  %v77 = vld [vmem:[%s0 + $0x1f0] sm:$0x3]
  %v78 = vld [vmem:[%s0 + $0x1f8] sm:$0x3]
  %v79 = vld [vmem:[%s0 + $0x200] sm:$0x3]
  %v80 = vpack.c.bf16 %v20, %v15
  %v81 = vpack.c.bf16 %v21, %v16
  %v82 = vpack.c.bf16 %v22, %v17
  %v83 = vpack.c.bf16 %v23, %v18
  %v84 = vpack.c.bf16 %v24, %v19
  %v85 = vpack.c.bf16 %v30, %v25
  %v86 = vpack.c.bf16 %v31, %v26
  %v87 = vpack.c.bf16 %v32, %v27
  %v88 = vpack.c.bf16 %v33, %v28
  %v89 = vpack.c.bf16 %v34, %v29
  %v90 = vpack.c.bf16 %v40, %v35
  %v91 = vpack.c.bf16 %v41, %v36
  %v92 = vpack.c.bf16 %v42, %v37
  %v93 = vpack.c.bf16 %v43, %v38
  %v94 = vpack.c.bf16 %v44, %v39
  %v95 = vpack.c.bf16 %v50, %v45
  %v96 = vpack.c.bf16 %v51, %v46
  %v97 = vpack.c.bf16 %v52, %v47
  %v98 = vpack.c.bf16 %v53, %v48
  %v99 = vpack.c.bf16 %v54, %v49
  %v100 = vpack.c.bf16 %v60, %v55
  %v101 = vpack.c.bf16 %v61, %v56
  %v102 = vpack.c.bf16 %v62, %v57
  %v103 = vpack.c.bf16 %v63, %v58
  %v104 = vpack.c.bf16 %v64, %v59
  %v105 = vpack.c.bf16 %v70, %v65
  %v106 = vpack.c.bf16 %v71, %v66
  %v107 = vpack.c.bf16 %v72, %v67
  %v108 = vpack.c.bf16 %v73, %v68
  %v109 = vpack.c.bf16 %v74, %v69
  %v110 = vpack.c.bf16 %v75, %v75
  %v111 = vpack.c.bf16 %v76, %v76
  %v112 = vpack.c.bf16 %v77, %v77
  %v113 = vpack.c.bf16 %v78, %v78
  %v114 = vpack.c.bf16 %v79, %v79
  %v115 = vld [vmem:[%s1] sm:$0xf]
  %v116 = vld [vmem:[%s1 + $0x4] sm:$0xf]
  %v117 = vld [vmem:[%s1 + $0x8] sm:$0xf]
  %v118 = vld [vmem:[%s1 + $0xc] sm:$0xf]
  %v119 = vld [vmem:[%s1 + $0x10] sm:$0xf]
  %v120 = vld [vmem:[%s1 + $0x14] sm:$0xf]
  %v121 = vld [vmem:[%s1 + $0x18] sm:$0xf]
  %v122 = vld [vmem:[%s1 + $0x1c] sm:$0xf]
  %v123 = vld [vmem:[%s1 + $0x20] sm:$0xf]
  %v124 = vld [vmem:[%s1 + $0x24] sm:$0xf]
  %v125 = vld [vmem:[%s1 + $0x28] sm:$0xf]
  %v126 = vld [vmem:[%s1 + $0x2c] sm:$0xf]
  %v127 = vld [vmem:[%s1 + $0x30] sm:$0xf]
  %v128 = vld [vmem:[%s1 + $0x34] sm:$0xf]
  %v129 = vld [vmem:[%s1 + $0x38] sm:$0xf]
  %v130 = vld [vmem:[%s1 + $0x3c] sm:$0xf]
  %v131 = vld [vmem:[%s1 + $0x40] sm:$0xf]
  %v132 = vld [vmem:[%s1 + $0x44] sm:$0xf]
  %v133 = vld [vmem:[%s1 + $0x48] sm:$0xf]
  %v134 = vld [vmem:[%s1 + $0x4c] sm:$0xf]
  %v135 = vld [vmem:[%s1 + $0x50] sm:$0xf]
  %v136 = vld [vmem:[%s1 + $0x54] sm:$0xf]
  %v137 = vld [vmem:[%s1 + $0x58] sm:$0xf]
  %v138 = vld [vmem:[%s1 + $0x5c] sm:$0xf]
  %v139 = vld [vmem:[%s1 + $0x60] sm:$0xf]
  %v140 = vld [vmem:[%s1 + $0x64] sm:$0xf]
  %v141 = vld [vmem:[%s1 + $0x68] sm:$0xf]
  %v142 = vld [vmem:[%s1 + $0x6c] sm:$0xf]
  %v143 = vld [vmem:[%s1 + $0x70] sm:$0xf]
  %v144 = vld [vmem:[%s1 + $0x74] sm:$0xf]
  %v145 = vld [vmem:[%s1 + $0x78] sm:$0xf]
  %v146 = vld [vmem:[%s1 + $0x7c] sm:$0xf]
  %v147 = vld [vmem:[%s1 + $0x80] sm:$0xf]
  %v148 = vld [vmem:[%s1 + $0x84] sm:$0xf]
  %v149 = vld [vmem:[%s1 + $0x88] sm:$0xf]
  %v150 = vld [vmem:[%s1 + $0x8c] sm:$0xf]
  %v151 = vld [vmem:[%s1 + $0x90] sm:$0xf]
  %v152 = vld [vmem:[%s1 + $0x94] sm:$0xf]
  %v153 = vld [vmem:[%s1 + $0x98] sm:$0xf]
  %v154 = vld [vmem:[%s1 + $0x9c] sm:$0xf]
  %v155 = vld [vmem:[%s1 + $0xa0] sm:$0xf]
  %v156 = vld [vmem:[%s1 + $0xa4] sm:$0xf]
  %v157 = vld [vmem:[%s1 + $0xa8] sm:$0xf]
  %v158 = vld [vmem:[%s1 + $0xac] sm:$0xf]
  %v159 = vld [vmem:[%s1 + $0xb0] sm:$0xf]
  %v160 = vld [vmem:[%s1 + $0xb4] sm:$0xf]
  %v161 = vld [vmem:[%s1 + $0xb8] sm:$0xf]
  %v162 = vld [vmem:[%s1 + $0xbc] sm:$0xf]
  %v163 = vld [vmem:[%s1 + $0xc0] sm:$0xf]
  %v164 = vld [vmem:[%s1 + $0xc4] sm:$0xf]
  %v165 = vld [vmem:[%s1 + $0xc8] sm:$0xf]
  %v166 = vld [vmem:[%s1 + $0xcc] sm:$0xf]
  %v167 = vld [vmem:[%s1 + $0xd0] sm:$0xf]
  %v168 = vld [vmem:[%s1 + $0xd4] sm:$0xf]
  %v169 = vld [vmem:[%s1 + $0xd8] sm:$0xf]
  %v170 = vld [vmem:[%s1 + $0xdc] sm:$0xf]
  %v171 = vld [vmem:[%s1 + $0xe0] sm:$0xf]
  %v172 = vld [vmem:[%s1 + $0xe4] sm:$0xf]
  %v173 = vld [vmem:[%s1 + $0xe8] sm:$0xf]
  %v174 = vld [vmem:[%s1 + $0xec] sm:$0xf]
  %v175 = vld [vmem:[%s1 + $0xf0] sm:$0xf]
  %v176 = vld [vmem:[%s1 + $0xf4] sm:$0xf]
  %v177 = vld [vmem:[%s1 + $0xf8] sm:$0xf]
  %v178 = vld [vmem:[%s1 + $0xfc] sm:$0xf]
  %v179 = vld [vmem:[%s1 + $0x100] sm:$0xf]
  %v180 = vld [vmem:[%s1 + $0x104] sm:$0xf]
  %v181 = vld [vmem:[%s1 + $0x108] sm:$0xf]
  %v182 = vld [vmem:[%s1 + $0x10c] sm:$0xf]
  %v183 = vld [vmem:[%s1 + $0x110] sm:$0xf]
  %v184 = vld [vmem:[%s1 + $0x114] sm:$0xf]
  %v185 = vld [vmem:[%s1 + $0x118] sm:$0xf]
  %v186 = vld [vmem:[%s1 + $0x11c] sm:$0xf]
  %v187 = vld [vmem:[%s2] sm:$0x1]
  %v189 = vlaneseq
  %v190 = vshrl.u32 %v189, 7
  %v191 = vsub.s32 0, %v190
  %v192 = vrot.slane %v187, %v191
  %v266 = vunpack.c.l.b16 %v115
  %v267 = vunpack.c.l.b16 %v116
  %v268 = vunpack.c.l.b16 %v117
  %v269 = vunpack.c.l.b16 %v118
  %v270 = vunpack.c.l.b16 %v119
  %v271 = vunpack.c.l.b16 %v120
  %v272 = vunpack.c.l.b16 %v121
  %v273 = vunpack.c.l.b16 %v122
  %v274 = vunpack.c.l.b16 %v123
  %v275 = vunpack.c.l.b16 %v124
  %v276 = vunpack.c.l.b16 %v125
  %v277 = vunpack.c.l.b16 %v126
  %v278 = vunpack.c.l.b16 %v127
  %v279 = vunpack.c.l.b16 %v128
  %v280 = vunpack.c.l.b16 %v129
  %v281 = vunpack.c.l.b16 %v130
  %v282 = vunpack.c.l.b16 %v131
  %v283 = vunpack.c.l.b16 %v132
  %v284 = vunpack.c.l.b16 %v133
  %v285 = vunpack.c.l.b16 %v134
  %v286 = vunpack.c.l.b16 %v135
  %v287 = vunpack.c.l.b16 %v136
  %v288 = vunpack.c.l.b16 %v137
  %v289 = vunpack.c.l.b16 %v138
  %v290 = vunpack.c.l.b16 %v139
  %v291 = vunpack.c.l.b16 %v140
  %v292 = vunpack.c.l.b16 %v141
  %v293 = vunpack.c.l.b16 %v142
  %v294 = vunpack.c.l.b16 %v143
  %v295 = vunpack.c.l.b16 %v144
  %v296 = vunpack.c.l.b16 %v145
  %v297 = vunpack.c.l.b16 %v146
  %v298 = vunpack.c.l.b16 %v147
  %v299 = vunpack.c.l.b16 %v148
  %v300 = vunpack.c.l.b16 %v149
  %v301 = vunpack.c.l.b16 %v150
  %v302 = vunpack.c.l.b16 %v151
  %v303 = vunpack.c.l.b16 %v152
  %v304 = vunpack.c.l.b16 %v153
  %v305 = vunpack.c.l.b16 %v154
  %v306 = vunpack.c.l.b16 %v155
  %v307 = vunpack.c.l.b16 %v156
  %v308 = vunpack.c.l.b16 %v157
  %v309 = vunpack.c.l.b16 %v158
  %v310 = vunpack.c.l.b16 %v159
  %v311 = vunpack.c.l.b16 %v160
  %v312 = vunpack.c.l.b16 %v161
  %v313 = vunpack.c.l.b16 %v162
  %v314 = vunpack.c.l.b16 %v163
  %v315 = vunpack.c.l.b16 %v164
  %v316 = vunpack.c.l.b16 %v165
  %v317 = vunpack.c.l.b16 %v166
  %v318 = vunpack.c.l.b16 %v167
  %v319 = vunpack.c.l.b16 %v168
  %v320 = vunpack.c.l.b16 %v169
  %v321 = vunpack.c.l.b16 %v170
  %v322 = vunpack.c.l.b16 %v171
  %v323 = vunpack.c.l.b16 %v172
  %v324 = vunpack.c.l.b16 %v173
  %v325 = vunpack.c.l.b16 %v174
  %v326 = vunpack.c.l.b16 %v175
  %v327 = vunpack.c.l.b16 %v176
  %v328 = vunpack.c.l.b16 %v177
  %v329 = vunpack.c.l.b16 %v178
  %v330 = vunpack.c.l.b16 %v179
  %v331 = vunpack.c.l.b16 %v180
  %v332 = vunpack.c.l.b16 %v181
  %v333 = vunpack.c.l.b16 %v182
  %v334 = vunpack.c.l.b16 %v183
  %v335 = vunpack.c.l.b16 %v184
  %v336 = vunpack.c.l.b16 %v185
  %v337 = vunpack.c.l.b16 %v186
  %v338 = vpack.c.b16 %v267, %v266
  %v339 = vpack.c.b16 %v269, %v268
  %v340 = vpack.c.b16 %v271, %v270
  %v341 = vpack.c.b16 %v273, %v272
  %v342 = vpack.c.b16 %v275, %v274
  %v343 = vpack.c.b16 %v277, %v276
  %v344 = vpack.c.b16 %v279, %v278
  %v345 = vpack.c.b16 %v281, %v280
  %v346 = vpack.c.b16 %v283, %v282
  %v347 = vpack.c.b16 %v285, %v284
  %v348 = vpack.c.b16 %v287, %v286
  %v349 = vpack.c.b16 %v289, %v288
  %v350 = vpack.c.b16 %v291, %v290
  %v351 = vpack.c.b16 %v293, %v292
  %v352 = vpack.c.b16 %v295, %v294
  %v353 = vpack.c.b16 %v297, %v296
  %v354 = vpack.c.b16 %v299, %v298
  %v355 = vpack.c.b16 %v301, %v300
  %v356 = vpack.c.b16 %v303, %v302
  %v357 = vpack.c.b16 %v305, %v304
  %v358 = vpack.c.b16 %v307, %v306
  %v359 = vpack.c.b16 %v309, %v308
  %v360 = vpack.c.b16 %v311, %v310
  %v361 = vpack.c.b16 %v313, %v312
  %v362 = vpack.c.b16 %v315, %v314
  %v363 = vpack.c.b16 %v317, %v316
  %v364 = vpack.c.b16 %v319, %v318
  %v365 = vpack.c.b16 %v321, %v320
  %v366 = vpack.c.b16 %v323, %v322
  %v367 = vpack.c.b16 %v325, %v324
  %v368 = vpack.c.b16 %v327, %v326
  %v369 = vpack.c.b16 %v329, %v328
  %v370 = vpack.c.b16 %v331, %v330
  %v371 = vpack.c.b16 %v333, %v332
  %v372 = vpack.c.b16 %v335, %v334
  %v373 = vpack.c.b16 %v337, %v336
  %vm410 = vcmask 523264
  %v412 = vsel %vm410, %v84, 0
  %v415 = vsel %vm410, %v89, 0
  %v418 = vsel %vm410, %v94, 0
  %v421 = vsel %vm410, %v99, 0
  %v424 = vsel %vm410, %v104, 0
  %v427 = vsel %vm410, %v109, 0
  %v430 = vsel %vm410, %v114, 0
  %432 = vmatprep.subr.bf16.mxu0 0
  %433 = vmatpush1.bf16.msra.mxu0 %v345
  %434 = vmatprep.subr.bf16.mxu0 0
  %435 = vmatpush1.bf16.msra.mxu0 %v344
  %436 = vmatprep.subr.bf16.mxu0 0
  %437 = vmatpush1.bf16.msra.mxu0 %v343
  %438 = vmatprep.subr.bf16.mxu0 0
  %439 = vmatpush1.bf16.msra.mxu0 %v342
  %440 = vmatprep.subr.bf16.mxu0 0
  %441 = vmatpush1.bf16.msra.mxu0 %v341
  %442 = vmatprep.subr.bf16.mxu0 0
  %443 = vmatpush1.bf16.msra.mxu0 %v340
  %444 = vmatprep.subr.bf16.mxu0 0
  %445 = vmatpush1.bf16.msra.mxu0 %v339
  %446 = vmatprep.subr.bf16.mxu0 0
  %447 = vmatpush1.bf16.msra.mxu0 %v338
  %448 = vmatprep.subr.bf16.mxu0 0
  %449 = vmatpush2.bf16.msra.mxu0 %v353
  %450 = vmatprep.subr.bf16.mxu0 0
  %451 = vmatpush2.bf16.msra.mxu0 %v352
  %452 = vmatprep.subr.bf16.mxu0 0
  %453 = vmatpush2.bf16.msra.mxu0 %v351
  %454 = vmatprep.subr.bf16.mxu0 0
  %455 = vmatpush2.bf16.msra.mxu0 %v350
  %456 = vmatprep.subr.bf16.mxu0 0
  %457 = vmatpush2.bf16.msra.mxu0 %v349
  %458 = vmatprep.subr.bf16.mxu0 0
  %459 = vmatpush2.bf16.msra.mxu0 %v348
  %460 = vmatprep.subr.bf16.mxu0 0
  %461 = vmatpush2.bf16.msra.mxu0 %v347
  %462 = vmatprep.subr.bf16.mxu0 0
  %463 = vmatpush2.bf16.msra.mxu0 %v346
  %464 = vmatprep.mubr.bf16.mxu0 %v81
  %465 = vmatmul.mubr.bf16.gmra.mxu0 %v80
  %v466 = vpop.f32.mrf.mxu0
  %v467 = vadd.f32 %v192, %v466
  %v468 = vpop.f32.mrf.mxu0
  %v469 = vpop.f32.mrf.mxu0
  %v470 = vadd.f32 %v192, %v469
  %v471 = vpop.f32.mrf.mxu0
  %472 = vmatprep.mubr.bf16.mxu0 %v86
  %473 = vmatmul.mubr.bf16.gmra.mxu0 %v85
  %v474 = vpop.f32.mrf.mxu0
  %v475 = vadd.f32 %v192, %v474
  %v476 = vpop.f32.mrf.mxu0
  %v477 = vpop.f32.mrf.mxu0
  %v478 = vadd.f32 %v192, %v477
  %v479 = vpop.f32.mrf.mxu0
  %480 = vmatprep.mubr.bf16.mxu0 %v91
  %481 = vmatmul.mubr.bf16.gmra.mxu0 %v90
  %v482 = vpop.f32.mrf.mxu0
  %v483 = vadd.f32 %v192, %v482
  %v484 = vpop.f32.mrf.mxu0
  %v485 = vpop.f32.mrf.mxu0
  %v486 = vadd.f32 %v192, %v485
  %v487 = vpop.f32.mrf.mxu0
  %488 = vmatprep.mubr.bf16.mxu0 %v96
  %489 = vmatmul.mubr.bf16.gmra.mxu0 %v95
  %v490 = vpop.f32.mrf.mxu0
  %v491 = vadd.f32 %v192, %v490
  %v492 = vpop.f32.mrf.mxu0
  %v493 = vpop.f32.mrf.mxu0
  %v494 = vadd.f32 %v192, %v493
  %v495 = vpop.f32.mrf.mxu0
  %496 = vmatprep.mubr.bf16.mxu0 %v101
  %497 = vmatmul.mubr.bf16.gmra.mxu0 %v100
  %v498 = vpop.f32.mrf.mxu0
  %v499 = vadd.f32 %v192, %v498
  %v500 = vpop.f32.mrf.mxu0
  %v501 = vpop.f32.mrf.mxu0
  %v502 = vadd.f32 %v192, %v501
  %v503 = vpop.f32.mrf.mxu0
  %504 = vmatprep.mubr.bf16.mxu0 %v106
  %505 = vmatmul.mubr.bf16.gmra.mxu0 %v105
  %v506 = vpop.f32.mrf.mxu0
  %v507 = vadd.f32 %v192, %v506
  %v508 = vpop.f32.mrf.mxu0
  %v509 = vpop.f32.mrf.mxu0
  %v510 = vadd.f32 %v192, %v509
  %v511 = vpop.f32.mrf.mxu0
  %512 = vmatprep.mubr.bf16.mxu0 %v111
  %513 = vmatmul.mubr.bf16.gmra.mxu0 %v110
  %v514 = vpop.f32.mrf.mxu0
  %v515 = vadd.f32 %v192, %v514
  %v516 = vpop.f32.mrf.mxu0
  %v517 = vpop.f32.mrf.mxu0
  %v518 = vpop.f32.mrf.mxu0
  %519 = vdwg.mxu0
  %520 = vmatprep.subr.bf16.mxu0 0
  %521 = vmatpush1.bf16.msra.mxu0 %v361
  %522 = vmatprep.subr.bf16.mxu0 0
  %523 = vmatpush1.bf16.msra.mxu0 %v360
  %524 = vmatprep.subr.bf16.mxu0 0
  %525 = vmatpush1.bf16.msra.mxu0 %v359
  %526 = vmatprep.subr.bf16.mxu0 0
  %527 = vmatpush1.bf16.msra.mxu0 %v358
  %528 = vmatprep.subr.bf16.mxu0 0
  %529 = vmatpush1.bf16.msra.mxu0 %v357
  %530 = vmatprep.subr.bf16.mxu0 0
  %531 = vmatpush1.bf16.msra.mxu0 %v356
  %532 = vmatprep.subr.bf16.mxu0 0
  %533 = vmatpush1.bf16.msra.mxu0 %v355
  %534 = vmatprep.subr.bf16.mxu0 0
  %535 = vmatpush1.bf16.msra.mxu0 %v354
  %536 = vmatprep.subr.bf16.mxu0 0
  %537 = vmatpush2.bf16.msra.mxu0 %v369
  %538 = vmatprep.subr.bf16.mxu0 0
  %539 = vmatpush2.bf16.msra.mxu0 %v368
  %540 = vmatprep.subr.bf16.mxu0 0
  %541 = vmatpush2.bf16.msra.mxu0 %v367
  %542 = vmatprep.subr.bf16.mxu0 0
  %543 = vmatpush2.bf16.msra.mxu0 %v366
  %544 = vmatprep.subr.bf16.mxu0 0
  %545 = vmatpush2.bf16.msra.mxu0 %v365
  %546 = vmatprep.subr.bf16.mxu0 0
  %547 = vmatpush2.bf16.msra.mxu0 %v364
  %548 = vmatprep.subr.bf16.mxu0 0
  %549 = vmatpush2.bf16.msra.mxu0 %v363
  %550 = vmatprep.subr.bf16.mxu0 0
  %551 = vmatpush2.bf16.msra.mxu0 %v362
  %552 = vmatprep.mubr.bf16.mxu0 %v83
  %553 = vmatmul.mubr.bf16.gmra.mxu0 %v82
  %v554 = vpop.f32.mrf.mxu0
  %v555 = vadd.f32 %v467, %v554
  %v556 = vpop.f32.mrf.mxu0
  %v557 = vpop.f32.mrf.mxu0
  %v558 = vadd.f32 %v470, %v557
  %v559 = vpop.f32.mrf.mxu0
  %560 = vmatprep.mubr.bf16.mxu0 %v88
  %561 = vmatmul.mubr.bf16.gmra.mxu0 %v87
  %v562 = vpop.f32.mrf.mxu0
  %v563 = vadd.f32 %v475, %v562
  %v564 = vpop.f32.mrf.mxu0
  %v565 = vpop.f32.mrf.mxu0
  %v566 = vadd.f32 %v478, %v565
  %v567 = vpop.f32.mrf.mxu0
  %568 = vmatprep.mubr.bf16.mxu0 %v93
  %569 = vmatmul.mubr.bf16.gmra.mxu0 %v92
  %v570 = vpop.f32.mrf.mxu0
  %v571 = vadd.f32 %v483, %v570
  %v572 = vpop.f32.mrf.mxu0
  %v573 = vpop.f32.mrf.mxu0
  %v574 = vadd.f32 %v486, %v573
  %v575 = vpop.f32.mrf.mxu0
  %576 = vmatprep.mubr.bf16.mxu0 %v98
  %577 = vmatmul.mubr.bf16.gmra.mxu0 %v97
  %v578 = vpop.f32.mrf.mxu0
  %v579 = vadd.f32 %v491, %v578
  %v580 = vpop.f32.mrf.mxu0
  %v581 = vpop.f32.mrf.mxu0
  %v582 = vadd.f32 %v494, %v581
  %v583 = vpop.f32.mrf.mxu0
  %584 = vmatprep.mubr.bf16.mxu0 %v103
  %585 = vmatmul.mubr.bf16.gmra.mxu0 %v102
  %v586 = vpop.f32.mrf.mxu0
  %v587 = vadd.f32 %v499, %v586
  %v588 = vpop.f32.mrf.mxu0
  %v589 = vpop.f32.mrf.mxu0
  %v590 = vadd.f32 %v502, %v589
  %v591 = vpop.f32.mrf.mxu0
  %592 = vmatprep.mubr.bf16.mxu0 %v108
  %593 = vmatmul.mubr.bf16.gmra.mxu0 %v107
  %v594 = vpop.f32.mrf.mxu0
  %v595 = vadd.f32 %v507, %v594
  %v596 = vpop.f32.mrf.mxu0
  %v597 = vpop.f32.mrf.mxu0
  %v598 = vadd.f32 %v510, %v597
  %v599 = vpop.f32.mrf.mxu0
  %600 = vmatprep.mubr.bf16.mxu0 %v113
  %601 = vmatmul.mubr.bf16.gmra.mxu0 %v112
  %v602 = vpop.f32.mrf.mxu0
  %v603 = vadd.f32 %v515, %v602
  %v604 = vpop.f32.mrf.mxu0
  %v605 = vpop.f32.mrf.mxu0
  %v606 = vpop.f32.mrf.mxu0
  %607 = vdwg.mxu0
  %608 = vmatprep.subr.bf16.mxu0 0
  %609 = vmatpush1.bf16.msra.mxu0 0
  %610 = vmatprep.subr.bf16.mxu0 0
  %611 = vmatpush1.bf16.msra.mxu0 0
  %612 = vmatprep.subr.bf16.mxu0 0
  %613 = vmatpush1.bf16.msra.mxu0 0
  %614 = vmatprep.subr.bf16.mxu0 0
  %615 = vmatpush1.bf16.msra.mxu0 0
  %616 = vmatprep.subr.bf16.mxu0 0
  %617 = vmatpush1.bf16.msra.mxu0 %v373
  %618 = vmatprep.subr.bf16.mxu0 0
  %619 = vmatpush1.bf16.msra.mxu0 %v372
  %620 = vmatprep.subr.bf16.mxu0 0
  %621 = vmatpush1.bf16.msra.mxu0 %v371
  %622 = vmatprep.subr.bf16.mxu0 0
  %623 = vmatpush1.bf16.msra.mxu0 %v370
  %624 = vmatprep.subr.bf16.mxu0 0
  %625 = vmatpush2.bf16.msra.mxu0 0
  %626 = vmatprep.subr.bf16.mxu0 0
  %627 = vmatpush2.bf16.msra.mxu0 0
  %628 = vmatprep.subr.bf16.mxu0 0
  %629 = vmatpush2.bf16.msra.mxu0 0
  %630 = vmatprep.subr.bf16.mxu0 0
  %631 = vmatpush2.bf16.msra.mxu0 0
  %632 = vmatprep.subr.bf16.mxu0 0
  %633 = vmatpush2.bf16.msra.mxu0 0
  %634 = vmatprep.subr.bf16.mxu0 0
  %635 = vmatpush2.bf16.msra.mxu0 0
  %636 = vmatprep.subr.bf16.mxu0 0
  %637 = vmatpush2.bf16.msra.mxu0 0
  %638 = vmatprep.subr.bf16.mxu0 0
  %639 = vmatpush2.bf16.msra.mxu0 0
  %640 = vmatprep.mubr.bf16.mxu0 0
  %641 = vmatmul.mubr.bf16.gmra.mxu0 %v412
  %v642 = vpop.f32.mrf.mxu0
  %v643 = vadd.f32 %v555, %v642
  %v644 = vpop.f32.mrf.mxu0
  %v645 = vpop.f32.mrf.mxu0
  %v646 = vadd.f32 %v558, %v645
  %v647 = vpop.f32.mrf.mxu0
  %648 = vmatprep.mubr.bf16.mxu0 0
  %649 = vmatmul.mubr.bf16.gmra.mxu0 %v415
  %v650 = vpop.f32.mrf.mxu0
  %v651 = vadd.f32 %v563, %v650
  %v652 = vpop.f32.mrf.mxu0
  %v653 = vpop.f32.mrf.mxu0
  %v654 = vadd.f32 %v566, %v653
  %v655 = vpop.f32.mrf.mxu0
  %656 = vmatprep.mubr.bf16.mxu0 0
  %657 = vmatmul.mubr.bf16.gmra.mxu0 %v418
  %v658 = vpop.f32.mrf.mxu0
  %v659 = vadd.f32 %v571, %v658
  %v660 = vpop.f32.mrf.mxu0
  %v661 = vpop.f32.mrf.mxu0
  %v662 = vadd.f32 %v574, %v661
  %v663 = vpop.f32.mrf.mxu0
  %664 = vmatprep.mubr.bf16.mxu0 0
  %665 = vmatmul.mubr.bf16.gmra.mxu0 %v421
  %v666 = vpop.f32.mrf.mxu0
  %v667 = vadd.f32 %v579, %v666
  %v668 = vpop.f32.mrf.mxu0
  %v669 = vpop.f32.mrf.mxu0
  %v670 = vadd.f32 %v582, %v669
  %v671 = vpop.f32.mrf.mxu0
  %672 = vmatprep.mubr.bf16.mxu0 0
  %673 = vmatmul.mubr.bf16.gmra.mxu0 %v424
  %v674 = vpop.f32.mrf.mxu0
  %v675 = vadd.f32 %v587, %v674
  %v676 = vpop.f32.mrf.mxu0
  %v677 = vpop.f32.mrf.mxu0
  %v678 = vadd.f32 %v590, %v677
  %v679 = vpop.f32.mrf.mxu0
  %680 = vmatprep.mubr.bf16.mxu0 0
  %681 = vmatmul.mubr.bf16.gmra.mxu0 %v427
  %v682 = vpop.f32.mrf.mxu0
  %v683 = vadd.f32 %v595, %v682
  %v684 = vpop.f32.mrf.mxu0
  %v685 = vpop.f32.mrf.mxu0
  %v686 = vadd.f32 %v598, %v685
  %v687 = vpop.f32.mrf.mxu0
  %688 = vmatprep.mubr.bf16.mxu0 0
  %689 = vmatmul.mubr.bf16.gmra.mxu0 %v430
  %v690 = vpop.f32.mrf.mxu0
  %v691 = vadd.f32 %v603, %v690
  %v692 = vpop.f32.mrf.mxu0
  %v693 = vpop.f32.mrf.mxu0
  %v694 = vpop.f32.mrf.mxu0
  %695 = vdwg.mxu0
  %vm696 = vcmask 261120
  %697 = vst.msk [vmem:[%s3] sm:$0xff] %vm696, %v643
  %698 = vst.msk [vmem:[%s3 + $0x8] sm:$0xff] %vm696, %v646
  %699 = vst.msk [vmem:[%s3 + $0x10] sm:$0xff] %vm696, %v651
  %700 = vst.msk [vmem:[%s3 + $0x18] sm:$0xff] %vm696, %v654
  %701 = vst.msk [vmem:[%s3 + $0x20] sm:$0xff] %vm696, %v659
  %702 = vst.msk [vmem:[%s3 + $0x28] sm:$0xff] %vm696, %v662
  %703 = vst.msk [vmem:[%s3 + $0x30] sm:$0xff] %vm696, %v667
  %704 = vst.msk [vmem:[%s3 + $0x38] sm:$0xff] %vm696, %v670
  %705 = vst.msk [vmem:[%s3 + $0x40] sm:$0xff] %vm696, %v675
  %706 = vst.msk [vmem:[%s3 + $0x48] sm:$0xff] %vm696, %v678
  %707 = vst.msk [vmem:[%s3 + $0x50] sm:$0xff] %vm696, %v683
  %708 = vst.msk [vmem:[%s3 + $0x58] sm:$0xff] %vm696, %v686
  %vm709 = vcmask 254976
  %710 = vst.msk [vmem:[%s3 + $0x60] sm:$0x3] %vm709, %v691
  // Predicated region
  $region14: #{transformer_forward.7} parent=0 // pred_check
    _
  $region15: #{transformer_forward.7} parent=0 // pred_check_branch
    %712 = sbr.rel (0) target = $region17
  $region16: #{transformer_forward.7} parent=0 // pred_region
    _
  $region17: #{transformer_forward.7} parent=0 // pred_fallthru
    _
  // Predicated region
  $region18: #{transformer_forward.7} parent=0 // pred_check
    _
  $region19: #{transformer_forward.7} parent=0 // pred_check_branch
    %714 = sbr.rel (0) target = $region21
  $region20: #{transformer_forward.7} parent=0 // pred_region
    _
  $region21: #{transformer_forward.7} parent=0 // pred_fallthru
    _

// kernel: transformer_forward.8
$region0: #{transformer_forward.8}
  #allocation0 [shape = 'u32[]', space=smem, size = 0x4, offset = 0x4, fixed_abs, tag = 'smem constant byte address 0x4 - core index']
  #allocation1 [shape = 'u32[144,128]{1,0:T(1,128)}', space=vmem, size = 0x12000, scoped, tag = 'internal scratch']
  %s0 = inlined_call_operand.vmem [shape: f32[18,288], index: 0, kind: input, shape index: {}]
  %s1 = inlined_call_operand.vmem [shape: bf16[288,16], index: 1, kind: input, shape index: {}]
  %s2 = inlined_call_operand.vmem [shape: f32[1,16], index: 2, kind: input, shape index: {}]
  %s3 = inlined_call_operand.vmem [shape: f32[18,16], index: 3, kind: output, shape index: {}]
  %s4 = sld [smem:[#allocation0]]
  $region22: #{transformer_forward.8} parent=0
    _
  %s6 = ssub.s32 1, %s4
  %s7 = scalar_select 0, %s6, %s4
  // Predicated region
  $region2: #{transformer_forward.8} parent=0 // pred_check
    _
  $region3: #{transformer_forward.8} parent=0 // pred_check_branch
    %9 = sbr.rel (0) target = $region5
  $region4: #{transformer_forward.8} parent=0 // pred_region
    _
  $region5: #{transformer_forward.8} parent=0 // pred_fallthru
    _
  // Predicated region
  $region6: #{transformer_forward.8} parent=0 // pred_check
    _
  $region7: #{transformer_forward.8} parent=0 // pred_check_branch
    %11 = sbr.rel (0) target = $region9
  $region8: #{transformer_forward.8} parent=0 // pred_region
    _
  $region9: #{transformer_forward.8} parent=0 // pred_fallthru
    _
  // Predicated region
  $region10: #{transformer_forward.8} parent=0 // pred_check
    _
  $region11: #{transformer_forward.8} parent=0 // pred_check_branch
    %13 = sbr.rel (0) target = $region13
  $region12: #{transformer_forward.8} parent=0 // pred_region
    _
  $region13: #{transformer_forward.8} parent=0 // pred_fallthru
    _
  %v15 = vld [vmem:[%s0] sm:$0xff]
  %v16 = vld [vmem:[%s0 + $0x8] sm:$0xff]
  %v17 = vld [vmem:[%s0 + $0x10] sm:$0xff]
  %v18 = vld [vmem:[%s0 + $0x18] sm:$0xff]
  %v19 = vld [vmem:[%s0 + $0x20] sm:$0xff]
  %v20 = vld [vmem:[%s0 + $0x28] sm:$0xff]
  %v21 = vld [vmem:[%s0 + $0x30] sm:$0x3]
  %v22 = vld [vmem:[%s0 + $0x38] sm:$0x3]
  %v23 = vld [vmem:[%s0 + $0x40] sm:$0x3]
  %v24 = vpack.c.bf16 %v18, %v15
  %v25 = vpack.c.bf16 %v19, %v16
  %v26 = vpack.c.bf16 %v20, %v17
  %v27 = vpack.c.bf16 %v21, %v21
  %v28 = vpack.c.bf16 %v22, %v22
  %v29 = vpack.c.bf16 %v23, %v23
  %v30 = vld [vmem:[%s1] sm:$0xf]
  %v31 = vld [vmem:[%s1 + $0x4] sm:$0xf]
  %v32 = vld [vmem:[%s1 + $0x8] sm:$0xf]
  %v33 = vld [vmem:[%s1 + $0xc] sm:$0xf]
  %v34 = vld [vmem:[%s1 + $0x10] sm:$0xf]
  %v35 = vld [vmem:[%s1 + $0x14] sm:$0xf]
  %v36 = vld [vmem:[%s1 + $0x18] sm:$0xf]
  %v37 = vld [vmem:[%s1 + $0x1c] sm:$0xf]
  %v38 = vld [vmem:[%s1 + $0x20] sm:$0xf]
  %v39 = vld [vmem:[%s1 + $0x24] sm:$0xf]
  %v40 = vld [vmem:[%s1 + $0x28] sm:$0xf]
  %v41 = vld [vmem:[%s1 + $0x2c] sm:$0xf]
  %v42 = vld [vmem:[%s1 + $0x30] sm:$0xf]
  %v43 = vld [vmem:[%s1 + $0x34] sm:$0xf]
  %v44 = vld [vmem:[%s1 + $0x38] sm:$0xf]
  %v45 = vld [vmem:[%s1 + $0x3c] sm:$0xf]
  %v46 = vld [vmem:[%s1 + $0x40] sm:$0xf]
  %v47 = vld [vmem:[%s1 + $0x44] sm:$0xf]
  %v48 = vld [vmem:[%s1 + $0x48] sm:$0xf]
  %v49 = vld [vmem:[%s1 + $0x4c] sm:$0xf]
  %v50 = vld [vmem:[%s1 + $0x50] sm:$0xf]
  %v51 = vld [vmem:[%s1 + $0x54] sm:$0xf]
  %v52 = vld [vmem:[%s1 + $0x58] sm:$0xf]
  %v53 = vld [vmem:[%s1 + $0x5c] sm:$0xf]
  %v54 = vld [vmem:[%s1 + $0x60] sm:$0xf]
  %v55 = vld [vmem:[%s1 + $0x64] sm:$0xf]
  %v56 = vld [vmem:[%s1 + $0x68] sm:$0xf]
  %v57 = vld [vmem:[%s1 + $0x6c] sm:$0xf]
  %v58 = vld [vmem:[%s1 + $0x70] sm:$0xf]
  %v59 = vld [vmem:[%s1 + $0x74] sm:$0xf]
  %v60 = vld [vmem:[%s1 + $0x78] sm:$0xf]
  %v61 = vld [vmem:[%s1 + $0x7c] sm:$0xf]
  %v62 = vld [vmem:[%s1 + $0x80] sm:$0xf]
  %v63 = vld [vmem:[%s1 + $0x84] sm:$0xf]
  %v64 = vld [vmem:[%s1 + $0x88] sm:$0xf]
  %v65 = vld [vmem:[%s1 + $0x8c] sm:$0xf]
  %v66 = vld [vmem:[%s2] sm:$0x1]
  %v68 = vlaneseq
  %v69 = vshrl.u32 %v68, 7
  %v70 = vsub.s32 0, %v69
  %v71 = vrot.slane %v66, %v70
  %v109 = vunpack.c.l.b16 %v30
  %v110 = vunpack.c.l.b16 %v31
  %v111 = vunpack.c.l.b16 %v32
  %v112 = vunpack.c.l.b16 %v33
  %v113 = vunpack.c.l.b16 %v34
  %v114 = vunpack.c.l.b16 %v35
  %v115 = vunpack.c.l.b16 %v36
  %v116 = vunpack.c.l.b16 %v37
  %v117 = vunpack.c.l.b16 %v38
  %v118 = vunpack.c.l.b16 %v39
  %v119 = vunpack.c.l.b16 %v40
  %v120 = vunpack.c.l.b16 %v41
  %v121 = vunpack.c.l.b16 %v42
  %v122 = vunpack.c.l.b16 %v43
  %v123 = vunpack.c.l.b16 %v44
  %v124 = vunpack.c.l.b16 %v45
  %v125 = vunpack.c.l.b16 %v46
  %v126 = vunpack.c.l.b16 %v47
  %v127 = vunpack.c.l.b16 %v48
  %v128 = vunpack.c.l.b16 %v49
  %v129 = vunpack.c.l.b16 %v50
  %v130 = vunpack.c.l.b16 %v51
  %v131 = vunpack.c.l.b16 %v52
  %v132 = vunpack.c.l.b16 %v53
  %v133 = vunpack.c.l.b16 %v54
  %v134 = vunpack.c.l.b16 %v55
  %v135 = vunpack.c.l.b16 %v56
  %v136 = vunpack.c.l.b16 %v57
  %v137 = vunpack.c.l.b16 %v58
  %v138 = vunpack.c.l.b16 %v59
  %v139 = vunpack.c.l.b16 %v60
  %v140 = vunpack.c.l.b16 %v61
  %v141 = vunpack.c.l.b16 %v62
  %v142 = vunpack.c.l.b16 %v63
  %v143 = vunpack.c.l.b16 %v64
  %v144 = vunpack.c.l.b16 %v65
  %v145 = vpack.c.b16 %v110, %v109
  %v146 = vpack.c.b16 %v112, %v111
  %v147 = vpack.c.b16 %v114, %v113
  %v148 = vpack.c.b16 %v116, %v115
  %v149 = vpack.c.b16 %v118, %v117
  %v150 = vpack.c.b16 %v120, %v119
  %v151 = vpack.c.b16 %v122, %v121
  %v152 = vpack.c.b16 %v124, %v123
  %v153 = vpack.c.b16 %v126, %v125
  %v154 = vpack.c.b16 %v128, %v127
  %v155 = vpack.c.b16 %v130, %v129
  %v156 = vpack.c.b16 %v132, %v131
  %v157 = vpack.c.b16 %v134, %v133
  %v158 = vpack.c.b16 %v136, %v135
  %v159 = vpack.c.b16 %v138, %v137
  %v160 = vpack.c.b16 %v140, %v139
  %v161 = vpack.c.b16 %v142, %v141
  %v162 = vpack.c.b16 %v144, %v143
  %vm181 = vcmask 261120
  %v183 = vsel %vm181, %v26, 0
  %v186 = vsel %vm181, %v29, 0
  %188 = vmatprep.subr.bf16.mxu0 0
  %189 = vmatpush1.bf16.msra.mxu0 %v152
  %190 = vmatprep.subr.bf16.mxu0 0
  %191 = vmatpush1.bf16.msra.mxu0 %v151
  %192 = vmatprep.subr.bf16.mxu0 0
  %193 = vmatpush1.bf16.msra.mxu0 %v150
  %194 = vmatprep.subr.bf16.mxu0 0
  %195 = vmatpush1.bf16.msra.mxu0 %v149
  %196 = vmatprep.subr.bf16.mxu0 0
  %197 = vmatpush1.bf16.msra.mxu0 %v148
  %198 = vmatprep.subr.bf16.mxu0 0
  %199 = vmatpush1.bf16.msra.mxu0 %v147
  %200 = vmatprep.subr.bf16.mxu0 0
  %201 = vmatpush1.bf16.msra.mxu0 %v146
  %202 = vmatprep.subr.bf16.mxu0 0
  %203 = vmatpush1.bf16.msra.mxu0 %v145
  %204 = vmatprep.subr.bf16.mxu0 0
  %205 = vmatpush2.bf16.msra.mxu0 %v160
  %206 = vmatprep.subr.bf16.mxu0 0
  %207 = vmatpush2.bf16.msra.mxu0 %v159
  %208 = vmatprep.subr.bf16.mxu0 0
  %209 = vmatpush2.bf16.msra.mxu0 %v158
  %210 = vmatprep.subr.bf16.mxu0 0
  %211 = vmatpush2.bf16.msra.mxu0 %v157
  %212 = vmatprep.subr.bf16.mxu0 0
  %213 = vmatpush2.bf16.msra.mxu0 %v156
  %214 = vmatprep.subr.bf16.mxu0 0
  %215 = vmatpush2.bf16.msra.mxu0 %v155
  %216 = vmatprep.subr.bf16.mxu0 0
  %217 = vmatpush2.bf16.msra.mxu0 %v154
  %218 = vmatprep.subr.bf16.mxu0 0
  %219 = vmatpush2.bf16.msra.mxu0 %v153
  %220 = vmatprep.mubr.bf16.mxu0 %v25
  %221 = vmatmul.mubr.bf16.gmra.mxu0 %v24
  %v222 = vpop.f32.mrf.mxu0
  %v223 = vadd.f32 %v71, %v222
  %v224 = vpop.f32.mrf.mxu0
  %v225 = vpop.f32.mrf.mxu0
  %v226 = vadd.f32 %v71, %v225
  %v227 = vpop.f32.mrf.mxu0
  %228 = vmatprep.mubr.bf16.mxu0 %v28
  %229 = vmatmul.mubr.bf16.gmra.mxu0 %v27
  %v230 = vpop.f32.mrf.mxu0
  %v231 = vadd.f32 %v71, %v230
  %v232 = vpop.f32.mrf.mxu0
  %v233 = vpop.f32.mrf.mxu0
  %v234 = vpop.f32.mrf.mxu0
  %235 = vdwg.mxu0
  %236 = vmatprep.subr.bf16.mxu0 0
  %237 = vmatpush1.bf16.msra.mxu0 0
  %238 = vmatprep.subr.bf16.mxu0 0
  %239 = vmatpush1.bf16.msra.mxu0 0
  %240 = vmatprep.subr.bf16.mxu0 0
  %241 = vmatpush1.bf16.msra.mxu0 0
  %242 = vmatprep.subr.bf16.mxu0 0
  %243 = vmatpush1.bf16.msra.mxu0 0
  %244 = vmatprep.subr.bf16.mxu0 0
  %245 = vmatpush1.bf16.msra.mxu0 0
  %246 = vmatprep.subr.bf16.mxu0 0
  %247 = vmatpush1.bf16.msra.mxu0 0
  %248 = vmatprep.subr.bf16.mxu0 0
  %249 = vmatpush1.bf16.msra.mxu0 %v162
  %250 = vmatprep.subr.bf16.mxu0 0
  %251 = vmatpush1.bf16.msra.mxu0 %v161
  %252 = vmatprep.subr.bf16.mxu0 0
  %253 = vmatpush2.bf16.msra.mxu0 0
  %254 = vmatprep.subr.bf16.mxu0 0
  %255 = vmatpush2.bf16.msra.mxu0 0
  %256 = vmatprep.subr.bf16.mxu0 0
  %257 = vmatpush2.bf16.msra.mxu0 0
  %258 = vmatprep.subr.bf16.mxu0 0
  %259 = vmatpush2.bf16.msra.mxu0 0
  %260 = vmatprep.subr.bf16.mxu0 0
  %261 = vmatpush2.bf16.msra.mxu0 0
  %262 = vmatprep.subr.bf16.mxu0 0
  %263 = vmatpush2.bf16.msra.mxu0 0
  %264 = vmatprep.subr.bf16.mxu0 0
  %265 = vmatpush2.bf16.msra.mxu0 0
  %266 = vmatprep.subr.bf16.mxu0 0
  %267 = vmatpush2.bf16.msra.mxu0 0
  %268 = vmatprep.mubr.bf16.mxu0 0
  %269 = vmatmul.mubr.bf16.gmra.mxu0 %v183
  %v270 = vpop.f32.mrf.mxu0
  %v271 = vadd.f32 %v223, %v270
  %v272 = vpop.f32.mrf.mxu0
  %v273 = vpop.f32.mrf.mxu0
  %v274 = vadd.f32 %v226, %v273
  %v275 = vpop.f32.mrf.mxu0
  %276 = vmatprep.mubr.bf16.mxu0 0
  %277 = vmatmul.mubr.bf16.gmra.mxu0 %v186
  %v278 = vpop.f32.mrf.mxu0
  %v279 = vadd.f32 %v231, %v278
  %v280 = vpop.f32.mrf.mxu0
  %v281 = vpop.f32.mrf.mxu0
  %v282 = vpop.f32.mrf.mxu0
  %283 = vdwg.mxu0
  %vm284 = vcmask 130048
  %285 = vst.msk [vmem:[%s3] sm:$0xff] %vm284, %v271
  %286 = vst.msk [vmem:[%s3 + $0x8] sm:$0xff] %vm284, %v274
  %vm287 = vcmask 123904
  %288 = vst.msk [vmem:[%s3 + $0x10] sm:$0x3] %vm287, %v279
  // Predicated region
  $region14: #{transformer_forward.8} parent=0 // pred_check
    _
  $region15: #{transformer_forward.8} parent=0 // pred_check_branch
    %290 = sbr.rel (0) target = $region17
  $region16: #{transformer_forward.8} parent=0 // pred_region
    _
  $region17: #{transformer_forward.8} parent=0 // pred_fallthru
    _
  // Predicated region
  $region18: #{transformer_forward.8} parent=0 // pred_check
    _
  $region19: #{transformer_forward.8} parent=0 // pred_check_branch
    %292 = sbr.rel (0) target = $region21
  $region20: #{transformer_forward.8} parent=0 // pred_region
    _
  $region21: #{transformer_forward.8} parent=0 // pred_fallthru
    _

// kernel: transformer_forward.9
$region0: #{transformer_forward.9}
  #allocation0 [shape = 'u32[]', space=smem, size = 0x4, offset = 0x4, fixed_abs, tag = 'smem constant byte address 0x4 - core index']
  #allocation1 [shape = 'u32[144,128]{1,0:T(1,128)}', space=vmem, size = 0x12000, scoped, tag = 'internal scratch']
  %s0 = inlined_call_operand.smem [shape: u32[33], index: -1, kind: input, shape index: {}]
  %s1 = sld [smem:[%s0]]
  %s2 = scalar_lea.smem %s0, 1
  %s3 = sld [smem:[%s2]]
  %s4 = scalar_lea.smem %s0, 2
  %s5 = sld [smem:[%s4]]
  %s6 = scalar_lea.smem %s0, 3
  %s7 = sld [smem:[%s6]]
  %s8 = scalar_lea.smem %s0, 4
  %s9 = sld [smem:[%s8]]
  %s10 = scalar_lea.smem %s0, 5
  %s11 = sld [smem:[%s10]]
  %s12 = scalar_lea.smem %s0, 6
  %s13 = sld [smem:[%s12]]
  %s14 = scalar_lea.smem %s0, 7
  %s15 = sld [smem:[%s14]]
  %s16 = scalar_lea.smem %s0, 8
  %s17 = sld [smem:[%s16]]
  %s18 = scalar_lea.smem %s0, 9
  %s19 = sld [smem:[%s18]]
  %s20 = scalar_lea.smem %s0, 10
  %s21 = sld [smem:[%s20]]
  %s22 = scalar_lea.smem %s0, 11
  %s23 = sld [smem:[%s22]]
  %s24 = scalar_lea.smem %s0, 12
  %s25 = sld [smem:[%s24]]
  %s26 = scalar_lea.smem %s0, 13
  %s27 = sld [smem:[%s26]]
  %s28 = scalar_lea.smem %s0, 14
  %s29 = sld [smem:[%s28]]
  %s30 = scalar_lea.smem %s0, 15
  %s31 = sld [smem:[%s30]]
  %s32 = scalar_lea.smem %s0, 16
  %s33 = sld [smem:[%s32]]
  %s34 = scalar_lea.smem %s0, 17
  %s35 = sld [smem:[%s34]]
  %s36 = scalar_lea.smem %s0, 18
  %s37 = sld [smem:[%s36]]
  %s38 = scalar_lea.smem %s0, 19
  %s39 = sld [smem:[%s38]]
  %s40 = scalar_lea.smem %s0, 20
  %s41 = sld [smem:[%s40]]
  %s42 = scalar_lea.smem %s0, 21
  %s43 = sld [smem:[%s42]]
  %s44 = scalar_lea.smem %s0, 22
  %s45 = sld [smem:[%s44]]
  %s46 = scalar_lea.smem %s0, 23
  %s47 = sld [smem:[%s46]]
  %s48 = scalar_lea.smem %s0, 24
  %s49 = sld [smem:[%s48]]
  %s50 = scalar_lea.smem %s0, 25
  %s51 = sld [smem:[%s50]]
  %s52 = scalar_lea.smem %s0, 26
  %s53 = sld [smem:[%s52]]
  %s54 = scalar_lea.smem %s0, 27
  %s55 = sld [smem:[%s54]]
  %s56 = scalar_lea.smem %s0, 28
  %s57 = sld [smem:[%s56]]
  %s58 = scalar_lea.smem %s0, 29
  %s59 = sld [smem:[%s58]]
  %s60 = scalar_lea.smem %s0, 30
  %s61 = sld [smem:[%s60]]
  %s62 = scalar_lea.smem %s0, 31
  %s63 = sld [smem:[%s62]]
  %s64 = scalar_lea.smem %s0, 32
  %s65 = sld [smem:[%s64]]
  %s66 = sld [smem:[#allocation0]]
  $region197: #{transformer_forward.9} parent=0
    _
  %s68 = ssub.s32 1, %s66
  %s69 = scalar_select 0, %s68, %s66
  $region1: #{transformer_forward.9} parent=0
    #allocation2 [shape = 'u8[512]{0}', space=vmem, size = 0x400, scoped, tag = 'input window, operand 19, single buffered']
    #allocation3 [shape = 's32[2]{0}', space=sflag, size = 0x8, scoped, tag = 'scoped memory for transformer_forward.9']
    #allocation4 [shape = 's32[2]{0}', space=sflag, size = 0x8, scoped, tag = 'scoped memory for transformer_forward.9']
    #allocation5 [shape = 'u8[512]{0}', space=vmem, size = 0x400, scoped, tag = 'input window, operand 20, single buffered']
    #allocation6 [shape = 's32[1]{0}', space=sflag, size = 0x4, scoped, tag = 'scoped memory for transformer_forward.9']
    #allocation7 [shape = 'u8[512]{0}', space=vmem, size = 0x400, scoped, tag = 'input window, operand 21, single buffered']
    #allocation8 [shape = 'u8[512]{0}', space=vmem, size = 0x400, scoped, tag = 'input window, operand 23, single buffered']
    #allocation9 [shape = 's32[1]{0}', space=sflag, size = 0x4, scoped, tag = 'scoped memory for transformer_forward.9']
    #allocation10 [shape = 'u8[512]{0}', space=vmem, size = 0x400, scoped, tag = 'input window, operand 25, single buffered']
    #allocation11 [shape = 'u8[512]{0}', space=vmem, size = 0x400, scoped, tag = 'input window, operand 26, single buffered']
    #allocation12 [shape = 's32[1]{0}', space=sflag, size = 0x4, scoped, tag = 'scoped memory for transformer_forward.9']
    #allocation13 [shape = 'u8[512]{0}', space=vmem, size = 0x400, scoped, tag = 'input window, operand 27, single buffered']
    #allocation14 [shape = 'u8[512]{0}', space=vmem, size = 0x400, scoped, tag = 'input window, operand 29, single buffered']
    #allocation15 [shape = 's32[1]{0}', space=sflag, size = 0x4, scoped, tag = 'scoped memory for transformer_forward.9']
    #allocation16 [shape = 'u8[512]{0}', space=vmem, size = 0x400, scoped, tag = 'input window, operand 31, single buffered']
    #allocation17 [shape = 'u8[1024]{0}', space=vmem, size = 0x400, scoped, tag = 'output window, operand 0']
    %70 = vsyncpa [#allocation3], 0
    %71 = vsyncpa [#allocation6], 0
    %72 = vsyncpa [#allocation9], 0
    %73 = vsyncpa [#allocation12], 0
    %74 = vsyncpa [#allocation15], 0
    %75 = vsyncpa [#allocation4], 0
    %s76 = scalar_lea.sflag [#allocation4], 1
    %77 = vsyncpa %s76, 0
    loop: start=0, step=1, limit=4
    $region2: #{transformer_forward.9} parent=1 // loop_pre_header
      _
    $region3: #{transformer_forward.9} parent=1 // loop_header
      %s79 = sphi 0, %s83
      %p80 = scmp.ge.s32.totalorder %s79, 4
      %s89 = sphi 0, %s91
      %s92 = sphi 0, %s89
      %s93 = sphi 0, %s92
      %s109 = sphi 0, %s93
      %s113 = sphi 0, %s113
      %s115 = sphi 0, %s113
      %s116 = sphi 0, %s115
      %s130 = sphi 0, %s116
      %s134 = sphi 0, %s134
      %s136 = sphi 0, %s134
      %s137 = sphi 0, %s136
      %s151 = sphi 0, %s137
      %s155 = sphi 0, %s155
      %s157 = sphi 0, %s155
      %s158 = sphi 0, %s157
      %s172 = sphi 0, %s158
      %s176 = sphi 0, %s176
      %s178 = sphi 0, %s176
      %s179 = sphi 0, %s178
      %s193 = sphi 0, %s179
      %s197 = sphi 0, %s197
      %s199 = sphi 0, %s197
      %s200 = sphi 0, %s199
      %s214 = sphi 0, %s200
      %s218 = sphi 0, %s218
      %s220 = sphi 0, %s218
      %s221 = sphi 0, %s220
      %s235 = sphi 0, %s221
      %s239 = sphi 0, %s239
      %s241 = sphi 0, %s239
      %s242 = sphi 0, %s241
      %s256 = sphi 0, %s242
      %s260 = sphi 0, %s260
      %s262 = sphi 0, %s260
      %s263 = sphi 0, %s262
      %s277 = sphi 0, %s263
      %s281 = sphi 0, %s281
      %s283 = sphi 0, %s281
      %s284 = sphi 0, %s283
      %s298 = sphi 0, %s284
      %s302 = sphi 0, %s302
      %s304 = sphi 0, %s302
      %s305 = sphi 0, %s304
      %s319 = sphi 0, %s305
      %s323 = sphi 0, %s323
      %s325 = sphi 0, %s323
      %s326 = sphi 0, %s325
      %s340 = sphi 0, %s326
      %s344 = sphi 0, %s344
      %s346 = sphi 0, %s344
      %s347 = sphi 0, %s346
      %s361 = sphi 0, %s347
      %s365 = sphi 0, %s365
      %s367 = sphi 0, %s365
      %s368 = sphi 0, %s367
      %s382 = sphi 0, %s368
      %s386 = sphi 0, %s386
      %s388 = sphi 0, %s386
      %s389 = sphi 0, %s388
      %s403 = sphi 0, %s389
      %s407 = sphi 0, %s407
      %s409 = sphi 0, %s407
      %s410 = sphi 0, %s409
      %s424 = sphi 0, %s410
      %s428 = sphi 0, %s428
      %s430 = sphi 0, %s428
      %s431 = sphi 0, %s430
      %s445 = sphi 0, %s431
      %s449 = sphi 0, %s449
      %s451 = sphi 0, %s449
      %s452 = sphi 0, %s451
      %s466 = sphi 0, %s452
      %s470 = sphi 0, %s470
      %s472 = sphi 0, %s470
      %s473 = sphi 0, %s472
      %s487 = sphi 0, %s473
      %s491 = sphi 0, %s491
      %s493 = sphi 0, %s491
      %s494 = sphi 0, %s493
      %s508 = sphi 0, %s494
      %s512 = sphi 0, %s512
      %s514 = sphi 0, %s512
      %s515 = sphi 0, %s514
      %s529 = sphi 0, %s515
      %s533 = sphi 0, %s533
      %s535 = sphi 0, %s533
      %s536 = sphi 0, %s535
      %s550 = sphi 0, %s536
      %s554 = sphi 0, %s554
      %s556 = sphi 0, %s554
      %s557 = sphi 0, %s556
      %s571 = sphi 0, %s557
      %s575 = sphi 0, %s575
      %s577 = sphi 0, %s575
      %s578 = sphi 0, %s577
      %s592 = sphi 0, %s578
      %s596 = sphi 0, %s596
      %s598 = sphi 0, %s596
      %s599 = sphi 0, %s598
      %s613 = sphi 0, %s599
      %s617 = sphi 0, %s617
      %s619 = sphi 0, %s617
      %s620 = sphi 0, %s619
      %s634 = sphi 0, %s620
      %s638 = sphi 0, %s638
      %s640 = sphi 0, %s638
      %s641 = sphi 0, %s640
      %s655 = sphi 0, %s641
      %s659 = sphi 0, %s659
      %s661 = sphi 0, %s659
      %s662 = sphi 0, %s661
      %s676 = sphi 0, %s662
      %s680 = sphi 0, %s680
      %s682 = sphi 0, %s680
      %s683 = sphi 0, %s682
      %s697 = sphi 0, %s683
      %s701 = sphi 0, %s701
      %s703 = sphi 0, %s701
      %s704 = sphi 0, %s703
      %s718 = sphi 0, %s704
      %s722 = sphi 0, %s722
      %s724 = sphi 0, %s722
      %s725 = sphi 0, %s724
      %s739 = sphi 0, %s725
      %s743 = sphi 0, %s743
      %s745 = sphi 0, %s743
      %s746 = sphi 0, %s745
      %s760 = sphi 0, %s746
      %s766 = sphi 0, %s768
      %s769 = sphi 0, %s766
      %s770 = sphi 0, %s769
      %s786 = sphi 0, %s770
    $region4: #{transformer_forward.9} parent=1 // loop_header_branch
      %82 = sbr.rel (%p80) target = $region8
    $region5: #{transformer_forward.9} parent=1 // loop_body
      %s84 = ssub.s32 %s79, 1
      %s85 = ssub.s32 %s79, 2
      %s86 = sadd.s32 %s79, 1
      %s87 = ssub.s32 %s79, %s86
      %p88 = scmp.eq.s32.totalorder %s87, 0
      %s90 = sadd.s32 %s89, 1
      %s91 = scalar_select %p88, %s89, %s90
      %p94 = pneg %p88
      %p95 = scmp.eq.s32.totalorder %s79, 1
      %p96 = por %p94, %p95
      %p97 = scmp.ne.s32.totalorder %s89, %s92
      %p98 = scmp.eq.s32.totalorder %s79, 0
      %p99 = por %p97, %p98
      %p100 = scmp.ne.s32.totalorder %s89, %s92
      %p101 = scmp.eq.s32.totalorder %s84, 1
      %p102 = por %p100, %p101
      %p103 = scmp.ne.s32.totalorder %s92, %s93
      %p104 = scmp.eq.s32.totalorder %s84, 0
      %p105 = por %p103, %p104
      %p106 = scmp.ne.s32.totalorder %s92, %s93
      %p107 = scmp.eq.s32.totalorder %s85, 1
      %p108 = por %p106, %p107
      %p110 = scmp.ne.s32.totalorder %s93, %s109
      %p111 = scmp.eq.s32.totalorder %s85, 0
      %p112 = por %p110, %p111
      %s114 = sadd.s32 %s113, 1
      %p117 = scmp.eq.s32.totalorder %s79, 1
      %p118 = scmp.ne.s32.totalorder %s113, %s115
      %p119 = scmp.eq.s32.totalorder %s79, 0
      %p120 = por %p118, %p119
      %p121 = scmp.ne.s32.totalorder %s113, %s115
      %p122 = scmp.eq.s32.totalorder %s84, 1
      %p123 = por %p121, %p122
      %p124 = scmp.ne.s32.totalorder %s115, %s116
      %p125 = scmp.eq.s32.totalorder %s84, 0
      %p126 = por %p124, %p125
      %p127 = scmp.ne.s32.totalorder %s115, %s116
      %p128 = scmp.eq.s32.totalorder %s85, 1
      %p129 = por %p127, %p128
      %p131 = scmp.ne.s32.totalorder %s116, %s130
      %p132 = scmp.eq.s32.totalorder %s85, 0
      %p133 = por %p131, %p132
      %s135 = sadd.s32 %s134, 1
      %p138 = scmp.eq.s32.totalorder %s79, 1
      %p139 = scmp.ne.s32.totalorder %s134, %s136
      %p140 = scmp.eq.s32.totalorder %s79, 0
      %p141 = por %p139, %p140
      %p142 = scmp.ne.s32.totalorder %s134, %s136
      %p143 = scmp.eq.s32.totalorder %s84, 1
      %p144 = por %p142, %p143
      %p145 = scmp.ne.s32.totalorder %s136, %s137
      %p146 = scmp.eq.s32.totalorder %s84, 0
      %p147 = por %p145, %p146
      %p148 = scmp.ne.s32.totalorder %s136, %s137
      %p149 = scmp.eq.s32.totalorder %s85, 1
      %p150 = por %p148, %p149
      %p152 = scmp.ne.s32.totalorder %s137, %s151
      %p153 = scmp.eq.s32.totalorder %s85, 0
      %p154 = por %p152, %p153
      %s156 = sadd.s32 %s155, 1
      %p159 = scmp.eq.s32.totalorder %s79, 1
      %p160 = scmp.ne.s32.totalorder %s155, %s157
      %p161 = scmp.eq.s32.totalorder %s79, 0
      %p162 = por %p160, %p161
      %p163 = scmp.ne.s32.totalorder %s155, %s157
      %p164 = scmp.eq.s32.totalorder %s84, 1
      %p165 = por %p163, %p164
      %p166 = scmp.ne.s32.totalorder %s157, %s158
      %p167 = scmp.eq.s32.totalorder %s84, 0
      %p168 = por %p166, %p167
      %p169 = scmp.ne.s32.totalorder %s157, %s158
      %p170 = scmp.eq.s32.totalorder %s85, 1
      %p171 = por %p169, %p170
      %p173 = scmp.ne.s32.totalorder %s158, %s172
      %p174 = scmp.eq.s32.totalorder %s85, 0
      %p175 = por %p173, %p174
      %s177 = sadd.s32 %s176, 1
      %p180 = scmp.eq.s32.totalorder %s79, 1
      %p181 = scmp.ne.s32.totalorder %s176, %s178
      %p182 = scmp.eq.s32.totalorder %s79, 0
      %p183 = por %p181, %p182
      %p184 = scmp.ne.s32.totalorder %s176, %s178
      %p185 = scmp.eq.s32.totalorder %s84, 1
      %p186 = por %p184, %p185
      %p187 = scmp.ne.s32.totalorder %s178, %s179
      %p188 = scmp.eq.s32.totalorder %s84, 0
      %p189 = por %p187, %p188
      %p190 = scmp.ne.s32.totalorder %s178, %s179
      %p191 = scmp.eq.s32.totalorder %s85, 1
      %p192 = por %p190, %p191
      %p194 = scmp.ne.s32.totalorder %s179, %s193
      %p195 = scmp.eq.s32.totalorder %s85, 0
      %p196 = por %p194, %p195
      %s198 = sadd.s32 %s197, 1
      %p201 = scmp.eq.s32.totalorder %s79, 1
      %p202 = scmp.ne.s32.totalorder %s197, %s199
      %p203 = scmp.eq.s32.totalorder %s79, 0
      %p204 = por %p202, %p203
      %p205 = scmp.ne.s32.totalorder %s197, %s199
      %p206 = scmp.eq.s32.totalorder %s84, 1
      %p207 = por %p205, %p206
      %p208 = scmp.ne.s32.totalorder %s199, %s200
      %p209 = scmp.eq.s32.totalorder %s84, 0
      %p210 = por %p208, %p209
      %p211 = scmp.ne.s32.totalorder %s199, %s200
      %p212 = scmp.eq.s32.totalorder %s85, 1
      %p213 = por %p211, %p212
      %p215 = scmp.ne.s32.totalorder %s200, %s214
      %p216 = scmp.eq.s32.totalorder %s85, 0
      %p217 = por %p215, %p216
      %s219 = sadd.s32 %s218, 1
      %p222 = scmp.eq.s32.totalorder %s79, 1
      %p223 = scmp.ne.s32.totalorder %s218, %s220
      %p224 = scmp.eq.s32.totalorder %s79, 0
      %p225 = por %p223, %p224
      %p226 = scmp.ne.s32.totalorder %s218, %s220
      %p227 = scmp.eq.s32.totalorder %s84, 1
      %p228 = por %p226, %p227
      %p229 = scmp.ne.s32.totalorder %s220, %s221
      %p230 = scmp.eq.s32.totalorder %s84, 0
      %p231 = por %p229, %p230
      %p232 = scmp.ne.s32.totalorder %s220, %s221
      %p233 = scmp.eq.s32.totalorder %s85, 1
      %p234 = por %p232, %p233
      %p236 = scmp.ne.s32.totalorder %s221, %s235
      %p237 = scmp.eq.s32.totalorder %s85, 0
      %p238 = por %p236, %p237
      %s240 = sadd.s32 %s239, 1
      %p243 = scmp.eq.s32.totalorder %s79, 1
      %p244 = scmp.ne.s32.totalorder %s239, %s241
      %p245 = scmp.eq.s32.totalorder %s79, 0
      %p246 = por %p244, %p245
      %p247 = scmp.ne.s32.totalorder %s239, %s241
      %p248 = scmp.eq.s32.totalorder %s84, 1
      %p249 = por %p247, %p248
      %p250 = scmp.ne.s32.totalorder %s241, %s242
      %p251 = scmp.eq.s32.totalorder %s84, 0
      %p252 = por %p250, %p251
      %p253 = scmp.ne.s32.totalorder %s241, %s242
      %p254 = scmp.eq.s32.totalorder %s85, 1
      %p255 = por %p253, %p254
      %p257 = scmp.ne.s32.totalorder %s242, %s256
      %p258 = scmp.eq.s32.totalorder %s85, 0
      %p259 = por %p257, %p258
      %s261 = sadd.s32 %s260, 1
      %p264 = scmp.eq.s32.totalorder %s79, 1
      %p265 = scmp.ne.s32.totalorder %s260, %s262
      %p266 = scmp.eq.s32.totalorder %s79, 0
      %p267 = por %p265, %p266
      %p268 = scmp.ne.s32.totalorder %s260, %s262
      %p269 = scmp.eq.s32.totalorder %s84, 1
      %p270 = por %p268, %p269
      %p271 = scmp.ne.s32.totalorder %s262, %s263
      %p272 = scmp.eq.s32.totalorder %s84, 0
      %p273 = por %p271, %p272
      %p274 = scmp.ne.s32.totalorder %s262, %s263
      %p275 = scmp.eq.s32.totalorder %s85, 1
      %p276 = por %p274, %p275
      %p278 = scmp.ne.s32.totalorder %s263, %s277
      %p279 = scmp.eq.s32.totalorder %s85, 0
      %p280 = por %p278, %p279
      %s282 = sadd.s32 %s281, 1
      %p285 = scmp.eq.s32.totalorder %s79, 1
      %p286 = scmp.ne.s32.totalorder %s281, %s283
      %p287 = scmp.eq.s32.totalorder %s79, 0
      %p288 = por %p286, %p287
      %p289 = scmp.ne.s32.totalorder %s281, %s283
      %p290 = scmp.eq.s32.totalorder %s84, 1
      %p291 = por %p289, %p290
      %p292 = scmp.ne.s32.totalorder %s283, %s284
      %p293 = scmp.eq.s32.totalorder %s84, 0
      %p294 = por %p292, %p293
      %p295 = scmp.ne.s32.totalorder %s283, %s284
      %p296 = scmp.eq.s32.totalorder %s85, 1
      %p297 = por %p295, %p296
      %p299 = scmp.ne.s32.totalorder %s284, %s298
      %p300 = scmp.eq.s32.totalorder %s85, 0
      %p301 = por %p299, %p300
      %s303 = sadd.s32 %s302, 1
      %p306 = scmp.eq.s32.totalorder %s79, 1
      %p307 = scmp.ne.s32.totalorder %s302, %s304
      %p308 = scmp.eq.s32.totalorder %s79, 0
      %p309 = por %p307, %p308
      %p310 = scmp.ne.s32.totalorder %s302, %s304
      %p311 = scmp.eq.s32.totalorder %s84, 1
      %p312 = por %p310, %p311
      %p313 = scmp.ne.s32.totalorder %s304, %s305
      %p314 = scmp.eq.s32.totalorder %s84, 0
      %p315 = por %p313, %p314
      %p316 = scmp.ne.s32.totalorder %s304, %s305
      %p317 = scmp.eq.s32.totalorder %s85, 1
      %p318 = por %p316, %p317
      %p320 = scmp.ne.s32.totalorder %s305, %s319
      %p321 = scmp.eq.s32.totalorder %s85, 0
      %p322 = por %p320, %p321
      %s324 = sadd.s32 %s323, 1
      %p327 = scmp.eq.s32.totalorder %s79, 1
      %p328 = scmp.ne.s32.totalorder %s323, %s325
      %p329 = scmp.eq.s32.totalorder %s79, 0
      %p330 = por %p328, %p329
      %p331 = scmp.ne.s32.totalorder %s323, %s325
      %p332 = scmp.eq.s32.totalorder %s84, 1
      %p333 = por %p331, %p332
      %p334 = scmp.ne.s32.totalorder %s325, %s326
      %p335 = scmp.eq.s32.totalorder %s84, 0
      %p336 = por %p334, %p335
      %p337 = scmp.ne.s32.totalorder %s325, %s326
      %p338 = scmp.eq.s32.totalorder %s85, 1
      %p339 = por %p337, %p338
      %p341 = scmp.ne.s32.totalorder %s326, %s340
      %p342 = scmp.eq.s32.totalorder %s85, 0
      %p343 = por %p341, %p342
      %s345 = sadd.s32 %s344, 1
      %p348 = scmp.eq.s32.totalorder %s79, 1
      %p349 = scmp.ne.s32.totalorder %s344, %s346
      %p350 = scmp.eq.s32.totalorder %s79, 0
      %p351 = por %p349, %p350
      %p352 = scmp.ne.s32.totalorder %s344, %s346
      %p353 = scmp.eq.s32.totalorder %s84, 1
      %p354 = por %p352, %p353
      %p355 = scmp.ne.s32.totalorder %s346, %s347
      %p356 = scmp.eq.s32.totalorder %s84, 0
      %p357 = por %p355, %p356
      %p358 = scmp.ne.s32.totalorder %s346, %s347
      %p359 = scmp.eq.s32.totalorder %s85, 1
      %p360 = por %p358, %p359
      %p362 = scmp.ne.s32.totalorder %s347, %s361
      %p363 = scmp.eq.s32.totalorder %s85, 0
      %p364 = por %p362, %p363
      %s366 = sadd.s32 %s365, 1
      %p369 = scmp.eq.s32.totalorder %s79, 1
      %p370 = scmp.ne.s32.totalorder %s365, %s367
      %p371 = scmp.eq.s32.totalorder %s79, 0
      %p372 = por %p370, %p371
      %p373 = scmp.ne.s32.totalorder %s365, %s367
      %p374 = scmp.eq.s32.totalorder %s84, 1
      %p375 = por %p373, %p374
      %p376 = scmp.ne.s32.totalorder %s367, %s368
      %p377 = scmp.eq.s32.totalorder %s84, 0
      %p378 = por %p376, %p377
      %p379 = scmp.ne.s32.totalorder %s367, %s368
      %p380 = scmp.eq.s32.totalorder %s85, 1
      %p381 = por %p379, %p380
      %p383 = scmp.ne.s32.totalorder %s368, %s382
      %p384 = scmp.eq.s32.totalorder %s85, 0
      %p385 = por %p383, %p384
      %s387 = sadd.s32 %s386, 1
      %p390 = scmp.eq.s32.totalorder %s79, 1
      %p391 = scmp.ne.s32.totalorder %s386, %s388
      %p392 = scmp.eq.s32.totalorder %s79, 0
      %p393 = por %p391, %p392
      %p394 = scmp.ne.s32.totalorder %s386, %s388
      %p395 = scmp.eq.s32.totalorder %s84, 1
      %p396 = por %p394, %p395
      %p397 = scmp.ne.s32.totalorder %s388, %s389
      %p398 = scmp.eq.s32.totalorder %s84, 0
      %p399 = por %p397, %p398
      %p400 = scmp.ne.s32.totalorder %s388, %s389
      %p401 = scmp.eq.s32.totalorder %s85, 1
      %p402 = por %p400, %p401
      %p404 = scmp.ne.s32.totalorder %s389, %s403
      %p405 = scmp.eq.s32.totalorder %s85, 0
      %p406 = por %p404, %p405
      %s408 = sadd.s32 %s407, 1
      %p411 = scmp.eq.s32.totalorder %s79, 1
      %p412 = scmp.ne.s32.totalorder %s407, %s409
      %p413 = scmp.eq.s32.totalorder %s79, 0
      %p414 = por %p412, %p413
      %p415 = scmp.ne.s32.totalorder %s407, %s409
      %p416 = scmp.eq.s32.totalorder %s84, 1
      %p417 = por %p415, %p416
      %p418 = scmp.ne.s32.totalorder %s409, %s410
      %p419 = scmp.eq.s32.totalorder %s84, 0
      %p420 = por %p418, %p419
      %p421 = scmp.ne.s32.totalorder %s409, %s410
      %p422 = scmp.eq.s32.totalorder %s85, 1
      %p423 = por %p421, %p422
      %p425 = scmp.ne.s32.totalorder %s410, %s424
      %p426 = scmp.eq.s32.totalorder %s85, 0
      %p427 = por %p425, %p426
      %s429 = sadd.s32 %s428, 1
      %p432 = scmp.eq.s32.totalorder %s79, 1
      %p433 = scmp.ne.s32.totalorder %s428, %s430
      %p434 = scmp.eq.s32.totalorder %s79, 0
      %p435 = por %p433, %p434
      %p436 = scmp.ne.s32.totalorder %s428, %s430
      %p437 = scmp.eq.s32.totalorder %s84, 1
      %p438 = por %p436, %p437
      %p439 = scmp.ne.s32.totalorder %s430, %s431
      %p440 = scmp.eq.s32.totalorder %s84, 0
      %p441 = por %p439, %p440
      %p442 = scmp.ne.s32.totalorder %s430, %s431
      %p443 = scmp.eq.s32.totalorder %s85, 1
      %p444 = por %p442, %p443
      %p446 = scmp.ne.s32.totalorder %s431, %s445
      %p447 = scmp.eq.s32.totalorder %s85, 0
      %p448 = por %p446, %p447
      %s450 = sadd.s32 %s449, 1
      %p453 = scmp.eq.s32.totalorder %s79, 1
      %p454 = scmp.ne.s32.totalorder %s449, %s451
      %p455 = scmp.eq.s32.totalorder %s79, 0
      %p456 = por %p454, %p455
      %p457 = scmp.ne.s32.totalorder %s449, %s451
      %p458 = scmp.eq.s32.totalorder %s84, 1
      %p459 = por %p457, %p458
      %p460 = scmp.ne.s32.totalorder %s451, %s452
      %p461 = scmp.eq.s32.totalorder %s84, 0
      %p462 = por %p460, %p461
      %p463 = scmp.ne.s32.totalorder %s451, %s452
      %p464 = scmp.eq.s32.totalorder %s85, 1
      %p465 = por %p463, %p464
      %p467 = scmp.ne.s32.totalorder %s452, %s466
      %p468 = scmp.eq.s32.totalorder %s85, 0
      %p469 = por %p467, %p468
      %s471 = sadd.s32 %s470, 1
      %p474 = scmp.eq.s32.totalorder %s79, 1
      %p475 = scmp.ne.s32.totalorder %s470, %s472
      %p476 = scmp.eq.s32.totalorder %s79, 0
      %p477 = por %p475, %p476
      %p478 = scmp.ne.s32.totalorder %s470, %s472
      %p479 = scmp.eq.s32.totalorder %s84, 1
      %p480 = por %p478, %p479
      %p481 = scmp.ne.s32.totalorder %s472, %s473
      %p482 = scmp.eq.s32.totalorder %s84, 0
      %p483 = por %p481, %p482
      %p484 = scmp.ne.s32.totalorder %s472, %s473
      %p485 = scmp.eq.s32.totalorder %s85, 1
      %p486 = por %p484, %p485
      %p488 = scmp.ne.s32.totalorder %s473, %s487
      %p489 = scmp.eq.s32.totalorder %s85, 0
      %p490 = por %p488, %p489
      %s492 = sadd.s32 %s491, 1
      %p495 = scmp.eq.s32.totalorder %s79, 1
      %p496 = scmp.ne.s32.totalorder %s491, %s493
      %p497 = scmp.eq.s32.totalorder %s79, 0
      %p498 = por %p496, %p497
      %p499 = scmp.ne.s32.totalorder %s491, %s493
      %p500 = scmp.eq.s32.totalorder %s84, 1
      %p501 = por %p499, %p500
      %p502 = scmp.ne.s32.totalorder %s493, %s494
      %p503 = scmp.eq.s32.totalorder %s84, 0
      %p504 = por %p502, %p503
      %p505 = scmp.ne.s32.totalorder %s493, %s494
      %p506 = scmp.eq.s32.totalorder %s85, 1
      %p507 = por %p505, %p506
      %p509 = scmp.ne.s32.totalorder %s494, %s508
      %p510 = scmp.eq.s32.totalorder %s85, 0
      %p511 = por %p509, %p510
      %s513 = sadd.s32 %s512, 1
      %p516 = scmp.eq.s32.totalorder %s79, 1
      %p517 = scmp.ne.s32.totalorder %s512, %s514
      %p518 = scmp.eq.s32.totalorder %s79, 0
      %p519 = por %p517, %p518
      %p520 = scmp.ne.s32.totalorder %s512, %s514
      %p521 = scmp.eq.s32.totalorder %s84, 1
      %p522 = por %p520, %p521
      %p523 = scmp.ne.s32.totalorder %s514, %s515
      %p524 = scmp.eq.s32.totalorder %s84, 0
      %p525 = por %p523, %p524
      %p526 = scmp.ne.s32.totalorder %s514, %s515
      %p527 = scmp.eq.s32.totalorder %s85, 1
      %p528 = por %p526, %p527
      %p530 = scmp.ne.s32.totalorder %s515, %s529
      %p531 = scmp.eq.s32.totalorder %s85, 0
      %p532 = por %p530, %p531
      %s534 = sadd.s32 %s533, 1
      %p537 = scmp.eq.s32.totalorder %s79, 1
      %p538 = scmp.ne.s32.totalorder %s533, %s535
      %p539 = scmp.eq.s32.totalorder %s79, 0
      %p540 = por %p538, %p539
      %p541 = scmp.ne.s32.totalorder %s533, %s535
      %p542 = scmp.eq.s32.totalorder %s84, 1
      %p543 = por %p541, %p542
      %p544 = scmp.ne.s32.totalorder %s535, %s536
      %p545 = scmp.eq.s32.totalorder %s84, 0
      %p546 = por %p544, %p545
      %p547 = scmp.ne.s32.totalorder %s535, %s536
      %p548 = scmp.eq.s32.totalorder %s85, 1
      %p549 = por %p547, %p548
      %p551 = scmp.ne.s32.totalorder %s536, %s550
      %p552 = scmp.eq.s32.totalorder %s85, 0
      %p553 = por %p551, %p552
      %s555 = sadd.s32 %s554, 1
      %p558 = scmp.eq.s32.totalorder %s79, 1
      %p559 = scmp.ne.s32.totalorder %s554, %s556
      %p560 = scmp.eq.s32.totalorder %s79, 0
      %p561 = por %p559, %p560
      %p562 = scmp.ne.s32.totalorder %s554, %s556
      %p563 = scmp.eq.s32.totalorder %s84, 1
      %p564 = por %p562, %p563
      %p565 = scmp.ne.s32.totalorder %s556, %s557
      %p566 = scmp.eq.s32.totalorder %s84, 0
      %p567 = por %p565, %p566
      %p568 = scmp.ne.s32.totalorder %s556, %s557
      %p569 = scmp.eq.s32.totalorder %s85, 1
      %p570 = por %p568, %p569
      %p572 = scmp.ne.s32.totalorder %s557, %s571
      %p573 = scmp.eq.s32.totalorder %s85, 0
      %p574 = por %p572, %p573
      %s576 = sadd.s32 %s575, 1
      %p579 = scmp.eq.s32.totalorder %s79, 1
      %p580 = scmp.ne.s32.totalorder %s575, %s577
      %p581 = scmp.eq.s32.totalorder %s79, 0
      %p582 = por %p580, %p581
      %p583 = scmp.ne.s32.totalorder %s575, %s577
      %p584 = scmp.eq.s32.totalorder %s84, 1
      %p585 = por %p583, %p584
      %p586 = scmp.ne.s32.totalorder %s577, %s578
      %p587 = scmp.eq.s32.totalorder %s84, 0
      %p588 = por %p586, %p587
      %p589 = scmp.ne.s32.totalorder %s577, %s578
      %p590 = scmp.eq.s32.totalorder %s85, 1
      %p591 = por %p589, %p590
      %p593 = scmp.ne.s32.totalorder %s578, %s592
      %p594 = scmp.eq.s32.totalorder %s85, 0
      %p595 = por %p593, %p594
      %s597 = sadd.s32 %s596, 1
      %p600 = scmp.eq.s32.totalorder %s79, 1
      %p601 = scmp.ne.s32.totalorder %s596, %s598
      %p602 = scmp.eq.s32.totalorder %s79, 0
      %p603 = por %p601, %p602
      %p604 = scmp.ne.s32.totalorder %s596, %s598
      %p605 = scmp.eq.s32.totalorder %s84, 1
      %p606 = por %p604, %p605
      %p607 = scmp.ne.s32.totalorder %s598, %s599
      %p608 = scmp.eq.s32.totalorder %s84, 0
      %p609 = por %p607, %p608
      %p610 = scmp.ne.s32.totalorder %s598, %s599
      %p611 = scmp.eq.s32.totalorder %s85, 1
      %p612 = por %p610, %p611
      %p614 = scmp.ne.s32.totalorder %s599, %s613
      %p615 = scmp.eq.s32.totalorder %s85, 0
      %p616 = por %p614, %p615
      %s618 = sadd.s32 %s617, 1
      %p621 = scmp.eq.s32.totalorder %s79, 1
      %p622 = scmp.ne.s32.totalorder %s617, %s619
      %p623 = scmp.eq.s32.totalorder %s79, 0
      %p624 = por %p622, %p623
      %p625 = scmp.ne.s32.totalorder %s617, %s619
      %p626 = scmp.eq.s32.totalorder %s84, 1
      %p627 = por %p625, %p626
      %p628 = scmp.ne.s32.totalorder %s619, %s620
      %p629 = scmp.eq.s32.totalorder %s84, 0
      %p630 = por %p628, %p629
      %p631 = scmp.ne.s32.totalorder %s619, %s620
      %p632 = scmp.eq.s32.totalorder %s85, 1
      %p633 = por %p631, %p632
      %p635 = scmp.ne.s32.totalorder %s620, %s634
      %p636 = scmp.eq.s32.totalorder %s85, 0
      %p637 = por %p635, %p636
      %s639 = sadd.s32 %s638, 1
      %p642 = scmp.eq.s32.totalorder %s79, 1
      %p643 = scmp.ne.s32.totalorder %s638, %s640
      %p644 = scmp.eq.s32.totalorder %s79, 0
      %p645 = por %p643, %p644
      %p646 = scmp.ne.s32.totalorder %s638, %s640
      %p647 = scmp.eq.s32.totalorder %s84, 1
      %p648 = por %p646, %p647
      %p649 = scmp.ne.s32.totalorder %s640, %s641
      %p650 = scmp.eq.s32.totalorder %s84, 0
      %p651 = por %p649, %p650
      %p652 = scmp.ne.s32.totalorder %s640, %s641
      %p653 = scmp.eq.s32.totalorder %s85, 1
      %p654 = por %p652, %p653
      %p656 = scmp.ne.s32.totalorder %s641, %s655
      %p657 = scmp.eq.s32.totalorder %s85, 0
      %p658 = por %p656, %p657
      %s660 = sadd.s32 %s659, 1
      %p663 = scmp.eq.s32.totalorder %s79, 1
      %p664 = scmp.ne.s32.totalorder %s659, %s661
      %p665 = scmp.eq.s32.totalorder %s79, 0
      %p666 = por %p664, %p665
      %p667 = scmp.ne.s32.totalorder %s659, %s661
      %p668 = scmp.eq.s32.totalorder %s84, 1
      %p669 = por %p667, %p668
      %p670 = scmp.ne.s32.totalorder %s661, %s662
      %p671 = scmp.eq.s32.totalorder %s84, 0
      %p672 = por %p670, %p671
      %p673 = scmp.ne.s32.totalorder %s661, %s662
      %p674 = scmp.eq.s32.totalorder %s85, 1
      %p675 = por %p673, %p674
      %p677 = scmp.ne.s32.totalorder %s662, %s676
      %p678 = scmp.eq.s32.totalorder %s85, 0
      %p679 = por %p677, %p678
      %s681 = sadd.s32 %s680, 1
      %p684 = scmp.eq.s32.totalorder %s79, 1
      %p685 = scmp.ne.s32.totalorder %s680, %s682
      %p686 = scmp.eq.s32.totalorder %s79, 0
      %p687 = por %p685, %p686
      %p688 = scmp.ne.s32.totalorder %s680, %s682
      %p689 = scmp.eq.s32.totalorder %s84, 1
      %p690 = por %p688, %p689
      %p691 = scmp.ne.s32.totalorder %s682, %s683
      %p692 = scmp.eq.s32.totalorder %s84, 0
      %p693 = por %p691, %p692
      %p694 = scmp.ne.s32.totalorder %s682, %s683
      %p695 = scmp.eq.s32.totalorder %s85, 1
      %p696 = por %p694, %p695
      %p698 = scmp.ne.s32.totalorder %s683, %s697
      %p699 = scmp.eq.s32.totalorder %s85, 0
      %p700 = por %p698, %p699
      %s702 = sadd.s32 %s701, 1
      %p705 = scmp.eq.s32.totalorder %s79, 1
      %p706 = scmp.ne.s32.totalorder %s701, %s703
      %p707 = scmp.eq.s32.totalorder %s79, 0
      %p708 = por %p706, %p707
      %p709 = scmp.ne.s32.totalorder %s701, %s703
      %p710 = scmp.eq.s32.totalorder %s84, 1
      %p711 = por %p709, %p710
      %p712 = scmp.ne.s32.totalorder %s703, %s704
      %p713 = scmp.eq.s32.totalorder %s84, 0
      %p714 = por %p712, %p713
      %p715 = scmp.ne.s32.totalorder %s703, %s704
      %p716 = scmp.eq.s32.totalorder %s85, 1
      %p717 = por %p715, %p716
      %p719 = scmp.ne.s32.totalorder %s704, %s718
      %p720 = scmp.eq.s32.totalorder %s85, 0
      %p721 = por %p719, %p720
      %s723 = sadd.s32 %s722, 1
      %p726 = scmp.eq.s32.totalorder %s79, 1
      %p727 = scmp.ne.s32.totalorder %s722, %s724
      %p728 = scmp.eq.s32.totalorder %s79, 0
      %p729 = por %p727, %p728
      %p730 = scmp.ne.s32.totalorder %s722, %s724
      %p731 = scmp.eq.s32.totalorder %s84, 1
      %p732 = por %p730, %p731
      %p733 = scmp.ne.s32.totalorder %s724, %s725
      %p734 = scmp.eq.s32.totalorder %s84, 0
      %p735 = por %p733, %p734
      %p736 = scmp.ne.s32.totalorder %s724, %s725
      %p737 = scmp.eq.s32.totalorder %s85, 1
      %p738 = por %p736, %p737
      %p740 = scmp.ne.s32.totalorder %s725, %s739
      %p741 = scmp.eq.s32.totalorder %s85, 0
      %p742 = por %p740, %p741
      %s744 = sadd.s32 %s743, 1
      %p747 = scmp.eq.s32.totalorder %s79, 1
      %p748 = scmp.ne.s32.totalorder %s743, %s745
      %p749 = scmp.eq.s32.totalorder %s79, 0
      %p750 = por %p748, %p749
      %p751 = scmp.ne.s32.totalorder %s743, %s745
      %p752 = scmp.eq.s32.totalorder %s84, 1
      %p753 = por %p751, %p752
      %p754 = scmp.ne.s32.totalorder %s745, %s746
      %p755 = scmp.eq.s32.totalorder %s84, 0
      %p756 = por %p754, %p755
      %p757 = scmp.ne.s32.totalorder %s745, %s746
      %p758 = scmp.eq.s32.totalorder %s85, 1
      %p759 = por %p757, %p758
      %p761 = scmp.ne.s32.totalorder %s746, %s760
      %p762 = scmp.eq.s32.totalorder %s85, 0
      %p763 = por %p761, %p762
      %s764 = ssub.s32 %s79, %s86
      %p765 = scmp.eq.s32.totalorder %s764, 0
      %s767 = sadd.s32 %s766, 1
      %s768 = scalar_select %p765, %s766, %s767
      %p771 = pneg %p765
      %p772 = scmp.eq.s32.totalorder %s79, 1
      %p773 = por %p771, %p772
      %p774 = scmp.ne.s32.totalorder %s766, %s769
      %p775 = scmp.eq.s32.totalorder %s79, 0
      %p776 = por %p774, %p775
      %p777 = scmp.ne.s32.totalorder %s766, %s769
      %p778 = scmp.eq.s32.totalorder %s84, 1
      %p779 = por %p777, %p778
      %p780 = scmp.ne.s32.totalorder %s769, %s770
      %p781 = scmp.eq.s32.totalorder %s84, 0
      %p782 = por %p780, %p781
      %p783 = scmp.ne.s32.totalorder %s769, %s770
      %p784 = scmp.eq.s32.totalorder %s85, 1
      %p785 = por %p783, %p784
      %p787 = scmp.ne.s32.totalorder %s770, %s786
      %p788 = scmp.eq.s32.totalorder %s85, 0
      %p789 = por %p787, %p788
      %p790 = scmp.le.s32.totalorder 1, %s79
      %p791 = scmp.lt.s32.totalorder %s79, 3
      %p792 = pnand %p790, %p791
      %p793 = pneg %p792
      // Predicated region
      $region9: #{transformer_forward.9} parent=5 // pred_check
        _
      $region10: #{transformer_forward.9} parent=5 // pred_check_branch
        %795 = sbr.rel (%p792) target = $region12
      $region11: #{transformer_forward.9} parent=5 // pred_region
        %s796 = ssub.s32 %s79, 1
        // Predicated region
        $region13: #{transformer_forward.9} parent=11 // pred_check
          %p797 = pneg %p126
        $region14: #{transformer_forward.9} parent=11 // pred_check_branch
          %799 = sbr.rel (%p797) target = $region16
        $region15: #{transformer_forward.9} parent=11 // pred_region
          _
        $region16: #{transformer_forward.9} parent=11 // pred_fallthru
          _
        // Predicated region
        $region17: #{transformer_forward.9} parent=11 // pred_check
          %p800 = pneg %p147
        $region18: #{transformer_forward.9} parent=11 // pred_check_branch
          %802 = sbr.rel (%p800) target = $region20
        $region19: #{transformer_forward.9} parent=11 // pred_region
          _
        $region20: #{transformer_forward.9} parent=11 // pred_fallthru
          _
        // Predicated region
        $region21: #{transformer_forward.9} parent=11 // pred_check
          %p803 = pneg %p168
        $region22: #{transformer_forward.9} parent=11 // pred_check_branch
          %805 = sbr.rel (%p803) target = $region24
        $region23: #{transformer_forward.9} parent=11 // pred_region
          _
        $region24: #{transformer_forward.9} parent=11 // pred_fallthru
          _
        // Predicated region
        $region25: #{transformer_forward.9} parent=11 // pred_check
          %p806 = pneg %p189
        $region26: #{transformer_forward.9} parent=11 // pred_check_branch
          %808 = sbr.rel (%p806) target = $region28
        $region27: #{transformer_forward.9} parent=11 // pred_region
          _
        $region28: #{transformer_forward.9} parent=11 // pred_fallthru
          _
        // Predicated region
        $region29: #{transformer_forward.9} parent=11 // pred_check
          %p809 = pneg %p210
        $region30: #{transformer_forward.9} parent=11 // pred_check_branch
          %811 = sbr.rel (%p809) target = $region32
        $region31: #{transformer_forward.9} parent=11 // pred_region
          _
        $region32: #{transformer_forward.9} parent=11 // pred_fallthru
          _
        // Predicated region
        $region33: #{transformer_forward.9} parent=11 // pred_check
          %p812 = pneg %p231
        $region34: #{transformer_forward.9} parent=11 // pred_check_branch
          %814 = sbr.rel (%p812) target = $region36
        $region35: #{transformer_forward.9} parent=11 // pred_region
          _
        $region36: #{transformer_forward.9} parent=11 // pred_fallthru
          _
        // Predicated region
        $region37: #{transformer_forward.9} parent=11 // pred_check
          %p815 = pneg %p252
        $region38: #{transformer_forward.9} parent=11 // pred_check_branch
          %817 = sbr.rel (%p815) target = $region40
        $region39: #{transformer_forward.9} parent=11 // pred_region
          _
        $region40: #{transformer_forward.9} parent=11 // pred_fallthru
          _
        // Predicated region
        $region41: #{transformer_forward.9} parent=11 // pred_check
          %p818 = pneg %p273
        $region42: #{transformer_forward.9} parent=11 // pred_check_branch
          %820 = sbr.rel (%p818) target = $region44
        $region43: #{transformer_forward.9} parent=11 // pred_region
          _
        $region44: #{transformer_forward.9} parent=11 // pred_fallthru
          _
        // Predicated region
        $region45: #{transformer_forward.9} parent=11 // pred_check
          %p821 = pneg %p294
        $region46: #{transformer_forward.9} parent=11 // pred_check_branch
          %823 = sbr.rel (%p821) target = $region48
        $region47: #{transformer_forward.9} parent=11 // pred_region
          _
        $region48: #{transformer_forward.9} parent=11 // pred_fallthru
          _
        // Predicated region
        $region49: #{transformer_forward.9} parent=11 // pred_check
          %p824 = pneg %p315
        $region50: #{transformer_forward.9} parent=11 // pred_check_branch
          %826 = sbr.rel (%p824) target = $region52
        $region51: #{transformer_forward.9} parent=11 // pred_region
          _
        $region52: #{transformer_forward.9} parent=11 // pred_fallthru
          _
        // Predicated region
        $region53: #{transformer_forward.9} parent=11 // pred_check
          %p827 = pneg %p336
        $region54: #{transformer_forward.9} parent=11 // pred_check_branch
          %829 = sbr.rel (%p827) target = $region56
        $region55: #{transformer_forward.9} parent=11 // pred_region
          _
        $region56: #{transformer_forward.9} parent=11 // pred_fallthru
          _
        // Predicated region
        $region57: #{transformer_forward.9} parent=11 // pred_check
          %p830 = pneg %p357
        $region58: #{transformer_forward.9} parent=11 // pred_check_branch
          %832 = sbr.rel (%p830) target = $region60
        $region59: #{transformer_forward.9} parent=11 // pred_region
          _
        $region60: #{transformer_forward.9} parent=11 // pred_fallthru
          _
        // Predicated region
        $region61: #{transformer_forward.9} parent=11 // pred_check
          %p833 = pneg %p378
        $region62: #{transformer_forward.9} parent=11 // pred_check_branch
          %835 = sbr.rel (%p833) target = $region64
        $region63: #{transformer_forward.9} parent=11 // pred_region
          _
        $region64: #{transformer_forward.9} parent=11 // pred_fallthru
          _
        // Predicated region
        $region65: #{transformer_forward.9} parent=11 // pred_check
          %p836 = pneg %p399
        $region66: #{transformer_forward.9} parent=11 // pred_check_branch
          %838 = sbr.rel (%p836) target = $region68
        $region67: #{transformer_forward.9} parent=11 // pred_region
          _
        $region68: #{transformer_forward.9} parent=11 // pred_fallthru
          _
        // Predicated region
        $region69: #{transformer_forward.9} parent=11 // pred_check
          %p839 = pneg %p420
        $region70: #{transformer_forward.9} parent=11 // pred_check_branch
          %841 = sbr.rel (%p839) target = $region72
        $region71: #{transformer_forward.9} parent=11 // pred_region
          _
        $region72: #{transformer_forward.9} parent=11 // pred_fallthru
          _
        // Predicated region
        $region73: #{transformer_forward.9} parent=11 // pred_check
          %p842 = pneg %p441
        $region74: #{transformer_forward.9} parent=11 // pred_check_branch
          %844 = sbr.rel (%p842) target = $region76
        $region75: #{transformer_forward.9} parent=11 // pred_region
          _
        $region76: #{transformer_forward.9} parent=11 // pred_fallthru
          _
        // Predicated region
        $region77: #{transformer_forward.9} parent=11 // pred_check
          %p845 = pneg %p462
        $region78: #{transformer_forward.9} parent=11 // pred_check_branch
          %847 = sbr.rel (%p845) target = $region80
        $region79: #{transformer_forward.9} parent=11 // pred_region
          _
        $region80: #{transformer_forward.9} parent=11 // pred_fallthru
          _
        // Predicated region
        $region81: #{transformer_forward.9} parent=11 // pred_check
          %p848 = pneg %p483
        $region82: #{transformer_forward.9} parent=11 // pred_check_branch
          %850 = sbr.rel (%p848) target = $region84
        $region83: #{transformer_forward.9} parent=11 // pred_region
          _
        $region84: #{transformer_forward.9} parent=11 // pred_fallthru
          _
        // Predicated region
        $region85: #{transformer_forward.9} parent=11 // pred_check
          %p851 = pneg %p504
        $region86: #{transformer_forward.9} parent=11 // pred_check_branch
          %853 = sbr.rel (%p851) target = $region88
        $region87: #{transformer_forward.9} parent=11 // pred_region
          %s855 = ssub.s32 16, 16
          %856 = vsyncadd [#allocation3], %s855
          %s858 = sshll.u32 [#allocation2], 4
          %s859 = int_to_ptr.vmem [resolvable:$true] %s858
          %861 = dma.hbm_to_vmem [thread:$0]  %s39, 16, %s859, [#allocation3]
        $region88: #{transformer_forward.9} parent=11 // pred_fallthru
          _
        // Predicated region
        $region89: #{transformer_forward.9} parent=11 // pred_check
          %p862 = pneg %p525
        $region90: #{transformer_forward.9} parent=11 // pred_check_branch
          %864 = sbr.rel (%p862) target = $region92
        $region91: #{transformer_forward.9} parent=11 // pred_region
          %s866 = ssub.s32 16, 16
          %867 = vsyncadd [#allocation6], %s866
          %s869 = sshll.u32 [#allocation5], 4
          %s870 = int_to_ptr.vmem [resolvable:$true] %s869
          %872 = dma.hbm_to_vmem [thread:$0]  %s41, 16, %s870, [#allocation6]
        $region92: #{transformer_forward.9} parent=11 // pred_fallthru
          _
        // Predicated region
        $region93: #{transformer_forward.9} parent=11 // pred_check
          %p873 = pneg %p546
        $region94: #{transformer_forward.9} parent=11 // pred_check_branch
          %875 = sbr.rel (%p873) target = $region96
        $region95: #{transformer_forward.9} parent=11 // pred_region
          %s877 = ssub.s32 16, 16
          %878 = vsyncadd [#allocation6], %s877
          %s880 = sshll.u32 [#allocation7], 4
          %s881 = int_to_ptr.vmem [resolvable:$true] %s880
          %883 = dma.hbm_to_vmem [thread:$0]  %s43, 16, %s881, [#allocation6]
        $region96: #{transformer_forward.9} parent=11 // pred_fallthru
          _
        // Predicated region
        $region97: #{transformer_forward.9} parent=11 // pred_check
          %p884 = pneg %p567
        $region98: #{transformer_forward.9} parent=11 // pred_check_branch
          %886 = sbr.rel (%p884) target = $region100
        $region99: #{transformer_forward.9} parent=11 // pred_region
          _
        $region100: #{transformer_forward.9} parent=11 // pred_fallthru
          _
        // Predicated region
        $region101: #{transformer_forward.9} parent=11 // pred_check
          %p887 = pneg %p588
        $region102: #{transformer_forward.9} parent=11 // pred_check_branch
          %889 = sbr.rel (%p887) target = $region104
        $region103: #{transformer_forward.9} parent=11 // pred_region
          %s891 = ssub.s32 16, 16
          %892 = vsyncadd [#allocation9], %s891
          %s894 = sshll.u32 [#allocation8], 4
          %s895 = int_to_ptr.vmem [resolvable:$true] %s894
          %897 = dma.hbm_to_vmem [thread:$0]  %s47, 16, %s895, [#allocation9]
        $region104: #{transformer_forward.9} parent=11 // pred_fallthru
          _
        // Predicated region
        $region105: #{transformer_forward.9} parent=11 // pred_check
          %p898 = pneg %p609
        $region106: #{transformer_forward.9} parent=11 // pred_check_branch
          %900 = sbr.rel (%p898) target = $region108
        $region107: #{transformer_forward.9} parent=11 // pred_region
          _
        $region108: #{transformer_forward.9} parent=11 // pred_fallthru
          _
        // Predicated region
        $region109: #{transformer_forward.9} parent=11 // pred_check
          %p901 = pneg %p630
        $region110: #{transformer_forward.9} parent=11 // pred_check_branch
          %903 = sbr.rel (%p901) target = $region112
        $region111: #{transformer_forward.9} parent=11 // pred_region
          %s905 = ssub.s32 16, 16
          %906 = vsyncadd [#allocation9], %s905
          %s908 = sshll.u32 [#allocation10], 4
          %s909 = int_to_ptr.vmem [resolvable:$true] %s908
          %911 = dma.hbm_to_vmem [thread:$0]  %s51, 16, %s909, [#allocation9]
        $region112: #{transformer_forward.9} parent=11 // pred_fallthru
          _
        // Predicated region
        $region113: #{transformer_forward.9} parent=11 // pred_check
          %p912 = pneg %p651
        $region114: #{transformer_forward.9} parent=11 // pred_check_branch
          %914 = sbr.rel (%p912) target = $region116
        $region115: #{transformer_forward.9} parent=11 // pred_region
          %s916 = ssub.s32 16, 16
          %917 = vsyncadd [#allocation12], %s916
          %s919 = sshll.u32 [#allocation11], 4
          %s920 = int_to_ptr.vmem [resolvable:$true] %s919
          %922 = dma.hbm_to_vmem [thread:$0]  %s53, 16, %s920, [#allocation12]
        $region116: #{transformer_forward.9} parent=11 // pred_fallthru
          _
        // Predicated region
        $region117: #{transformer_forward.9} parent=11 // pred_check
          %p923 = pneg %p672
        $region118: #{transformer_forward.9} parent=11 // pred_check_branch
          %925 = sbr.rel (%p923) target = $region120
        $region119: #{transformer_forward.9} parent=11 // pred_region
          %s927 = ssub.s32 16, 16
          %928 = vsyncadd [#allocation12], %s927
          %s930 = sshll.u32 [#allocation13], 4
          %s931 = int_to_ptr.vmem [resolvable:$true] %s930
          %933 = dma.hbm_to_vmem [thread:$0]  %s55, 16, %s931, [#allocation12]
        $region120: #{transformer_forward.9} parent=11 // pred_fallthru
          _
        // Predicated region
        $region121: #{transformer_forward.9} parent=11 // pred_check
          %p934 = pneg %p693
        $region122: #{transformer_forward.9} parent=11 // pred_check_branch
          %936 = sbr.rel (%p934) target = $region124
        $region123: #{transformer_forward.9} parent=11 // pred_region
          _
        $region124: #{transformer_forward.9} parent=11 // pred_fallthru
          _
        // Predicated region
        $region125: #{transformer_forward.9} parent=11 // pred_check
          %p937 = pneg %p714
        $region126: #{transformer_forward.9} parent=11 // pred_check_branch
          %939 = sbr.rel (%p937) target = $region128
        $region127: #{transformer_forward.9} parent=11 // pred_region
          %s941 = ssub.s32 16, 16
          %942 = vsyncadd [#allocation15], %s941
          %s944 = sshll.u32 [#allocation14], 4
          %s945 = int_to_ptr.vmem [resolvable:$true] %s944
          %947 = dma.hbm_to_vmem [thread:$0]  %s59, 16, %s945, [#allocation15]
        $region128: #{transformer_forward.9} parent=11 // pred_fallthru
          _
        // Predicated region
        $region129: #{transformer_forward.9} parent=11 // pred_check
          %p948 = pneg %p735
        $region130: #{transformer_forward.9} parent=11 // pred_check_branch
          %950 = sbr.rel (%p948) target = $region132
        $region131: #{transformer_forward.9} parent=11 // pred_region
          _
        $region132: #{transformer_forward.9} parent=11 // pred_fallthru
          _
        // Predicated region
        $region133: #{transformer_forward.9} parent=11 // pred_check
          %p951 = pneg %p756
        $region134: #{transformer_forward.9} parent=11 // pred_check_branch
          %953 = sbr.rel (%p951) target = $region136
        $region135: #{transformer_forward.9} parent=11 // pred_region
          %s955 = ssub.s32 16, 16
          %956 = vsyncadd [#allocation15], %s955
          %s958 = sshll.u32 [#allocation16], 4
          %s959 = int_to_ptr.vmem [resolvable:$true] %s958
          %961 = dma.hbm_to_vmem [thread:$0]  %s63, 16, %s959, [#allocation15]
        $region136: #{transformer_forward.9} parent=11 // pred_fallthru
          _
      $region12: #{transformer_forward.9} parent=5 // pred_fallthru
        _
      %p962 = scmp.lt.s32.totalorder %s79, 2
      // Predicated region
      $region137: #{transformer_forward.9} parent=5 // pred_check
        %p963 = pneg %p962
      $region138: #{transformer_forward.9} parent=5 // pred_check_branch
        %965 = sbr.rel (%p963) target = $region140
      $region139: #{transformer_forward.9} parent=5 // pred_region
        // Predicated region
        $region141: #{transformer_forward.9} parent=139 // pred_check
          %p966 = pneg %p99
        $region142: #{transformer_forward.9} parent=139 // pred_check_branch
          %968 = sbr.rel (%p966) target = $region144
        $region143: #{transformer_forward.9} parent=139 // pred_region
          %p969 = scmp.lt.s32.totalorder %s79, 1
          %s970 = scalar_select %p969, %s79, 1
          %s971 = smul.addr %s970, 2
          %s972 = smul.addr %s971, 8
          %s973 = scalar_lea.vmem %s1, %s972
        $region144: #{transformer_forward.9} parent=139 // pred_fallthru
          _
      $region140: #{transformer_forward.9} parent=5 // pred_fallthru
        _
      %p974 = scmp.le.s32.totalorder 1, %s79
      %p975 = scmp.lt.s32.totalorder %s79, 3
      %p976 = pnand %p974, %p975
      %p977 = pneg %p976
      // Predicated region
      $region145: #{transformer_forward.9} parent=5 // pred_check
        _
      $region146: #{transformer_forward.9} parent=5 // pred_check_branch
        %979 = sbr.rel (%p976) target = $region148
      $region147: #{transformer_forward.9} parent=5 // pred_region
        %s980 = ssub.s32 %s79, 1
        // Predicated region
        $region149: #{transformer_forward.9} parent=147 // pred_check
          %p981 = pneg %p504
        $region150: #{transformer_forward.9} parent=147 // pred_check_branch
          %983 = sbr.rel (%p981) target = $region152
        $region151: #{transformer_forward.9} parent=147 // pred_region
          %984 = dma.done [#allocation3], 16
        $region152: #{transformer_forward.9} parent=147 // pred_fallthru
          _
        // Predicated region
        $region153: #{transformer_forward.9} parent=147 // pred_check
          %p985 = pneg %p525
        $region154: #{transformer_forward.9} parent=147 // pred_check_branch
          %987 = sbr.rel (%p985) target = $region156
        $region155: #{transformer_forward.9} parent=147 // pred_region
          %988 = dma.done [#allocation6], 16
        $region156: #{transformer_forward.9} parent=147 // pred_fallthru
          _
        // Predicated region
        $region157: #{transformer_forward.9} parent=147 // pred_check
          %p989 = pneg %p546
        $region158: #{transformer_forward.9} parent=147 // pred_check_branch
          %991 = sbr.rel (%p989) target = $region160
        $region159: #{transformer_forward.9} parent=147 // pred_region
          %992 = dma.done [#allocation6], 16
        $region160: #{transformer_forward.9} parent=147 // pred_fallthru
          _
        // Predicated region
        $region161: #{transformer_forward.9} parent=147 // pred_check
          %p993 = pneg %p588
        $region162: #{transformer_forward.9} parent=147 // pred_check_branch
          %995 = sbr.rel (%p993) target = $region164
        $region163: #{transformer_forward.9} parent=147 // pred_region
          %996 = dma.done [#allocation9], 16
        $region164: #{transformer_forward.9} parent=147 // pred_fallthru
          _
        // Predicated region
        $region165: #{transformer_forward.9} parent=147 // pred_check
          %p997 = pneg %p630
        $region166: #{transformer_forward.9} parent=147 // pred_check_branch
          %999 = sbr.rel (%p997) target = $region168
        $region167: #{transformer_forward.9} parent=147 // pred_region
          %1000 = dma.done [#allocation9], 16
        $region168: #{transformer_forward.9} parent=147 // pred_fallthru
          _
        // Predicated region
        $region169: #{transformer_forward.9} parent=147 // pred_check
          %p1001 = pneg %p651
        $region170: #{transformer_forward.9} parent=147 // pred_check_branch
          %1003 = sbr.rel (%p1001) target = $region172
        $region171: #{transformer_forward.9} parent=147 // pred_region
          %1004 = dma.done [#allocation12], 16
        $region172: #{transformer_forward.9} parent=147 // pred_fallthru
          _
        // Predicated region
        $region173: #{transformer_forward.9} parent=147 // pred_check
          %p1005 = pneg %p672
        $region174: #{transformer_forward.9} parent=147 // pred_check_branch
          %1007 = sbr.rel (%p1005) target = $region176
        $region175: #{transformer_forward.9} parent=147 // pred_region
          %1008 = dma.done [#allocation12], 16
        $region176: #{transformer_forward.9} parent=147 // pred_fallthru
          _
        // Predicated region
        $region177: #{transformer_forward.9} parent=147 // pred_check
          %p1009 = pneg %p714
        $region178: #{transformer_forward.9} parent=147 // pred_check_branch
          %1011 = sbr.rel (%p1009) target = $region180
        $region179: #{transformer_forward.9} parent=147 // pred_region
          %1012 = dma.done [#allocation15], 16
        $region180: #{transformer_forward.9} parent=147 // pred_fallthru
          _
        // Predicated region
        $region181: #{transformer_forward.9} parent=147 // pred_check
          %p1013 = pneg %p756
        $region182: #{transformer_forward.9} parent=147 // pred_check_branch
          %1015 = sbr.rel (%p1013) target = $region184
        $region183: #{transformer_forward.9} parent=147 // pred_region
          %1016 = dma.done [#allocation15], 16
        $region184: #{transformer_forward.9} parent=147 // pred_fallthru
          _
        %p1017 = scmp.lt.s32.totalorder %s84, 1
        %s1018 = scalar_select %p1017, %s84, 1
        %s1019 = smul.addr %s1018, 2
        %s1020 = smul.addr %s1019, 8
        %s1021 = scalar_lea.vmem %s1, %s1020
        %p1022 = pneg %p105
        %p1023 = pneg %p102
        %p1024 = pneg %p126
        %p1025 = pneg %p123
        %p1026 = pneg %p147
        %p1027 = pneg %p144
        %p1028 = pneg %p168
        %p1029 = pneg %p165
        %p1030 = pneg %p189
        %p1031 = pneg %p186
        %p1032 = pneg %p210
        %p1033 = pneg %p207
        %p1034 = pneg %p231
        %p1035 = pneg %p228
        %p1036 = pneg %p252
        %p1037 = pneg %p249
        %p1038 = pneg %p273
        %p1039 = pneg %p270
        %p1040 = pneg %p294
        %p1041 = pneg %p291
        %p1042 = pneg %p315
        %p1043 = pneg %p312
        %p1044 = pneg %p336
        %p1045 = pneg %p333
        %p1046 = pneg %p357
        %p1047 = pneg %p354
        %p1048 = pneg %p378
        %p1049 = pneg %p375
        %p1050 = pneg %p399
        %p1051 = pneg %p396
        %p1052 = pneg %p420
        %p1053 = pneg %p417
        %p1054 = pneg %p441
        %p1055 = pneg %p438
        %p1056 = pneg %p462
        %p1057 = pneg %p459
        %p1058 = pneg %p483
        %p1059 = pneg %p480
        %p1060 = pneg %p504
        %p1061 = pneg %p501
        %p1062 = pneg %p525
        %p1063 = pneg %p522
        %p1064 = pneg %p546
        %p1065 = pneg %p543
        %p1066 = pneg %p567
        %p1067 = pneg %p564
        %p1068 = pneg %p588
        %p1069 = pneg %p585
        %p1070 = pneg %p609
        %p1071 = pneg %p606
        %p1072 = pneg %p630
        %p1073 = pneg %p627
        %p1074 = pneg %p651
        %p1075 = pneg %p648
        %p1076 = pneg %p672
        %p1077 = pneg %p669
        %p1078 = pneg %p693
        %p1079 = pneg %p690
        %p1080 = pneg %p714
        %p1081 = pneg %p711
        %p1082 = pneg %p735
        %p1083 = pneg %p732
        %p1084 = pneg %p756
        %p1085 = pneg %p753
        %p1086 = pneg %p782
        %p1087 = pneg %p779
        %s1088 = sand.u32 %s769, 1
        %s1089 = scalar_lea.sflag [#allocation4], %s1088
        %s1090 = sand.u32 %s769, 1
        %s1091 = scalar_lea.vmem [#allocation17], %s1090
        %p1092 = scmp.lt.s32.totalorder %s84, 1
        %s1093 = scalar_select %p1092, %s84, 1
        %s1094 = smul.addr %s1093, 2
        %s1095 = smul.addr %s1094, 8
        %s1096 = scalar_lea.vmem %s1, %s1095
        %v1098 = vld [vmem:[%s1096] sm:$0xff]
        %v1099 = vld [vmem:[%s1096 + $0x8] sm:$0x1]
        %v1100 = vlaneseq
        %v1101 = vshrl.u32 %v1100, 7
        %v1102 = vsub.s32 0, %v1101
        %v1103 = vrot.slane %v1098, %v1102
        %1105 = vbcast.lane.b32.xlu0 %v1103, 256
        %v1106 = vpop.permute.xlu0 %1105
        %s1108 = sor.u32 256, 8
        %1109 = vbcast.lane.b32.xlu0 %v1103, %s1108
        %v1110 = vpop.permute.xlu0 %1109
        %v1111 = vlaneseq
        %v1112 = vshrl.u32 %v1111, 7
        %v1113 = vsub.s32 1, %v1112
        %v1114 = vrot.slane %v1098, %v1113
        %1116 = vbcast.lane.b32.xlu0 %v1114, 256
        %v1117 = vpop.permute.xlu0 %1116
        %s1119 = sor.u32 256, 8
        %1120 = vbcast.lane.b32.xlu0 %v1114, %s1119
        %v1121 = vpop.permute.xlu0 %1120
        %v1122 = vlaneseq
        %v1123 = vshrl.u32 %v1122, 7
        %v1124 = vsub.s32 2, %v1123
        %v1125 = vrot.slane %v1098, %v1124
        %1127 = vbcast.lane.b32.xlu0 %v1125, 256
        %v1128 = vpop.permute.xlu0 %1127
        %s1130 = sor.u32 256, 8
        %1131 = vbcast.lane.b32.xlu0 %v1125, %s1130
        %v1132 = vpop.permute.xlu0 %1131
        %v1133 = vlaneseq
        %v1134 = vshrl.u32 %v1133, 7
        %v1135 = vsub.s32 3, %v1134
        %v1136 = vrot.slane %v1098, %v1135
        %1138 = vbcast.lane.b32.xlu0 %v1136, 256
        %v1139 = vpop.permute.xlu0 %1138
        %s1141 = sor.u32 256, 8
        %1142 = vbcast.lane.b32.xlu0 %v1136, %s1141
        %v1143 = vpop.permute.xlu0 %1142
        %v1144 = vlaneseq
        %v1145 = vshrl.u32 %v1144, 7
        %v1146 = vsub.s32 4, %v1145
        %v1147 = vrot.slane %v1098, %v1146
        %1149 = vbcast.lane.b32.xlu0 %v1147, 256
        %v1150 = vpop.permute.xlu0 %1149
        %s1152 = sor.u32 256, 8
        %1153 = vbcast.lane.b32.xlu0 %v1147, %s1152
        %v1154 = vpop.permute.xlu0 %1153
        %v1155 = vlaneseq
        %v1156 = vshrl.u32 %v1155, 7
        %v1157 = vsub.s32 5, %v1156
        %v1158 = vrot.slane %v1098, %v1157
        %1160 = vbcast.lane.b32.xlu0 %v1158, 256
        %v1161 = vpop.permute.xlu0 %1160
        %s1163 = sor.u32 256, 8
        %1164 = vbcast.lane.b32.xlu0 %v1158, %s1163
        %v1165 = vpop.permute.xlu0 %1164
        %v1166 = vlaneseq
        %v1167 = vshrl.u32 %v1166, 7
        %v1168 = vsub.s32 6, %v1167
        %v1169 = vrot.slane %v1098, %v1168
        %1171 = vbcast.lane.b32.xlu0 %v1169, 256
        %v1172 = vpop.permute.xlu0 %1171
        %s1174 = sor.u32 256, 8
        %1175 = vbcast.lane.b32.xlu0 %v1169, %s1174
        %v1176 = vpop.permute.xlu0 %1175
        %v1177 = vlaneseq
        %v1178 = vshrl.u32 %v1177, 7
        %v1179 = vsub.s32 7, %v1178
        %v1180 = vrot.slane %v1098, %v1179
        %1182 = vbcast.lane.b32.xlu0 %v1180, 256
        %v1183 = vpop.permute.xlu0 %1182
        %s1185 = sor.u32 256, 8
        %1186 = vbcast.lane.b32.xlu0 %v1180, %s1185
        %v1187 = vpop.permute.xlu0 %1186
        %v1188 = vlaneseq
        %v1189 = vshrl.u32 %v1188, 7
        %v1190 = vsub.s32 0, %v1189
        %v1191 = vrot.slane %v1099, %v1190
        %1193 = vbcast.lane.b32.xlu0 %v1191, 256
        %v1194 = vpop.permute.xlu0 %1193
        %s1196 = sor.u32 256, 8
        %1197 = vbcast.lane.b32.xlu0 %v1191, %s1196
        %v1198 = vpop.permute.xlu0 %1197
        %v1199 = vld [vmem:[%s3] sm:$0xf]
        %v1200 = vld [vmem:[%s3 + $0x4] sm:$0xf]
        %v1201 = vld [vmem:[%s3 + $0x8] sm:$0xf]
        %v1202 = vld [vmem:[%s3 + $0xc] sm:$0xf]
        %v1203 = vld [vmem:[%s3 + $0x10] sm:$0xf]
        %v1204 = vld [vmem:[%s3 + $0x14] sm:$0xf]
        %v1205 = vld [vmem:[%s3 + $0x18] sm:$0xf]
        %v1206 = vld [vmem:[%s3 + $0x1c] sm:$0xf]
        %v1207 = vld [vmem:[%s3 + $0x20] sm:$0xf]
        %v1208 = vld [vmem:[%s3 + $0x24] sm:$0xf]
        %v1209 = vld [vmem:[%s3 + $0x28] sm:$0xf]
        %v1210 = vld [vmem:[%s3 + $0x2c] sm:$0xf]
        %v1211 = vld [vmem:[%s3 + $0x30] sm:$0xf]
        %v1212 = vld [vmem:[%s3 + $0x34] sm:$0xf]
        %v1213 = vld [vmem:[%s3 + $0x38] sm:$0xf]
        %v1214 = vld [vmem:[%s3 + $0x3c] sm:$0xf]
        %v1215 = vld [vmem:[%s3 + $0x40] sm:$0xf]
        %v1216 = vld [vmem:[%s3 + $0x44] sm:$0xf]
        %v1217 = vunpack.c.l.bf16 %v1199
        %v1218 = vunpack.c.l.bf16 %v1200
        %v1219 = vunpack.c.l.bf16 %v1201
        %v1220 = vunpack.c.l.bf16 %v1202
        %v1221 = vunpack.c.l.bf16 %v1203
        %v1222 = vunpack.c.l.bf16 %v1204
        %v1223 = vunpack.c.l.bf16 %v1205
        %v1224 = vunpack.c.l.bf16 %v1206
        %v1225 = vunpack.c.l.bf16 %v1207
        %v1226 = vunpack.c.l.bf16 %v1208
        %v1227 = vunpack.c.l.bf16 %v1209
        %v1228 = vunpack.c.l.bf16 %v1210
        %v1229 = vunpack.c.l.bf16 %v1211
        %v1230 = vunpack.c.l.bf16 %v1212
        %v1231 = vunpack.c.l.bf16 %v1213
        %v1232 = vunpack.c.l.bf16 %v1214
        %v1233 = vunpack.c.l.bf16 %v1215
        %v1234 = vunpack.c.l.bf16 %v1216
        %v1235 = vmul.f32 %v1106, %v1217
        %v1236 = vmul.f32 %v1110, %v1218
        %v1237 = vmul.f32 %v1117, %v1219
        %v1238 = vmul.f32 %v1121, %v1220
        %v1239 = vmul.f32 %v1128, %v1221
        %v1240 = vmul.f32 %v1132, %v1222
        %v1241 = vmul.f32 %v1139, %v1223
        %v1242 = vmul.f32 %v1143, %v1224
        %v1243 = vmul.f32 %v1150, %v1225
        %v1244 = vmul.f32 %v1154, %v1226
        %v1245 = vmul.f32 %v1161, %v1227
        %v1246 = vmul.f32 %v1165, %v1228
        %v1247 = vmul.f32 %v1172, %v1229
        %v1248 = vmul.f32 %v1176, %v1230
        %v1249 = vmul.f32 %v1183, %v1231
        %v1250 = vmul.f32 %v1187, %v1232
        %v1251 = vmul.f32 %v1194, %v1233
        %v1252 = vmul.f32 %v1198, %v1234
        %vm1253 = vcmask 261120
        %v1254 = vsel %vm1253, %v1235, 0.0
        %v1255 = vsel %vm1253, %v1236, 0.0
        %v1256 = vadd.f32 %v1254, %v1255
        %v1257 = vrot.slane %v1256, 4
        %v1258 = vadd.f32 %v1256, %v1257
        %v1259 = vrot.slane %v1258, 2
        %v1260 = vadd.f32 %v1258, %v1259
        %v1261 = vrot.slane %v1260, 1
        %v1262 = vadd.f32 %v1260, %v1261
        %v1263 = vsel %vm1253, %v1237, 0.0
        %v1264 = vsel %vm1253, %v1238, 0.0
        %v1265 = vadd.f32 %v1263, %v1264
        %v1266 = vrot.slane %v1265, 4
        %v1267 = vadd.f32 %v1265, %v1266
        %v1268 = vrot.slane %v1267, 2
        %v1269 = vadd.f32 %v1267, %v1268
        %v1270 = vrot.slane %v1269, 1
        %v1271 = vadd.f32 %v1269, %v1270
        %v1272 = vsel %vm1253, %v1239, 0.0
        %v1273 = vsel %vm1253, %v1240, 0.0
        %v1274 = vadd.f32 %v1272, %v1273
        %v1275 = vrot.slane %v1274, 4
        %v1276 = vadd.f32 %v1274, %v1275
        %v1277 = vrot.slane %v1276, 2
        %v1278 = vadd.f32 %v1276, %v1277
        %v1279 = vrot.slane %v1278, 1
        %v1280 = vadd.f32 %v1278, %v1279
        %v1281 = vsel %vm1253, %v1241, 0.0
        %v1282 = vsel %vm1253, %v1242, 0.0
        %v1283 = vadd.f32 %v1281, %v1282
        %v1284 = vrot.slane %v1283, 4
        %v1285 = vadd.f32 %v1283, %v1284
        %v1286 = vrot.slane %v1285, 2
        %v1287 = vadd.f32 %v1285, %v1286
        %v1288 = vrot.slane %v1287, 1
        %v1289 = vadd.f32 %v1287, %v1288
        %v1290 = vsel %vm1253, %v1243, 0.0
        %v1291 = vsel %vm1253, %v1244, 0.0
        %v1292 = vadd.f32 %v1290, %v1291
        %v1293 = vrot.slane %v1292, 4
        %v1294 = vadd.f32 %v1292, %v1293
        %v1295 = vrot.slane %v1294, 2
        %v1296 = vadd.f32 %v1294, %v1295
        %v1297 = vrot.slane %v1296, 1
        %v1298 = vadd.f32 %v1296, %v1297
        %v1299 = vsel %vm1253, %v1245, 0.0
        %v1300 = vsel %vm1253, %v1246, 0.0
        %v1301 = vadd.f32 %v1299, %v1300
        %v1302 = vrot.slane %v1301, 4
        %v1303 = vadd.f32 %v1301, %v1302
        %v1304 = vrot.slane %v1303, 2
        %v1305 = vadd.f32 %v1303, %v1304
        %v1306 = vrot.slane %v1305, 1
        %v1307 = vadd.f32 %v1305, %v1306
        %v1308 = vsel %vm1253, %v1247, 0.0
        %v1309 = vsel %vm1253, %v1248, 0.0
        %v1310 = vadd.f32 %v1308, %v1309
        %v1311 = vrot.slane %v1310, 4
        %v1312 = vadd.f32 %v1310, %v1311
        %v1313 = vrot.slane %v1312, 2
        %v1314 = vadd.f32 %v1312, %v1313
        %v1315 = vrot.slane %v1314, 1
        %v1316 = vadd.f32 %v1314, %v1315
        %v1317 = vsel %vm1253, %v1249, 0.0
        %v1318 = vsel %vm1253, %v1250, 0.0
        %v1319 = vadd.f32 %v1317, %v1318
        %v1320 = vrot.slane %v1319, 4
        %v1321 = vadd.f32 %v1319, %v1320
        %v1322 = vrot.slane %v1321, 2
        %v1323 = vadd.f32 %v1321, %v1322
        %v1324 = vrot.slane %v1323, 1
        %v1325 = vadd.f32 %v1323, %v1324
        %v1326 = vsel %vm1253, %v1251, 0.0
        %v1327 = vsel %vm1253, %v1252, 0.0
        %v1328 = vadd.f32 %v1326, %v1327
        %v1329 = vrot.slane %v1328, 4
        %v1330 = vadd.f32 %v1328, %v1329
        %v1331 = vrot.slane %v1330, 2
        %v1332 = vadd.f32 %v1330, %v1331
        %v1333 = vrot.slane %v1332, 1
        %v1334 = vadd.f32 %v1332, %v1333
        %v1335 = vld [vmem:[%s5] sm:$0xff]
        %v1336 = vld [vmem:[%s5 + $0x8] sm:$0x1]
        %v1339 = vrot.slane %v1335, 1
        %v1340 = vrot.slane %v1335, 2
        %v1341 = vrot.slane %v1335, 3
        %v1342 = vrot.slane %v1335, 4
        %v1343 = vrot.slane %v1335, 5
        %v1344 = vrot.slane %v1335, 6
        %v1345 = vrot.slane %v1335, 7
        %v1355 = vadd.f32 %v1262, %v1335
        %v1356 = vadd.f32 %v1271, %v1339
        %v1357 = vadd.f32 %v1280, %v1340
        %v1358 = vadd.f32 %v1289, %v1341
        %v1359 = vadd.f32 %v1298, %v1342
        %v1360 = vadd.f32 %v1307, %v1343
        %v1361 = vadd.f32 %v1316, %v1344
        %v1362 = vadd.f32 %v1325, %v1345
        %v1363 = vadd.f32 %v1334, %v1336
        %v1364 = vld [vmem:[%s7] sm:$0xff]
        %v1365 = vld [vmem:[%s7 + $0x8] sm:$0x1]
        %v1368 = vrot.slane %v1364, 1
        %v1369 = vrot.slane %v1364, 2
        %v1370 = vrot.slane %v1364, 3
        %v1371 = vrot.slane %v1364, 4
        %v1372 = vrot.slane %v1364, 5
        %v1373 = vrot.slane %v1364, 6
        %v1374 = vrot.slane %v1364, 7
        %v1384 = vadd.f32 %v1355, %v1364
        %v1385 = vadd.f32 %v1356, %v1368
        %v1386 = vadd.f32 %v1357, %v1369
        %v1387 = vadd.f32 %v1358, %v1370
        %v1388 = vadd.f32 %v1359, %v1371
        %v1389 = vadd.f32 %v1360, %v1372
        %v1390 = vadd.f32 %v1361, %v1373
        %v1391 = vadd.f32 %v1362, %v1374
        %v1392 = vadd.f32 %v1363, %v1365
        %v1393 = vpack.c.bf16 %v1384, %v1384
        %v1394 = vpack.c.bf16 %v1385, %v1385
        %v1395 = vpack.c.bf16 %v1386, %v1386
        %v1396 = vpack.c.bf16 %v1387, %v1387
        %v1397 = vpack.c.bf16 %v1388, %v1388
        %v1398 = vpack.c.bf16 %v1389, %v1389
        %v1399 = vpack.c.bf16 %v1390, %v1390
        %v1400 = vpack.c.bf16 %v1391, %v1391
        %v1401 = vpack.c.bf16 %v1392, %v1392
        %v1402 = vld [vmem:[%s9] sm:$0xf]
        %v1403 = vld [vmem:[%s9 + $0x4] sm:$0xf]
        %v1404 = vld [vmem:[%s9 + $0x8] sm:$0xf]
        %v1405 = vld [vmem:[%s9 + $0xc] sm:$0xf]
        %v1406 = vld [vmem:[%s11] sm:$0x1]
        %v1408 = vlaneseq
        %v1409 = vshrl.u32 %v1408, 7
        %v1410 = vsub.s32 0, %v1409
        %v1411 = vrot.slane %v1406, %v1410
        %v1422 = vunpack.c.l.b16 %v1393
        %v1423 = vunpack.c.l.b16 %v1394
        %v1424 = vunpack.c.l.b16 %v1395
        %v1425 = vunpack.c.l.b16 %v1396
        %v1426 = vunpack.c.l.b16 %v1397
        %v1427 = vunpack.c.l.b16 %v1398
        %v1428 = vunpack.c.l.b16 %v1399
        %v1429 = vunpack.c.l.b16 %v1400
        %v1430 = vunpack.c.l.b16 %v1401
        %v1431 = vrot.slane %v1423, 7
        %vm1432 = vcmask 1041409
        %v1433 = vsel %vm1432, %v1431, %v1422
        %v1434 = vrot.slane %v1424, 6
        %vm1435 = vcmask 1042434
        %v1436 = vsel %vm1435, %v1434, %v1433
        %v1437 = vrot.slane %v1425, 5
        %vm1438 = vcmask 1043459
        %v1439 = vsel %vm1438, %v1437, %v1436
        %v1440 = vrot.slane %v1426, 4
        %vm1441 = vcmask 1044484
        %v1442 = vsel %vm1441, %v1440, %v1439
        %v1443 = vrot.slane %v1427, 3
        %vm1444 = vcmask 1045509
        %v1445 = vsel %vm1444, %v1443, %v1442
        %v1446 = vrot.slane %v1428, 2
        %vm1447 = vcmask 1046534
        %v1448 = vsel %vm1447, %v1446, %v1445
        %v1449 = vrot.slane %v1429, 1
        %vm1450 = vcmask 1047559
        %v1451 = vsel %vm1450, %v1449, %v1448
        %v1452 = vpack.c.b16 %v1430, %v1451
        %v1457 = vunpack.c.l.b16 %v1402
        %v1458 = vunpack.c.l.b16 %v1403
        %v1459 = vunpack.c.l.b16 %v1404
        %v1460 = vunpack.c.l.b16 %v1405
        %v1461 = vpack.c.b16 %v1458, %v1457
        %v1462 = vpack.c.b16 %v1460, %v1459
        %v1466 = vsel %vm1253, %v1452, 0
        %1468 = vmatprep.subr.bf16.mxu0 0
        %1469 = vmatpush1.bf16.msra.mxu0 0
        %1470 = vmatprep.subr.bf16.mxu0 0
        %1471 = vmatpush1.bf16.msra.mxu0 0
        %1472 = vmatprep.subr.bf16.mxu0 0
        %1473 = vmatpush1.bf16.msra.mxu0 0
        %1474 = vmatprep.subr.bf16.mxu0 0
        %1475 = vmatpush1.bf16.msra.mxu0 0
        %1476 = vmatprep.subr.bf16.mxu0 0
        %1477 = vmatpush1.bf16.msra.mxu0 0
        %1478 = vmatprep.subr.bf16.mxu0 0
        %1479 = vmatpush1.bf16.msra.mxu0 0
        %1480 = vmatprep.subr.bf16.mxu0 0
        %1481 = vmatpush1.bf16.msra.mxu0 %v1462
        %1482 = vmatprep.subr.bf16.mxu0 0
        %1483 = vmatpush1.bf16.msra.mxu0 %v1461
        %1484 = vmatprep.subr.bf16.mxu0 0
        %1485 = vmatpush2.bf16.msra.mxu0 0
        %1486 = vmatprep.subr.bf16.mxu0 0
        %1487 = vmatpush2.bf16.msra.mxu0 0
        %1488 = vmatprep.subr.bf16.mxu0 0
        %1489 = vmatpush2.bf16.msra.mxu0 0
        %1490 = vmatprep.subr.bf16.mxu0 0
        %1491 = vmatpush2.bf16.msra.mxu0 0
        %1492 = vmatprep.subr.bf16.mxu0 0
        %1493 = vmatpush2.bf16.msra.mxu0 0
        %1494 = vmatprep.subr.bf16.mxu0 0
        %1495 = vmatpush2.bf16.msra.mxu0 0
        %1496 = vmatprep.subr.bf16.mxu0 0
        %1497 = vmatpush2.bf16.msra.mxu0 0
        %1498 = vmatprep.subr.bf16.mxu0 0
        %1499 = vmatpush2.bf16.msra.mxu0 0
        %1500 = vmatprep.mubr.bf16.mxu0 0
        %1501 = vmatmul.mubr.bf16.gmra.mxu0 %v1466
        %v1502 = vpop.f32.mrf.mxu0
        %v1503 = vadd.f32 %v1411, %v1502
        %v1504 = vpop.f32.mrf.mxu0
        %v1505 = vpop.f32.mrf.mxu0
        %v1506 = vadd.f32 %v1411, %v1505
        %v1507 = vpop.f32.mrf.mxu0
        %1508 = vdwg.mxu0
        %v1509 = vld [vmem:[%s13] sm:$0xf]
        %v1510 = vld [vmem:[%s13 + $0x4] sm:$0xf]
        %v1511 = vld [vmem:[%s13 + $0x8] sm:$0xf]
        %v1512 = vld [vmem:[%s13 + $0xc] sm:$0xf]
        %1515 = vrot.lane.b32.xlu0 %v1503, 96
        %v1516 = vpop.permute.xlu0 %1515
        %1517 = vrot.lane.b32.xlu0 %v1506, 96
        %v1518 = vpop.permute.xlu0 %1517
        %vm1519 = vcmask 64512
        %v1520 = vsel %vm1519, %v1503, 0
        %v1522 = vsel %vm1519, %v1506, 0
        %v1524 = vsel %vm1519, %v1516, 0
        %v1526 = vsel %vm1519, %v1518, 0
        %1528 = vmatprep.subr.mxu0 0.0
        %1529 = vmatpush1.xpose.msra.mxu0 0.0
        %1530 = vmatprep.subr.mxu0 0.0
        %1531 = vmatpush1.xpose.msra.mxu0 0.0
        %1532 = vmatprep.subr.mxu0 0.0
        %1533 = vmatpush1.xpose.msra.mxu0 0.0
        %1534 = vmatprep.subr.mxu0 0.0
        %1535 = vmatpush1.xpose.msra.mxu0 0.0
        %1536 = vmatprep.subr.mxu0 0.0
        %1537 = vmatpush1.xpose.msra.mxu0 0.0
        %1538 = vmatprep.subr.mxu0 0.0
        %1539 = vmatpush1.xpose.msra.mxu0 0.0
        %1540 = vmatprep.subr.mxu0 0.0
        %1541 = vmatpush1.xpose.msra.mxu0 0.0
        %1542 = vmatprep.subr.mxu0 0.0
        %1543 = vmatpush1.xpose.msra.mxu0 0.0
        %1544 = vmatprep.subr.mxu0 0.0
        %1545 = vmatpush1.xpose.msra.mxu0 0.0
        %1546 = vmatprep.subr.mxu0 0.0
        %1547 = vmatpush1.xpose.msra.mxu0 0.0
        %1548 = vmatprep.subr.mxu0 0.0
        %1549 = vmatpush1.xpose.msra.mxu0 0.0
        %1550 = vmatprep.subr.mxu0 0.0
        %1551 = vmatpush1.xpose.msra.mxu0 0.0
        %1552 = vmatprep.subr.mxu0 0.0
        %1553 = vmatpush1.xpose.msra.mxu0 0.0
        %1554 = vmatprep.subr.mxu0 0.0
        %1555 = vmatpush1.xpose.msra.mxu0 0.0
        %1556 = vmatprep.subr.mxu0 0.0
        %1557 = vmatpush1.xpose.msra.mxu0 %v1526
        %1558 = vmatprep.subr.mxu0 0.0
        %1559 = vmatpush1.xpose.msra.mxu0 %v1524
        %1560 = vmatprep.subr.mxu0 0.0
        %1561 = vmatpush2.xpose.msra.mxu0 0.0
        %1562 = vmatprep.subr.mxu0 0.0
        %1563 = vmatpush2.xpose.msra.mxu0 0.0
        %1564 = vmatprep.subr.mxu0 0.0
        %1565 = vmatpush2.xpose.msra.mxu0 0.0
        %1566 = vmatprep.subr.mxu0 0.0
        %1567 = vmatpush2.xpose.msra.mxu0 0.0
        %1568 = vmatprep.subr.mxu0 0.0
        %1569 = vmatpush2.xpose.msra.mxu0 0.0
        %1570 = vmatprep.subr.mxu0 0.0
        %1571 = vmatpush2.xpose.msra.mxu0 0.0
        %1572 = vmatprep.subr.mxu0 0.0
        %1573 = vmatpush2.xpose.msra.mxu0 0.0
        %1574 = vmatprep.subr.mxu0 0.0
        %1575 = vmatpush2.xpose.msra.mxu0 0.0
        %1576 = vmatprep.subr.mxu0 0.0
        %1577 = vmatpush2.xpose.msra.mxu0 0.0
        %1578 = vmatprep.subr.mxu0 0.0
        %1579 = vmatpush2.xpose.msra.mxu0 0.0
        %1580 = vmatprep.subr.mxu0 0.0
        %1581 = vmatpush2.xpose.msra.mxu0 0.0
        %1582 = vmatprep.subr.mxu0 0.0
        %1583 = vmatpush2.xpose.msra.mxu0 0.0
        %1584 = vmatprep.subr.mxu0 0.0
        %1585 = vmatpush2.xpose.msra.mxu0 0.0
        %1586 = vmatprep.subr.mxu0 0.0
        %1587 = vmatpush2.xpose.msra.mxu0 0.0
        %1588 = vmatprep.subr.mxu0 0.0
        %1589 = vmatpush2.xpose.msra.mxu0 0.0
        %1590 = vmatprep.subr.mxu0 0.0
        %1591 = vmatpush2.xpose.msra.mxu0 0.0
        %1592 = vmatprep.mubr.f32.mxu0 0.0
        %1593 = vmatmul.mubr.f32.gmra.mxu0 %v1520
        %v1594 = vpop.f32.mrf.mxu0
        %v1595 = vadd.f32 0.0, %v1594
        %v1596 = vpop.f32.mrf.mxu0
        %1597 = vmatprep.mubr.f32.mxu0 0.0
        %1598 = vmatmul.mubr.f32.gmra.mxu0 %v1522
        %v1599 = vpop.f32.mrf.mxu0
        %v1600 = vadd.f32 0.0, %v1599
        %v1601 = vpop.f32.mrf.mxu0
        %1602 = vdwg.mxu0
        %v1603 = vmul.f32 %v1595, 0.35355338
        %v1604 = vmul.f32 %v1600, 0.35355338
        %vm1605 = vcmask 72704
        %v1606 = vsel %vm1605, %v1603, -inf
        %1607 = vmax.xlane.f32.xlu0 %v1606
        %v1608 = vpop.xlane.xlu0 %1607
        %vm1609 = vcmask 65536
        %v1610 = vsel %vm1609, %v1604, -inf
        %1611 = vmax.xlane.f32.xlu0 %v1610
        %v1612 = vpop.xlane.xlu0 %1611
        %v1613 = vsub.f32 %v1603, %v1608
        %v1614 = vsub.f32 %v1604, %v1612
        %v1615 = vmul.f32 %v1613, 1.442695
        %v1616 = vpow.pop %v1615
        %v1617 = vmul.f32 %v1614, 1.442695
        %v1618 = vpow.pop %v1617
        %v1619 = vsel %vm1605, %v1616, 0.0
        %1620 = vadd.xlane.f32.xlu0 %v1619
        %v1621 = vpop.xlane.xlu0 %1620
        %v1622 = vsel %vm1609, %v1618, 0.0
        %1623 = vadd.xlane.f32.xlu0 %v1622
        %v1624 = vpop.xlane.xlu0 %1623
        %v1625 = vrcp.pop %v1621
        %v1626 = vmul.f32 %v1616, %v1625
        %v1627 = vrcp.pop %v1624
        %v1628 = vmul.f32 %v1618, %v1627
        %v1629 = vpack.c.bf16 %v1628, %v1626
        %v1630 = vpack.c.bf16 %v1506, %v1503
        %1632 = vrot.lane.b32.xlu0 %v1630, 64
        %v1633 = vpop.permute.xlu0 %1632
        %v1635 = vsel %vm1605, %v1629, 0
        %vm1637 = vcmask 1043456
        %vm1638 = vcmask 1044480
        %v1639 = vsel %vm1637, 4294967295, 65535
        %v1640 = vsel %vm1638, %v1639, 0
        %v1642 = vand.u32 %v1633, %v1640
        %1644 = vmatprep.subr.bf16.mxu0 0
        %1645 = vmatpush1.bf16.msra.mxu0 0
        %1646 = vmatprep.subr.bf16.mxu0 0
        %1647 = vmatpush1.bf16.msra.mxu0 0
        %1648 = vmatprep.subr.bf16.mxu0 0
        %1649 = vmatpush1.bf16.msra.mxu0 0
        %1650 = vmatprep.subr.bf16.mxu0 0
        %1651 = vmatpush1.bf16.msra.mxu0 0
        %1652 = vmatprep.subr.bf16.mxu0 0
        %1653 = vmatpush1.bf16.msra.mxu0 0
        %1654 = vmatprep.subr.bf16.mxu0 0
        %1655 = vmatpush1.bf16.msra.mxu0 0
        %1656 = vmatprep.subr.bf16.mxu0 0
        %1657 = vmatpush1.bf16.msra.mxu0 0
        %1658 = vmatprep.subr.bf16.mxu0 0
        %1659 = vmatpush1.bf16.msra.mxu0 %v1642
        %1660 = vmatprep.subr.bf16.mxu0 0
        %1661 = vmatpush2.bf16.msra.mxu0 0
        %1662 = vmatprep.subr.bf16.mxu0 0
        %1663 = vmatpush2.bf16.msra.mxu0 0
        %1664 = vmatprep.subr.bf16.mxu0 0
        %1665 = vmatpush2.bf16.msra.mxu0 0
        %1666 = vmatprep.subr.bf16.mxu0 0
        %1667 = vmatpush2.bf16.msra.mxu0 0
        %1668 = vmatprep.subr.bf16.mxu0 0
        %1669 = vmatpush2.bf16.msra.mxu0 0
        %1670 = vmatprep.subr.bf16.mxu0 0
        %1671 = vmatpush2.bf16.msra.mxu0 0
        %1672 = vmatprep.subr.bf16.mxu0 0
        %1673 = vmatpush2.bf16.msra.mxu0 0
        %1674 = vmatprep.subr.bf16.mxu0 0
        %1675 = vmatpush2.bf16.msra.mxu0 0
        %1676 = vmatprep.mubr.bf16.mxu0 0
        %1677 = vmatmul.mubr.bf16.gmra.mxu0 %v1635
        %v1678 = vpop.f32.mrf.mxu0
        %v1679 = vadd.f32 0.0, %v1678
        %v1680 = vpop.f32.mrf.mxu0
        %v1681 = vpop.f32.mrf.mxu0
        %v1682 = vadd.f32 0.0, %v1681
        %v1683 = vpop.f32.mrf.mxu0
        %1684 = vdwg.mxu0
        %v1685 = vpack.c.bf16 %v1682, %v1679
        %1686 = vrot.lane.b32.xlu0 %v1503, 120
        %v1687 = vpop.permute.xlu0 %1686
        %1688 = vrot.lane.b32.xlu0 %v1506, 120
        %v1689 = vpop.permute.xlu0 %1688
        %1690 = vrot.lane.b32.xlu0 %v1503, 88
        %v1691 = vpop.permute.xlu0 %1690
        %1692 = vrot.lane.b32.xlu0 %v1506, 88
        %v1693 = vpop.permute.xlu0 %1692
        %v1694 = vsel %vm1519, %v1687, 0
        %v1696 = vsel %vm1519, %v1689, 0
        %v1698 = vsel %vm1519, %v1691, 0
        %v1700 = vsel %vm1519, %v1693, 0
        %1702 = vmatprep.subr.mxu0 0.0
        %1703 = vmatpush1.xpose.msra.mxu0 0.0
        %1704 = vmatprep.subr.mxu0 0.0
        %1705 = vmatpush1.xpose.msra.mxu0 0.0
        %1706 = vmatprep.subr.mxu0 0.0
        %1707 = vmatpush1.xpose.msra.mxu0 0.0
        %1708 = vmatprep.subr.mxu0 0.0
        %1709 = vmatpush1.xpose.msra.mxu0 0.0
        %1710 = vmatprep.subr.mxu0 0.0
        %1711 = vmatpush1.xpose.msra.mxu0 0.0
        %1712 = vmatprep.subr.mxu0 0.0
        %1713 = vmatpush1.xpose.msra.mxu0 0.0
        %1714 = vmatprep.subr.mxu0 0.0
        %1715 = vmatpush1.xpose.msra.mxu0 0.0
        %1716 = vmatprep.subr.mxu0 0.0
        %1717 = vmatpush1.xpose.msra.mxu0 0.0
        %1718 = vmatprep.subr.mxu0 0.0
        %1719 = vmatpush1.xpose.msra.mxu0 0.0
        %1720 = vmatprep.subr.mxu0 0.0
        %1721 = vmatpush1.xpose.msra.mxu0 0.0
        %1722 = vmatprep.subr.mxu0 0.0
        %1723 = vmatpush1.xpose.msra.mxu0 0.0
        %1724 = vmatprep.subr.mxu0 0.0
        %1725 = vmatpush1.xpose.msra.mxu0 0.0
        %1726 = vmatprep.subr.mxu0 0.0
        %1727 = vmatpush1.xpose.msra.mxu0 0.0
        %1728 = vmatprep.subr.mxu0 0.0
        %1729 = vmatpush1.xpose.msra.mxu0 0.0
        %1730 = vmatprep.subr.mxu0 0.0
        %1731 = vmatpush1.xpose.msra.mxu0 %v1700
        %1732 = vmatprep.subr.mxu0 0.0
        %1733 = vmatpush1.xpose.msra.mxu0 %v1698
        %1734 = vmatprep.subr.mxu0 0.0
        %1735 = vmatpush2.xpose.msra.mxu0 0.0
        %1736 = vmatprep.subr.mxu0 0.0
        %1737 = vmatpush2.xpose.msra.mxu0 0.0
        %1738 = vmatprep.subr.mxu0 0.0
        %1739 = vmatpush2.xpose.msra.mxu0 0.0
        %1740 = vmatprep.subr.mxu0 0.0
        %1741 = vmatpush2.xpose.msra.mxu0 0.0
        %1742 = vmatprep.subr.mxu0 0.0
        %1743 = vmatpush2.xpose.msra.mxu0 0.0
        %1744 = vmatprep.subr.mxu0 0.0
        %1745 = vmatpush2.xpose.msra.mxu0 0.0
        %1746 = vmatprep.subr.mxu0 0.0
        %1747 = vmatpush2.xpose.msra.mxu0 0.0
        %1748 = vmatprep.subr.mxu0 0.0
        %1749 = vmatpush2.xpose.msra.mxu0 0.0
        %1750 = vmatprep.subr.mxu0 0.0
        %1751 = vmatpush2.xpose.msra.mxu0 0.0
        %1752 = vmatprep.subr.mxu0 0.0
        %1753 = vmatpush2.xpose.msra.mxu0 0.0
        %1754 = vmatprep.subr.mxu0 0.0
        %1755 = vmatpush2.xpose.msra.mxu0 0.0
        %1756 = vmatprep.subr.mxu0 0.0
        %1757 = vmatpush2.xpose.msra.mxu0 0.0
        %1758 = vmatprep.subr.mxu0 0.0
        %1759 = vmatpush2.xpose.msra.mxu0 0.0
        %1760 = vmatprep.subr.mxu0 0.0
        %1761 = vmatpush2.xpose.msra.mxu0 0.0
        %1762 = vmatprep.subr.mxu0 0.0
        %1763 = vmatpush2.xpose.msra.mxu0 0.0
        %1764 = vmatprep.subr.mxu0 0.0
        %1765 = vmatpush2.xpose.msra.mxu0 0.0
        %1766 = vmatprep.mubr.f32.mxu0 0.0
        %1767 = vmatmul.mubr.f32.gmra.mxu0 %v1694
        %v1768 = vpop.f32.mrf.mxu0
        %v1769 = vadd.f32 0.0, %v1768
        %v1770 = vpop.f32.mrf.mxu0
        %1771 = vmatprep.mubr.f32.mxu0 0.0
        %1772 = vmatmul.mubr.f32.gmra.mxu0 %v1696
        %v1773 = vpop.f32.mrf.mxu0
        %v1774 = vadd.f32 0.0, %v1773
        %v1775 = vpop.f32.mrf.mxu0
        %1776 = vdwg.mxu0
        %v1777 = vmul.f32 %v1769, 0.35355338
        %v1778 = vmul.f32 %v1774, 0.35355338
        %v1779 = vsel %vm1605, %v1777, -inf
        %1780 = vmax.xlane.f32.xlu0 %v1779
        %v1781 = vpop.xlane.xlu0 %1780
        %v1782 = vsel %vm1609, %v1778, -inf
        %1783 = vmax.xlane.f32.xlu0 %v1782
        %v1784 = vpop.xlane.xlu0 %1783
        %v1785 = vsub.f32 %v1777, %v1781
        %v1786 = vsub.f32 %v1778, %v1784
        %v1787 = vmul.f32 %v1785, 1.442695
        %v1788 = vpow.pop %v1787
        %v1789 = vmul.f32 %v1786, 1.442695
        %v1790 = vpow.pop %v1789
        %v1791 = vsel %vm1605, %v1788, 0.0
        %1792 = vadd.xlane.f32.xlu0 %v1791
        %v1793 = vpop.xlane.xlu0 %1792
        %v1794 = vsel %vm1609, %v1790, 0.0
        %1795 = vadd.xlane.f32.xlu0 %v1794
        %v1796 = vpop.xlane.xlu0 %1795
        %v1797 = vrcp.pop %v1793
        %v1798 = vmul.f32 %v1788, %v1797
        %v1799 = vrcp.pop %v1796
        %v1800 = vmul.f32 %v1790, %v1799
        %v1801 = vpack.c.bf16 %v1800, %v1798
        %1802 = vrot.lane.b32.xlu0 %v1630, 56
        %v1803 = vpop.permute.xlu0 %1802
        %v1805 = vsel %vm1605, %v1801, 0
        %v1808 = vand.u32 %v1803, %v1640
        %1810 = vmatprep.subr.bf16.mxu0 0
        %1811 = vmatpush1.bf16.msra.mxu0 0
        %1812 = vmatprep.subr.bf16.mxu0 0
        %1813 = vmatpush1.bf16.msra.mxu0 0
        %1814 = vmatprep.subr.bf16.mxu0 0
        %1815 = vmatpush1.bf16.msra.mxu0 0
        %1816 = vmatprep.subr.bf16.mxu0 0
        %1817 = vmatpush1.bf16.msra.mxu0 0
        %1818 = vmatprep.subr.bf16.mxu0 0
        %1819 = vmatpush1.bf16.msra.mxu0 0
        %1820 = vmatprep.subr.bf16.mxu0 0
        %1821 = vmatpush1.bf16.msra.mxu0 0
        %1822 = vmatprep.subr.bf16.mxu0 0
        %1823 = vmatpush1.bf16.msra.mxu0 0
        %1824 = vmatprep.subr.bf16.mxu0 0
        %1825 = vmatpush1.bf16.msra.mxu0 %v1808
        %1826 = vmatprep.subr.bf16.mxu0 0
        %1827 = vmatpush2.bf16.msra.mxu0 0
        %1828 = vmatprep.subr.bf16.mxu0 0
        %1829 = vmatpush2.bf16.msra.mxu0 0
        %1830 = vmatprep.subr.bf16.mxu0 0
        %1831 = vmatpush2.bf16.msra.mxu0 0
        %1832 = vmatprep.subr.bf16.mxu0 0
        %1833 = vmatpush2.bf16.msra.mxu0 0
        %1834 = vmatprep.subr.bf16.mxu0 0
        %1835 = vmatpush2.bf16.msra.mxu0 0
        %1836 = vmatprep.subr.bf16.mxu0 0
        %1837 = vmatpush2.bf16.msra.mxu0 0
        %1838 = vmatprep.subr.bf16.mxu0 0
        %1839 = vmatpush2.bf16.msra.mxu0 0
        %1840 = vmatprep.subr.bf16.mxu0 0
        %1841 = vmatpush2.bf16.msra.mxu0 0
        %1842 = vmatprep.mubr.bf16.mxu0 0
        %1843 = vmatmul.mubr.bf16.gmra.mxu0 %v1805
        %v1844 = vpop.f32.mrf.mxu0
        %v1845 = vadd.f32 0.0, %v1844
        %v1846 = vpop.f32.mrf.mxu0
        %v1847 = vpop.f32.mrf.mxu0
        %v1848 = vadd.f32 0.0, %v1847
        %v1849 = vpop.f32.mrf.mxu0
        %1850 = vdwg.mxu0
        %v1851 = vpack.c.bf16 %v1848, %v1845
        %v1853 = vsel %vm1519, %v1851, 0
        %v1856 = vsel %vm1637, %v1510, 0
        %1858 = vmatprep.subr.bf16.mxu0 0
        %1859 = vmatpush1.bf16.msra.mxu0 0
        %1860 = vmatprep.subr.bf16.mxu0 0
        %1861 = vmatpush1.bf16.msra.mxu0 0
        %1862 = vmatprep.subr.bf16.mxu0 0
        %1863 = vmatpush1.bf16.msra.mxu0 0
        %1864 = vmatprep.subr.bf16.mxu0 0
        %1865 = vmatpush1.bf16.msra.mxu0 0
        %1866 = vmatprep.subr.bf16.mxu0 0
        %1867 = vmatpush1.bf16.msra.mxu0 0
        %1868 = vmatprep.subr.bf16.mxu0 0
        %1869 = vmatpush1.bf16.msra.mxu0 0
        %1870 = vmatprep.subr.bf16.mxu0 0
        %1871 = vmatpush1.bf16.msra.mxu0 0
        %1872 = vmatprep.subr.bf16.mxu0 0
        %1873 = vmatpush1.bf16.msra.mxu0 %v1856
        %1874 = vmatprep.subr.bf16.mxu0 0
        %1875 = vmatpush2.bf16.msra.mxu0 0
        %1876 = vmatprep.subr.bf16.mxu0 0
        %1877 = vmatpush2.bf16.msra.mxu0 0
        %1878 = vmatprep.subr.bf16.mxu0 0
        %1879 = vmatpush2.bf16.msra.mxu0 0
        %1880 = vmatprep.subr.bf16.mxu0 0
        %1881 = vmatpush2.bf16.msra.mxu0 0
        %1882 = vmatprep.subr.bf16.mxu0 0
        %1883 = vmatpush2.bf16.msra.mxu0 0
        %1884 = vmatprep.subr.bf16.mxu0 0
        %1885 = vmatpush2.bf16.msra.mxu0 0
        %1886 = vmatprep.subr.bf16.mxu0 0
        %1887 = vmatpush2.bf16.msra.mxu0 0
        %1888 = vmatprep.subr.bf16.mxu0 0
        %1889 = vmatpush2.bf16.msra.mxu0 0
        %1890 = vmatprep.mubr.bf16.mxu0 0
        %1891 = vmatmul.mubr.bf16.gmra.mxu0 %v1853
        %v1892 = vpop.f32.mrf.mxu0
        %v1893 = vadd.f32 0.0, %v1892
        %v1894 = vpop.f32.mrf.mxu0
        %v1895 = vpop.f32.mrf.mxu0
        %v1896 = vadd.f32 0.0, %v1895
        %v1897 = vpop.f32.mrf.mxu0
        %1898 = vdwg.mxu0
        %v1900 = vsel %vm1519, %v1685, 0
        %v1903 = vsel %vm1637, %v1509, 0
        %1905 = vmatprep.subr.bf16.mxu0 0
        %1906 = vmatpush1.bf16.msra.mxu0 0
        %1907 = vmatprep.subr.bf16.mxu0 0
        %1908 = vmatpush1.bf16.msra.mxu0 0
        %1909 = vmatprep.subr.bf16.mxu0 0
        %1910 = vmatpush1.bf16.msra.mxu0 0
        %1911 = vmatprep.subr.bf16.mxu0 0
        %1912 = vmatpush1.bf16.msra.mxu0 0
        %1913 = vmatprep.subr.bf16.mxu0 0
        %1914 = vmatpush1.bf16.msra.mxu0 0
        %1915 = vmatprep.subr.bf16.mxu0 0
        %1916 = vmatpush1.bf16.msra.mxu0 0
        %1917 = vmatprep.subr.bf16.mxu0 0
        %1918 = vmatpush1.bf16.msra.mxu0 0
        %1919 = vmatprep.subr.bf16.mxu0 0
        %1920 = vmatpush1.bf16.msra.mxu0 %v1903
        %1921 = vmatprep.subr.bf16.mxu0 0
        %1922 = vmatpush2.bf16.msra.mxu0 0
        %1923 = vmatprep.subr.bf16.mxu0 0
        %1924 = vmatpush2.bf16.msra.mxu0 0
        %1925 = vmatprep.subr.bf16.mxu0 0
        %1926 = vmatpush2.bf16.msra.mxu0 0
        %1927 = vmatprep.subr.bf16.mxu0 0
        %1928 = vmatpush2.bf16.msra.mxu0 0
        %1929 = vmatprep.subr.bf16.mxu0 0
        %1930 = vmatpush2.bf16.msra.mxu0 0
        %1931 = vmatprep.subr.bf16.mxu0 0
        %1932 = vmatpush2.bf16.msra.mxu0 0
        %1933 = vmatprep.subr.bf16.mxu0 0
        %1934 = vmatpush2.bf16.msra.mxu0 0
        %1935 = vmatprep.subr.bf16.mxu0 0
        %1936 = vmatpush2.bf16.msra.mxu0 0
        %1937 = vmatprep.mubr.bf16.mxu0 0
        %1938 = vmatmul.mubr.bf16.gmra.mxu0 %v1900
        %v1939 = vpop.f32.mrf.mxu0
        %v1940 = vadd.f32 %v1893, %v1939
        %v1941 = vpop.f32.mrf.mxu0
        %v1942 = vpop.f32.mrf.mxu0
        %v1943 = vadd.f32 %v1896, %v1942
        %v1944 = vpop.f32.mrf.mxu0
        %1945 = vdwg.mxu0
        %1946 = vrot.lane.b32.xlu0 %v1503, 112
        %v1947 = vpop.permute.xlu0 %1946
        %1948 = vrot.lane.b32.xlu0 %v1506, 112
        %v1949 = vpop.permute.xlu0 %1948
        %1950 = vrot.lane.b32.xlu0 %v1503, 80
        %v1951 = vpop.permute.xlu0 %1950
        %1952 = vrot.lane.b32.xlu0 %v1506, 80
        %v1953 = vpop.permute.xlu0 %1952
        %v1954 = vsel %vm1519, %v1947, 0
        %v1956 = vsel %vm1519, %v1949, 0
        %v1958 = vsel %vm1519, %v1951, 0
        %v1960 = vsel %vm1519, %v1953, 0
        %1962 = vmatprep.subr.mxu0 0.0
        %1963 = vmatpush1.xpose.msra.mxu0 0.0
        %1964 = vmatprep.subr.mxu0 0.0
        %1965 = vmatpush1.xpose.msra.mxu0 0.0
        %1966 = vmatprep.subr.mxu0 0.0
        %1967 = vmatpush1.xpose.msra.mxu0 0.0
        %1968 = vmatprep.subr.mxu0 0.0
        %1969 = vmatpush1.xpose.msra.mxu0 0.0
        %1970 = vmatprep.subr.mxu0 0.0
        %1971 = vmatpush1.xpose.msra.mxu0 0.0
        %1972 = vmatprep.subr.mxu0 0.0
        %1973 = vmatpush1.xpose.msra.mxu0 0.0
        %1974 = vmatprep.subr.mxu0 0.0
        %1975 = vmatpush1.xpose.msra.mxu0 0.0
        %1976 = vmatprep.subr.mxu0 0.0
        %1977 = vmatpush1.xpose.msra.mxu0 0.0
        %1978 = vmatprep.subr.mxu0 0.0
        %1979 = vmatpush1.xpose.msra.mxu0 0.0
        %1980 = vmatprep.subr.mxu0 0.0
        %1981 = vmatpush1.xpose.msra.mxu0 0.0
        %1982 = vmatprep.subr.mxu0 0.0
        %1983 = vmatpush1.xpose.msra.mxu0 0.0
        %1984 = vmatprep.subr.mxu0 0.0
        %1985 = vmatpush1.xpose.msra.mxu0 0.0
        %1986 = vmatprep.subr.mxu0 0.0
        %1987 = vmatpush1.xpose.msra.mxu0 0.0
        %1988 = vmatprep.subr.mxu0 0.0
        %1989 = vmatpush1.xpose.msra.mxu0 0.0
        %1990 = vmatprep.subr.mxu0 0.0
        %1991 = vmatpush1.xpose.msra.mxu0 %v1960
        %1992 = vmatprep.subr.mxu0 0.0
        %1993 = vmatpush1.xpose.msra.mxu0 %v1958
        %1994 = vmatprep.subr.mxu0 0.0
        %1995 = vmatpush2.xpose.msra.mxu0 0.0
        %1996 = vmatprep.subr.mxu0 0.0
        %1997 = vmatpush2.xpose.msra.mxu0 0.0
        %1998 = vmatprep.subr.mxu0 0.0
        %1999 = vmatpush2.xpose.msra.mxu0 0.0
        %2000 = vmatprep.subr.mxu0 0.0
        %2001 = vmatpush2.xpose.msra.mxu0 0.0
        %2002 = vmatprep.subr.mxu0 0.0
        %2003 = vmatpush2.xpose.msra.mxu0 0.0
        %2004 = vmatprep.subr.mxu0 0.0
        %2005 = vmatpush2.xpose.msra.mxu0 0.0
        %2006 = vmatprep.subr.mxu0 0.0
        %2007 = vmatpush2.xpose.msra.mxu0 0.0
        %2008 = vmatprep.subr.mxu0 0.0
        %2009 = vmatpush2.xpose.msra.mxu0 0.0
        %2010 = vmatprep.subr.mxu0 0.0
        %2011 = vmatpush2.xpose.msra.mxu0 0.0
        %2012 = vmatprep.subr.mxu0 0.0
        %2013 = vmatpush2.xpose.msra.mxu0 0.0
        %2014 = vmatprep.subr.mxu0 0.0
        %2015 = vmatpush2.xpose.msra.mxu0 0.0
        %2016 = vmatprep.subr.mxu0 0.0
        %2017 = vmatpush2.xpose.msra.mxu0 0.0
        %2018 = vmatprep.subr.mxu0 0.0
        %2019 = vmatpush2.xpose.msra.mxu0 0.0
        %2020 = vmatprep.subr.mxu0 0.0
        %2021 = vmatpush2.xpose.msra.mxu0 0.0
        %2022 = vmatprep.subr.mxu0 0.0
        %2023 = vmatpush2.xpose.msra.mxu0 0.0
        %2024 = vmatprep.subr.mxu0 0.0
        %2025 = vmatpush2.xpose.msra.mxu0 0.0
        %2026 = vmatprep.mubr.f32.mxu0 0.0
        %2027 = vmatmul.mubr.f32.gmra.mxu0 %v1954
        %v2028 = vpop.f32.mrf.mxu0
        %v2029 = vadd.f32 0.0, %v2028
        %v2030 = vpop.f32.mrf.mxu0
        %2031 = vmatprep.mubr.f32.mxu0 0.0
        %2032 = vmatmul.mubr.f32.gmra.mxu0 %v1956
        %v2033 = vpop.f32.mrf.mxu0
        %v2034 = vadd.f32 0.0, %v2033
        %v2035 = vpop.f32.mrf.mxu0
        %2036 = vdwg.mxu0
        %v2037 = vmul.f32 %v2029, 0.35355338
        %v2038 = vmul.f32 %v2034, 0.35355338
        %v2039 = vsel %vm1605, %v2037, -inf
        %2040 = vmax.xlane.f32.xlu0 %v2039
        %v2041 = vpop.xlane.xlu0 %2040
        %v2042 = vsel %vm1609, %v2038, -inf
        %2043 = vmax.xlane.f32.xlu0 %v2042
        %v2044 = vpop.xlane.xlu0 %2043
        %v2045 = vsub.f32 %v2037, %v2041
        %v2046 = vsub.f32 %v2038, %v2044
        %v2047 = vmul.f32 %v2045, 1.442695
        %v2048 = vpow.pop %v2047
        %v2049 = vmul.f32 %v2046, 1.442695
        %v2050 = vpow.pop %v2049
        %v2051 = vsel %vm1605, %v2048, 0.0
        %2052 = vadd.xlane.f32.xlu0 %v2051
        %v2053 = vpop.xlane.xlu0 %2052
        %v2054 = vsel %vm1609, %v2050, 0.0
        %2055 = vadd.xlane.f32.xlu0 %v2054
        %v2056 = vpop.xlane.xlu0 %2055
        %v2057 = vrcp.pop %v2053
        %v2058 = vmul.f32 %v2048, %v2057
        %v2059 = vrcp.pop %v2056
        %v2060 = vmul.f32 %v2050, %v2059
        %v2061 = vpack.c.bf16 %v2060, %v2058
        %2062 = vrot.lane.b32.xlu0 %v1630, 48
        %v2063 = vpop.permute.xlu0 %2062
        %v2065 = vsel %vm1605, %v2061, 0
        %v2068 = vand.u32 %v2063, %v1640
        %2070 = vmatprep.subr.bf16.mxu0 0
        %2071 = vmatpush1.bf16.msra.mxu0 0
        %2072 = vmatprep.subr.bf16.mxu0 0
        %2073 = vmatpush1.bf16.msra.mxu0 0
        %2074 = vmatprep.subr.bf16.mxu0 0
        %2075 = vmatpush1.bf16.msra.mxu0 0
        %2076 = vmatprep.subr.bf16.mxu0 0
        %2077 = vmatpush1.bf16.msra.mxu0 0
        %2078 = vmatprep.subr.bf16.mxu0 0
        %2079 = vmatpush1.bf16.msra.mxu0 0
        %2080 = vmatprep.subr.bf16.mxu0 0
        %2081 = vmatpush1.bf16.msra.mxu0 0
        %2082 = vmatprep.subr.bf16.mxu0 0
        %2083 = vmatpush1.bf16.msra.mxu0 0
        %2084 = vmatprep.subr.bf16.mxu0 0
        %2085 = vmatpush1.bf16.msra.mxu0 %v2068
        %2086 = vmatprep.subr.bf16.mxu0 0
        %2087 = vmatpush2.bf16.msra.mxu0 0
        %2088 = vmatprep.subr.bf16.mxu0 0
        %2089 = vmatpush2.bf16.msra.mxu0 0
        %2090 = vmatprep.subr.bf16.mxu0 0
        %2091 = vmatpush2.bf16.msra.mxu0 0
        %2092 = vmatprep.subr.bf16.mxu0 0
        %2093 = vmatpush2.bf16.msra.mxu0 0
        %2094 = vmatprep.subr.bf16.mxu0 0
        %2095 = vmatpush2.bf16.msra.mxu0 0
        %2096 = vmatprep.subr.bf16.mxu0 0
        %2097 = vmatpush2.bf16.msra.mxu0 0
        %2098 = vmatprep.subr.bf16.mxu0 0
        %2099 = vmatpush2.bf16.msra.mxu0 0
        %2100 = vmatprep.subr.bf16.mxu0 0
        %2101 = vmatpush2.bf16.msra.mxu0 0
        %2102 = vmatprep.mubr.bf16.mxu0 0
        %2103 = vmatmul.mubr.bf16.gmra.mxu0 %v2065
        %v2104 = vpop.f32.mrf.mxu0
        %v2105 = vadd.f32 0.0, %v2104
        %v2106 = vpop.f32.mrf.mxu0
        %v2107 = vpop.f32.mrf.mxu0
        %v2108 = vadd.f32 0.0, %v2107
        %v2109 = vpop.f32.mrf.mxu0
        %2110 = vdwg.mxu0
        %v2111 = vpack.c.bf16 %v2108, %v2105
        %v2113 = vsel %vm1519, %v2111, 0
        %v2116 = vsel %vm1637, %v1511, 0
        %2118 = vmatprep.subr.bf16.mxu0 0
        %2119 = vmatpush1.bf16.msra.mxu0 0
        %2120 = vmatprep.subr.bf16.mxu0 0
        %2121 = vmatpush1.bf16.msra.mxu0 0
        %2122 = vmatprep.subr.bf16.mxu0 0
        %2123 = vmatpush1.bf16.msra.mxu0 0
        %2124 = vmatprep.subr.bf16.mxu0 0
        %2125 = vmatpush1.bf16.msra.mxu0 0
        %2126 = vmatprep.subr.bf16.mxu0 0
        %2127 = vmatpush1.bf16.msra.mxu0 0
        %2128 = vmatprep.subr.bf16.mxu0 0
        %2129 = vmatpush1.bf16.msra.mxu0 0
        %2130 = vmatprep.subr.bf16.mxu0 0
        %2131 = vmatpush1.bf16.msra.mxu0 0
        %2132 = vmatprep.subr.bf16.mxu0 0
        %2133 = vmatpush1.bf16.msra.mxu0 %v2116
        %2134 = vmatprep.subr.bf16.mxu0 0
        %2135 = vmatpush2.bf16.msra.mxu0 0
        %2136 = vmatprep.subr.bf16.mxu0 0
        %2137 = vmatpush2.bf16.msra.mxu0 0
        %2138 = vmatprep.subr.bf16.mxu0 0
        %2139 = vmatpush2.bf16.msra.mxu0 0
        %2140 = vmatprep.subr.bf16.mxu0 0
        %2141 = vmatpush2.bf16.msra.mxu0 0
        %2142 = vmatprep.subr.bf16.mxu0 0
        %2143 = vmatpush2.bf16.msra.mxu0 0
        %2144 = vmatprep.subr.bf16.mxu0 0
        %2145 = vmatpush2.bf16.msra.mxu0 0
        %2146 = vmatprep.subr.bf16.mxu0 0
        %2147 = vmatpush2.bf16.msra.mxu0 0
        %2148 = vmatprep.subr.bf16.mxu0 0
        %2149 = vmatpush2.bf16.msra.mxu0 0
        %2150 = vmatprep.mubr.bf16.mxu0 0
        %2151 = vmatmul.mubr.bf16.gmra.mxu0 %v2113
        %v2152 = vpop.f32.mrf.mxu0
        %v2153 = vadd.f32 0.0, %v2152
        %v2154 = vpop.f32.mrf.mxu0
        %v2155 = vpop.f32.mrf.mxu0
        %v2156 = vadd.f32 0.0, %v2155
        %v2157 = vpop.f32.mrf.mxu0
        %2158 = vdwg.mxu0
        %v2159 = vadd.f32 %v1940, %v2153
        %v2160 = vadd.f32 %v1943, %v2156
        %2161 = vrot.lane.b32.xlu0 %v1503, 104
        %v2162 = vpop.permute.xlu0 %2161
        %2163 = vrot.lane.b32.xlu0 %v1506, 104
        %v2164 = vpop.permute.xlu0 %2163
        %2165 = vrot.lane.b32.xlu0 %v1503, 72
        %v2166 = vpop.permute.xlu0 %2165
        %2167 = vrot.lane.b32.xlu0 %v1506, 72
        %v2168 = vpop.permute.xlu0 %2167
        %v2169 = vsel %vm1519, %v2162, 0
        %v2171 = vsel %vm1519, %v2164, 0
        %v2173 = vsel %vm1519, %v2166, 0
        %v2175 = vsel %vm1519, %v2168, 0
        %2177 = vmatprep.subr.mxu0 0.0
        %2178 = vmatpush1.xpose.msra.mxu0 0.0
        %2179 = vmatprep.subr.mxu0 0.0
        %2180 = vmatpush1.xpose.msra.mxu0 0.0
        %2181 = vmatprep.subr.mxu0 0.0
        %2182 = vmatpush1.xpose.msra.mxu0 0.0
        %2183 = vmatprep.subr.mxu0 0.0
        %2184 = vmatpush1.xpose.msra.mxu0 0.0
        %2185 = vmatprep.subr.mxu0 0.0
        %2186 = vmatpush1.xpose.msra.mxu0 0.0
        %2187 = vmatprep.subr.mxu0 0.0
        %2188 = vmatpush1.xpose.msra.mxu0 0.0
        %2189 = vmatprep.subr.mxu0 0.0
        %2190 = vmatpush1.xpose.msra.mxu0 0.0
        %2191 = vmatprep.subr.mxu0 0.0
        %2192 = vmatpush1.xpose.msra.mxu0 0.0
        %2193 = vmatprep.subr.mxu0 0.0
        %2194 = vmatpush1.xpose.msra.mxu0 0.0
        %2195 = vmatprep.subr.mxu0 0.0
        %2196 = vmatpush1.xpose.msra.mxu0 0.0
        %2197 = vmatprep.subr.mxu0 0.0
        %2198 = vmatpush1.xpose.msra.mxu0 0.0
        %2199 = vmatprep.subr.mxu0 0.0
        %2200 = vmatpush1.xpose.msra.mxu0 0.0
        %2201 = vmatprep.subr.mxu0 0.0
        %2202 = vmatpush1.xpose.msra.mxu0 0.0
        %2203 = vmatprep.subr.mxu0 0.0
        %2204 = vmatpush1.xpose.msra.mxu0 0.0
        %2205 = vmatprep.subr.mxu0 0.0
        %2206 = vmatpush1.xpose.msra.mxu0 %v2175
        %2207 = vmatprep.subr.mxu0 0.0
        %2208 = vmatpush1.xpose.msra.mxu0 %v2173
        %2209 = vmatprep.subr.mxu0 0.0
        %2210 = vmatpush2.xpose.msra.mxu0 0.0
        %2211 = vmatprep.subr.mxu0 0.0
        %2212 = vmatpush2.xpose.msra.mxu0 0.0
        %2213 = vmatprep.subr.mxu0 0.0
        %2214 = vmatpush2.xpose.msra.mxu0 0.0
        %2215 = vmatprep.subr.mxu0 0.0
        %2216 = vmatpush2.xpose.msra.mxu0 0.0
        %2217 = vmatprep.subr.mxu0 0.0
        %2218 = vmatpush2.xpose.msra.mxu0 0.0
        %2219 = vmatprep.subr.mxu0 0.0
        %2220 = vmatpush2.xpose.msra.mxu0 0.0
        %2221 = vmatprep.subr.mxu0 0.0
        %2222 = vmatpush2.xpose.msra.mxu0 0.0
        %2223 = vmatprep.subr.mxu0 0.0
        %2224 = vmatpush2.xpose.msra.mxu0 0.0
        %2225 = vmatprep.subr.mxu0 0.0
        %2226 = vmatpush2.xpose.msra.mxu0 0.0
        %2227 = vmatprep.subr.mxu0 0.0
        %2228 = vmatpush2.xpose.msra.mxu0 0.0
        %2229 = vmatprep.subr.mxu0 0.0
        %2230 = vmatpush2.xpose.msra.mxu0 0.0
        %2231 = vmatprep.subr.mxu0 0.0
        %2232 = vmatpush2.xpose.msra.mxu0 0.0
        %2233 = vmatprep.subr.mxu0 0.0
        %2234 = vmatpush2.xpose.msra.mxu0 0.0
        %2235 = vmatprep.subr.mxu0 0.0
        %2236 = vmatpush2.xpose.msra.mxu0 0.0
        %2237 = vmatprep.subr.mxu0 0.0
        %2238 = vmatpush2.xpose.msra.mxu0 0.0
        %2239 = vmatprep.subr.mxu0 0.0
        %2240 = vmatpush2.xpose.msra.mxu0 0.0
        %2241 = vmatprep.mubr.f32.mxu0 0.0
        %2242 = vmatmul.mubr.f32.gmra.mxu0 %v2169
        %v2243 = vpop.f32.mrf.mxu0
        %v2244 = vadd.f32 0.0, %v2243
        %v2245 = vpop.f32.mrf.mxu0
        %2246 = vmatprep.mubr.f32.mxu0 0.0
        %2247 = vmatmul.mubr.f32.gmra.mxu0 %v2171
        %v2248 = vpop.f32.mrf.mxu0
        %v2249 = vadd.f32 0.0, %v2248
        %v2250 = vpop.f32.mrf.mxu0
        %2251 = vdwg.mxu0
        %v2252 = vmul.f32 %v2244, 0.35355338
        %v2253 = vmul.f32 %v2249, 0.35355338
        %v2254 = vsel %vm1605, %v2252, -inf
        %2255 = vmax.xlane.f32.xlu0 %v2254
        %v2256 = vpop.xlane.xlu0 %2255
        %v2257 = vsel %vm1609, %v2253, -inf
        %2258 = vmax.xlane.f32.xlu0 %v2257
        %v2259 = vpop.xlane.xlu0 %2258
        %v2260 = vsub.f32 %v2252, %v2256
        %v2261 = vsub.f32 %v2253, %v2259
        %v2262 = vmul.f32 %v2260, 1.442695
        %v2263 = vpow.pop %v2262
        %v2264 = vmul.f32 %v2261, 1.442695
        %v2265 = vpow.pop %v2264
        %v2266 = vsel %vm1605, %v2263, 0.0
        %2267 = vadd.xlane.f32.xlu0 %v2266
        %v2268 = vpop.xlane.xlu0 %2267
        %v2269 = vsel %vm1609, %v2265, 0.0
        %2270 = vadd.xlane.f32.xlu0 %v2269
        %v2271 = vpop.xlane.xlu0 %2270
        %v2272 = vrcp.pop %v2268
        %v2273 = vmul.f32 %v2263, %v2272
        %v2274 = vrcp.pop %v2271
        %v2275 = vmul.f32 %v2265, %v2274
        %v2276 = vpack.c.bf16 %v2275, %v2273
        %2277 = vrot.lane.b32.xlu0 %v1630, 40
        %v2278 = vpop.permute.xlu0 %2277
        %v2280 = vsel %vm1605, %v2276, 0
        %v2283 = vand.u32 %v2278, %v1640
        %2285 = vmatprep.subr.bf16.mxu0 0
        %2286 = vmatpush1.bf16.msra.mxu0 0
        %2287 = vmatprep.subr.bf16.mxu0 0
        %2288 = vmatpush1.bf16.msra.mxu0 0
        %2289 = vmatprep.subr.bf16.mxu0 0
        %2290 = vmatpush1.bf16.msra.mxu0 0
        %2291 = vmatprep.subr.bf16.mxu0 0
        %2292 = vmatpush1.bf16.msra.mxu0 0
        %2293 = vmatprep.subr.bf16.mxu0 0
        %2294 = vmatpush1.bf16.msra.mxu0 0
        %2295 = vmatprep.subr.bf16.mxu0 0
        %2296 = vmatpush1.bf16.msra.mxu0 0
        %2297 = vmatprep.subr.bf16.mxu0 0
        %2298 = vmatpush1.bf16.msra.mxu0 0
        %2299 = vmatprep.subr.bf16.mxu0 0
        %2300 = vmatpush1.bf16.msra.mxu0 %v2283
        %2301 = vmatprep.subr.bf16.mxu0 0
        %2302 = vmatpush2.bf16.msra.mxu0 0
        %2303 = vmatprep.subr.bf16.mxu0 0
        %2304 = vmatpush2.bf16.msra.mxu0 0
        %2305 = vmatprep.subr.bf16.mxu0 0
        %2306 = vmatpush2.bf16.msra.mxu0 0
        %2307 = vmatprep.subr.bf16.mxu0 0
        %2308 = vmatpush2.bf16.msra.mxu0 0
        %2309 = vmatprep.subr.bf16.mxu0 0
        %2310 = vmatpush2.bf16.msra.mxu0 0
        %2311 = vmatprep.subr.bf16.mxu0 0
        %2312 = vmatpush2.bf16.msra.mxu0 0
        %2313 = vmatprep.subr.bf16.mxu0 0
        %2314 = vmatpush2.bf16.msra.mxu0 0
        %2315 = vmatprep.subr.bf16.mxu0 0
        %2316 = vmatpush2.bf16.msra.mxu0 0
        %2317 = vmatprep.mubr.bf16.mxu0 0
        %2318 = vmatmul.mubr.bf16.gmra.mxu0 %v2280
        %v2319 = vpop.f32.mrf.mxu0
        %v2320 = vadd.f32 0.0, %v2319
        %v2321 = vpop.f32.mrf.mxu0
        %v2322 = vpop.f32.mrf.mxu0
        %v2323 = vadd.f32 0.0, %v2322
        %v2324 = vpop.f32.mrf.mxu0
        %2325 = vdwg.mxu0
        %v2326 = vpack.c.bf16 %v2323, %v2320
        %v2328 = vsel %vm1519, %v2326, 0
        %v2331 = vsel %vm1637, %v1512, 0
        %2333 = vmatprep.subr.bf16.mxu0 0
        %2334 = vmatpush1.bf16.msra.mxu0 0
        %2335 = vmatprep.subr.bf16.mxu0 0
        %2336 = vmatpush1.bf16.msra.mxu0 0
        %2337 = vmatprep.subr.bf16.mxu0 0
        %2338 = vmatpush1.bf16.msra.mxu0 0
        %2339 = vmatprep.subr.bf16.mxu0 0
        %2340 = vmatpush1.bf16.msra.mxu0 0
        %2341 = vmatprep.subr.bf16.mxu0 0
        %2342 = vmatpush1.bf16.msra.mxu0 0
        %2343 = vmatprep.subr.bf16.mxu0 0
        %2344 = vmatpush1.bf16.msra.mxu0 0
        %2345 = vmatprep.subr.bf16.mxu0 0
        %2346 = vmatpush1.bf16.msra.mxu0 0
        %2347 = vmatprep.subr.bf16.mxu0 0
        %2348 = vmatpush1.bf16.msra.mxu0 %v2331
        %2349 = vmatprep.subr.bf16.mxu0 0
        %2350 = vmatpush2.bf16.msra.mxu0 0
        %2351 = vmatprep.subr.bf16.mxu0 0
        %2352 = vmatpush2.bf16.msra.mxu0 0
        %2353 = vmatprep.subr.bf16.mxu0 0
        %2354 = vmatpush2.bf16.msra.mxu0 0
        %2355 = vmatprep.subr.bf16.mxu0 0
        %2356 = vmatpush2.bf16.msra.mxu0 0
        %2357 = vmatprep.subr.bf16.mxu0 0
        %2358 = vmatpush2.bf16.msra.mxu0 0
        %2359 = vmatprep.subr.bf16.mxu0 0
        %2360 = vmatpush2.bf16.msra.mxu0 0
        %2361 = vmatprep.subr.bf16.mxu0 0
        %2362 = vmatpush2.bf16.msra.mxu0 0
        %2363 = vmatprep.subr.bf16.mxu0 0
        %2364 = vmatpush2.bf16.msra.mxu0 0
        %2365 = vmatprep.mubr.bf16.mxu0 0
        %2366 = vmatmul.mubr.bf16.gmra.mxu0 %v2328
        %v2367 = vpop.f32.mrf.mxu0
        %v2368 = vadd.f32 0.0, %v2367
        %v2369 = vpop.f32.mrf.mxu0
        %v2370 = vpop.f32.mrf.mxu0
        %v2371 = vadd.f32 0.0, %v2370
        %v2372 = vpop.f32.mrf.mxu0
        %2373 = vdwg.mxu0
        %v2374 = vadd.f32 %v2159, %v2368
        %v2375 = vadd.f32 %v2160, %v2371
        %v2376 = vld [vmem:[%s15] sm:$0x1]
        %v2378 = vlaneseq
        %v2379 = vshrl.u32 %v2378, 7
        %v2380 = vsub.s32 0, %v2379
        %v2381 = vrot.slane %v2376, %v2380
        %v2383 = vadd.f32 %v2374, %v2381
        %v2384 = vadd.f32 %v2375, %v2381
        %v2387 = vrot.slane %v2383, 1
        %v2388 = vrot.slane %v2383, 2
        %v2389 = vrot.slane %v2383, 3
        %v2390 = vrot.slane %v2383, 4
        %v2391 = vrot.slane %v2383, 5
        %v2392 = vrot.slane %v2383, 6
        %v2393 = vrot.slane %v2383, 7
        %v2403 = vadd.f32 %v1384, %v2383
        %v2404 = vadd.f32 %v1385, %v2387
        %v2405 = vadd.f32 %v1386, %v2388
        %v2406 = vadd.f32 %v1387, %v2389
        %v2407 = vadd.f32 %v1388, %v2390
        %v2408 = vadd.f32 %v1389, %v2391
        %v2409 = vadd.f32 %v1390, %v2392
        %v2410 = vadd.f32 %v1391, %v2393
        %v2411 = vadd.f32 %v1392, %v2384
        %v2412 = vld [vmem:[%s17] sm:$0x1]
        %v2413 = vld [vmem:[%s19] sm:$0x1]
        %v2423 = vrot.slane %v2404, 7
        %v2424 = vsel %vm1432, %v2423, %v2403
        %v2425 = vrot.slane %v2405, 6
        %v2426 = vsel %vm1435, %v2425, %v2424
        %v2427 = vrot.slane %v2406, 5
        %v2428 = vsel %vm1438, %v2427, %v2426
        %v2429 = vrot.slane %v2407, 4
        %v2430 = vsel %vm1441, %v2429, %v2428
        %v2431 = vrot.slane %v2408, 3
        %v2432 = vsel %vm1444, %v2431, %v2430
        %v2433 = vrot.slane %v2409, 2
        %v2434 = vsel %vm1447, %v2433, %v2432
        %v2435 = vrot.slane %v2410, 1
        %v2436 = vsel %vm1450, %v2435, %v2434
        %v2439 = vsel %vm1253, %v2436, 0.0
        %2440 = vadd.xlane.f32.xlu0 %v2439
        %v2441 = vpop.xlane.xlu0 %2440
        %vm2442 = vcmask 253952
        %v2443 = vsel %vm2442, %v2411, 0.0
        %2444 = vadd.xlane.f32.xlu0 %v2443
        %v2445 = vpop.xlane.xlu0 %2444
        %v2446 = vrcp.pop 32.0
        %v2447 = vmul.f32 %v2441, %v2446
        %v2448 = vmul.f32 %v2445, %v2446
        %v2451 = vrot.slane %v2447, 1
        %v2452 = vrot.slane %v2447, 2
        %v2453 = vrot.slane %v2447, 3
        %v2454 = vrot.slane %v2447, 4
        %v2455 = vrot.slane %v2447, 5
        %v2456 = vrot.slane %v2447, 6
        %v2457 = vrot.slane %v2447, 7
        %v2467 = vsub.f32 %v2403, %v2447
        %v2468 = vsub.f32 %v2404, %v2451
        %v2469 = vsub.f32 %v2405, %v2452
        %v2470 = vsub.f32 %v2406, %v2453
        %v2471 = vsub.f32 %v2407, %v2454
        %v2472 = vsub.f32 %v2408, %v2455
        %v2473 = vsub.f32 %v2409, %v2456
        %v2474 = vsub.f32 %v2410, %v2457
        %v2475 = vsub.f32 %v2411, %v2448
        %v2476 = vmul.f32 %v2467, %v2467
        %v2477 = vmul.f32 %v2468, %v2468
        %v2478 = vmul.f32 %v2469, %v2469
        %v2479 = vmul.f32 %v2470, %v2470
        %v2480 = vmul.f32 %v2471, %v2471
        %v2481 = vmul.f32 %v2472, %v2472
        %v2482 = vmul.f32 %v2473, %v2473
        %v2483 = vmul.f32 %v2474, %v2474
        %v2484 = vmul.f32 %v2475, %v2475
        %v2494 = vrot.slane %v2477, 7
        %v2495 = vsel %vm1432, %v2494, %v2476
        %v2496 = vrot.slane %v2478, 6
        %v2497 = vsel %vm1435, %v2496, %v2495
        %v2498 = vrot.slane %v2479, 5
        %v2499 = vsel %vm1438, %v2498, %v2497
        %v2500 = vrot.slane %v2480, 4
        %v2501 = vsel %vm1441, %v2500, %v2499
        %v2502 = vrot.slane %v2481, 3
        %v2503 = vsel %vm1444, %v2502, %v2501
        %v2504 = vrot.slane %v2482, 2
        %v2505 = vsel %vm1447, %v2504, %v2503
        %v2506 = vrot.slane %v2483, 1
        %v2507 = vsel %vm1450, %v2506, %v2505
        %v2510 = vsel %vm1253, %v2507, 0.0
        %2511 = vadd.xlane.f32.xlu0 %v2510
        %v2512 = vpop.xlane.xlu0 %2511
        %v2513 = vsel %vm2442, %v2484, 0.0
        %2514 = vadd.xlane.f32.xlu0 %v2513
        %v2515 = vpop.xlane.xlu0 %2514
        %v2516 = vmul.f32 %v2512, %v2446
        %v2517 = vmul.f32 %v2515, %v2446
        %v2518 = vadd.f32 %v2516, 1e-05
        %v2519 = vadd.f32 %v2517, 1e-05
        %v2520 = vrsqrt.pop %v2518
        %v2521 = vrsqrt.pop %v2519
        %v2524 = vrot.slane %v2520, 1
        %v2525 = vrot.slane %v2520, 2
        %v2526 = vrot.slane %v2520, 3
        %v2527 = vrot.slane %v2520, 4
        %v2528 = vrot.slane %v2520, 5
        %v2529 = vrot.slane %v2520, 6
        %v2530 = vrot.slane %v2520, 7
        %v2540 = vmul.f32 %v2467, %v2520
        %v2541 = vmul.f32 %v2468, %v2524
        %v2542 = vmul.f32 %v2469, %v2525
        %v2543 = vmul.f32 %v2470, %v2526
        %v2544 = vmul.f32 %v2471, %v2527
        %v2545 = vmul.f32 %v2472, %v2528
        %v2546 = vmul.f32 %v2473, %v2529
        %v2547 = vmul.f32 %v2474, %v2530
        %v2548 = vmul.f32 %v2475, %v2521
        %v2550 = vlaneseq
        %v2551 = vshrl.u32 %v2550, 7
        %v2552 = vsub.s32 0, %v2551
        %v2553 = vrot.slane %v2412, %v2552
        %v2555 = vmul.f32 %v2540, %v2553
        %v2556 = vmul.f32 %v2541, %v2553
        %v2557 = vmul.f32 %v2542, %v2553
        %v2558 = vmul.f32 %v2543, %v2553
        %v2559 = vmul.f32 %v2544, %v2553
        %v2560 = vmul.f32 %v2545, %v2553
        %v2561 = vmul.f32 %v2546, %v2553
        %v2562 = vmul.f32 %v2547, %v2553
        %v2563 = vmul.f32 %v2548, %v2553
        %v2565 = vlaneseq
        %v2566 = vshrl.u32 %v2565, 7
        %v2567 = vsub.s32 0, %v2566
        %v2568 = vrot.slane %v2413, %v2567
        %v2570 = vadd.f32 %v2555, %v2568
        %v2571 = vadd.f32 %v2556, %v2568
        %v2572 = vadd.f32 %v2557, %v2568
        %v2573 = vadd.f32 %v2558, %v2568
        %v2574 = vadd.f32 %v2559, %v2568
        %v2575 = vadd.f32 %v2560, %v2568
        %v2576 = vadd.f32 %v2561, %v2568
        %v2577 = vadd.f32 %v2562, %v2568
        %v2578 = vadd.f32 %v2563, %v2568
        %v2579 = vpack.c.bf16 %v2570, %v2570
        %v2580 = vpack.c.bf16 %v2571, %v2571
        %v2581 = vpack.c.bf16 %v2572, %v2572
        %v2582 = vpack.c.bf16 %v2573, %v2573
        %v2583 = vpack.c.bf16 %v2574, %v2574
        %v2584 = vpack.c.bf16 %v2575, %v2575
        %v2585 = vpack.c.bf16 %v2576, %v2576
        %v2586 = vpack.c.bf16 %v2577, %v2577
        %v2587 = vpack.c.bf16 %v2578, %v2578
        %v2588 = vld [vmem:[%s21] sm:$0xf]
        %v2589 = vld [vmem:[%s21 + $0x4] sm:$0xf]
        %v2590 = vld [vmem:[%s21 + $0x8] sm:$0xf]
        %v2591 = vld [vmem:[%s21 + $0xc] sm:$0xf]
        %v2592 = vld [vmem:[%s23] sm:$0x1]
        %v2594 = vlaneseq
        %v2595 = vshrl.u32 %v2594, 7
        %v2596 = vsub.s32 0, %v2595
        %v2597 = vrot.slane %v2592, %v2596
        %v2608 = vunpack.c.l.b16 %v2579
        %v2609 = vunpack.c.l.b16 %v2580
        %v2610 = vunpack.c.l.b16 %v2581
        %v2611 = vunpack.c.l.b16 %v2582
        %v2612 = vunpack.c.l.b16 %v2583
        %v2613 = vunpack.c.l.b16 %v2584
        %v2614 = vunpack.c.l.b16 %v2585
        %v2615 = vunpack.c.l.b16 %v2586
        %v2616 = vunpack.c.l.b16 %v2587
        %v2617 = vrot.slane %v2609, 7
        %v2618 = vsel %vm1432, %v2617, %v2608
        %v2619 = vrot.slane %v2610, 6
        %v2620 = vsel %vm1435, %v2619, %v2618
        %v2621 = vrot.slane %v2611, 5
        %v2622 = vsel %vm1438, %v2621, %v2620
        %v2623 = vrot.slane %v2612, 4
        %v2624 = vsel %vm1441, %v2623, %v2622
        %v2625 = vrot.slane %v2613, 3
        %v2626 = vsel %vm1444, %v2625, %v2624
        %v2627 = vrot.slane %v2614, 2
        %v2628 = vsel %vm1447, %v2627, %v2626
        %v2629 = vrot.slane %v2615, 1
        %v2630 = vsel %vm1450, %v2629, %v2628
        %v2631 = vpack.c.b16 %v2616, %v2630
        %v2636 = vunpack.c.l.b16 %v2588
        %v2637 = vunpack.c.l.b16 %v2589
        %v2638 = vunpack.c.l.b16 %v2590
        %v2639 = vunpack.c.l.b16 %v2591
        %v2640 = vpack.c.b16 %v2637, %v2636
        %v2641 = vpack.c.b16 %v2639, %v2638
        %v2645 = vsel %vm1253, %v2631, 0
        %2647 = vmatprep.subr.bf16.mxu0 0
        %2648 = vmatpush1.bf16.msra.mxu0 0
        %2649 = vmatprep.subr.bf16.mxu0 0
        %2650 = vmatpush1.bf16.msra.mxu0 0
        %2651 = vmatprep.subr.bf16.mxu0 0
        %2652 = vmatpush1.bf16.msra.mxu0 0
        %2653 = vmatprep.subr.bf16.mxu0 0
        %2654 = vmatpush1.bf16.msra.mxu0 0
        %2655 = vmatprep.subr.bf16.mxu0 0
        %2656 = vmatpush1.bf16.msra.mxu0 0
        %2657 = vmatprep.subr.bf16.mxu0 0
        %2658 = vmatpush1.bf16.msra.mxu0 0
        %2659 = vmatprep.subr.bf16.mxu0 0
        %2660 = vmatpush1.bf16.msra.mxu0 %v2641
        %2661 = vmatprep.subr.bf16.mxu0 0
        %2662 = vmatpush1.bf16.msra.mxu0 %v2640
        %2663 = vmatprep.subr.bf16.mxu0 0
        %2664 = vmatpush2.bf16.msra.mxu0 0
        %2665 = vmatprep.subr.bf16.mxu0 0
        %2666 = vmatpush2.bf16.msra.mxu0 0
        %2667 = vmatprep.subr.bf16.mxu0 0
        %2668 = vmatpush2.bf16.msra.mxu0 0
        %2669 = vmatprep.subr.bf16.mxu0 0
        %2670 = vmatpush2.bf16.msra.mxu0 0
        %2671 = vmatprep.subr.bf16.mxu0 0
        %2672 = vmatpush2.bf16.msra.mxu0 0
        %2673 = vmatprep.subr.bf16.mxu0 0
        %2674 = vmatpush2.bf16.msra.mxu0 0
        %2675 = vmatprep.subr.bf16.mxu0 0
        %2676 = vmatpush2.bf16.msra.mxu0 0
        %2677 = vmatprep.subr.bf16.mxu0 0
        %2678 = vmatpush2.bf16.msra.mxu0 0
        %2679 = vmatprep.mubr.bf16.mxu0 0
        %2680 = vmatmul.mubr.bf16.gmra.mxu0 %v2645
        %v2681 = vpop.f32.mrf.mxu0
        %v2682 = vadd.f32 %v2597, %v2681
        %v2683 = vpop.f32.mrf.mxu0
        %v2684 = vpop.f32.mrf.mxu0
        %v2685 = vadd.f32 %v2597, %v2684
        %v2686 = vpop.f32.mrf.mxu0
        %2687 = vdwg.mxu0
        %v2688 = vmax.f32 %v2682, 0.0
        %v2689 = vmax.f32 %v2685, 0.0
        %v2690 = vpack.c.bf16 %v2689, %v2688
        %v2691 = vld [vmem:[%s25] sm:$0xf]
        %v2692 = vld [vmem:[%s25 + $0x4] sm:$0xf]
        %v2693 = vld [vmem:[%s25 + $0x8] sm:$0xf]
        %v2694 = vld [vmem:[%s25 + $0xc] sm:$0xf]
        %v2695 = vld [vmem:[%s25 + $0x10] sm:$0xf]
        %v2696 = vld [vmem:[%s25 + $0x14] sm:$0xf]
        %v2697 = vld [vmem:[%s25 + $0x18] sm:$0xf]
        %v2698 = vld [vmem:[%s25 + $0x1c] sm:$0xf]
        %v2699 = vld [vmem:[%s27] sm:$0x1]
        %v2701 = vlaneseq
        %v2702 = vshrl.u32 %v2701, 7
        %v2703 = vsub.s32 0, %v2702
        %v2704 = vrot.slane %v2699, %v2703
        %v2714 = vunpack.c.l.b16 %v2691
        %v2715 = vunpack.c.l.b16 %v2692
        %v2716 = vunpack.c.l.b16 %v2693
        %v2717 = vunpack.c.l.b16 %v2694
        %v2718 = vunpack.c.l.b16 %v2695
        %v2719 = vunpack.c.l.b16 %v2696
        %v2720 = vunpack.c.l.b16 %v2697
        %v2721 = vunpack.c.l.b16 %v2698
        %v2722 = vpack.c.b16 %v2715, %v2714
        %v2723 = vpack.c.b16 %v2717, %v2716
        %v2724 = vpack.c.b16 %v2719, %v2718
        %v2725 = vpack.c.b16 %v2721, %v2720
        %vm2730 = vcmask 523264
        %v2732 = vsel %vm2730, %v2690, 0
        %2734 = vmatprep.subr.bf16.mxu0 0
        %2735 = vmatpush1.bf16.msra.mxu0 0
        %2736 = vmatprep.subr.bf16.mxu0 0
        %2737 = vmatpush1.bf16.msra.mxu0 0
        %2738 = vmatprep.subr.bf16.mxu0 0
        %2739 = vmatpush1.bf16.msra.mxu0 0
        %2740 = vmatprep.subr.bf16.mxu0 0
        %2741 = vmatpush1.bf16.msra.mxu0 0
        %2742 = vmatprep.subr.bf16.mxu0 0
        %2743 = vmatpush1.bf16.msra.mxu0 %v2725
        %2744 = vmatprep.subr.bf16.mxu0 0
        %2745 = vmatpush1.bf16.msra.mxu0 %v2724
        %2746 = vmatprep.subr.bf16.mxu0 0
        %2747 = vmatpush1.bf16.msra.mxu0 %v2723
        %2748 = vmatprep.subr.bf16.mxu0 0
        %2749 = vmatpush1.bf16.msra.mxu0 %v2722
        %2750 = vmatprep.subr.bf16.mxu0 0
        %2751 = vmatpush2.bf16.msra.mxu0 0
        %2752 = vmatprep.subr.bf16.mxu0 0
        %2753 = vmatpush2.bf16.msra.mxu0 0
        %2754 = vmatprep.subr.bf16.mxu0 0
        %2755 = vmatpush2.bf16.msra.mxu0 0
        %2756 = vmatprep.subr.bf16.mxu0 0
        %2757 = vmatpush2.bf16.msra.mxu0 0
        %2758 = vmatprep.subr.bf16.mxu0 0
        %2759 = vmatpush2.bf16.msra.mxu0 0
        %2760 = vmatprep.subr.bf16.mxu0 0
        %2761 = vmatpush2.bf16.msra.mxu0 0
        %2762 = vmatprep.subr.bf16.mxu0 0
        %2763 = vmatpush2.bf16.msra.mxu0 0
        %2764 = vmatprep.subr.bf16.mxu0 0
        %2765 = vmatpush2.bf16.msra.mxu0 0
        %2766 = vmatprep.mubr.bf16.mxu0 0
        %2767 = vmatmul.mubr.bf16.gmra.mxu0 %v2732
        %v2768 = vpop.f32.mrf.mxu0
        %v2769 = vadd.f32 %v2704, %v2768
        %v2770 = vpop.f32.mrf.mxu0
        %v2771 = vpop.f32.mrf.mxu0
        %v2772 = vadd.f32 %v2704, %v2771
        %v2773 = vpop.f32.mrf.mxu0
        %2774 = vdwg.mxu0
        %v2777 = vrot.slane %v2769, 1
        %v2778 = vrot.slane %v2769, 2
        %v2779 = vrot.slane %v2769, 3
        %v2780 = vrot.slane %v2769, 4
        %v2781 = vrot.slane %v2769, 5
        %v2782 = vrot.slane %v2769, 6
        %v2783 = vrot.slane %v2769, 7
        %v2793 = vadd.f32 %v2570, %v2769
        %v2794 = vadd.f32 %v2571, %v2777
        %v2795 = vadd.f32 %v2572, %v2778
        %v2796 = vadd.f32 %v2573, %v2779
        %v2797 = vadd.f32 %v2574, %v2780
        %v2798 = vadd.f32 %v2575, %v2781
        %v2799 = vadd.f32 %v2576, %v2782
        %v2800 = vadd.f32 %v2577, %v2783
        %v2801 = vadd.f32 %v2578, %v2772
        %v2802 = vld [vmem:[%s29] sm:$0x1]
        %v2803 = vld [vmem:[%s31] sm:$0x1]
        %v2813 = vrot.slane %v2794, 7
        %v2814 = vsel %vm1432, %v2813, %v2793
        %v2815 = vrot.slane %v2795, 6
        %v2816 = vsel %vm1435, %v2815, %v2814
        %v2817 = vrot.slane %v2796, 5
        %v2818 = vsel %vm1438, %v2817, %v2816
        %v2819 = vrot.slane %v2797, 4
        %v2820 = vsel %vm1441, %v2819, %v2818
        %v2821 = vrot.slane %v2798, 3
        %v2822 = vsel %vm1444, %v2821, %v2820
        %v2823 = vrot.slane %v2799, 2
        %v2824 = vsel %vm1447, %v2823, %v2822
        %v2825 = vrot.slane %v2800, 1
        %v2826 = vsel %vm1450, %v2825, %v2824
        %v2829 = vsel %vm1253, %v2826, 0.0
        %2830 = vadd.xlane.f32.xlu0 %v2829
        %v2831 = vpop.xlane.xlu0 %2830
        %v2832 = vsel %vm2442, %v2801, 0.0
        %2833 = vadd.xlane.f32.xlu0 %v2832
        %v2834 = vpop.xlane.xlu0 %2833
        %v2835 = vmul.f32 %v2831, %v2446
        %v2836 = vmul.f32 %v2834, %v2446
        %v2839 = vrot.slane %v2835, 1
        %v2840 = vrot.slane %v2835, 2
        %v2841 = vrot.slane %v2835, 3
        %v2842 = vrot.slane %v2835, 4
        %v2843 = vrot.slane %v2835, 5
        %v2844 = vrot.slane %v2835, 6
        %v2845 = vrot.slane %v2835, 7
        %v2855 = vsub.f32 %v2793, %v2835
        %v2856 = vsub.f32 %v2794, %v2839
        %v2857 = vsub.f32 %v2795, %v2840
        %v2858 = vsub.f32 %v2796, %v2841
        %v2859 = vsub.f32 %v2797, %v2842
        %v2860 = vsub.f32 %v2798, %v2843
        %v2861 = vsub.f32 %v2799, %v2844
        %v2862 = vsub.f32 %v2800, %v2845
        %v2863 = vsub.f32 %v2801, %v2836
        %v2864 = vmul.f32 %v2855, %v2855
        %v2865 = vmul.f32 %v2856, %v2856
        %v2866 = vmul.f32 %v2857, %v2857
        %v2867 = vmul.f32 %v2858, %v2858
        %v2868 = vmul.f32 %v2859, %v2859
        %v2869 = vmul.f32 %v2860, %v2860
        %v2870 = vmul.f32 %v2861, %v2861
        %v2871 = vmul.f32 %v2862, %v2862
        %v2872 = vmul.f32 %v2863, %v2863
        %v2882 = vrot.slane %v2865, 7
        %v2883 = vsel %vm1432, %v2882, %v2864
        %v2884 = vrot.slane %v2866, 6
        %v2885 = vsel %vm1435, %v2884, %v2883
        %v2886 = vrot.slane %v2867, 5
        %v2887 = vsel %vm1438, %v2886, %v2885
        %v2888 = vrot.slane %v2868, 4
        %v2889 = vsel %vm1441, %v2888, %v2887
        %v2890 = vrot.slane %v2869, 3
        %v2891 = vsel %vm1444, %v2890, %v2889
        %v2892 = vrot.slane %v2870, 2
        %v2893 = vsel %vm1447, %v2892, %v2891
        %v2894 = vrot.slane %v2871, 1
        %v2895 = vsel %vm1450, %v2894, %v2893
        %v2898 = vsel %vm1253, %v2895, 0.0
        %2899 = vadd.xlane.f32.xlu0 %v2898
        %v2900 = vpop.xlane.xlu0 %2899
        %v2901 = vsel %vm2442, %v2872, 0.0
        %2902 = vadd.xlane.f32.xlu0 %v2901
        %v2903 = vpop.xlane.xlu0 %2902
        %v2904 = vmul.f32 %v2900, %v2446
        %v2905 = vmul.f32 %v2903, %v2446
        %v2906 = vadd.f32 %v2904, 1e-05
        %v2907 = vadd.f32 %v2905, 1e-05
        %v2908 = vrsqrt.pop %v2906
        %v2909 = vrsqrt.pop %v2907
        %v2912 = vrot.slane %v2908, 1
        %v2913 = vrot.slane %v2908, 2
        %v2914 = vrot.slane %v2908, 3
        %v2915 = vrot.slane %v2908, 4
        %v2916 = vrot.slane %v2908, 5
        %v2917 = vrot.slane %v2908, 6
        %v2918 = vrot.slane %v2908, 7
        %v2928 = vmul.f32 %v2855, %v2908
        %v2929 = vmul.f32 %v2856, %v2912
        %v2930 = vmul.f32 %v2857, %v2913
        %v2931 = vmul.f32 %v2858, %v2914
        %v2932 = vmul.f32 %v2859, %v2915
        %v2933 = vmul.f32 %v2860, %v2916
        %v2934 = vmul.f32 %v2861, %v2917
        %v2935 = vmul.f32 %v2862, %v2918
        %v2936 = vmul.f32 %v2863, %v2909
        %v2938 = vlaneseq
        %v2939 = vshrl.u32 %v2938, 7
        %v2940 = vsub.s32 0, %v2939
        %v2941 = vrot.slane %v2802, %v2940
        %v2943 = vmul.f32 %v2928, %v2941
        %v2944 = vmul.f32 %v2929, %v2941
        %v2945 = vmul.f32 %v2930, %v2941
        %v2946 = vmul.f32 %v2931, %v2941
        %v2947 = vmul.f32 %v2932, %v2941
        %v2948 = vmul.f32 %v2933, %v2941
        %v2949 = vmul.f32 %v2934, %v2941
        %v2950 = vmul.f32 %v2935, %v2941
        %v2951 = vmul.f32 %v2936, %v2941
        %v2953 = vlaneseq
        %v2954 = vshrl.u32 %v2953, 7
        %v2955 = vsub.s32 0, %v2954
        %v2956 = vrot.slane %v2803, %v2955
        %v2958 = vadd.f32 %v2943, %v2956
        %v2959 = vadd.f32 %v2944, %v2956
        %v2960 = vadd.f32 %v2945, %v2956
        %v2961 = vadd.f32 %v2946, %v2956
        %v2962 = vadd.f32 %v2947, %v2956
        %v2963 = vadd.f32 %v2948, %v2956
        %v2964 = vadd.f32 %v2949, %v2956
        %v2965 = vadd.f32 %v2950, %v2956
        %v2966 = vadd.f32 %v2951, %v2956
        %v2967 = vpack.c.bf16 %v2958, %v2958
        %v2968 = vpack.c.bf16 %v2959, %v2959
        %v2969 = vpack.c.bf16 %v2960, %v2960
        %v2970 = vpack.c.bf16 %v2961, %v2961
        %v2971 = vpack.c.bf16 %v2962, %v2962
        %v2972 = vpack.c.bf16 %v2963, %v2963
        %v2973 = vpack.c.bf16 %v2964, %v2964
        %v2974 = vpack.c.bf16 %v2965, %v2965
        %v2975 = vpack.c.bf16 %v2966, %v2966
        %v2976 = vld [vmem:[%s33] sm:$0xf]
        %v2977 = vld [vmem:[%s33 + $0x4] sm:$0xf]
        %v2978 = vld [vmem:[%s33 + $0x8] sm:$0xf]
        %v2979 = vld [vmem:[%s33 + $0xc] sm:$0xf]
        %v2980 = vld [vmem:[%s35] sm:$0x1]
        %v2982 = vlaneseq
        %v2983 = vshrl.u32 %v2982, 7
        %v2984 = vsub.s32 0, %v2983
        %v2985 = vrot.slane %v2980, %v2984
        %v2996 = vunpack.c.l.b16 %v2967
        %v2997 = vunpack.c.l.b16 %v2968
        %v2998 = vunpack.c.l.b16 %v2969
        %v2999 = vunpack.c.l.b16 %v2970
        %v3000 = vunpack.c.l.b16 %v2971
        %v3001 = vunpack.c.l.b16 %v2972
        %v3002 = vunpack.c.l.b16 %v2973
        %v3003 = vunpack.c.l.b16 %v2974
        %v3004 = vunpack.c.l.b16 %v2975
        %v3005 = vrot.slane %v2997, 7
        %v3006 = vsel %vm1432, %v3005, %v2996
        %v3007 = vrot.slane %v2998, 6
        %v3008 = vsel %vm1435, %v3007, %v3006
        %v3009 = vrot.slane %v2999, 5
        %v3010 = vsel %vm1438, %v3009, %v3008
        %v3011 = vrot.slane %v3000, 4
        %v3012 = vsel %vm1441, %v3011, %v3010
        %v3013 = vrot.slane %v3001, 3
        %v3014 = vsel %vm1444, %v3013, %v3012
        %v3015 = vrot.slane %v3002, 2
        %v3016 = vsel %vm1447, %v3015, %v3014
        %v3017 = vrot.slane %v3003, 1
        %v3018 = vsel %vm1450, %v3017, %v3016
        %v3019 = vpack.c.b16 %v3004, %v3018
        %v3024 = vunpack.c.l.b16 %v2976
        %v3025 = vunpack.c.l.b16 %v2977
        %v3026 = vunpack.c.l.b16 %v2978
        %v3027 = vunpack.c.l.b16 %v2979
        %v3028 = vpack.c.b16 %v3025, %v3024
        %v3029 = vpack.c.b16 %v3027, %v3026
        %v3033 = vsel %vm1253, %v3019, 0
        %3035 = vmatprep.subr.bf16.mxu0 0
        %3036 = vmatpush1.bf16.msra.mxu0 0
        %3037 = vmatprep.subr.bf16.mxu0 0
        %3038 = vmatpush1.bf16.msra.mxu0 0
        %3039 = vmatprep.subr.bf16.mxu0 0
        %3040 = vmatpush1.bf16.msra.mxu0 0
        %3041 = vmatprep.subr.bf16.mxu0 0
        %3042 = vmatpush1.bf16.msra.mxu0 0
        %3043 = vmatprep.subr.bf16.mxu0 0
        %3044 = vmatpush1.bf16.msra.mxu0 0
        %3045 = vmatprep.subr.bf16.mxu0 0
        %3046 = vmatpush1.bf16.msra.mxu0 0
        %3047 = vmatprep.subr.bf16.mxu0 0
        %3048 = vmatpush1.bf16.msra.mxu0 %v3029
        %3049 = vmatprep.subr.bf16.mxu0 0
        %3050 = vmatpush1.bf16.msra.mxu0 %v3028
        %3051 = vmatprep.subr.bf16.mxu0 0
        %3052 = vmatpush2.bf16.msra.mxu0 0
        %3053 = vmatprep.subr.bf16.mxu0 0
        %3054 = vmatpush2.bf16.msra.mxu0 0
        %3055 = vmatprep.subr.bf16.mxu0 0
        %3056 = vmatpush2.bf16.msra.mxu0 0
        %3057 = vmatprep.subr.bf16.mxu0 0
        %3058 = vmatpush2.bf16.msra.mxu0 0
        %3059 = vmatprep.subr.bf16.mxu0 0
        %3060 = vmatpush2.bf16.msra.mxu0 0
        %3061 = vmatprep.subr.bf16.mxu0 0
        %3062 = vmatpush2.bf16.msra.mxu0 0
        %3063 = vmatprep.subr.bf16.mxu0 0
        %3064 = vmatpush2.bf16.msra.mxu0 0
        %3065 = vmatprep.subr.bf16.mxu0 0
        %3066 = vmatpush2.bf16.msra.mxu0 0
        %3067 = vmatprep.mubr.bf16.mxu0 0
        %3068 = vmatmul.mubr.bf16.gmra.mxu0 %v3033
        %v3069 = vpop.f32.mrf.mxu0
        %v3070 = vadd.f32 %v2985, %v3069
        %v3071 = vpop.f32.mrf.mxu0
        %v3072 = vpop.f32.mrf.mxu0
        %v3073 = vadd.f32 %v2985, %v3072
        %v3074 = vpop.f32.mrf.mxu0
        %3075 = vdwg.mxu0
        %v3076 = vld [vmem:[%s37] sm:$0xf]
        %v3077 = vld [vmem:[%s37 + $0x4] sm:$0xf]
        %v3078 = vld [vmem:[%s37 + $0x8] sm:$0xf]
        %v3079 = vld [vmem:[%s37 + $0xc] sm:$0xf]
        %3082 = vrot.lane.b32.xlu0 %v3070, 96
        %v3083 = vpop.permute.xlu0 %3082
        %3084 = vrot.lane.b32.xlu0 %v3073, 96
        %v3085 = vpop.permute.xlu0 %3084
        %v3086 = vsel %vm1519, %v3070, 0
        %v3088 = vsel %vm1519, %v3073, 0
        %v3090 = vsel %vm1519, %v3083, 0
        %v3092 = vsel %vm1519, %v3085, 0
        %3094 = vmatprep.subr.mxu0 0.0
        %3095 = vmatpush1.xpose.msra.mxu0 0.0
        %3096 = vmatprep.subr.mxu0 0.0
        %3097 = vmatpush1.xpose.msra.mxu0 0.0
        %3098 = vmatprep.subr.mxu0 0.0
        %3099 = vmatpush1.xpose.msra.mxu0 0.0
        %3100 = vmatprep.subr.mxu0 0.0
        %3101 = vmatpush1.xpose.msra.mxu0 0.0
        %3102 = vmatprep.subr.mxu0 0.0
        %3103 = vmatpush1.xpose.msra.mxu0 0.0
        %3104 = vmatprep.subr.mxu0 0.0
        %3105 = vmatpush1.xpose.msra.mxu0 0.0
        %3106 = vmatprep.subr.mxu0 0.0
        %3107 = vmatpush1.xpose.msra.mxu0 0.0
        %3108 = vmatprep.subr.mxu0 0.0
        %3109 = vmatpush1.xpose.msra.mxu0 0.0
        %3110 = vmatprep.subr.mxu0 0.0
        %3111 = vmatpush1.xpose.msra.mxu0 0.0
        %3112 = vmatprep.subr.mxu0 0.0
        %3113 = vmatpush1.xpose.msra.mxu0 0.0
        %3114 = vmatprep.subr.mxu0 0.0
        %3115 = vmatpush1.xpose.msra.mxu0 0.0
        %3116 = vmatprep.subr.mxu0 0.0
        %3117 = vmatpush1.xpose.msra.mxu0 0.0
        %3118 = vmatprep.subr.mxu0 0.0
        %3119 = vmatpush1.xpose.msra.mxu0 0.0
        %3120 = vmatprep.subr.mxu0 0.0
        %3121 = vmatpush1.xpose.msra.mxu0 0.0
        %3122 = vmatprep.subr.mxu0 0.0
        %3123 = vmatpush1.xpose.msra.mxu0 %v3092
        %3124 = vmatprep.subr.mxu0 0.0
        %3125 = vmatpush1.xpose.msra.mxu0 %v3090
        %3126 = vmatprep.subr.mxu0 0.0
        %3127 = vmatpush2.xpose.msra.mxu0 0.0
        %3128 = vmatprep.subr.mxu0 0.0
        %3129 = vmatpush2.xpose.msra.mxu0 0.0
        %3130 = vmatprep.subr.mxu0 0.0
        %3131 = vmatpush2.xpose.msra.mxu0 0.0
        %3132 = vmatprep.subr.mxu0 0.0
        %3133 = vmatpush2.xpose.msra.mxu0 0.0
        %3134 = vmatprep.subr.mxu0 0.0
        %3135 = vmatpush2.xpose.msra.mxu0 0.0
        %3136 = vmatprep.subr.mxu0 0.0
        %3137 = vmatpush2.xpose.msra.mxu0 0.0
        %3138 = vmatprep.subr.mxu0 0.0
        %3139 = vmatpush2.xpose.msra.mxu0 0.0
        %3140 = vmatprep.subr.mxu0 0.0
        %3141 = vmatpush2.xpose.msra.mxu0 0.0
        %3142 = vmatprep.subr.mxu0 0.0
        %3143 = vmatpush2.xpose.msra.mxu0 0.0
        %3144 = vmatprep.subr.mxu0 0.0
        %3145 = vmatpush2.xpose.msra.mxu0 0.0
        %3146 = vmatprep.subr.mxu0 0.0
        %3147 = vmatpush2.xpose.msra.mxu0 0.0
        %3148 = vmatprep.subr.mxu0 0.0
        %3149 = vmatpush2.xpose.msra.mxu0 0.0
        %3150 = vmatprep.subr.mxu0 0.0
        %3151 = vmatpush2.xpose.msra.mxu0 0.0
        %3152 = vmatprep.subr.mxu0 0.0
        %3153 = vmatpush2.xpose.msra.mxu0 0.0
        %3154 = vmatprep.subr.mxu0 0.0
        %3155 = vmatpush2.xpose.msra.mxu0 0.0
        %3156 = vmatprep.subr.mxu0 0.0
        %3157 = vmatpush2.xpose.msra.mxu0 0.0
        %3158 = vmatprep.mubr.f32.mxu0 0.0
        %3159 = vmatmul.mubr.f32.gmra.mxu0 %v3086
        %v3160 = vpop.f32.mrf.mxu0
        %v3161 = vadd.f32 0.0, %v3160
        %v3162 = vpop.f32.mrf.mxu0
        %3163 = vmatprep.mubr.f32.mxu0 0.0
        %3164 = vmatmul.mubr.f32.gmra.mxu0 %v3088
        %v3165 = vpop.f32.mrf.mxu0
        %v3166 = vadd.f32 0.0, %v3165
        %v3167 = vpop.f32.mrf.mxu0
        %3168 = vdwg.mxu0
        %v3169 = vmul.f32 %v3161, 0.35355338
        %v3170 = vmul.f32 %v3166, 0.35355338
        %v3171 = vsel %vm1605, %v3169, -inf
        %3172 = vmax.xlane.f32.xlu0 %v3171
        %v3173 = vpop.xlane.xlu0 %3172
        %v3174 = vsel %vm1609, %v3170, -inf
        %3175 = vmax.xlane.f32.xlu0 %v3174
        %v3176 = vpop.xlane.xlu0 %3175
        %v3177 = vsub.f32 %v3169, %v3173
        %v3178 = vsub.f32 %v3170, %v3176
        %v3179 = vmul.f32 %v3177, 1.442695
        %v3180 = vpow.pop %v3179
        %v3181 = vmul.f32 %v3178, 1.442695
        %v3182 = vpow.pop %v3181
        %v3183 = vsel %vm1605, %v3180, 0.0
        %3184 = vadd.xlane.f32.xlu0 %v3183
        %v3185 = vpop.xlane.xlu0 %3184
        %v3186 = vsel %vm1609, %v3182, 0.0
        %3187 = vadd.xlane.f32.xlu0 %v3186
        %v3188 = vpop.xlane.xlu0 %3187
        %v3189 = vrcp.pop %v3185
        %v3190 = vmul.f32 %v3180, %v3189
        %v3191 = vrcp.pop %v3188
        %v3192 = vmul.f32 %v3182, %v3191
        %v3193 = vpack.c.bf16 %v3192, %v3190
        %v3194 = vpack.c.bf16 %v3073, %v3070
        %3196 = vrot.lane.b32.xlu0 %v3194, 64
        %v3197 = vpop.permute.xlu0 %3196
        %v3199 = vsel %vm1605, %v3193, 0
        %v3202 = vand.u32 %v3197, %v1640
        %3204 = vmatprep.subr.bf16.mxu0 0
        %3205 = vmatpush1.bf16.msra.mxu0 0
        %3206 = vmatprep.subr.bf16.mxu0 0
        %3207 = vmatpush1.bf16.msra.mxu0 0
        %3208 = vmatprep.subr.bf16.mxu0 0
        %3209 = vmatpush1.bf16.msra.mxu0 0
        %3210 = vmatprep.subr.bf16.mxu0 0
        %3211 = vmatpush1.bf16.msra.mxu0 0
        %3212 = vmatprep.subr.bf16.mxu0 0
        %3213 = vmatpush1.bf16.msra.mxu0 0
        %3214 = vmatprep.subr.bf16.mxu0 0
        %3215 = vmatpush1.bf16.msra.mxu0 0
        %3216 = vmatprep.subr.bf16.mxu0 0
        %3217 = vmatpush1.bf16.msra.mxu0 0
        %3218 = vmatprep.subr.bf16.mxu0 0
        %3219 = vmatpush1.bf16.msra.mxu0 %v3202
        %3220 = vmatprep.subr.bf16.mxu0 0
        %3221 = vmatpush2.bf16.msra.mxu0 0
        %3222 = vmatprep.subr.bf16.mxu0 0
        %3223 = vmatpush2.bf16.msra.mxu0 0
        %3224 = vmatprep.subr.bf16.mxu0 0
        %3225 = vmatpush2.bf16.msra.mxu0 0
        %3226 = vmatprep.subr.bf16.mxu0 0
        %3227 = vmatpush2.bf16.msra.mxu0 0
        %3228 = vmatprep.subr.bf16.mxu0 0
        %3229 = vmatpush2.bf16.msra.mxu0 0
        %3230 = vmatprep.subr.bf16.mxu0 0
        %3231 = vmatpush2.bf16.msra.mxu0 0
        %3232 = vmatprep.subr.bf16.mxu0 0
        %3233 = vmatpush2.bf16.msra.mxu0 0
        %3234 = vmatprep.subr.bf16.mxu0 0
        %3235 = vmatpush2.bf16.msra.mxu0 0
        %3236 = vmatprep.mubr.bf16.mxu0 0
        %3237 = vmatmul.mubr.bf16.gmra.mxu0 %v3199
        %v3238 = vpop.f32.mrf.mxu0
        %v3239 = vadd.f32 0.0, %v3238
        %v3240 = vpop.f32.mrf.mxu0
        %v3241 = vpop.f32.mrf.mxu0
        %v3242 = vadd.f32 0.0, %v3241
        %v3243 = vpop.f32.mrf.mxu0
        %3244 = vdwg.mxu0
        %v3245 = vpack.c.bf16 %v3242, %v3239
        %3246 = vrot.lane.b32.xlu0 %v3070, 120
        %v3247 = vpop.permute.xlu0 %3246
        %3248 = vrot.lane.b32.xlu0 %v3073, 120
        %v3249 = vpop.permute.xlu0 %3248
        %3250 = vrot.lane.b32.xlu0 %v3070, 88
        %v3251 = vpop.permute.xlu0 %3250
        %3252 = vrot.lane.b32.xlu0 %v3073, 88
        %v3253 = vpop.permute.xlu0 %3252
        %v3254 = vsel %vm1519, %v3247, 0
        %v3256 = vsel %vm1519, %v3249, 0
        %v3258 = vsel %vm1519, %v3251, 0
        %v3260 = vsel %vm1519, %v3253, 0
        %3262 = vmatprep.subr.mxu0 0.0
        %3263 = vmatpush1.xpose.msra.mxu0 0.0
        %3264 = vmatprep.subr.mxu0 0.0
        %3265 = vmatpush1.xpose.msra.mxu0 0.0
        %3266 = vmatprep.subr.mxu0 0.0
        %3267 = vmatpush1.xpose.msra.mxu0 0.0
        %3268 = vmatprep.subr.mxu0 0.0
        %3269 = vmatpush1.xpose.msra.mxu0 0.0
        %3270 = vmatprep.subr.mxu0 0.0
        %3271 = vmatpush1.xpose.msra.mxu0 0.0
        %3272 = vmatprep.subr.mxu0 0.0
        %3273 = vmatpush1.xpose.msra.mxu0 0.0
        %3274 = vmatprep.subr.mxu0 0.0
        %3275 = vmatpush1.xpose.msra.mxu0 0.0
        %3276 = vmatprep.subr.mxu0 0.0
        %3277 = vmatpush1.xpose.msra.mxu0 0.0
        %3278 = vmatprep.subr.mxu0 0.0
        %3279 = vmatpush1.xpose.msra.mxu0 0.0
        %3280 = vmatprep.subr.mxu0 0.0
        %3281 = vmatpush1.xpose.msra.mxu0 0.0
        %3282 = vmatprep.subr.mxu0 0.0
        %3283 = vmatpush1.xpose.msra.mxu0 0.0
        %3284 = vmatprep.subr.mxu0 0.0
        %3285 = vmatpush1.xpose.msra.mxu0 0.0
        %3286 = vmatprep.subr.mxu0 0.0
        %3287 = vmatpush1.xpose.msra.mxu0 0.0
        %3288 = vmatprep.subr.mxu0 0.0
        %3289 = vmatpush1.xpose.msra.mxu0 0.0
        %3290 = vmatprep.subr.mxu0 0.0
        %3291 = vmatpush1.xpose.msra.mxu0 %v3260
        %3292 = vmatprep.subr.mxu0 0.0
        %3293 = vmatpush1.xpose.msra.mxu0 %v3258
        %3294 = vmatprep.subr.mxu0 0.0
        %3295 = vmatpush2.xpose.msra.mxu0 0.0
        %3296 = vmatprep.subr.mxu0 0.0
        %3297 = vmatpush2.xpose.msra.mxu0 0.0
        %3298 = vmatprep.subr.mxu0 0.0
        %3299 = vmatpush2.xpose.msra.mxu0 0.0
        %3300 = vmatprep.subr.mxu0 0.0
        %3301 = vmatpush2.xpose.msra.mxu0 0.0
        %3302 = vmatprep.subr.mxu0 0.0
        %3303 = vmatpush2.xpose.msra.mxu0 0.0
        %3304 = vmatprep.subr.mxu0 0.0
        %3305 = vmatpush2.xpose.msra.mxu0 0.0
        %3306 = vmatprep.subr.mxu0 0.0
        %3307 = vmatpush2.xpose.msra.mxu0 0.0
        %3308 = vmatprep.subr.mxu0 0.0
        %3309 = vmatpush2.xpose.msra.mxu0 0.0
        %3310 = vmatprep.subr.mxu0 0.0
        %3311 = vmatpush2.xpose.msra.mxu0 0.0
        %3312 = vmatprep.subr.mxu0 0.0
        %3313 = vmatpush2.xpose.msra.mxu0 0.0
        %3314 = vmatprep.subr.mxu0 0.0
        %3315 = vmatpush2.xpose.msra.mxu0 0.0
        %3316 = vmatprep.subr.mxu0 0.0
        %3317 = vmatpush2.xpose.msra.mxu0 0.0
        %3318 = vmatprep.subr.mxu0 0.0
        %3319 = vmatpush2.xpose.msra.mxu0 0.0
        %3320 = vmatprep.subr.mxu0 0.0
        %3321 = vmatpush2.xpose.msra.mxu0 0.0
        %3322 = vmatprep.subr.mxu0 0.0
        %3323 = vmatpush2.xpose.msra.mxu0 0.0
        %3324 = vmatprep.subr.mxu0 0.0
        %3325 = vmatpush2.xpose.msra.mxu0 0.0
        %3326 = vmatprep.mubr.f32.mxu0 0.0
        %3327 = vmatmul.mubr.f32.gmra.mxu0 %v3254
        %v3328 = vpop.f32.mrf.mxu0
        %v3329 = vadd.f32 0.0, %v3328
        %v3330 = vpop.f32.mrf.mxu0
        %3331 = vmatprep.mubr.f32.mxu0 0.0
        %3332 = vmatmul.mubr.f32.gmra.mxu0 %v3256
        %v3333 = vpop.f32.mrf.mxu0
        %v3334 = vadd.f32 0.0, %v3333
        %v3335 = vpop.f32.mrf.mxu0
        %3336 = vdwg.mxu0
        %v3337 = vmul.f32 %v3329, 0.35355338
        %v3338 = vmul.f32 %v3334, 0.35355338
        %v3339 = vsel %vm1605, %v3337, -inf
        %3340 = vmax.xlane.f32.xlu0 %v3339
        %v3341 = vpop.xlane.xlu0 %3340
        %v3342 = vsel %vm1609, %v3338, -inf
        %3343 = vmax.xlane.f32.xlu0 %v3342
        %v3344 = vpop.xlane.xlu0 %3343
        %v3345 = vsub.f32 %v3337, %v3341
        %v3346 = vsub.f32 %v3338, %v3344
        %v3347 = vmul.f32 %v3345, 1.442695
        %v3348 = vpow.pop %v3347
        %v3349 = vmul.f32 %v3346, 1.442695
        %v3350 = vpow.pop %v3349
        %v3351 = vsel %vm1605, %v3348, 0.0
        %3352 = vadd.xlane.f32.xlu0 %v3351
        %v3353 = vpop.xlane.xlu0 %3352
        %v3354 = vsel %vm1609, %v3350, 0.0
        %3355 = vadd.xlane.f32.xlu0 %v3354
        %v3356 = vpop.xlane.xlu0 %3355
        %v3357 = vrcp.pop %v3353
        %v3358 = vmul.f32 %v3348, %v3357
        %v3359 = vrcp.pop %v3356
        %v3360 = vmul.f32 %v3350, %v3359
        %v3361 = vpack.c.bf16 %v3360, %v3358
        %3362 = vrot.lane.b32.xlu0 %v3194, 56
        %v3363 = vpop.permute.xlu0 %3362
        %v3365 = vsel %vm1605, %v3361, 0
        %v3368 = vand.u32 %v3363, %v1640
        %3370 = vmatprep.subr.bf16.mxu0 0
        %3371 = vmatpush1.bf16.msra.mxu0 0
        %3372 = vmatprep.subr.bf16.mxu0 0
        %3373 = vmatpush1.bf16.msra.mxu0 0
        %3374 = vmatprep.subr.bf16.mxu0 0
        %3375 = vmatpush1.bf16.msra.mxu0 0
        %3376 = vmatprep.subr.bf16.mxu0 0
        %3377 = vmatpush1.bf16.msra.mxu0 0
        %3378 = vmatprep.subr.bf16.mxu0 0
        %3379 = vmatpush1.bf16.msra.mxu0 0
        %3380 = vmatprep.subr.bf16.mxu0 0
        %3381 = vmatpush1.bf16.msra.mxu0 0
        %3382 = vmatprep.subr.bf16.mxu0 0
        %3383 = vmatpush1.bf16.msra.mxu0 0
        %3384 = vmatprep.subr.bf16.mxu0 0
        %3385 = vmatpush1.bf16.msra.mxu0 %v3368
        %3386 = vmatprep.subr.bf16.mxu0 0
        %3387 = vmatpush2.bf16.msra.mxu0 0
        %3388 = vmatprep.subr.bf16.mxu0 0
        %3389 = vmatpush2.bf16.msra.mxu0 0
        %3390 = vmatprep.subr.bf16.mxu0 0
        %3391 = vmatpush2.bf16.msra.mxu0 0
        %3392 = vmatprep.subr.bf16.mxu0 0
        %3393 = vmatpush2.bf16.msra.mxu0 0
        %3394 = vmatprep.subr.bf16.mxu0 0
        %3395 = vmatpush2.bf16.msra.mxu0 0
        %3396 = vmatprep.subr.bf16.mxu0 0
        %3397 = vmatpush2.bf16.msra.mxu0 0
        %3398 = vmatprep.subr.bf16.mxu0 0
        %3399 = vmatpush2.bf16.msra.mxu0 0
        %3400 = vmatprep.subr.bf16.mxu0 0
        %3401 = vmatpush2.bf16.msra.mxu0 0
        %3402 = vmatprep.mubr.bf16.mxu0 0
        %3403 = vmatmul.mubr.bf16.gmra.mxu0 %v3365
        %v3404 = vpop.f32.mrf.mxu0
        %v3405 = vadd.f32 0.0, %v3404
        %v3406 = vpop.f32.mrf.mxu0
        %v3407 = vpop.f32.mrf.mxu0
        %v3408 = vadd.f32 0.0, %v3407
        %v3409 = vpop.f32.mrf.mxu0
        %3410 = vdwg.mxu0
        %v3411 = vpack.c.bf16 %v3408, %v3405
        %v3413 = vsel %vm1519, %v3411, 0
        %v3416 = vsel %vm1637, %v3077, 0
        %3418 = vmatprep.subr.bf16.mxu0 0
        %3419 = vmatpush1.bf16.msra.mxu0 0
        %3420 = vmatprep.subr.bf16.mxu0 0
        %3421 = vmatpush1.bf16.msra.mxu0 0
        %3422 = vmatprep.subr.bf16.mxu0 0
        %3423 = vmatpush1.bf16.msra.mxu0 0
        %3424 = vmatprep.subr.bf16.mxu0 0
        %3425 = vmatpush1.bf16.msra.mxu0 0
        %3426 = vmatprep.subr.bf16.mxu0 0
        %3427 = vmatpush1.bf16.msra.mxu0 0
        %3428 = vmatprep.subr.bf16.mxu0 0
        %3429 = vmatpush1.bf16.msra.mxu0 0
        %3430 = vmatprep.subr.bf16.mxu0 0
        %3431 = vmatpush1.bf16.msra.mxu0 0
        %3432 = vmatprep.subr.bf16.mxu0 0
        %3433 = vmatpush1.bf16.msra.mxu0 %v3416
        %3434 = vmatprep.subr.bf16.mxu0 0
        %3435 = vmatpush2.bf16.msra.mxu0 0
        %3436 = vmatprep.subr.bf16.mxu0 0
        %3437 = vmatpush2.bf16.msra.mxu0 0
        %3438 = vmatprep.subr.bf16.mxu0 0
        %3439 = vmatpush2.bf16.msra.mxu0 0
        %3440 = vmatprep.subr.bf16.mxu0 0
        %3441 = vmatpush2.bf16.msra.mxu0 0
        %3442 = vmatprep.subr.bf16.mxu0 0
        %3443 = vmatpush2.bf16.msra.mxu0 0
        %3444 = vmatprep.subr.bf16.mxu0 0
        %3445 = vmatpush2.bf16.msra.mxu0 0
        %3446 = vmatprep.subr.bf16.mxu0 0
        %3447 = vmatpush2.bf16.msra.mxu0 0
        %3448 = vmatprep.subr.bf16.mxu0 0
        %3449 = vmatpush2.bf16.msra.mxu0 0
        %3450 = vmatprep.mubr.bf16.mxu0 0
        %3451 = vmatmul.mubr.bf16.gmra.mxu0 %v3413
        %v3452 = vpop.f32.mrf.mxu0
        %v3453 = vadd.f32 0.0, %v3452
        %v3454 = vpop.f32.mrf.mxu0
        %v3455 = vpop.f32.mrf.mxu0
        %v3456 = vadd.f32 0.0, %v3455
        %v3457 = vpop.f32.mrf.mxu0
        %3458 = vdwg.mxu0
        %v3460 = vsel %vm1519, %v3245, 0
        %v3463 = vsel %vm1637, %v3076, 0
        %3465 = vmatprep.subr.bf16.mxu0 0
        %3466 = vmatpush1.bf16.msra.mxu0 0
        %3467 = vmatprep.subr.bf16.mxu0 0
        %3468 = vmatpush1.bf16.msra.mxu0 0
        %3469 = vmatprep.subr.bf16.mxu0 0
        %3470 = vmatpush1.bf16.msra.mxu0 0
        %3471 = vmatprep.subr.bf16.mxu0 0
        %3472 = vmatpush1.bf16.msra.mxu0 0
        %3473 = vmatprep.subr.bf16.mxu0 0
        %3474 = vmatpush1.bf16.msra.mxu0 0
        %3475 = vmatprep.subr.bf16.mxu0 0
        %3476 = vmatpush1.bf16.msra.mxu0 0
        %3477 = vmatprep.subr.bf16.mxu0 0
        %3478 = vmatpush1.bf16.msra.mxu0 0
        %3479 = vmatprep.subr.bf16.mxu0 0
        %3480 = vmatpush1.bf16.msra.mxu0 %v3463
        %3481 = vmatprep.subr.bf16.mxu0 0
        %3482 = vmatpush2.bf16.msra.mxu0 0
        %3483 = vmatprep.subr.bf16.mxu0 0
        %3484 = vmatpush2.bf16.msra.mxu0 0
        %3485 = vmatprep.subr.bf16.mxu0 0
        %3486 = vmatpush2.bf16.msra.mxu0 0
        %3487 = vmatprep.subr.bf16.mxu0 0
        %3488 = vmatpush2.bf16.msra.mxu0 0
        %3489 = vmatprep.subr.bf16.mxu0 0
        %3490 = vmatpush2.bf16.msra.mxu0 0
        %3491 = vmatprep.subr.bf16.mxu0 0
        %3492 = vmatpush2.bf16.msra.mxu0 0
        %3493 = vmatprep.subr.bf16.mxu0 0
        %3494 = vmatpush2.bf16.msra.mxu0 0
        %3495 = vmatprep.subr.bf16.mxu0 0
        %3496 = vmatpush2.bf16.msra.mxu0 0
        %3497 = vmatprep.mubr.bf16.mxu0 0
        %3498 = vmatmul.mubr.bf16.gmra.mxu0 %v3460
        %v3499 = vpop.f32.mrf.mxu0
        %v3500 = vadd.f32 %v3453, %v3499
        %v3501 = vpop.f32.mrf.mxu0
        %v3502 = vpop.f32.mrf.mxu0
        %v3503 = vadd.f32 %v3456, %v3502
        %v3504 = vpop.f32.mrf.mxu0
        %3505 = vdwg.mxu0
        %3506 = vrot.lane.b32.xlu0 %v3070, 112
        %v3507 = vpop.permute.xlu0 %3506
        %3508 = vrot.lane.b32.xlu0 %v3073, 112
        %v3509 = vpop.permute.xlu0 %3508
        %3510 = vrot.lane.b32.xlu0 %v3070, 80
        %v3511 = vpop.permute.xlu0 %3510
        %3512 = vrot.lane.b32.xlu0 %v3073, 80
        %v3513 = vpop.permute.xlu0 %3512
        %v3514 = vsel %vm1519, %v3507, 0
        %v3516 = vsel %vm1519, %v3509, 0
        %v3518 = vsel %vm1519, %v3511, 0
        %v3520 = vsel %vm1519, %v3513, 0
        %3522 = vmatprep.subr.mxu0 0.0
        %3523 = vmatpush1.xpose.msra.mxu0 0.0
        %3524 = vmatprep.subr.mxu0 0.0
        %3525 = vmatpush1.xpose.msra.mxu0 0.0
        %3526 = vmatprep.subr.mxu0 0.0
        %3527 = vmatpush1.xpose.msra.mxu0 0.0
        %3528 = vmatprep.subr.mxu0 0.0
        %3529 = vmatpush1.xpose.msra.mxu0 0.0
        %3530 = vmatprep.subr.mxu0 0.0
        %3531 = vmatpush1.xpose.msra.mxu0 0.0
        %3532 = vmatprep.subr.mxu0 0.0
        %3533 = vmatpush1.xpose.msra.mxu0 0.0
        %3534 = vmatprep.subr.mxu0 0.0
        %3535 = vmatpush1.xpose.msra.mxu0 0.0
        %3536 = vmatprep.subr.mxu0 0.0
        %3537 = vmatpush1.xpose.msra.mxu0 0.0
        %3538 = vmatprep.subr.mxu0 0.0
        %3539 = vmatpush1.xpose.msra.mxu0 0.0
        %3540 = vmatprep.subr.mxu0 0.0
        %3541 = vmatpush1.xpose.msra.mxu0 0.0
        %3542 = vmatprep.subr.mxu0 0.0
        %3543 = vmatpush1.xpose.msra.mxu0 0.0
        %3544 = vmatprep.subr.mxu0 0.0
        %3545 = vmatpush1.xpose.msra.mxu0 0.0
        %3546 = vmatprep.subr.mxu0 0.0
        %3547 = vmatpush1.xpose.msra.mxu0 0.0
        %3548 = vmatprep.subr.mxu0 0.0
        %3549 = vmatpush1.xpose.msra.mxu0 0.0
        %3550 = vmatprep.subr.mxu0 0.0
        %3551 = vmatpush1.xpose.msra.mxu0 %v3520
        %3552 = vmatprep.subr.mxu0 0.0
        %3553 = vmatpush1.xpose.msra.mxu0 %v3518
        %3554 = vmatprep.subr.mxu0 0.0
        %3555 = vmatpush2.xpose.msra.mxu0 0.0
        %3556 = vmatprep.subr.mxu0 0.0
        %3557 = vmatpush2.xpose.msra.mxu0 0.0
        %3558 = vmatprep.subr.mxu0 0.0
        %3559 = vmatpush2.xpose.msra.mxu0 0.0
        %3560 = vmatprep.subr.mxu0 0.0
        %3561 = vmatpush2.xpose.msra.mxu0 0.0
        %3562 = vmatprep.subr.mxu0 0.0
        %3563 = vmatpush2.xpose.msra.mxu0 0.0
        %3564 = vmatprep.subr.mxu0 0.0
        %3565 = vmatpush2.xpose.msra.mxu0 0.0
        %3566 = vmatprep.subr.mxu0 0.0
        %3567 = vmatpush2.xpose.msra.mxu0 0.0
        %3568 = vmatprep.subr.mxu0 0.0
        %3569 = vmatpush2.xpose.msra.mxu0 0.0
        %3570 = vmatprep.subr.mxu0 0.0
        %3571 = vmatpush2.xpose.msra.mxu0 0.0
        %3572 = vmatprep.subr.mxu0 0.0
        %3573 = vmatpush2.xpose.msra.mxu0 0.0
        %3574 = vmatprep.subr.mxu0 0.0
        %3575 = vmatpush2.xpose.msra.mxu0 0.0
        %3576 = vmatprep.subr.mxu0 0.0
        %3577 = vmatpush2.xpose.msra.mxu0 0.0
        %3578 = vmatprep.subr.mxu0 0.0
        %3579 = vmatpush2.xpose.msra.mxu0 0.0
        %3580 = vmatprep.subr.mxu0 0.0
        %3581 = vmatpush2.xpose.msra.mxu0 0.0
        %3582 = vmatprep.subr.mxu0 0.0
        %3583 = vmatpush2.xpose.msra.mxu0 0.0
        %3584 = vmatprep.subr.mxu0 0.0
        %3585 = vmatpush2.xpose.msra.mxu0 0.0
        %3586 = vmatprep.mubr.f32.mxu0 0.0
        %3587 = vmatmul.mubr.f32.gmra.mxu0 %v3514
        %v3588 = vpop.f32.mrf.mxu0
        %v3589 = vadd.f32 0.0, %v3588
        %v3590 = vpop.f32.mrf.mxu0
        %3591 = vmatprep.mubr.f32.mxu0 0.0
        %3592 = vmatmul.mubr.f32.gmra.mxu0 %v3516
        %v3593 = vpop.f32.mrf.mxu0
        %v3594 = vadd.f32 0.0, %v3593
        %v3595 = vpop.f32.mrf.mxu0
        %3596 = vdwg.mxu0
        %v3597 = vmul.f32 %v3589, 0.35355338
        %v3598 = vmul.f32 %v3594, 0.35355338
        %v3599 = vsel %vm1605, %v3597, -inf
        %3600 = vmax.xlane.f32.xlu0 %v3599
        %v3601 = vpop.xlane.xlu0 %3600
        %v3602 = vsel %vm1609, %v3598, -inf
        %3603 = vmax.xlane.f32.xlu0 %v3602
        %v3604 = vpop.xlane.xlu0 %3603
        %v3605 = vsub.f32 %v3597, %v3601
        %v3606 = vsub.f32 %v3598, %v3604
        %v3607 = vmul.f32 %v3605, 1.442695
        %v3608 = vpow.pop %v3607
        %v3609 = vmul.f32 %v3606, 1.442695
        %v3610 = vpow.pop %v3609
        %v3611 = vsel %vm1605, %v3608, 0.0
        %3612 = vadd.xlane.f32.xlu0 %v3611
        %v3613 = vpop.xlane.xlu0 %3612
        %v3614 = vsel %vm1609, %v3610, 0.0
        %3615 = vadd.xlane.f32.xlu0 %v3614
        %v3616 = vpop.xlane.xlu0 %3615
        %v3617 = vrcp.pop %v3613
        %v3618 = vmul.f32 %v3608, %v3617
        %v3619 = vrcp.pop %v3616
        %v3620 = vmul.f32 %v3610, %v3619
        %v3621 = vpack.c.bf16 %v3620, %v3618
        %3622 = vrot.lane.b32.xlu0 %v3194, 48
        %v3623 = vpop.permute.xlu0 %3622
        %v3625 = vsel %vm1605, %v3621, 0
        %v3628 = vand.u32 %v3623, %v1640
        %3630 = vmatprep.subr.bf16.mxu0 0
        %3631 = vmatpush1.bf16.msra.mxu0 0
        %3632 = vmatprep.subr.bf16.mxu0 0
        %3633 = vmatpush1.bf16.msra.mxu0 0
        %3634 = vmatprep.subr.bf16.mxu0 0
        %3635 = vmatpush1.bf16.msra.mxu0 0
        %3636 = vmatprep.subr.bf16.mxu0 0
        %3637 = vmatpush1.bf16.msra.mxu0 0
        %3638 = vmatprep.subr.bf16.mxu0 0
        %3639 = vmatpush1.bf16.msra.mxu0 0
        %3640 = vmatprep.subr.bf16.mxu0 0
        %3641 = vmatpush1.bf16.msra.mxu0 0
        %3642 = vmatprep.subr.bf16.mxu0 0
        %3643 = vmatpush1.bf16.msra.mxu0 0
        %3644 = vmatprep.subr.bf16.mxu0 0
        %3645 = vmatpush1.bf16.msra.mxu0 %v3628
        %3646 = vmatprep.subr.bf16.mxu0 0
        %3647 = vmatpush2.bf16.msra.mxu0 0
        %3648 = vmatprep.subr.bf16.mxu0 0
        %3649 = vmatpush2.bf16.msra.mxu0 0
        %3650 = vmatprep.subr.bf16.mxu0 0
        %3651 = vmatpush2.bf16.msra.mxu0 0
        %3652 = vmatprep.subr.bf16.mxu0 0
        %3653 = vmatpush2.bf16.msra.mxu0 0
        %3654 = vmatprep.subr.bf16.mxu0 0
        %3655 = vmatpush2.bf16.msra.mxu0 0
        %3656 = vmatprep.subr.bf16.mxu0 0
        %3657 = vmatpush2.bf16.msra.mxu0 0
        %3658 = vmatprep.subr.bf16.mxu0 0
        %3659 = vmatpush2.bf16.msra.mxu0 0
        %3660 = vmatprep.subr.bf16.mxu0 0
        %3661 = vmatpush2.bf16.msra.mxu0 0
        %3662 = vmatprep.mubr.bf16.mxu0 0
        %3663 = vmatmul.mubr.bf16.gmra.mxu0 %v3625
        %v3664 = vpop.f32.mrf.mxu0
        %v3665 = vadd.f32 0.0, %v3664
        %v3666 = vpop.f32.mrf.mxu0
        %v3667 = vpop.f32.mrf.mxu0
        %v3668 = vadd.f32 0.0, %v3667
        %v3669 = vpop.f32.mrf.mxu0
        %3670 = vdwg.mxu0
        %v3671 = vpack.c.bf16 %v3668, %v3665
        %v3673 = vsel %vm1519, %v3671, 0
        %v3676 = vsel %vm1637, %v3078, 0
        %3678 = vmatprep.subr.bf16.mxu0 0
        %3679 = vmatpush1.bf16.msra.mxu0 0
        %3680 = vmatprep.subr.bf16.mxu0 0
        %3681 = vmatpush1.bf16.msra.mxu0 0
        %3682 = vmatprep.subr.bf16.mxu0 0
        %3683 = vmatpush1.bf16.msra.mxu0 0
        %3684 = vmatprep.subr.bf16.mxu0 0
        %3685 = vmatpush1.bf16.msra.mxu0 0
        %3686 = vmatprep.subr.bf16.mxu0 0
        %3687 = vmatpush1.bf16.msra.mxu0 0
        %3688 = vmatprep.subr.bf16.mxu0 0
        %3689 = vmatpush1.bf16.msra.mxu0 0
        %3690 = vmatprep.subr.bf16.mxu0 0
        %3691 = vmatpush1.bf16.msra.mxu0 0
        %3692 = vmatprep.subr.bf16.mxu0 0
        %3693 = vmatpush1.bf16.msra.mxu0 %v3676
        %3694 = vmatprep.subr.bf16.mxu0 0
        %3695 = vmatpush2.bf16.msra.mxu0 0
        %3696 = vmatprep.subr.bf16.mxu0 0
        %3697 = vmatpush2.bf16.msra.mxu0 0
        %3698 = vmatprep.subr.bf16.mxu0 0
        %3699 = vmatpush2.bf16.msra.mxu0 0
        %3700 = vmatprep.subr.bf16.mxu0 0
        %3701 = vmatpush2.bf16.msra.mxu0 0
        %3702 = vmatprep.subr.bf16.mxu0 0
        %3703 = vmatpush2.bf16.msra.mxu0 0
        %3704 = vmatprep.subr.bf16.mxu0 0
        %3705 = vmatpush2.bf16.msra.mxu0 0
        %3706 = vmatprep.subr.bf16.mxu0 0
        %3707 = vmatpush2.bf16.msra.mxu0 0
        %3708 = vmatprep.subr.bf16.mxu0 0
        %3709 = vmatpush2.bf16.msra.mxu0 0
        %3710 = vmatprep.mubr.bf16.mxu0 0
        %3711 = vmatmul.mubr.bf16.gmra.mxu0 %v3673
        %v3712 = vpop.f32.mrf.mxu0
        %v3713 = vadd.f32 0.0, %v3712
        %v3714 = vpop.f32.mrf.mxu0
        %v3715 = vpop.f32.mrf.mxu0
        %v3716 = vadd.f32 0.0, %v3715
        %v3717 = vpop.f32.mrf.mxu0
        %3718 = vdwg.mxu0
        %v3719 = vadd.f32 %v3500, %v3713
        %v3720 = vadd.f32 %v3503, %v3716
        %3721 = vrot.lane.b32.xlu0 %v3070, 104
        %v3722 = vpop.permute.xlu0 %3721
        %3723 = vrot.lane.b32.xlu0 %v3073, 104
        %v3724 = vpop.permute.xlu0 %3723
        %3725 = vrot.lane.b32.xlu0 %v3070, 72
        %v3726 = vpop.permute.xlu0 %3725
        %3727 = vrot.lane.b32.xlu0 %v3073, 72
        %v3728 = vpop.permute.xlu0 %3727
        %v3729 = vsel %vm1519, %v3722, 0
        %v3731 = vsel %vm1519, %v3724, 0
        %v3733 = vsel %vm1519, %v3726, 0
        %v3735 = vsel %vm1519, %v3728, 0
        %3737 = vmatprep.subr.mxu0 0.0
        %3738 = vmatpush1.xpose.msra.mxu0 0.0
        %3739 = vmatprep.subr.mxu0 0.0
        %3740 = vmatpush1.xpose.msra.mxu0 0.0
        %3741 = vmatprep.subr.mxu0 0.0
        %3742 = vmatpush1.xpose.msra.mxu0 0.0
        %3743 = vmatprep.subr.mxu0 0.0
        %3744 = vmatpush1.xpose.msra.mxu0 0.0
        %3745 = vmatprep.subr.mxu0 0.0
        %3746 = vmatpush1.xpose.msra.mxu0 0.0
        %3747 = vmatprep.subr.mxu0 0.0
        %3748 = vmatpush1.xpose.msra.mxu0 0.0
        %3749 = vmatprep.subr.mxu0 0.0
        %3750 = vmatpush1.xpose.msra.mxu0 0.0
        %3751 = vmatprep.subr.mxu0 0.0
        %3752 = vmatpush1.xpose.msra.mxu0 0.0
        %3753 = vmatprep.subr.mxu0 0.0
        %3754 = vmatpush1.xpose.msra.mxu0 0.0
        %3755 = vmatprep.subr.mxu0 0.0
        %3756 = vmatpush1.xpose.msra.mxu0 0.0
        %3757 = vmatprep.subr.mxu0 0.0
        %3758 = vmatpush1.xpose.msra.mxu0 0.0
        %3759 = vmatprep.subr.mxu0 0.0
        %3760 = vmatpush1.xpose.msra.mxu0 0.0
        %3761 = vmatprep.subr.mxu0 0.0
        %3762 = vmatpush1.xpose.msra.mxu0 0.0
        %3763 = vmatprep.subr.mxu0 0.0
        %3764 = vmatpush1.xpose.msra.mxu0 0.0
        %3765 = vmatprep.subr.mxu0 0.0
        %3766 = vmatpush1.xpose.msra.mxu0 %v3735
        %3767 = vmatprep.subr.mxu0 0.0
        %3768 = vmatpush1.xpose.msra.mxu0 %v3733
        %3769 = vmatprep.subr.mxu0 0.0
        %3770 = vmatpush2.xpose.msra.mxu0 0.0
        %3771 = vmatprep.subr.mxu0 0.0
        %3772 = vmatpush2.xpose.msra.mxu0 0.0
        %3773 = vmatprep.subr.mxu0 0.0
        %3774 = vmatpush2.xpose.msra.mxu0 0.0
        %3775 = vmatprep.subr.mxu0 0.0
        %3776 = vmatpush2.xpose.msra.mxu0 0.0
        %3777 = vmatprep.subr.mxu0 0.0
        %3778 = vmatpush2.xpose.msra.mxu0 0.0
        %3779 = vmatprep.subr.mxu0 0.0
        %3780 = vmatpush2.xpose.msra.mxu0 0.0
        %3781 = vmatprep.subr.mxu0 0.0
        %3782 = vmatpush2.xpose.msra.mxu0 0.0
        %3783 = vmatprep.subr.mxu0 0.0
        %3784 = vmatpush2.xpose.msra.mxu0 0.0
        %3785 = vmatprep.subr.mxu0 0.0
        %3786 = vmatpush2.xpose.msra.mxu0 0.0
        %3787 = vmatprep.subr.mxu0 0.0
        %3788 = vmatpush2.xpose.msra.mxu0 0.0
        %3789 = vmatprep.subr.mxu0 0.0
        %3790 = vmatpush2.xpose.msra.mxu0 0.0
        %3791 = vmatprep.subr.mxu0 0.0
        %3792 = vmatpush2.xpose.msra.mxu0 0.0
        %3793 = vmatprep.subr.mxu0 0.0
        %3794 = vmatpush2.xpose.msra.mxu0 0.0
        %3795 = vmatprep.subr.mxu0 0.0
        %3796 = vmatpush2.xpose.msra.mxu0 0.0
        %3797 = vmatprep.subr.mxu0 0.0
        %3798 = vmatpush2.xpose.msra.mxu0 0.0
        %3799 = vmatprep.subr.mxu0 0.0
        %3800 = vmatpush2.xpose.msra.mxu0 0.0
        %3801 = vmatprep.mubr.f32.mxu0 0.0
        %3802 = vmatmul.mubr.f32.gmra.mxu0 %v3729
        %v3803 = vpop.f32.mrf.mxu0
        %v3804 = vadd.f32 0.0, %v3803
        %v3805 = vpop.f32.mrf.mxu0
        %3806 = vmatprep.mubr.f32.mxu0 0.0
        %3807 = vmatmul.mubr.f32.gmra.mxu0 %v3731
        %v3808 = vpop.f32.mrf.mxu0
        %v3809 = vadd.f32 0.0, %v3808
        %v3810 = vpop.f32.mrf.mxu0
        %3811 = vdwg.mxu0
        %v3812 = vmul.f32 %v3804, 0.35355338
        %v3813 = vmul.f32 %v3809, 0.35355338
        %v3814 = vsel %vm1605, %v3812, -inf
        %3815 = vmax.xlane.f32.xlu0 %v3814
        %v3816 = vpop.xlane.xlu0 %3815
        %v3817 = vsel %vm1609, %v3813, -inf
        %3818 = vmax.xlane.f32.xlu0 %v3817
        %v3819 = vpop.xlane.xlu0 %3818
        %v3820 = vsub.f32 %v3812, %v3816
        %v3821 = vsub.f32 %v3813, %v3819
        %v3822 = vmul.f32 %v3820, 1.442695
        %v3823 = vpow.pop %v3822
        %v3824 = vmul.f32 %v3821, 1.442695
        %v3825 = vpow.pop %v3824
        %v3826 = vsel %vm1605, %v3823, 0.0
        %3827 = vadd.xlane.f32.xlu0 %v3826
        %v3828 = vpop.xlane.xlu0 %3827
        %v3829 = vsel %vm1609, %v3825, 0.0
        %3830 = vadd.xlane.f32.xlu0 %v3829
        %v3831 = vpop.xlane.xlu0 %3830
        %v3832 = vrcp.pop %v3828
        %v3833 = vmul.f32 %v3823, %v3832
        %v3834 = vrcp.pop %v3831
        %v3835 = vmul.f32 %v3825, %v3834
        %v3836 = vpack.c.bf16 %v3835, %v3833
        %3837 = vrot.lane.b32.xlu0 %v3194, 40
        %v3838 = vpop.permute.xlu0 %3837
        %v3840 = vsel %vm1605, %v3836, 0
        %v3843 = vand.u32 %v3838, %v1640
        %3845 = vmatprep.subr.bf16.mxu0 0
        %3846 = vmatpush1.bf16.msra.mxu0 0
        %3847 = vmatprep.subr.bf16.mxu0 0
        %3848 = vmatpush1.bf16.msra.mxu0 0
        %3849 = vmatprep.subr.bf16.mxu0 0
        %3850 = vmatpush1.bf16.msra.mxu0 0
        %3851 = vmatprep.subr.bf16.mxu0 0
        %3852 = vmatpush1.bf16.msra.mxu0 0
        %3853 = vmatprep.subr.bf16.mxu0 0
        %3854 = vmatpush1.bf16.msra.mxu0 0
        %3855 = vmatprep.subr.bf16.mxu0 0
        %3856 = vmatpush1.bf16.msra.mxu0 0
        %3857 = vmatprep.subr.bf16.mxu0 0
        %3858 = vmatpush1.bf16.msra.mxu0 0
        %3859 = vmatprep.subr.bf16.mxu0 0
        %3860 = vmatpush1.bf16.msra.mxu0 %v3843
        %3861 = vmatprep.subr.bf16.mxu0 0
        %3862 = vmatpush2.bf16.msra.mxu0 0
        %3863 = vmatprep.subr.bf16.mxu0 0
        %3864 = vmatpush2.bf16.msra.mxu0 0
        %3865 = vmatprep.subr.bf16.mxu0 0
        %3866 = vmatpush2.bf16.msra.mxu0 0
        %3867 = vmatprep.subr.bf16.mxu0 0
        %3868 = vmatpush2.bf16.msra.mxu0 0
        %3869 = vmatprep.subr.bf16.mxu0 0
        %3870 = vmatpush2.bf16.msra.mxu0 0
        %3871 = vmatprep.subr.bf16.mxu0 0
        %3872 = vmatpush2.bf16.msra.mxu0 0
        %3873 = vmatprep.subr.bf16.mxu0 0
        %3874 = vmatpush2.bf16.msra.mxu0 0
        %3875 = vmatprep.subr.bf16.mxu0 0
        %3876 = vmatpush2.bf16.msra.mxu0 0
        %3877 = vmatprep.mubr.bf16.mxu0 0
        %3878 = vmatmul.mubr.bf16.gmra.mxu0 %v3840
        %v3879 = vpop.f32.mrf.mxu0
        %v3880 = vadd.f32 0.0, %v3879
        %v3881 = vpop.f32.mrf.mxu0
        %v3882 = vpop.f32.mrf.mxu0
        %v3883 = vadd.f32 0.0, %v3882
        %v3884 = vpop.f32.mrf.mxu0
        %3885 = vdwg.mxu0
        %v3886 = vpack.c.bf16 %v3883, %v3880
        %v3888 = vsel %vm1519, %v3886, 0
        %v3891 = vsel %vm1637, %v3079, 0
        %3893 = vmatprep.subr.bf16.mxu0 0
        %3894 = vmatpush1.bf16.msra.mxu0 0
        %3895 = vmatprep.subr.bf16.mxu0 0
        %3896 = vmatpush1.bf16.msra.mxu0 0
        %3897 = vmatprep.subr.bf16.mxu0 0
        %3898 = vmatpush1.bf16.msra.mxu0 0
        %3899 = vmatprep.subr.bf16.mxu0 0
        %3900 = vmatpush1.bf16.msra.mxu0 0
        %3901 = vmatprep.subr.bf16.mxu0 0
        %3902 = vmatpush1.bf16.msra.mxu0 0
        %3903 = vmatprep.subr.bf16.mxu0 0
        %3904 = vmatpush1.bf16.msra.mxu0 0
        %3905 = vmatprep.subr.bf16.mxu0 0
        %3906 = vmatpush1.bf16.msra.mxu0 0
        %3907 = vmatprep.subr.bf16.mxu0 0
        %3908 = vmatpush1.bf16.msra.mxu0 %v3891
        %3909 = vmatprep.subr.bf16.mxu0 0
        %3910 = vmatpush2.bf16.msra.mxu0 0
        %3911 = vmatprep.subr.bf16.mxu0 0
        %3912 = vmatpush2.bf16.msra.mxu0 0
        %3913 = vmatprep.subr.bf16.mxu0 0
        %3914 = vmatpush2.bf16.msra.mxu0 0
        %3915 = vmatprep.subr.bf16.mxu0 0
        %3916 = vmatpush2.bf16.msra.mxu0 0
        %3917 = vmatprep.subr.bf16.mxu0 0
        %3918 = vmatpush2.bf16.msra.mxu0 0
        %3919 = vmatprep.subr.bf16.mxu0 0
        %3920 = vmatpush2.bf16.msra.mxu0 0
        %3921 = vmatprep.subr.bf16.mxu0 0
        %3922 = vmatpush2.bf16.msra.mxu0 0
        %3923 = vmatprep.subr.bf16.mxu0 0
        %3924 = vmatpush2.bf16.msra.mxu0 0
        %3925 = vmatprep.mubr.bf16.mxu0 0
        %3926 = vmatmul.mubr.bf16.gmra.mxu0 %v3888
        %v3927 = vpop.f32.mrf.mxu0
        %v3928 = vadd.f32 0.0, %v3927
        %v3929 = vpop.f32.mrf.mxu0
        %v3930 = vpop.f32.mrf.mxu0
        %v3931 = vadd.f32 0.0, %v3930
        %v3932 = vpop.f32.mrf.mxu0
        %3933 = vdwg.mxu0
        %v3934 = vadd.f32 %v3719, %v3928
        %v3935 = vadd.f32 %v3720, %v3931
        %v3936 = vld [vmem:[#allocation2] sm:$0x1]
        %v3938 = vlaneseq
        %v3939 = vshrl.u32 %v3938, 7
        %v3940 = vsub.s32 0, %v3939
        %v3941 = vrot.slane %v3936, %v3940
        %v3943 = vadd.f32 %v3934, %v3941
        %v3944 = vadd.f32 %v3935, %v3941
        %v3947 = vrot.slane %v3943, 1
        %v3948 = vrot.slane %v3943, 2
        %v3949 = vrot.slane %v3943, 3
        %v3950 = vrot.slane %v3943, 4
        %v3951 = vrot.slane %v3943, 5
        %v3952 = vrot.slane %v3943, 6
        %v3953 = vrot.slane %v3943, 7
        %v3963 = vadd.f32 %v2958, %v3943
        %v3964 = vadd.f32 %v2959, %v3947
        %v3965 = vadd.f32 %v2960, %v3948
        %v3966 = vadd.f32 %v2961, %v3949
        %v3967 = vadd.f32 %v2962, %v3950
        %v3968 = vadd.f32 %v2963, %v3951
        %v3969 = vadd.f32 %v2964, %v3952
        %v3970 = vadd.f32 %v2965, %v3953
        %v3971 = vadd.f32 %v2966, %v3944
        %v3972 = vld [vmem:[#allocation5] sm:$0x1]
        %v3973 = vld [vmem:[#allocation7] sm:$0x1]
        %v3983 = vrot.slane %v3964, 7
        %v3984 = vsel %vm1432, %v3983, %v3963
        %v3985 = vrot.slane %v3965, 6
        %v3986 = vsel %vm1435, %v3985, %v3984
        %v3987 = vrot.slane %v3966, 5
        %v3988 = vsel %vm1438, %v3987, %v3986
        %v3989 = vrot.slane %v3967, 4
        %v3990 = vsel %vm1441, %v3989, %v3988
        %v3991 = vrot.slane %v3968, 3
        %v3992 = vsel %vm1444, %v3991, %v3990
        %v3993 = vrot.slane %v3969, 2
        %v3994 = vsel %vm1447, %v3993, %v3992
        %v3995 = vrot.slane %v3970, 1
        %v3996 = vsel %vm1450, %v3995, %v3994
        %v3999 = vsel %vm1253, %v3996, 0.0
        %4000 = vadd.xlane.f32.xlu0 %v3999
        %v4001 = vpop.xlane.xlu0 %4000
        %v4002 = vsel %vm2442, %v3971, 0.0
        %4003 = vadd.xlane.f32.xlu0 %v4002
        %v4004 = vpop.xlane.xlu0 %4003
        %v4005 = vmul.f32 %v4001, %v2446
        %v4006 = vmul.f32 %v4004, %v2446
        %v4009 = vrot.slane %v4005, 1
        %v4010 = vrot.slane %v4005, 2
        %v4011 = vrot.slane %v4005, 3
        %v4012 = vrot.slane %v4005, 4
        %v4013 = vrot.slane %v4005, 5
        %v4014 = vrot.slane %v4005, 6
        %v4015 = vrot.slane %v4005, 7
        %v4025 = vsub.f32 %v3963, %v4005
        %v4026 = vsub.f32 %v3964, %v4009
        %v4027 = vsub.f32 %v3965, %v4010
        %v4028 = vsub.f32 %v3966, %v4011
        %v4029 = vsub.f32 %v3967, %v4012
        %v4030 = vsub.f32 %v3968, %v4013
        %v4031 = vsub.f32 %v3969, %v4014
        %v4032 = vsub.f32 %v3970, %v4015
        %v4033 = vsub.f32 %v3971, %v4006
        %v4034 = vmul.f32 %v4025, %v4025
        %v4035 = vmul.f32 %v4026, %v4026
        %v4036 = vmul.f32 %v4027, %v4027
        %v4037 = vmul.f32 %v4028, %v4028
        %v4038 = vmul.f32 %v4029, %v4029
        %v4039 = vmul.f32 %v4030, %v4030
        %v4040 = vmul.f32 %v4031, %v4031
        %v4041 = vmul.f32 %v4032, %v4032
        %v4042 = vmul.f32 %v4033, %v4033
        %v4052 = vrot.slane %v4035, 7
        %v4053 = vsel %vm1432, %v4052, %v4034
        %v4054 = vrot.slane %v4036, 6
        %v4055 = vsel %vm1435, %v4054, %v4053
        %v4056 = vrot.slane %v4037, 5
        %v4057 = vsel %vm1438, %v4056, %v4055
        %v4058 = vrot.slane %v4038, 4
        %v4059 = vsel %vm1441, %v4058, %v4057
        %v4060 = vrot.slane %v4039, 3
        %v4061 = vsel %vm1444, %v4060, %v4059
        %v4062 = vrot.slane %v4040, 2
        %v4063 = vsel %vm1447, %v4062, %v4061
        %v4064 = vrot.slane %v4041, 1
        %v4065 = vsel %vm1450, %v4064, %v4063
        %v4068 = vsel %vm1253, %v4065, 0.0
        %4069 = vadd.xlane.f32.xlu0 %v4068
        %v4070 = vpop.xlane.xlu0 %4069
        %v4071 = vsel %vm2442, %v4042, 0.0
        %4072 = vadd.xlane.f32.xlu0 %v4071
        %v4073 = vpop.xlane.xlu0 %4072
        %v4074 = vmul.f32 %v4070, %v2446
        %v4075 = vmul.f32 %v4073, %v2446
        %v4076 = vadd.f32 %v4074, 1e-05
        %v4077 = vadd.f32 %v4075, 1e-05
        %v4078 = vrsqrt.pop %v4076
        %v4079 = vrsqrt.pop %v4077
        %v4082 = vrot.slane %v4078, 1
        %v4083 = vrot.slane %v4078, 2
        %v4084 = vrot.slane %v4078, 3
        %v4085 = vrot.slane %v4078, 4
        %v4086 = vrot.slane %v4078, 5
        %v4087 = vrot.slane %v4078, 6
        %v4088 = vrot.slane %v4078, 7
        %v4098 = vmul.f32 %v4025, %v4078
        %v4099 = vmul.f32 %v4026, %v4082
        %v4100 = vmul.f32 %v4027, %v4083
        %v4101 = vmul.f32 %v4028, %v4084
        %v4102 = vmul.f32 %v4029, %v4085
        %v4103 = vmul.f32 %v4030, %v4086
        %v4104 = vmul.f32 %v4031, %v4087
        %v4105 = vmul.f32 %v4032, %v4088
        %v4106 = vmul.f32 %v4033, %v4079
        %v4108 = vlaneseq
        %v4109 = vshrl.u32 %v4108, 7
        %v4110 = vsub.s32 0, %v4109
        %v4111 = vrot.slane %v3972, %v4110
        %v4113 = vmul.f32 %v4098, %v4111
        %v4114 = vmul.f32 %v4099, %v4111
        %v4115 = vmul.f32 %v4100, %v4111
        %v4116 = vmul.f32 %v4101, %v4111
        %v4117 = vmul.f32 %v4102, %v4111
        %v4118 = vmul.f32 %v4103, %v4111
        %v4119 = vmul.f32 %v4104, %v4111
        %v4120 = vmul.f32 %v4105, %v4111
        %v4121 = vmul.f32 %v4106, %v4111
        %v4123 = vlaneseq
        %v4124 = vshrl.u32 %v4123, 7
        %v4125 = vsub.s32 0, %v4124
        %v4126 = vrot.slane %v3973, %v4125
        %v4128 = vadd.f32 %v4113, %v4126
        %v4129 = vadd.f32 %v4114, %v4126
        %v4130 = vadd.f32 %v4115, %v4126
        %v4131 = vadd.f32 %v4116, %v4126
        %v4132 = vadd.f32 %v4117, %v4126
        %v4133 = vadd.f32 %v4118, %v4126
        %v4134 = vadd.f32 %v4119, %v4126
        %v4135 = vadd.f32 %v4120, %v4126
        %v4136 = vadd.f32 %v4121, %v4126
        %v4137 = vpack.c.bf16 %v4128, %v4128
        %v4138 = vpack.c.bf16 %v4129, %v4129
        %v4139 = vpack.c.bf16 %v4130, %v4130
        %v4140 = vpack.c.bf16 %v4131, %v4131
        %v4141 = vpack.c.bf16 %v4132, %v4132
        %v4142 = vpack.c.bf16 %v4133, %v4133
        %v4143 = vpack.c.bf16 %v4134, %v4134
        %v4144 = vpack.c.bf16 %v4135, %v4135
        %v4145 = vpack.c.bf16 %v4136, %v4136
        %v4146 = vld [vmem:[%s45] sm:$0xf]
        %v4147 = vld [vmem:[%s45 + $0x4] sm:$0xf]
        %v4148 = vld [vmem:[%s45 + $0x8] sm:$0xf]
        %v4149 = vld [vmem:[%s45 + $0xc] sm:$0xf]
        %v4150 = vld [vmem:[#allocation8] sm:$0x1]
        %v4152 = vlaneseq
        %v4153 = vshrl.u32 %v4152, 7
        %v4154 = vsub.s32 0, %v4153
        %v4155 = vrot.slane %v4150, %v4154
        %v4166 = vunpack.c.l.b16 %v4137
        %v4167 = vunpack.c.l.b16 %v4138
        %v4168 = vunpack.c.l.b16 %v4139
        %v4169 = vunpack.c.l.b16 %v4140
        %v4170 = vunpack.c.l.b16 %v4141
        %v4171 = vunpack.c.l.b16 %v4142
        %v4172 = vunpack.c.l.b16 %v4143
        %v4173 = vunpack.c.l.b16 %v4144
        %v4174 = vunpack.c.l.b16 %v4145
        %v4175 = vrot.slane %v4167, 7
        %v4176 = vsel %vm1432, %v4175, %v4166
        %v4177 = vrot.slane %v4168, 6
        %v4178 = vsel %vm1435, %v4177, %v4176
        %v4179 = vrot.slane %v4169, 5
        %v4180 = vsel %vm1438, %v4179, %v4178
        %v4181 = vrot.slane %v4170, 4
        %v4182 = vsel %vm1441, %v4181, %v4180
        %v4183 = vrot.slane %v4171, 3
        %v4184 = vsel %vm1444, %v4183, %v4182
        %v4185 = vrot.slane %v4172, 2
        %v4186 = vsel %vm1447, %v4185, %v4184
        %v4187 = vrot.slane %v4173, 1
        %v4188 = vsel %vm1450, %v4187, %v4186
        %v4189 = vpack.c.b16 %v4174, %v4188
        %v4194 = vunpack.c.l.b16 %v4146
        %v4195 = vunpack.c.l.b16 %v4147
        %v4196 = vunpack.c.l.b16 %v4148
        %v4197 = vunpack.c.l.b16 %v4149
        %v4198 = vpack.c.b16 %v4195, %v4194
        %v4199 = vpack.c.b16 %v4197, %v4196
        %v4203 = vsel %vm1253, %v4189, 0
        %4205 = vmatprep.subr.bf16.mxu0 0
        %4206 = vmatpush1.bf16.msra.mxu0 0
        %4207 = vmatprep.subr.bf16.mxu0 0
        %4208 = vmatpush1.bf16.msra.mxu0 0
        %4209 = vmatprep.subr.bf16.mxu0 0
        %4210 = vmatpush1.bf16.msra.mxu0 0
        %4211 = vmatprep.subr.bf16.mxu0 0
        %4212 = vmatpush1.bf16.msra.mxu0 0
        %4213 = vmatprep.subr.bf16.mxu0 0
        %4214 = vmatpush1.bf16.msra.mxu0 0
        %4215 = vmatprep.subr.bf16.mxu0 0
        %4216 = vmatpush1.bf16.msra.mxu0 0
        %4217 = vmatprep.subr.bf16.mxu0 0
        %4218 = vmatpush1.bf16.msra.mxu0 %v4199
        %4219 = vmatprep.subr.bf16.mxu0 0
        %4220 = vmatpush1.bf16.msra.mxu0 %v4198
        %4221 = vmatprep.subr.bf16.mxu0 0
        %4222 = vmatpush2.bf16.msra.mxu0 0
        %4223 = vmatprep.subr.bf16.mxu0 0
        %4224 = vmatpush2.bf16.msra.mxu0 0
        %4225 = vmatprep.subr.bf16.mxu0 0
        %4226 = vmatpush2.bf16.msra.mxu0 0
        %4227 = vmatprep.subr.bf16.mxu0 0
        %4228 = vmatpush2.bf16.msra.mxu0 0
        %4229 = vmatprep.subr.bf16.mxu0 0
        %4230 = vmatpush2.bf16.msra.mxu0 0
        %4231 = vmatprep.subr.bf16.mxu0 0
        %4232 = vmatpush2.bf16.msra.mxu0 0
        %4233 = vmatprep.subr.bf16.mxu0 0
        %4234 = vmatpush2.bf16.msra.mxu0 0
        %4235 = vmatprep.subr.bf16.mxu0 0
        %4236 = vmatpush2.bf16.msra.mxu0 0
        %4237 = vmatprep.mubr.bf16.mxu0 0
        %4238 = vmatmul.mubr.bf16.gmra.mxu0 %v4203
        %v4239 = vpop.f32.mrf.mxu0
        %v4240 = vadd.f32 %v4155, %v4239
        %v4241 = vpop.f32.mrf.mxu0
        %v4242 = vpop.f32.mrf.mxu0
        %v4243 = vadd.f32 %v4155, %v4242
        %v4244 = vpop.f32.mrf.mxu0
        %4245 = vdwg.mxu0
        %v4246 = vmax.f32 %v4240, 0.0
        %v4247 = vmax.f32 %v4243, 0.0
        %v4248 = vpack.c.bf16 %v4247, %v4246
        %v4249 = vld [vmem:[%s49] sm:$0xf]
        %v4250 = vld [vmem:[%s49 + $0x4] sm:$0xf]
        %v4251 = vld [vmem:[%s49 + $0x8] sm:$0xf]
        %v4252 = vld [vmem:[%s49 + $0xc] sm:$0xf]
        %v4253 = vld [vmem:[%s49 + $0x10] sm:$0xf]
        %v4254 = vld [vmem:[%s49 + $0x14] sm:$0xf]
        %v4255 = vld [vmem:[%s49 + $0x18] sm:$0xf]
        %v4256 = vld [vmem:[%s49 + $0x1c] sm:$0xf]
        %v4257 = vld [vmem:[#allocation10] sm:$0x1]
        %v4259 = vlaneseq
        %v4260 = vshrl.u32 %v4259, 7
        %v4261 = vsub.s32 0, %v4260
        %v4262 = vrot.slane %v4257, %v4261
        %v4272 = vunpack.c.l.b16 %v4249
        %v4273 = vunpack.c.l.b16 %v4250
        %v4274 = vunpack.c.l.b16 %v4251
        %v4275 = vunpack.c.l.b16 %v4252
        %v4276 = vunpack.c.l.b16 %v4253
        %v4277 = vunpack.c.l.b16 %v4254
        %v4278 = vunpack.c.l.b16 %v4255
        %v4279 = vunpack.c.l.b16 %v4256
        %v4280 = vpack.c.b16 %v4273, %v4272
        %v4281 = vpack.c.b16 %v4275, %v4274
        %v4282 = vpack.c.b16 %v4277, %v4276
        %v4283 = vpack.c.b16 %v4279, %v4278
        %v4289 = vsel %vm2730, %v4248, 0
        %4291 = vmatprep.subr.bf16.mxu0 0
        %4292 = vmatpush1.bf16.msra.mxu0 0
        %4293 = vmatprep.subr.bf16.mxu0 0
        %4294 = vmatpush1.bf16.msra.mxu0 0
        %4295 = vmatprep.subr.bf16.mxu0 0
        %4296 = vmatpush1.bf16.msra.mxu0 0
        %4297 = vmatprep.subr.bf16.mxu0 0
        %4298 = vmatpush1.bf16.msra.mxu0 0
        %4299 = vmatprep.subr.bf16.mxu0 0
        %4300 = vmatpush1.bf16.msra.mxu0 %v4283
        %4301 = vmatprep.subr.bf16.mxu0 0
        %4302 = vmatpush1.bf16.msra.mxu0 %v4282
        %4303 = vmatprep.subr.bf16.mxu0 0
        %4304 = vmatpush1.bf16.msra.mxu0 %v4281
        %4305 = vmatprep.subr.bf16.mxu0 0
        %4306 = vmatpush1.bf16.msra.mxu0 %v4280
        %4307 = vmatprep.subr.bf16.mxu0 0
        %4308 = vmatpush2.bf16.msra.mxu0 0
        %4309 = vmatprep.subr.bf16.mxu0 0
        %4310 = vmatpush2.bf16.msra.mxu0 0
        %4311 = vmatprep.subr.bf16.mxu0 0
        %4312 = vmatpush2.bf16.msra.mxu0 0
        %4313 = vmatprep.subr.bf16.mxu0 0
        %4314 = vmatpush2.bf16.msra.mxu0 0
        %4315 = vmatprep.subr.bf16.mxu0 0
        %4316 = vmatpush2.bf16.msra.mxu0 0
        %4317 = vmatprep.subr.bf16.mxu0 0
        %4318 = vmatpush2.bf16.msra.mxu0 0
        %4319 = vmatprep.subr.bf16.mxu0 0
        %4320 = vmatpush2.bf16.msra.mxu0 0
        %4321 = vmatprep.subr.bf16.mxu0 0
        %4322 = vmatpush2.bf16.msra.mxu0 0
        %4323 = vmatprep.mubr.bf16.mxu0 0
        %4324 = vmatmul.mubr.bf16.gmra.mxu0 %v4289
        %v4325 = vpop.f32.mrf.mxu0
        %v4326 = vadd.f32 %v4262, %v4325
        %v4327 = vpop.f32.mrf.mxu0
        %v4328 = vpop.f32.mrf.mxu0
        %v4329 = vadd.f32 %v4262, %v4328
        %v4330 = vpop.f32.mrf.mxu0
        %4331 = vdwg.mxu0
        %v4334 = vrot.slane %v4326, 1
        %v4335 = vrot.slane %v4326, 2
        %v4336 = vrot.slane %v4326, 3
        %v4337 = vrot.slane %v4326, 4
        %v4338 = vrot.slane %v4326, 5
        %v4339 = vrot.slane %v4326, 6
        %v4340 = vrot.slane %v4326, 7
        %v4350 = vadd.f32 %v4128, %v4326
        %v4351 = vadd.f32 %v4129, %v4334
        %v4352 = vadd.f32 %v4130, %v4335
        %v4353 = vadd.f32 %v4131, %v4336
        %v4354 = vadd.f32 %v4132, %v4337
        %v4355 = vadd.f32 %v4133, %v4338
        %v4356 = vadd.f32 %v4134, %v4339
        %v4357 = vadd.f32 %v4135, %v4340
        %v4358 = vadd.f32 %v4136, %v4329
        %v4359 = vld [vmem:[#allocation11] sm:$0x1]
        %v4360 = vld [vmem:[#allocation13] sm:$0x1]
        %v4370 = vrot.slane %v4351, 7
        %v4371 = vsel %vm1432, %v4370, %v4350
        %v4372 = vrot.slane %v4352, 6
        %v4373 = vsel %vm1435, %v4372, %v4371
        %v4374 = vrot.slane %v4353, 5
        %v4375 = vsel %vm1438, %v4374, %v4373
        %v4376 = vrot.slane %v4354, 4
        %v4377 = vsel %vm1441, %v4376, %v4375
        %v4378 = vrot.slane %v4355, 3
        %v4379 = vsel %vm1444, %v4378, %v4377
        %v4380 = vrot.slane %v4356, 2
        %v4381 = vsel %vm1447, %v4380, %v4379
        %v4382 = vrot.slane %v4357, 1
        %v4383 = vsel %vm1450, %v4382, %v4381
        %v4386 = vsel %vm1253, %v4383, 0.0
        %4387 = vadd.xlane.f32.xlu0 %v4386
        %v4388 = vpop.xlane.xlu0 %4387
        %v4389 = vsel %vm2442, %v4358, 0.0
        %4390 = vadd.xlane.f32.xlu0 %v4389
        %v4391 = vpop.xlane.xlu0 %4390
        %v4392 = vmul.f32 %v4388, %v2446
        %v4393 = vmul.f32 %v4391, %v2446
        %v4396 = vrot.slane %v4392, 1
        %v4397 = vrot.slane %v4392, 2
        %v4398 = vrot.slane %v4392, 3
        %v4399 = vrot.slane %v4392, 4
        %v4400 = vrot.slane %v4392, 5
        %v4401 = vrot.slane %v4392, 6
        %v4402 = vrot.slane %v4392, 7
        %v4412 = vsub.f32 %v4350, %v4392
        %v4413 = vsub.f32 %v4351, %v4396
        %v4414 = vsub.f32 %v4352, %v4397
        %v4415 = vsub.f32 %v4353, %v4398
        %v4416 = vsub.f32 %v4354, %v4399
        %v4417 = vsub.f32 %v4355, %v4400
        %v4418 = vsub.f32 %v4356, %v4401
        %v4419 = vsub.f32 %v4357, %v4402
        %v4420 = vsub.f32 %v4358, %v4393
        %v4421 = vmul.f32 %v4412, %v4412
        %v4422 = vmul.f32 %v4413, %v4413
        %v4423 = vmul.f32 %v4414, %v4414
        %v4424 = vmul.f32 %v4415, %v4415
        %v4425 = vmul.f32 %v4416, %v4416
        %v4426 = vmul.f32 %v4417, %v4417
        %v4427 = vmul.f32 %v4418, %v4418
        %v4428 = vmul.f32 %v4419, %v4419
        %v4429 = vmul.f32 %v4420, %v4420
        %v4439 = vrot.slane %v4422, 7
        %v4440 = vsel %vm1432, %v4439, %v4421
        %v4441 = vrot.slane %v4423, 6
        %v4442 = vsel %vm1435, %v4441, %v4440
        %v4443 = vrot.slane %v4424, 5
        %v4444 = vsel %vm1438, %v4443, %v4442
        %v4445 = vrot.slane %v4425, 4
        %v4446 = vsel %vm1441, %v4445, %v4444
        %v4447 = vrot.slane %v4426, 3
        %v4448 = vsel %vm1444, %v4447, %v4446
        %v4449 = vrot.slane %v4427, 2
        %v4450 = vsel %vm1447, %v4449, %v4448
        %v4451 = vrot.slane %v4428, 1
        %v4452 = vsel %vm1450, %v4451, %v4450
        %v4455 = vsel %vm1253, %v4452, 0.0
        %4456 = vadd.xlane.f32.xlu0 %v4455
        %v4457 = vpop.xlane.xlu0 %4456
        %v4458 = vsel %vm2442, %v4429, 0.0
        %4459 = vadd.xlane.f32.xlu0 %v4458
        %v4460 = vpop.xlane.xlu0 %4459
        %v4461 = vmul.f32 %v4457, %v2446
        %v4462 = vmul.f32 %v4460, %v2446
        %v4463 = vadd.f32 %v4461, 1e-05
        %v4464 = vadd.f32 %v4462, 1e-05
        %v4465 = vrsqrt.pop %v4463
        %v4466 = vrsqrt.pop %v4464
        %v4469 = vrot.slane %v4465, 1
        %v4470 = vrot.slane %v4465, 2
        %v4471 = vrot.slane %v4465, 3
        %v4472 = vrot.slane %v4465, 4
        %v4473 = vrot.slane %v4465, 5
        %v4474 = vrot.slane %v4465, 6
        %v4475 = vrot.slane %v4465, 7
        %v4485 = vmul.f32 %v4412, %v4465
        %v4486 = vmul.f32 %v4413, %v4469
        %v4487 = vmul.f32 %v4414, %v4470
        %v4488 = vmul.f32 %v4415, %v4471
        %v4489 = vmul.f32 %v4416, %v4472
        %v4490 = vmul.f32 %v4417, %v4473
        %v4491 = vmul.f32 %v4418, %v4474
        %v4492 = vmul.f32 %v4419, %v4475
        %v4493 = vmul.f32 %v4420, %v4466
        %v4495 = vlaneseq
        %v4496 = vshrl.u32 %v4495, 7
        %v4497 = vsub.s32 0, %v4496
        %v4498 = vrot.slane %v4359, %v4497
        %v4500 = vmul.f32 %v4485, %v4498
        %v4501 = vmul.f32 %v4486, %v4498
        %v4502 = vmul.f32 %v4487, %v4498
        %v4503 = vmul.f32 %v4488, %v4498
        %v4504 = vmul.f32 %v4489, %v4498
        %v4505 = vmul.f32 %v4490, %v4498
        %v4506 = vmul.f32 %v4491, %v4498
        %v4507 = vmul.f32 %v4492, %v4498
        %v4508 = vmul.f32 %v4493, %v4498
        %v4510 = vlaneseq
        %v4511 = vshrl.u32 %v4510, 7
        %v4512 = vsub.s32 0, %v4511
        %v4513 = vrot.slane %v4360, %v4512
        %v4515 = vadd.f32 %v4500, %v4513
        %v4516 = vadd.f32 %v4501, %v4513
        %v4517 = vadd.f32 %v4502, %v4513
        %v4518 = vadd.f32 %v4503, %v4513
        %v4519 = vadd.f32 %v4504, %v4513
        %v4520 = vadd.f32 %v4505, %v4513
        %v4521 = vadd.f32 %v4506, %v4513
        %v4522 = vadd.f32 %v4507, %v4513
        %v4523 = vadd.f32 %v4508, %v4513
        %v4524 = vld [vmem:[%s57] sm:$0xff]
        %v4525 = vld [vmem:[%s57 + $0x8] sm:$0xff]
        %v4526 = vld [vmem:[%s57 + $0x10] sm:$0xff]
        %v4527 = vld [vmem:[%s57 + $0x18] sm:$0xff]
        %v4528 = vld [vmem:[#allocation14] sm:$0x1]
        %v4530 = vlaneseq
        %v4531 = vshrl.u32 %v4530, 7
        %v4532 = vsub.s32 0, %v4531
        %v4533 = vrot.slane %v4528, %v4532
        %v4544 = vrot.slane %v4516, 7
        %v4545 = vsel %vm1432, %v4544, %v4515
        %v4546 = vrot.slane %v4517, 6
        %v4547 = vsel %vm1435, %v4546, %v4545
        %v4548 = vrot.slane %v4518, 5
        %v4549 = vsel %vm1438, %v4548, %v4547
        %v4550 = vrot.slane %v4519, 4
        %v4551 = vsel %vm1441, %v4550, %v4549
        %v4552 = vrot.slane %v4520, 3
        %v4553 = vsel %vm1444, %v4552, %v4551
        %v4554 = vrot.slane %v4521, 2
        %v4555 = vsel %vm1447, %v4554, %v4553
        %v4556 = vrot.slane %v4522, 1
        %v4557 = vsel %vm1450, %v4556, %v4555
        %v4558 = vsel %vm1253, %v4557, 0
        %v4560 = vsel %vm1253, %v4523, 0
        %4562 = vmatprep.subr.mxu0 0.0
        %4563 = vmatpush1.msra.mxu0 0.0
        %4564 = vmatprep.subr.mxu0 0.0
        %4565 = vmatpush1.msra.mxu0 0.0
        %4566 = vmatprep.subr.mxu0 0.0
        %4567 = vmatpush1.msra.mxu0 0.0
        %4568 = vmatprep.subr.mxu0 0.0
        %4569 = vmatpush1.msra.mxu0 0.0
        %4570 = vmatprep.subr.mxu0 0.0
        %4571 = vmatpush1.msra.mxu0 0.0
        %4572 = vmatprep.subr.mxu0 0.0
        %4573 = vmatpush1.msra.mxu0 0.0
        %4574 = vmatprep.subr.mxu0 0.0
        %4575 = vmatpush1.msra.mxu0 0.0
        %4576 = vmatprep.subr.mxu0 0.0
        %4577 = vmatpush1.msra.mxu0 0.0
        %4578 = vmatprep.subr.mxu0 0.0
        %4579 = vmatpush1.msra.mxu0 0.0
        %4580 = vmatprep.subr.mxu0 0.0
        %4581 = vmatpush1.msra.mxu0 0.0
        %4582 = vmatprep.subr.mxu0 0.0
        %4583 = vmatpush1.msra.mxu0 0.0
        %4584 = vmatprep.subr.mxu0 0.0
        %4585 = vmatpush1.msra.mxu0 0.0
        %4586 = vmatprep.subr.mxu0 0.0
        %4587 = vmatpush1.msra.mxu0 %v4527
        %4588 = vmatprep.subr.mxu0 0.0
        %4589 = vmatpush1.msra.mxu0 %v4526
        %4590 = vmatprep.subr.mxu0 0.0
        %4591 = vmatpush1.msra.mxu0 %v4525
        %4592 = vmatprep.subr.mxu0 0.0
        %4593 = vmatpush1.msra.mxu0 %v4524
        %4594 = vmatprep.subr.mxu0 0.0
        %4595 = vmatpush2.msra.mxu0 0.0
        %4596 = vmatprep.subr.mxu0 0.0
        %4597 = vmatpush2.msra.mxu0 0.0
        %4598 = vmatprep.subr.mxu0 0.0
        %4599 = vmatpush2.msra.mxu0 0.0
        %4600 = vmatprep.subr.mxu0 0.0
        %4601 = vmatpush2.msra.mxu0 0.0
        %4602 = vmatprep.subr.mxu0 0.0
        %4603 = vmatpush2.msra.mxu0 0.0
        %4604 = vmatprep.subr.mxu0 0.0
        %4605 = vmatpush2.msra.mxu0 0.0
        %4606 = vmatprep.subr.mxu0 0.0
        %4607 = vmatpush2.msra.mxu0 0.0
        %4608 = vmatprep.subr.mxu0 0.0
        %4609 = vmatpush2.msra.mxu0 0.0
        %4610 = vmatprep.subr.mxu0 0.0
        %4611 = vmatpush2.msra.mxu0 0.0
        %4612 = vmatprep.subr.mxu0 0.0
        %4613 = vmatpush2.msra.mxu0 0.0
        %4614 = vmatprep.subr.mxu0 0.0
        %4615 = vmatpush2.msra.mxu0 0.0
        %4616 = vmatprep.subr.mxu0 0.0
        %4617 = vmatpush2.msra.mxu0 0.0
        %4618 = vmatprep.subr.mxu0 0.0
        %4619 = vmatpush2.msra.mxu0 0.0
        %4620 = vmatprep.subr.mxu0 0.0
        %4621 = vmatpush2.msra.mxu0 0.0
        %4622 = vmatprep.subr.mxu0 0.0
        %4623 = vmatpush2.msra.mxu0 0.0
        %4624 = vmatprep.subr.mxu0 0.0
        %4625 = vmatpush2.msra.mxu0 0.0
        %4626 = vmatprep.mubr.f32.mxu0 0.0
        %4627 = vmatmul.mubr.f32.gmra.mxu0 %v4558
        %v4628 = vpop.f32.mrf.mxu0
        %v4629 = vadd.f32 %v4533, %v4628
        %v4630 = vpop.f32.mrf.mxu0
        %4631 = vmatprep.mubr.f32.mxu0 0.0
        %4632 = vmatmul.mubr.f32.gmra.mxu0 %v4560
        %v4633 = vpop.f32.mrf.mxu0
        %v4634 = vadd.f32 %v4533, %v4633
        %v4635 = vpop.f32.mrf.mxu0
        %4636 = vdwg.mxu0
        %v4637 = vlaneseq
        %v4638 = vshrl.u32 %v4637, 7
        %v4639 = vsub.s32 0, %v4638
        %v4640 = vrot.slane %v4629, %v4639
        %4642 = vbcast.lane.b32.xlu0 %v4640, 256
        %v4643 = vpop.permute.xlu0 %4642
        %v4644 = vlaneseq
        %v4645 = vshrl.u32 %v4644, 7
        %v4646 = vsub.s32 1, %v4645
        %v4647 = vrot.slane %v4629, %v4646
        %4649 = vbcast.lane.b32.xlu0 %v4647, 256
        %v4650 = vpop.permute.xlu0 %4649
        %v4651 = vlaneseq
        %v4652 = vshrl.u32 %v4651, 7
        %v4653 = vsub.s32 2, %v4652
        %v4654 = vrot.slane %v4629, %v4653
        %4656 = vbcast.lane.b32.xlu0 %v4654, 256
        %v4657 = vpop.permute.xlu0 %4656
        %v4658 = vlaneseq
        %v4659 = vshrl.u32 %v4658, 7
        %v4660 = vsub.s32 3, %v4659
        %v4661 = vrot.slane %v4629, %v4660
        %4663 = vbcast.lane.b32.xlu0 %v4661, 256
        %v4664 = vpop.permute.xlu0 %4663
        %v4665 = vlaneseq
        %v4666 = vshrl.u32 %v4665, 7
        %v4667 = vsub.s32 4, %v4666
        %v4668 = vrot.slane %v4629, %v4667
        %4670 = vbcast.lane.b32.xlu0 %v4668, 256
        %v4671 = vpop.permute.xlu0 %4670
        %v4672 = vlaneseq
        %v4673 = vshrl.u32 %v4672, 7
        %v4674 = vsub.s32 5, %v4673
        %v4675 = vrot.slane %v4629, %v4674
        %4677 = vbcast.lane.b32.xlu0 %v4675, 256
        %v4678 = vpop.permute.xlu0 %4677
        %v4679 = vlaneseq
        %v4680 = vshrl.u32 %v4679, 7
        %v4681 = vsub.s32 6, %v4680
        %v4682 = vrot.slane %v4629, %v4681
        %4684 = vbcast.lane.b32.xlu0 %v4682, 256
        %v4685 = vpop.permute.xlu0 %4684
        %v4686 = vlaneseq
        %v4687 = vshrl.u32 %v4686, 7
        %v4688 = vsub.s32 7, %v4687
        %v4689 = vrot.slane %v4629, %v4688
        %4691 = vbcast.lane.b32.xlu0 %v4689, 256
        %v4692 = vpop.permute.xlu0 %4691
        %v4693 = vlaneseq
        %v4694 = vshrl.u32 %v4693, 7
        %v4695 = vsub.s32 0, %v4694
        %v4696 = vrot.slane %v4634, %v4695
        %4698 = vbcast.lane.b32.xlu0 %v4696, 256
        %v4699 = vpop.permute.xlu0 %4698
        %v4700 = vld [vmem:[%s61] sm:$0x3]
        %v4701 = vld [vmem:[%s61 + $0x2] sm:$0x3]
        %v4702 = vld [vmem:[%s61 + $0x4] sm:$0x3]
        %v4703 = vld [vmem:[%s61 + $0x6] sm:$0x3]
        %v4704 = vld [vmem:[%s61 + $0x8] sm:$0x3]
        %v4705 = vld [vmem:[%s61 + $0xa] sm:$0x3]
        %v4706 = vld [vmem:[%s61 + $0xc] sm:$0x3]
        %v4707 = vld [vmem:[%s61 + $0xe] sm:$0x3]
        %v4708 = vld [vmem:[%s61 + $0x10] sm:$0x3]
        %v4709 = vmul.f32 %v4643, %v4700
        %v4710 = vmul.f32 %v4650, %v4701
        %v4711 = vmul.f32 %v4657, %v4702
        %v4712 = vmul.f32 %v4664, %v4703
        %v4713 = vmul.f32 %v4671, %v4704
        %v4714 = vmul.f32 %v4678, %v4705
        %v4715 = vmul.f32 %v4685, %v4706
        %v4716 = vmul.f32 %v4692, %v4707
        %v4717 = vmul.f32 %v4699, %v4708
        %vm4718 = vcmask 9216
        %v4719 = vsel %vm4718, %v4709, 0.0
        %v4720 = vsel %vm4718, %v4710, 0.0
        %v4721 = vadd.f32 %v4719, %v4720
        %v4722 = vsel %vm4718, %v4711, 0.0
        %v4723 = vadd.f32 %v4721, %v4722
        %v4724 = vsel %vm4718, %v4712, 0.0
        %v4725 = vadd.f32 %v4723, %v4724
        %v4726 = vsel %vm4718, %v4713, 0.0
        %v4727 = vadd.f32 %v4725, %v4726
        %v4728 = vsel %vm4718, %v4714, 0.0
        %v4729 = vadd.f32 %v4727, %v4728
        %v4730 = vsel %vm4718, %v4715, 0.0
        %v4731 = vadd.f32 %v4729, %v4730
        %v4732 = vsel %vm4718, %v4716, 0.0
        %v4733 = vadd.f32 %v4731, %v4732
        %v4734 = vsel %vm4718, %v4717, 0.0
        %v4735 = vadd.f32 %v4733, %v4734
        %v4736 = vsel %vm4718, %v4735, 0.0
        %v4737 = vrot.slane %v4736, 4
        %v4738 = vadd.f32 %v4736, %v4737
        %v4739 = vrot.slane %v4738, 2
        %v4740 = vadd.f32 %v4738, %v4739
        %v4741 = vrot.slane %v4740, 1
        %v4742 = vadd.f32 %v4740, %v4741
        %v4743 = vld [vmem:[#allocation16] sm:$0x1]
        %v4744 = vadd.f32 %v4742, %v4743
        %vm4745 = vcmask 8192
        %4746 = vst.msk [vmem:[%s1091] sm:$0x1] %vm4745, %v4744
        %s4747 = sand.u32 %s769, 1
        %s4748 = scalar_lea.sflag [#allocation4], %s4747
        %s4749 = sand.u32 %s769, 1
        %s4750 = scalar_lea.vmem [#allocation17], %s4749
        // Predicated region
        $region185: #{transformer_forward.9} parent=147 // pred_check
          %p4751 = pneg %p779
        $region186: #{transformer_forward.9} parent=147 // pred_check_branch
          %4753 = sbr.rel (%p4751) target = $region188
        $region187: #{transformer_forward.9} parent=147 // pred_region
          %s4755 = ssub.s32 16, 16
          %4756 = vsyncadd %s4748, %s4755
          %s4757 = smul.addr %s84, 16
          %s4758 = scalar_lea.hbm %s65, %s4757
          %s4760 = sshll.u32 %s4750, 4
          %s4761 = int_to_ptr.vmem [resolvable:$true] %s4760
          %4763 = dma.vmem_to_hbm [thread:$0]  %s4761, 16, %s4758, %s4748
        $region188: #{transformer_forward.9} parent=147 // pred_fallthru
          _
      $region148: #{transformer_forward.9} parent=5 // pred_fallthru
        _
      %p4764 = scmp.le.s32.totalorder 2, %s79
      // Predicated region
      $region189: #{transformer_forward.9} parent=5 // pred_check
        %p4765 = pneg %p4764
      $region190: #{transformer_forward.9} parent=5 // pred_check_branch
        %4767 = sbr.rel (%p4765) target = $region192
      $region191: #{transformer_forward.9} parent=5 // pred_region
        %s4768 = ssub.s32 %s79, 2
        // Predicated region
        $region193: #{transformer_forward.9} parent=191 // pred_check
          %p4769 = pneg %p785
        $region194: #{transformer_forward.9} parent=191 // pred_check_branch
          %4771 = sbr.rel (%p4769) target = $region196
        $region195: #{transformer_forward.9} parent=191 // pred_region
          %s4772 = sand.u32 %s770, 1
          %s4773 = scalar_lea.sflag [#allocation4], %s4772
          %s4774 = sand.u32 %s770, 1
          %s4775 = scalar_lea.vmem [#allocation17], %s4774
          %4776 = dma.done %s4773, 16
        $region196: #{transformer_forward.9} parent=191 // pred_fallthru
          _
      $region192: #{transformer_forward.9} parent=5 // pred_fallthru
        _
    $region6: #{transformer_forward.9} parent=1 // loop_footer
      %s83 = sadd.s32 1, %s79
    $region7: #{transformer_forward.9} parent=1 // loop_footer_branch
      %78 = sbr.rel target = $region3
    $region8: #{transformer_forward.9} parent=1 // loop_exit
      _
    %4777 = vsyncpa [#allocation3], 1
    %s4778 = scalar_lea.sflag [#allocation3], 1
    %4779 = vsyncpa %s4778, 1
    %4780 = vsyncpa [#allocation6], 1
    %4781 = vsyncpa [#allocation9], 1
    %4782 = vsyncpa [#allocation12], 1
    %4783 = vsyncpa [#allocation15], 1
    %4784 = vsyncpa [#allocation4], 1
    %s4785 = scalar_lea.sflag [#allocation4], 1
    %4786 = vsyncpa %s4785, 1

</llo_original>
